<compile_context>
chip_gen: v5e
topology: v5e:2x2
jax: 0.10.0
libtpu: 0.0.40
codegen_flags: <defaults>
</compile_context>

<pallas_src>
import math
from functools import partial

import jax
import jax.numpy as jnp
from jax.experimental import pallas as pl
from jax.experimental.pallas import tpu as pltpu

_LANE = 128      # channel dims are zero-padded to a multiple of this (lane width)
_CO_TILE = 128   # output-channel tile handled per grid step


def _round_up(n, m):
    return (n + m - 1) // m * m


# ----------------------------------------------------------------------------
# Pallas kernel: fused [pre BN+ReLU] -> zero-pad -> im2col -> one MXU matmul
#                -> [post BN+ReLU] -> [+ residual]
# ----------------------------------------------------------------------------

def _make_conv_kernel(*, src_hw, pad, taps, tap_c, out_hw, co_tile,
                      has_pre, has_post, has_res, use_pad_scratch):
    H, W = src_hw
    Ho, Wo = out_hw
    K = len(taps) * tap_c

    def kernel(*refs):
        i = 0
        x_ref = refs[i]; i += 1
        w_ref = refs[i]; i += 1
        pre_s = pre_b = post_s = post_b = r_ref = None
        if has_pre:
            pre_s, pre_b = refs[i], refs[i + 1]; i += 2
        if has_post:
            post_s, post_b = refs[i], refs[i + 1]; i += 2
        if has_res:
            r_ref = refs[i]; i += 1
        o_ref = refs[i]; i += 1
        pad_buf = refs[i] if use_pad_scratch else None
        patch = refs[-1]

        co_idx = pl.program_id(1)

        # The im2col patch depends only on the batch index -> build it once per
        # batch element and reuse it for every Cout tile.
        @pl.when(co_idx == 0)
        def _build_patch():
            if use_pad_scratch:
                if pad > 0:
                    pad_buf[...] = jnp.zeros_like(pad_buf)   # zero halo
                v = x_ref[0]
                if has_pre:   # fused bn1 + relu1 (applied before padding -> halo stays 0)
                    v = jnp.maximum(
                        v.astype(jnp.float32) * pre_s[...] + pre_b[...], 0.0)
                pad_buf[pl.ds(pad, H), pl.ds(pad, W), :] = v.astype(pad_buf.dtype)
                src = pad_buf[...]
            else:
                # Input was already padded / space-to-depth'ed by the wrapper.
                src = x_ref[0].astype(patch.dtype)
            for t, (oy, ox, oc) in enumerate(taps):
                tap = src[oy:oy + Ho, ox:ox + Wo, oc:oc + tap_c]
                patch[:, :, pl.ds(t * tap_c, tap_c)] = tap.astype(patch.dtype)

        # Single combined-K matmul: (Ho*Wo, KH*KW*C) @ (KH*KW*C, co_tile), f32 acc.
        acc = jnp.dot(patch[...].reshape(Ho * Wo, K), w_ref[...],
                      preferred_element_type=jnp.float32)
        if has_post:              # fused bn2 + relu2
            acc = jnp.maximum(acc * post_s[...] + post_b[...], 0.0)
        out = acc.reshape(Ho, Wo, co_tile)
        if has_res:               # fused shortcut add
            out = out + r_ref[0].astype(jnp.float32)
        o_ref[0] = out.astype(o_ref.dtype)

    return kernel


def conv2d_fused(x, w_flat, *, taps, tap_c, pad, out_hw, use_pad_scratch,
                 out_dtype, pre=None, post=None, residual=None,
                 co_tile=_CO_TILE):
    """x: (N, H, W, Cx) NHWC, channel-padded; w_flat: (KH*KW*Cin_p, Cout_p) bf16."""
    N, H, W, Cx = x.shape
    K, Coutp = w_flat.shape
    Ho, Wo = out_hw
    assert K == len(taps) * tap_c
    assert Coutp % co_tile == 0
    nco = Coutp // co_tile

    kernel = _make_conv_kernel(
        src_hw=(H, W), pad=pad, taps=taps, tap_c=tap_c, out_hw=out_hw,
        co_tile=co_tile, has_pre=pre is not None, has_post=post is not None,
        has_res=residual is not None, use_pad_scratch=use_pad_scratch)

    in_specs = [
        pl.BlockSpec((1, H, W, Cx), lambda n, c: (n, 0, 0, 0)),
        pl.BlockSpec((K, co_tile), lambda n, c: (0, c)),
    ]
    args = [x, w_flat]
    if pre is not None:
        in_specs += [pl.BlockSpec((1, tap_c), lambda n, c: (0, 0)),
                     pl.BlockSpec((1, tap_c), lambda n, c: (0, 0))]
        args += list(pre)
    if post is not None:
        in_specs += [pl.BlockSpec((1, co_tile), lambda n, c: (0, c)),
                     pl.BlockSpec((1, co_tile), lambda n, c: (0, c))]
        args += list(post)
    if residual is not None:
        in_specs += [pl.BlockSpec((1, Ho, Wo, co_tile), lambda n, c: (n, 0, 0, c))]
        args += [residual]

    scratch = []
    if use_pad_scratch:
        scratch.append(pltpu.VMEM((H + 2 * pad, W + 2 * pad, tap_c), jnp.bfloat16))
    scratch.append(pltpu.VMEM((Ho, Wo, K), jnp.bfloat16))   # im2col patch

    flops = 2 * N * Ho * Wo * K * Coutp
    bytes_accessed = int(x.size * x.dtype.itemsize
                         + w_flat.size * w_flat.dtype.itemsize
                         + N * Ho * Wo * Coutp * jnp.dtype(out_dtype).itemsize)

    return pl.pallas_call(
        kernel,
        out_shape=jax.ShapeDtypeStruct((N, Ho, Wo, Coutp), out_dtype),
        grid=(N, nco),
        in_specs=in_specs,
        out_specs=pl.BlockSpec((1, Ho, Wo, co_tile), lambda n, c: (n, 0, 0, c)),
        scratch_shapes=scratch,
        compiler_params=pltpu.CompilerParams(
            dimension_semantics=("parallel", "arbitrary"),
            vmem_limit_bytes=32 * 1024 * 1024),
        cost_estimate=pl.CostEstimate(flops=flops, transcendentals=0,
                                      bytes_accessed=bytes_accessed),
    )(*args)


# ----------------------------------------------------------------------------
# Wrapper-side layout glue (one-time per block boundary)
# ----------------------------------------------------------------------------

def _prep_weight(w_hwio, cin_p, cout_p):
    """HWIO conv weight -> zero-pad channels -> (KH*KW*Cin_p, Cout_p) bf16."""
    kh, kw, ci, co = w_hwio.shape
    w = jnp.pad(w_hwio, ((0, 0), (0, 0), (0, cin_p - ci), (0, cout_p - co)))
    return w.reshape(kh * kw * cin_p, cout_p).astype(jnp.bfloat16)


def _pad_vec(v, cp):
    return jnp.pad(v, ((0, 0), (0, cp - v.shape[-1]))).astype(jnp.float32)


def _space_to_depth(x, *, k, pad, stride, out_hw):
    """Zero-pad spatially and fold the stride phases into channels so a stride-s
    conv becomes a stride-1 conv with contiguous tap reads inside the kernel."""
    N, H, W, C = x.shape
    Ho, Wo = out_hw
    Hh = Ho + (k - 1) // stride
    Wh = Wo + (k - 1) // stride
    xp = jnp.pad(x, ((0, 0),
                     (pad, stride * Hh - H - pad),
                     (pad, stride * Wh - W - pad),
                     (0, 0)))
    xp = xp.reshape(N, Hh, stride, Wh, stride, C)
    xp = jnp.transpose(xp, (0, 1, 3, 2, 4, 5))
    return xp.reshape(N, Hh, Wh, stride * stride * C).astype(jnp.bfloat16)


# ----------------------------------------------------------------------------
# BasicBlock forward (Pallas) + parameter init + pure-JAX reference
# ----------------------------------------------------------------------------

@partial(jax.jit, static_argnames=("stride", "kernel_size"))
def basic_block_forward(x_nchw, params, *, stride, kernel_size=(3, 3)):
    """Pallas implementation of BasicBlock.forward. Input/output are NCHW."""
    k1, k2 = kernel_size
    p1 = 1 if k1 == 3 else 0
    p2 = 1 if k2 == 3 else 0
    N, Cin, H, W = x_nchw.shape
    Cout = params["w1"].shape[-1]
    equal = (Cin == Cout) and (stride == 1)

    Cinp = _round_up(Cin, _LANE)
    Coutp = _round_up(Cout, _LANE)

    # NCHW -> NHWC + channel pad.  In a full WRN these are one-time model-boundary
    # costs: stacked blocks should stay NHWC / channel-padded end-to-end.
    x = jnp.transpose(x_nchw, (0, 2, 3, 1)).astype(jnp.float32)
    x = jnp.pad(x, ((0, 0), (0, 0), (0, 0), (0, Cinp - Cin)))

    w1 = _prep_weight(params["w1"], Cinp, Coutp)
    w2 = _prep_weight(params["w2"], Coutp, Coutp)
    bn2 = (_pad_vec(params["bn2_scale"], Coutp), _pad_vec(params["bn2_shift"], Coutp))

    Ho1 = (H + 2 * p1 - k1) // stride + 1
    Wo1 = (W + 2 * p1 - k1) // stride + 1
    Ho2 = Ho1 + 2 * p2 - k2 + 1
    Wo2 = Wo1 + 2 * p2 - k2 + 1

    taps1 = [(dy, dx, 0) for dy in range(k1) for dx in range(k1)]

    # Residual branch: [bn1+relu1 if equalInOut] -> conv1 -> bn2+relu2 -> conv2.
    if equal:
        bn1 = (_pad_vec(params["bn1_scale"], Cinp), _pad_vec(params["bn1_shift"], Cinp))
        y1 = conv2d_fused(x, w1, taps=taps1, tap_c=Cinp, pad=p1, out_hw=(Ho1, Wo1),
                          pre=bn1, post=bn2, use_pad_scratch=True,
                          out_dtype=jnp.bfloat16)
    elif stride == 1:
        # Per the PyTorch module, there is no bn1/relu1 when in_planes != out_planes.
        y1 = conv2d_fused(x, w1, taps=taps1, tap_c=Cinp, pad=p1, out_hw=(Ho1, Wo1),
                          post=bn2, use_pad_scratch=True, out_dtype=jnp.bfloat16)
    else:
        # Strided conv (never has a pre-activation): space-to-depth in the wrapper,
        # contiguous stride-1 reads in the kernel.
        x_s2d = _space_to_depth(x, k=k1, pad=p1, stride=stride, out_hw=(Ho1, Wo1))
        taps_s2d = [(dy // stride, dx // stride,
                     ((dy % stride) * stride + (dx % stride)) * Cinp)
                    for dy in range(k1) for dx in range(k1)]
        y1 = conv2d_fused(x_s2d, w1, taps=taps_s2d, tap_c=Cinp, pad=0,
                          out_hw=(Ho1, Wo1), post=bn2, use_pad_scratch=False,
                          out_dtype=jnp.bfloat16)

    # Shortcut branch: identity, or 1x1 (possibly strided) conv.
    if equal:
        shortcut = x
    else:
        ws = _prep_weight(params["ws"], Cinp, Coutp)
        xs = x[:, ::stride, ::stride, :] if stride > 1 else x
        shortcut = conv2d_fused(xs.astype(jnp.bfloat16), ws, taps=[(0, 0, 0)],
                                tap_c=Cinp, pad=0, out_hw=(Ho2, Wo2),
                                use_pad_scratch=False, out_dtype=jnp.float32)

    # conv2 with the residual add fused into its epilogue.
    taps2 = [(dy, dx, 0) for dy in range(k2) for dx in range(k2)]
    out = conv2d_fused(y1, w2, taps=taps2, tap_c=Coutp, pad=p2, out_hw=(Ho2, Wo2),
                       residual=shortcut, use_pad_scratch=True,
                       out_dtype=jnp.float32)

    out = out[:, :, :, :Cout]                    # drop channel padding
    return jnp.transpose(out, (0, 3, 1, 2))      # back to NCHW


def init_params(key, in_planes, out_planes, stride, kernel_size=(3, 3)):
    k1, k2 = kernel_size
    equal = (in_planes == out_planes) and (stride == 1)
    keys = jax.random.split(key, 5)
    eps = 1e-5

    def conv_w(k, kh, kw, ci, co):
        fan_in = ci * kh * kw
        return jax.random.normal(k, (kh, kw, ci, co), jnp.float32) / math.sqrt(fan_in)

    def bn_fold(k, c):
        kg, kb, km, kv = jax.random.split(k, 4)
        gamma = 1.0 + 0.1 * jax.random.normal(kg, (c,), jnp.float32)
        beta = 0.1 * jax.random.normal(kb, (c,), jnp.float32)
        mean = 0.1 * jax.random.normal(km, (c,), jnp.float32)
        var = 0.5 + jax.random.uniform(kv, (c,), jnp.float32)
        scale = gamma / jnp.sqrt(var + eps)
        shift = beta - mean * scale
        return scale.reshape(1, c), shift.reshape(1, c)

    params = {
        "w1": conv_w(keys[0], k1, k1, in_planes, out_planes),
        "w2": conv_w(keys[1], k2, k2, out_planes, out_planes),
    }
    params["bn2_scale"], params["bn2_shift"] = bn_fold(keys[2], out_planes)
    if equal:
        params["bn1_scale"], params["bn1_shift"] = bn_fold(keys[3], in_planes)
    else:
        params["ws"] = conv_w(keys[4], 1, 1, in_planes, out_planes)
    return params


def basic_block_reference(x_nchw, params, *, stride, kernel_size=(3, 3)):
    """Pure-JAX (lax.conv, f32) reference mirroring the PyTorch forward."""
    k1, k2 = kernel_size
    p1 = 1 if k1 == 3 else 0
    p2 = 1 if k2 == 3 else 0
    Cin = x_nchw.shape[1]
    Cout = params["w1"].shape[-1]
    equal = (Cin == Cout) and (stride == 1)

    def conv(x, w, s, p):
        return jax.lax.conv_general_dilated(
            x, w, window_strides=(s, s), padding=((p, p), (p, p)),
            dimension_numbers=("NCHW", "HWIO", "NCHW"))

    def bn_relu(x, scale, shift):
        return jnp.maximum(
            x * scale.reshape(1, -1, 1, 1) + shift.reshape(1, -1, 1, 1), 0.0)

    h = bn_relu(x_nchw, params["bn1_scale"], params["bn1_shift"]) if equal else x_nchw
    h = conv(h, params["w1"], stride, p1)
    h = bn_relu(h, params["bn2_scale"], params["bn2_shift"])
    h = conv(h, params["w2"], 1, p2)
    sc = x_nchw if equal else conv(x_nchw, params["ws"], stride, 0)
    return sc + h


def _check(name, out, ref):
    err = float(jnp.max(jnp.abs(out - ref)))
    scale = float(jnp.max(jnp.abs(ref)))
    tol = 3e-2 * scale + 1e-2          # bf16 matmul operands, f32 accumulation
    assert err <= tol, f"{name}: max abs err {err:.4f} > tol {tol:.4f}"


if __name__ == "__main__":
    key = jax.random.PRNGKey(0)
    kx1, kx2, kp1, kp2 = jax.random.split(key, 4)

    # Case 1: equalInOut (in==out, stride=1) -> bn1/relu1 fused into conv1,
    # identity shortcut fused into conv2's epilogue.
    x1 = jax.random.normal(kx1, (2, 8, 16, 16), jnp.float32)
    prm1 = init_params(kp1, 8, 8, 1)
    out1 = jax.block_until_ready(basic_block_forward(x1, prm1, stride=1))
    ref1 = basic_block_reference(x1, prm1, stride=1)
    assert out1.shape == (2, 8, 16, 16)
    _check("equalInOut", out1, ref1)

    # Case 2: downsample (in!=out, stride=2) -> space-to-depth conv1 and a
    # 1x1 strided shortcut conv.
    x2 = jax.random.normal(kx2, (2, 4, 16, 16), jnp.float32)
    prm2 = init_params(kp2, 4, 8, 2)
    out2 = jax.block_until_ready(basic_block_forward(x2, prm2, stride=2))
    ref2 = basic_block_reference(x2, prm2, stride=2)
    assert out2.shape == (2, 8, 8, 8)
    _check("downsample", out2, ref2)

    print("KERNEL_OK")
</pallas_src>

<mosaic_0001>
module attributes {stable_mosaic.version = 11 : i64} {
  func.func @kernel(%arg0: i32, %arg1: i32, %arg2: memref<1x16x16x128xf32, #tpu.memory_space<vmem>>, %arg3: memref<1152x128xbf16, #tpu.memory_space<vmem>>, %arg4: memref<1x128xf32, #tpu.memory_space<vmem>>, %arg5: memref<1x128xf32, #tpu.memory_space<vmem>>, %arg6: memref<1x128xf32, #tpu.memory_space<vmem>>, %arg7: memref<1x128xf32, #tpu.memory_space<vmem>>, %arg8: memref<1x16x16x128xbf16, #tpu.memory_space<vmem>>, %arg9: memref<18x18x128xbf16, #tpu.memory_space<vmem>>, %arg10: memref<16x16x1152xbf16, #tpu.memory_space<vmem>>) attributes {dimension_semantics = [#tpu.dimension_semantics<parallel>, #tpu.dimension_semantics<arbitrary>], iteration_bounds = array<i64: 2, 1>, scalar_prefetch = 0 : i64, scratch_operands = 2 : i64, tpu.core_type = #tpu.core_type<tc>, window_params = [{transform_indices = @transform_0, window_bounds = array<i64: 1, 16, 16, 128>}, {transform_indices = @transform_1, window_bounds = array<i64: 1152, 128>}, {pipeline_mode = #tpu.pipeline_mode<synchronous>, transform_indices = @transform_2, window_bounds = array<i64: 1, 128>}, {pipeline_mode = #tpu.pipeline_mode<synchronous>, transform_indices = @transform_3, window_bounds = array<i64: 1, 128>}, {transform_indices = @transform_4, window_bounds = array<i64: 1, 128>}, {transform_indices = @transform_5, window_bounds = array<i64: 1, 128>}, {transform_indices = @transform_6, window_bounds = array<i64: 1, 16, 16, 128>}]} {
    %c0_i32 = arith.constant 0 : i32
    %0 = arith.cmpi eq, %arg1, %c0_i32 : i32
    %1 = arith.extui %0 : i1 to i32
    %c0_i32_0 = arith.constant 0 : i32
    %2 = arith.cmpi ne, %1, %c0_i32_0 : i32
    scf.if %2 {
      %cst_14 = arith.constant 0.000000e+00 : bf16
      %20 = vector.broadcast %cst_14 : bf16 to vector<18x18x128xbf16>
      %c0_15 = arith.constant 0 : index
      %c0_16 = arith.constant 0 : index
      %c0_17 = arith.constant 0 : index
      %21 = vector.load %arg9[%c0_15, %c0_16, %c0_17] : memref<18x18x128xbf16, #tpu.memory_space<vmem>>, vector<18x18x128xbf16>
      tpu.vector_store %arg9[%c0_15, %c0_16, %c0_17], %20 {strides = array<i32>} : memref<18x18x128xbf16, #tpu.memory_space<vmem>>, vector<18x18x128xbf16>,
      %c0_18 = arith.constant 0 : index
      %c0_19 = arith.constant 0 : index
      %c0_20 = arith.constant 0 : index
      %c0_21 = arith.constant 0 : index
      %22 = vector.load %arg2[%c0_18, %c0_19, %c0_20, %c0_21] : memref<1x16x16x128xf32, #tpu.memory_space<vmem>>, vector<1x16x16x128xf32>
      %23 = vector.shape_cast %22 : vector<1x16x16x128xf32> to vector<16x16x128xf32>
      %c0_22 = arith.constant 0 : index
      %c0_23 = arith.constant 0 : index
      %24 = vector.load %arg4[%c0_22, %c0_23] : memref<1x128xf32, #tpu.memory_space<vmem>>, vector<1x128xf32>
      %25 = vector.shape_cast %24 : vector<1x128xf32> to vector<1x1x128xf32>
      %26 = vector.broadcast %25 : vector<1x1x128xf32> to vector<16x16x128xf32>
      %27 = arith.mulf %23, %26 : vector<16x16x128xf32>
      %c0_24 = arith.constant 0 : index
      %c0_25 = arith.constant 0 : index
      %28 = vector.load %arg5[%c0_24, %c0_25] : memref<1x128xf32, #tpu.memory_space<vmem>>, vector<1x128xf32>
      %29 = vector.shape_cast %28 : vector<1x128xf32> to vector<1x1x128xf32>
      %30 = vector.broadcast %29 : vector<1x1x128xf32> to vector<16x16x128xf32>
      %31 = arith.addf %27, %30 : vector<16x16x128xf32>
      %cst_26 = arith.constant 0.000000e+00 : f32
      %32 = vector.broadcast %cst_26 : f32 to vector<16x16x128xf32>
      %33 = arith.maximumf %31, %32 : vector<16x16x128xf32>
      %34 = arith.truncf %33 : vector<16x16x128xf32> to vector<16x16x128xbf16>
      %c1 = arith.constant 1 : index
      %c1_27 = arith.constant 1 : index
      %c0_28 = arith.constant 0 : index
      %35 = vector.load %arg9[%c1, %c1_27, %c0_28] : memref<18x18x128xbf16, #tpu.memory_space<vmem>>, vector<16x16x128xbf16>
      tpu.vector_store %arg9[%c1, %c1_27, %c0_28], %34 {strides = array<i32>} : memref<18x18x128xbf16, #tpu.memory_space<vmem>>, vector<16x16x128xbf16>,
      %c0_29 = arith.constant 0 : index
      %c0_30 = arith.constant 0 : index
      %c0_31 = arith.constant 0 : index
      %36 = vector.load %arg9[%c0_29, %c0_30, %c0_31] : memref<18x18x128xbf16, #tpu.memory_space<vmem>>, vector<18x18x128xbf16>
      %37 = vector.extract_strided_slice %36 {offsets = [0, 0, 0], sizes = [16, 16, 128], strides = [1, 1, 1]} : vector<18x18x128xbf16> to vector<16x16x128xbf16>
      %c0_32 = arith.constant 0 : index
      %c0_33 = arith.constant 0 : index
      %c0_34 = arith.constant 0 : index
      %38 = vector.load %arg10[%c0_32, %c0_33, %c0_34] : memref<16x16x1152xbf16, #tpu.memory_space<vmem>>, vector<16x16x128xbf16>
      tpu.vector_store %arg10[%c0_32, %c0_33, %c0_34], %37 {strides = array<i32>} : memref<16x16x1152xbf16, #tpu.memory_space<vmem>>, vector<16x16x128xbf16>,
      %39 = vector.extract_strided_slice %36 {offsets = [0, 1, 0], sizes = [16, 16, 128], strides = [1, 1, 1]} : vector<18x18x128xbf16> to vector<16x16x128xbf16>
      %c0_35 = arith.constant 0 : index
      %c0_36 = arith.constant 0 : index
      %c128 = arith.constant 128 : index
      %40 = vector.load %arg10[%c0_35, %c0_36, %c128] : memref<16x16x1152xbf16, #tpu.memory_space<vmem>>, vector<16x16x128xbf16>
      tpu.vector_store %arg10[%c0_35, %c0_36, %c128], %39 {strides = array<i32>} : memref<16x16x1152xbf16, #tpu.memory_space<vmem>>, vector<16x16x128xbf16>,
      %41 = vector.extract_strided_slice %36 {offsets = [0, 2, 0], sizes = [16, 16, 128], strides = [1, 1, 1]} : vector<18x18x128xbf16> to vector<16x16x128xbf16>
      %c0_37 = arith.constant 0 : index
      %c0_38 = arith.constant 0 : index
      %c256 = arith.constant 256 : index
      %42 = vector.load %arg10[%c0_37, %c0_38, %c256] : memref<16x16x1152xbf16, #tpu.memory_space<vmem>>, vector<16x16x128xbf16>
      tpu.vector_store %arg10[%c0_37, %c0_38, %c256], %41 {strides = array<i32>} : memref<16x16x1152xbf16, #tpu.memory_space<vmem>>, vector<16x16x128xbf16>,
      %43 = vector.extract_strided_slice %36 {offsets = [1, 0, 0], sizes = [16, 16, 128], strides = [1, 1, 1]} : vector<18x18x128xbf16> to vector<16x16x128xbf16>
      %c0_39 = arith.constant 0 : index
      %c0_40 = arith.constant 0 : index
      %c384 = arith.constant 384 : index
      %44 = vector.load %arg10[%c0_39, %c0_40, %c384] : memref<16x16x1152xbf16, #tpu.memory_space<vmem>>, vector<16x16x128xbf16>
      tpu.vector_store %arg10[%c0_39, %c0_40, %c384], %43 {strides = array<i32>} : memref<16x16x1152xbf16, #tpu.memory_space<vmem>>, vector<16x16x128xbf16>,
      %45 = vector.extract_strided_slice %36 {offsets = [1, 1, 0], sizes = [16, 16, 128], strides = [1, 1, 1]} : vector<18x18x128xbf16> to vector<16x16x128xbf16>
      %c0_41 = arith.constant 0 : index
      %c0_42 = arith.constant 0 : index
      %c512 = arith.constant 512 : index
      %46 = vector.load %arg10[%c0_41, %c0_42, %c512] : memref<16x16x1152xbf16, #tpu.memory_space<vmem>>, vector<16x16x128xbf16>
      tpu.vector_store %arg10[%c0_41, %c0_42, %c512], %45 {strides = array<i32>} : memref<16x16x1152xbf16, #tpu.memory_space<vmem>>, vector<16x16x128xbf16>,
      %47 = vector.extract_strided_slice %36 {offsets = [1, 2, 0], sizes = [16, 16, 128], strides = [1, 1, 1]} : vector<18x18x128xbf16> to vector<16x16x128xbf16>
      %c0_43 = arith.constant 0 : index
      %c0_44 = arith.constant 0 : index
      %c640 = arith.constant 640 : index
      %48 = vector.load %arg10[%c0_43, %c0_44, %c640] : memref<16x16x1152xbf16, #tpu.memory_space<vmem>>, vector<16x16x128xbf16>
      tpu.vector_store %arg10[%c0_43, %c0_44, %c640], %47 {strides = array<i32>} : memref<16x16x1152xbf16, #tpu.memory_space<vmem>>, vector<16x16x128xbf16>,
      %49 = vector.extract_strided_slice %36 {offsets = [2, 0, 0], sizes = [16, 16, 128], strides = [1, 1, 1]} : vector<18x18x128xbf16> to vector<16x16x128xbf16>
      %c0_45 = arith.constant 0 : index
      %c0_46 = arith.constant 0 : index
      %c768 = arith.constant 768 : index
      %50 = vector.load %arg10[%c0_45, %c0_46, %c768] : memref<16x16x1152xbf16, #tpu.memory_space<vmem>>, vector<16x16x128xbf16>
      tpu.vector_store %arg10[%c0_45, %c0_46, %c768], %49 {strides = array<i32>} : memref<16x16x1152xbf16, #tpu.memory_space<vmem>>, vector<16x16x128xbf16>,
      %51 = vector.extract_strided_slice %36 {offsets = [2, 1, 0], sizes = [16, 16, 128], strides = [1, 1, 1]} : vector<18x18x128xbf16> to vector<16x16x128xbf16>
      %c0_47 = arith.constant 0 : index
      %c0_48 = arith.constant 0 : index
      %c896 = arith.constant 896 : index
      %52 = vector.load %arg10[%c0_47, %c0_48, %c896] : memref<16x16x1152xbf16, #tpu.memory_space<vmem>>, vector<16x16x128xbf16>
      tpu.vector_store %arg10[%c0_47, %c0_48, %c896], %51 {strides = array<i32>} : memref<16x16x1152xbf16, #tpu.memory_space<vmem>>, vector<16x16x128xbf16>,
      %53 = vector.extract_strided_slice %36 {offsets = [2, 2, 0], sizes = [16, 16, 128], strides = [1, 1, 1]} : vector<18x18x128xbf16> to vector<16x16x128xbf16>
      %c0_49 = arith.constant 0 : index
      %c0_50 = arith.constant 0 : index
      %c1024 = arith.constant 1024 : index
      %54 = vector.load %arg10[%c0_49, %c0_50, %c1024] : memref<16x16x1152xbf16, #tpu.memory_space<vmem>>, vector<16x16x128xbf16>
      tpu.vector_store %arg10[%c0_49, %c0_50, %c1024], %53 {strides = array<i32>} : memref<16x16x1152xbf16, #tpu.memory_space<vmem>>, vector<16x16x128xbf16>,
    } else {
    }
    %c0 = arith.constant 0 : index
    %c0_1 = arith.constant 0 : index
    %c0_2 = arith.constant 0 : index
    %3 = vector.load %arg10[%c0, %c0_1, %c0_2] : memref<16x16x1152xbf16, #tpu.memory_space<vmem>>, vector<16x16x1152xbf16>
    %4 = vector.shape_cast %3 : vector<16x16x1152xbf16> to vector<256x1152xbf16>
    %c0_3 = arith.constant 0 : index
    %c0_4 = arith.constant 0 : index
    %5 = vector.load %arg3[%c0_3, %c0_4] : memref<1152x128xbf16, #tpu.memory_space<vmem>>, vector<1152x128xbf16>
    %cst = arith.constant dense<0.000000e+00> : vector<256x128xf32>
    %6 = tpu.matmul %4, %5, %cst {dimension_numbers = #tpu.dot_dimension_numbers<[1], [0], [0], [1], [0, 0, 1, 1], [], []>} : vector<256x1152xbf16>, vector<1152x128xbf16>, vector<256x128xf32> -> vector<256x128xf32>
    %c0_5 = arith.constant 0 : index
    %c0_6 = arith.constant 0 : index
    %7 = vector.load %arg6[%c0_5, %c0_6] : memref<1x128xf32, #tpu.memory_space<vmem>>, vector<1x128xf32>
    %8 = vector.broadcast %7 : vector<1x128xf32> to vector<256x128xf32>
    %9 = arith.mulf %6, %8 : vector<256x128xf32>
    %c0_7 = arith.constant 0 : index
    %c0_8 = arith.constant 0 : index
    %10 = vector.load %arg7[%c0_7, %c0_8] : memref<1x128xf32, #tpu.memory_space<vmem>>, vector<1x128xf32>
    %11 = vector.broadcast %10 : vector<1x128xf32> to vector<256x128xf32>
    %12 = arith.addf %9, %11 : vector<256x128xf32>
    %cst_9 = arith.constant 0.000000e+00 : f32
    %13 = vector.broadcast %cst_9 : f32 to vector<256x128xf32>
    %14 = arith.maximumf %12, %13 : vector<256x128xf32>
    %15 = vector.shape_cast %14 : vector<256x128xf32> to vector<16x16x128xf32>
    %16 = arith.truncf %15 : vector<16x16x128xf32> to vector<16x16x128xbf16>
    %c0_10 = arith.constant 0 : index
    %c0_11 = arith.constant 0 : index
    %c0_12 = arith.constant 0 : index
    %c0_13 = arith.constant 0 : index
    %17 = vector.load %arg8[%c0_10, %c0_11, %c0_12, %c0_13] : memref<1x16x16x128xbf16, #tpu.memory_space<vmem>>, vector<1x16x16x128xbf16>
    %18 = vector.shape_cast %17 : vector<1x16x16x128xbf16> to vector<16x16x128xbf16>
    %19 = vector.shape_cast %16 : vector<16x16x128xbf16> to vector<1x16x16x128xbf16>
    tpu.vector_store %arg8[%c0_10, %c0_11, %c0_12, %c0_13], %19 {strides = array<i32>} : memref<1x16x16x128xbf16, #tpu.memory_space<vmem>>, vector<1x16x16x128xbf16>,
    return
  }
  func.func @transform_0(%arg0: i32, %arg1: i32) -> (i32, i32, i32, i32) {
    %c0_i32 = arith.constant 0 : i32
    %c0_i32_0 = arith.constant 0 : i32
    %c0_i32_1 = arith.constant 0 : i32
    %c0_i32_2 = arith.constant 0 : i32
    return %arg0, %c0_i32, %c0_i32_0, %c0_i32_1 : i32, i32, i32, i32
  }
  func.func @transform_1(%arg0: i32, %arg1: i32) -> (i32, i32) {
    %c0_i32 = arith.constant 0 : i32
    %c0_i32_0 = arith.constant 0 : i32
    return %c0_i32, %arg1 : i32, i32
  }
  func.func @transform_2(%arg0: i32, %arg1: i32) -> (i32, i32) {
    %c0_i32 = arith.constant 0 : i32
    %c0_i32_0 = arith.constant 0 : i32
    %c0_i32_1 = arith.constant 0 : i32
    return %c0_i32, %c0_i32_0 : i32, i32
  }
  func.func @transform_3(%arg0: i32, %arg1: i32) -> (i32, i32) {
    %c0_i32 = arith.constant 0 : i32
    %c0_i32_0 = arith.constant 0 : i32
    %c0_i32_1 = arith.constant 0 : i32
    return %c0_i32, %c0_i32_0 : i32, i32
  }
  func.func @transform_4(%arg0: i32, %arg1: i32) -> (i32, i32) {
    %c0_i32 = arith.constant 0 : i32
    %c0_i32_0 = arith.constant 0 : i32
    return %c0_i32, %arg1 : i32, i32
  }
  func.func @transform_5(%arg0: i32, %arg1: i32) -> (i32, i32) {
    %c0_i32 = arith.constant 0 : i32
    %c0_i32_0 = arith.constant 0 : i32
    return %c0_i32, %arg1 : i32, i32
  }
  func.func @transform_6(%arg0: i32, %arg1: i32) -> (i32, i32, i32, i32) {
    %c0_i32 = arith.constant 0 : i32
    %c0_i32_0 = arith.constant 0 : i32
    %c0_i32_1 = arith.constant 0 : i32
    return %arg0, %c0_i32, %c0_i32_0, %arg1 : i32, i32, i32, i32
  }
}

module attributes {stable_mosaic.version = 11 : i64} {
  func.func @kernel(%arg0: i32, %arg1: i32, %arg2: memref<1x16x16x128xbf16, #tpu.memory_space<vmem>>, %arg3: memref<1152x128xbf16, #tpu.memory_space<vmem>>, %arg4: memref<1x16x16x128xf32, #tpu.memory_space<vmem>>, %arg5: memref<1x16x16x128xf32, #tpu.memory_space<vmem>>, %arg6: memref<18x18x128xbf16, #tpu.memory_space<vmem>>, %arg7: memref<16x16x1152xbf16, #tpu.memory_space<vmem>>) attributes {dimension_semantics = [#tpu.dimension_semantics<parallel>, #tpu.dimension_semantics<arbitrary>], iteration_bounds = array<i64: 2, 1>, scalar_prefetch = 0 : i64, scratch_operands = 2 : i64, tpu.core_type = #tpu.core_type<tc>, window_params = [{transform_indices = @transform_0, window_bounds = array<i64: 1, 16, 16, 128>}, {transform_indices = @transform_1, window_bounds = array<i64: 1152, 128>}, {transform_indices = @transform_2, window_bounds = array<i64: 1, 16, 16, 128>}, {transform_indices = @transform_3, window_bounds = array<i64: 1, 16, 16, 128>}]} {
    %c0_i32 = arith.constant 0 : i32
    %0 = arith.cmpi eq, %arg1, %c0_i32 : i32
    %1 = arith.extui %0 : i1 to i32
    %c0_i32_0 = arith.constant 0 : i32
    %2 = arith.cmpi ne, %1, %c0_i32_0 : i32
    scf.if %2 {
      %cst_13 = arith.constant 0.000000e+00 : bf16
      %14 = vector.broadcast %cst_13 : bf16 to vector<18x18x128xbf16>
      %c0_14 = arith.constant 0 : index
      %c0_15 = arith.constant 0 : index
      %c0_16 = arith.constant 0 : index
      %15 = vector.load %arg6[%c0_14, %c0_15, %c0_16] : memref<18x18x128xbf16, #tpu.memory_space<vmem>>, vector<18x18x128xbf16>
      tpu.vector_store %arg6[%c0_14, %c0_15, %c0_16], %14 {strides = array<i32>} : memref<18x18x128xbf16, #tpu.memory_space<vmem>>, vector<18x18x128xbf16>,
      %c0_17 = arith.constant 0 : index
      %c0_18 = arith.constant 0 : index
      %c0_19 = arith.constant 0 : index
      %c0_20 = arith.constant 0 : index
      %16 = vector.load %arg2[%c0_17, %c0_18, %c0_19, %c0_20] : memref<1x16x16x128xbf16, #tpu.memory_space<vmem>>, vector<1x16x16x128xbf16>
      %17 = vector.shape_cast %16 : vector<1x16x16x128xbf16> to vector<16x16x128xbf16>
      %c1 = arith.constant 1 : index
      %c1_21 = arith.constant 1 : index
      %c0_22 = arith.constant 0 : index
      %18 = vector.load %arg6[%c1, %c1_21, %c0_22] : memref<18x18x128xbf16, #tpu.memory_space<vmem>>, vector<16x16x128xbf16>
      tpu.vector_store %arg6[%c1, %c1_21, %c0_22], %17 {strides = array<i32>} : memref<18x18x128xbf16, #tpu.memory_space<vmem>>, vector<16x16x128xbf16>,
      %c0_23 = arith.constant 0 : index
      %c0_24 = arith.constant 0 : index
      %c0_25 = arith.constant 0 : index
      %19 = vector.load %arg6[%c0_23, %c0_24, %c0_25] : memref<18x18x128xbf16, #tpu.memory_space<vmem>>, vector<18x18x128xbf16>
      %20 = vector.extract_strided_slice %19 {offsets = [0, 0, 0], sizes = [16, 16, 128], strides = [1, 1, 1]} : vector<18x18x128xbf16> to vector<16x16x128xbf16>
      %c0_26 = arith.constant 0 : index
      %c0_27 = arith.constant 0 : index
      %c0_28 = arith.constant 0 : index
      %21 = vector.load %arg7[%c0_26, %c0_27, %c0_28] : memref<16x16x1152xbf16, #tpu.memory_space<vmem>>, vector<16x16x128xbf16>
      tpu.vector_store %arg7[%c0_26, %c0_27, %c0_28], %20 {strides = array<i32>} : memref<16x16x1152xbf16, #tpu.memory_space<vmem>>, vector<16x16x128xbf16>,
      %22 = vector.extract_strided_slice %19 {offsets = [0, 1, 0], sizes = [16, 16, 128], strides = [1, 1, 1]} : vector<18x18x128xbf16> to vector<16x16x128xbf16>
      %c0_29 = arith.constant 0 : index
      %c0_30 = arith.constant 0 : index
      %c128 = arith.constant 128 : index
      %23 = vector.load %arg7[%c0_29, %c0_30, %c128] : memref<16x16x1152xbf16, #tpu.memory_space<vmem>>, vector<16x16x128xbf16>
      tpu.vector_store %arg7[%c0_29, %c0_30, %c128], %22 {strides = array<i32>} : memref<16x16x1152xbf16, #tpu.memory_space<vmem>>, vector<16x16x128xbf16>,
      %24 = vector.extract_strided_slice %19 {offsets = [0, 2, 0], sizes = [16, 16, 128], strides = [1, 1, 1]} : vector<18x18x128xbf16> to vector<16x16x128xbf16>
      %c0_31 = arith.constant 0 : index
      %c0_32 = arith.constant 0 : index
      %c256 = arith.constant 256 : index
      %25 = vector.load %arg7[%c0_31, %c0_32, %c256] : memref<16x16x1152xbf16, #tpu.memory_space<vmem>>, vector<16x16x128xbf16>
      tpu.vector_store %arg7[%c0_31, %c0_32, %c256], %24 {strides = array<i32>} : memref<16x16x1152xbf16, #tpu.memory_space<vmem>>, vector<16x16x128xbf16>,
      %26 = vector.extract_strided_slice %19 {offsets = [1, 0, 0], sizes = [16, 16, 128], strides = [1, 1, 1]} : vector<18x18x128xbf16> to vector<16x16x128xbf16>
      %c0_33 = arith.constant 0 : index
      %c0_34 = arith.constant 0 : index
      %c384 = arith.constant 384 : index
      %27 = vector.load %arg7[%c0_33, %c0_34, %c384] : memref<16x16x1152xbf16, #tpu.memory_space<vmem>>, vector<16x16x128xbf16>
      tpu.vector_store %arg7[%c0_33, %c0_34, %c384], %26 {strides = array<i32>} : memref<16x16x1152xbf16, #tpu.memory_space<vmem>>, vector<16x16x128xbf16>,
      %28 = vector.extract_strided_slice %19 {offsets = [1, 1, 0], sizes = [16, 16, 128], strides = [1, 1, 1]} : vector<18x18x128xbf16> to vector<16x16x128xbf16>
      %c0_35 = arith.constant 0 : index
      %c0_36 = arith.constant 0 : index
      %c512 = arith.constant 512 : index
      %29 = vector.load %arg7[%c0_35, %c0_36, %c512] : memref<16x16x1152xbf16, #tpu.memory_space<vmem>>, vector<16x16x128xbf16>
      tpu.vector_store %arg7[%c0_35, %c0_36, %c512], %28 {strides = array<i32>} : memref<16x16x1152xbf16, #tpu.memory_space<vmem>>, vector<16x16x128xbf16>,
      %30 = vector.extract_strided_slice %19 {offsets = [1, 2, 0], sizes = [16, 16, 128], strides = [1, 1, 1]} : vector<18x18x128xbf16> to vector<16x16x128xbf16>
      %c0_37 = arith.constant 0 : index
      %c0_38 = arith.constant 0 : index
      %c640 = arith.constant 640 : index
      %31 = vector.load %arg7[%c0_37, %c0_38, %c640] : memref<16x16x1152xbf16, #tpu.memory_space<vmem>>, vector<16x16x128xbf16>
      tpu.vector_store %arg7[%c0_37, %c0_38, %c640], %30 {strides = array<i32>} : memref<16x16x1152xbf16, #tpu.memory_space<vmem>>, vector<16x16x128xbf16>,
      %32 = vector.extract_strided_slice %19 {offsets = [2, 0, 0], sizes = [16, 16, 128], strides = [1, 1, 1]} : vector<18x18x128xbf16> to vector<16x16x128xbf16>
      %c0_39 = arith.constant 0 : index
      %c0_40 = arith.constant 0 : index
      %c768 = arith.constant 768 : index
      %33 = vector.load %arg7[%c0_39, %c0_40, %c768] : memref<16x16x1152xbf16, #tpu.memory_space<vmem>>, vector<16x16x128xbf16>
      tpu.vector_store %arg7[%c0_39, %c0_40, %c768], %32 {strides = array<i32>} : memref<16x16x1152xbf16, #tpu.memory_space<vmem>>, vector<16x16x128xbf16>,
      %34 = vector.extract_strided_slice %19 {offsets = [2, 1, 0], sizes = [16, 16, 128], strides = [1, 1, 1]} : vector<18x18x128xbf16> to vector<16x16x128xbf16>
      %c0_41 = arith.constant 0 : index
      %c0_42 = arith.constant 0 : index
      %c896 = arith.constant 896 : index
      %35 = vector.load %arg7[%c0_41, %c0_42, %c896] : memref<16x16x1152xbf16, #tpu.memory_space<vmem>>, vector<16x16x128xbf16>
      tpu.vector_store %arg7[%c0_41, %c0_42, %c896], %34 {strides = array<i32>} : memref<16x16x1152xbf16, #tpu.memory_space<vmem>>, vector<16x16x128xbf16>,
      %36 = vector.extract_strided_slice %19 {offsets = [2, 2, 0], sizes = [16, 16, 128], strides = [1, 1, 1]} : vector<18x18x128xbf16> to vector<16x16x128xbf16>
      %c0_43 = arith.constant 0 : index
      %c0_44 = arith.constant 0 : index
      %c1024 = arith.constant 1024 : index
      %37 = vector.load %arg7[%c0_43, %c0_44, %c1024] : memref<16x16x1152xbf16, #tpu.memory_space<vmem>>, vector<16x16x128xbf16>
      tpu.vector_store %arg7[%c0_43, %c0_44, %c1024], %36 {strides = array<i32>} : memref<16x16x1152xbf16, #tpu.memory_space<vmem>>, vector<16x16x128xbf16>,
    } else {
    }
    %c0 = arith.constant 0 : index
    %c0_1 = arith.constant 0 : index
    %c0_2 = arith.constant 0 : index
    %3 = vector.load %arg7[%c0, %c0_1, %c0_2] : memref<16x16x1152xbf16, #tpu.memory_space<vmem>>, vector<16x16x1152xbf16>
    %4 = vector.shape_cast %3 : vector<16x16x1152xbf16> to vector<256x1152xbf16>
    %c0_3 = arith.constant 0 : index
    %c0_4 = arith.constant 0 : index
    %5 = vector.load %arg3[%c0_3, %c0_4] : memref<1152x128xbf16, #tpu.memory_space<vmem>>, vector<1152x128xbf16>
    %cst = arith.constant dense<0.000000e+00> : vector<256x128xf32>
    %6 = tpu.matmul %4, %5, %cst {dimension_numbers = #tpu.dot_dimension_numbers<[1], [0], [0], [1], [0, 0, 1, 1], [], []>} : vector<256x1152xbf16>, vector<1152x128xbf16>, vector<256x128xf32> -> vector<256x128xf32>
    %7 = vector.shape_cast %6 : vector<256x128xf32> to vector<16x16x128xf32>
    %c0_5 = arith.constant 0 : index
    %c0_6 = arith.constant 0 : index
    %c0_7 = arith.constant 0 : index
    %c0_8 = arith.constant 0 : index
    %8 = vector.load %arg4[%c0_5, %c0_6, %c0_7, %c0_8] : memref<1x16x16x128xf32, #tpu.memory_space<vmem>>, vector<1x16x16x128xf32>
    %9 = vector.shape_cast %8 : vector<1x16x16x128xf32> to vector<16x16x128xf32>
    %10 = arith.addf %7, %9 : vector<16x16x128xf32>
    %c0_9 = arith.constant 0 : index
    %c0_10 = arith.constant 0 : index
    %c0_11 = arith.constant 0 : index
    %c0_12 = arith.constant 0 : index
    %11 = vector.load %arg5[%c0_9, %c0_10, %c0_11, %c0_12] : memref<1x16x16x128xf32, #tpu.memory_space<vmem>>, vector<1x16x16x128xf32>
    %12 = vector.shape_cast %11 : vector<1x16x16x128xf32> to vector<16x16x128xf32>
    %13 = vector.shape_cast %10 : vector<16x16x128xf32> to vector<1x16x16x128xf32>
    tpu.vector_store %arg5[%c0_9, %c0_10, %c0_11, %c0_12], %13 {strides = array<i32>} : memref<1x16x16x128xf32, #tpu.memory_space<vmem>>, vector<1x16x16x128xf32>,
    return
  }
  func.func @transform_0(%arg0: i32, %arg1: i32) -> (i32, i32, i32, i32) {
    %c0_i32 = arith.constant 0 : i32
    %c0_i32_0 = arith.constant 0 : i32
    %c0_i32_1 = arith.constant 0 : i32
    %c0_i32_2 = arith.constant 0 : i32
    return %arg0, %c0_i32, %c0_i32_0, %c0_i32_1 : i32, i32, i32, i32
  }
  func.func @transform_1(%arg0: i32, %arg1: i32) -> (i32, i32) {
    %c0_i32 = arith.constant 0 : i32
    %c0_i32_0 = arith.constant 0 : i32
    return %c0_i32, %arg1 : i32, i32
  }
  func.func @transform_2(%arg0: i32, %arg1: i32) -> (i32, i32, i32, i32) {
    %c0_i32 = arith.constant 0 : i32
    %c0_i32_0 = arith.constant 0 : i32
    %c0_i32_1 = arith.constant 0 : i32
    return %arg0, %c0_i32, %c0_i32_0, %arg1 : i32, i32, i32, i32
  }
  func.func @transform_3(%arg0: i32, %arg1: i32) -> (i32, i32, i32, i32) {
    %c0_i32 = arith.constant 0 : i32
    %c0_i32_0 = arith.constant 0 : i32
    %c0_i32_1 = arith.constant 0 : i32
    return %arg0, %c0_i32, %c0_i32_0, %arg1 : i32, i32, i32, i32
  }
}

</mosaic_0001>

<llo_original>
// kernel: basic_block_forward.3
$region0: #{basic_block_forward.3}
  #allocation0 [shape = 'u32[]', space=smem, size = 0x4, offset = 0x4, fixed_abs, tag = 'smem constant byte address 0x4 - core index']
  #allocation1 [shape = 'u32[72,128]{1,0:T(1,128)}', space=vmem, size = 0x9000, scoped, tag = 'internal scratch']
  #allocation2 [shape = 'bf16[18,18,128]{2,1,0:T(8,128)(2,1)}', space=vmem, size = 0x1b000, scoped, tag = 'scratch operand']
  #allocation3 [shape = 'bf16[16,16,1152]{2,1,0:T(8,128)(2,1)}', space=vmem, size = 0x90000, scoped, tag = 'scratch operand']
  %s0 = inlined_call_operand.vmem [shape: bf16[2,16,16,128], index: 0, kind: input, shape index: {}]
  %s1 = inlined_call_operand.vmem [shape: bf16[1152,128], index: 1, kind: input, shape index: {}]
  %s2 = inlined_call_operand.vmem [shape: f32[2,16,16,128], index: 2, kind: input, shape index: {}]
  %s3 = inlined_call_operand.vmem [shape: f32[2,16,16,128], index: 3, kind: output, shape index: {}]
  %s4 = sld [smem:[#allocation0]]
  $region49: #{basic_block_forward.3} parent=0
    _
  %s6 = ssub.s32 1, %s4
  %s7 = scalar_select 0, %s6, %s4
  loop: start=0, step=1, limit=4
  $region2: #{basic_block_forward.3} parent=0 // loop_pre_header
    _
  $region3: #{basic_block_forward.3} parent=0 // loop_header
    %s9 = sphi 0, %s13
    %p10 = scmp.ge.s32.totalorder %s9, 4
    %s16 = sphi 0, %s28
    %s17 = sphi 0, %s24
    %s18 = sphi 0, %s16
    %s19 = sphi 0, %s17
    %s20 = sphi 0, %s18
    %s21 = sphi 0, %s19
    %s31 = sphi 0, %s33
    %s34 = sphi 0, %s31
    %s35 = sphi 0, %s34
    %s51 = sphi 0, %s35
    %s57 = sphi 0, %s59
    %s60 = sphi 0, %s57
    %s61 = sphi 0, %s60
    %s77 = sphi 0, %s61
    %s85 = sphi 0, %s87
    %s88 = sphi 0, %s85
    %s89 = sphi 0, %s88
    %s105 = sphi 0, %s89
    %s113 = sphi 0, %s115
    %s116 = sphi 0, %s113
    %s117 = sphi 0, %s116
    %s133 = sphi 0, %s117
  $region4: #{basic_block_forward.3} parent=0 // loop_header_branch
    %12 = sbr.rel (%p10) target = $region8
  $region5: #{basic_block_forward.3} parent=0 // loop_body
    %s14 = ssub.s32 %s9, 1
    %s15 = ssub.s32 %s9, 2
    %s22 = sadd.s32 1, %s17
    %p23 = scmp.ge.s32.totalorder %s22, 1
    %s24 = scalar_select %p23, 0, %s22
    %s25 = sadd.s32 1, %s16
    %s26 = scalar_select %p23, %s25, %s16
    %p27 = scmp.ge.s32.totalorder %s26, 2
    %s28 = scalar_select %p27, 0, %s26
    %s29 = ssub.s32 %s16, %s28
    %p30 = scmp.eq.s32.totalorder %s29, 0
    %s32 = sadd.s32 %s31, 1
    %s33 = scalar_select %p30, %s31, %s32
    %p36 = pneg %p30
    %p37 = scmp.eq.s32.totalorder %s9, 1
    %p38 = por %p36, %p37
    %p39 = scmp.ne.s32.totalorder %s31, %s34
    %p40 = scmp.eq.s32.totalorder %s9, 0
    %p41 = por %p39, %p40
    %p42 = scmp.ne.s32.totalorder %s31, %s34
    %p43 = scmp.eq.s32.totalorder %s14, 1
    %p44 = por %p42, %p43
    %p45 = scmp.ne.s32.totalorder %s34, %s35
    %p46 = scmp.eq.s32.totalorder %s14, 0
    %p47 = por %p45, %p46
    %p48 = scmp.ne.s32.totalorder %s34, %s35
    %p49 = scmp.eq.s32.totalorder %s15, 1
    %p50 = por %p48, %p49
    %p52 = scmp.ne.s32.totalorder %s35, %s51
    %p53 = scmp.eq.s32.totalorder %s15, 0
    %p54 = por %p52, %p53
    %s55 = ssub.s32 %s17, %s24
    %p56 = scmp.eq.s32.totalorder %s55, 0
    %s58 = sadd.s32 %s57, 1
    %s59 = scalar_select %p56, %s57, %s58
    %p62 = pneg %p56
    %p63 = scmp.eq.s32.totalorder %s9, 1
    %p64 = por %p62, %p63
    %p65 = scmp.ne.s32.totalorder %s57, %s60
    %p66 = scmp.eq.s32.totalorder %s9, 0
    %p67 = por %p65, %p66
    %p68 = scmp.ne.s32.totalorder %s57, %s60
    %p69 = scmp.eq.s32.totalorder %s14, 1
    %p70 = por %p68, %p69
    %p71 = scmp.ne.s32.totalorder %s60, %s61
    %p72 = scmp.eq.s32.totalorder %s14, 0
    %p73 = por %p71, %p72
    %p74 = scmp.ne.s32.totalorder %s60, %s61
    %p75 = scmp.eq.s32.totalorder %s15, 1
    %p76 = por %p74, %p75
    %p78 = scmp.ne.s32.totalorder %s61, %s77
    %p79 = scmp.eq.s32.totalorder %s15, 0
    %p80 = por %p78, %p79
    %s81 = ssub.s32 %s16, %s28
    %s82 = ssub.s32 %s17, %s24
    %s83 = sor.u32 %s81, %s82
    %p84 = scmp.eq.s32.totalorder %s83, 0
    %s86 = sadd.s32 %s85, 1
    %s87 = scalar_select %p84, %s85, %s86
    %p90 = pneg %p84
    %p91 = scmp.eq.s32.totalorder %s9, 1
    %p92 = por %p90, %p91
    %p93 = scmp.ne.s32.totalorder %s85, %s88
    %p94 = scmp.eq.s32.totalorder %s9, 0
    %p95 = por %p93, %p94
    %p96 = scmp.ne.s32.totalorder %s85, %s88
    %p97 = scmp.eq.s32.totalorder %s14, 1
    %p98 = por %p96, %p97
    %p99 = scmp.ne.s32.totalorder %s88, %s89
    %p100 = scmp.eq.s32.totalorder %s14, 0
    %p101 = por %p99, %p100
    %p102 = scmp.ne.s32.totalorder %s88, %s89
    %p103 = scmp.eq.s32.totalorder %s15, 1
    %p104 = por %p102, %p103
    %p106 = scmp.ne.s32.totalorder %s89, %s105
    %p107 = scmp.eq.s32.totalorder %s15, 0
    %p108 = por %p106, %p107
    %s109 = ssub.s32 %s16, %s28
    %s110 = ssub.s32 %s17, %s24
    %s111 = sor.u32 %s109, %s110
    %p112 = scmp.eq.s32.totalorder %s111, 0
    %s114 = sadd.s32 %s113, 1
    %s115 = scalar_select %p112, %s113, %s114
    %p118 = pneg %p112
    %p119 = scmp.eq.s32.totalorder %s9, 1
    %p120 = por %p118, %p119
    %p121 = scmp.ne.s32.totalorder %s113, %s116
    %p122 = scmp.eq.s32.totalorder %s9, 0
    %p123 = por %p121, %p122
    %p124 = scmp.ne.s32.totalorder %s113, %s116
    %p125 = scmp.eq.s32.totalorder %s14, 1
    %p126 = por %p124, %p125
    %p127 = scmp.ne.s32.totalorder %s116, %s117
    %p128 = scmp.eq.s32.totalorder %s14, 0
    %p129 = por %p127, %p128
    %p130 = scmp.ne.s32.totalorder %s116, %s117
    %p131 = scmp.eq.s32.totalorder %s15, 1
    %p132 = por %p130, %p131
    %p134 = scmp.ne.s32.totalorder %s117, %s133
    %p135 = scmp.eq.s32.totalorder %s15, 0
    %p136 = por %p134, %p135
    %p137 = scmp.le.s32.totalorder 1, %s9
    %p138 = scmp.lt.s32.totalorder %s9, 3
    %p139 = pnand %p137, %p138
    %p140 = pneg %p139
    // Predicated region
    $region9: #{basic_block_forward.3} parent=5 // pred_check
      _
    $region10: #{basic_block_forward.3} parent=5 // pred_check_branch
      %142 = sbr.rel (%p139) target = $region12
    $region11: #{basic_block_forward.3} parent=5 // pred_region
      %s143 = ssub.s32 %s9, 1
      // Predicated region
      $region13: #{basic_block_forward.3} parent=11 // pred_check
        %p144 = pneg %p73
      $region14: #{basic_block_forward.3} parent=11 // pred_check_branch
        %146 = sbr.rel (%p144) target = $region16
      $region15: #{basic_block_forward.3} parent=11 // pred_region
        %p147 = scmp.lt.s32.totalorder %s19, 0
        %s148 = scalar_select %p147, %s19, 0
        %s149 = smul.addr %s148, 4
        %s150 = scalar_lea.vmem %s1, %s149
      $region16: #{basic_block_forward.3} parent=11 // pred_fallthru
        _
    $region12: #{basic_block_forward.3} parent=5 // pred_fallthru
      _
    %p151 = scmp.lt.s32.totalorder %s9, 2
    // Predicated region
    $region17: #{basic_block_forward.3} parent=5 // pred_check
      %p152 = pneg %p151
    $region18: #{basic_block_forward.3} parent=5 // pred_check_branch
      %154 = sbr.rel (%p152) target = $region20
    $region19: #{basic_block_forward.3} parent=5 // pred_region
      // Predicated region
      $region21: #{basic_block_forward.3} parent=19 // pred_check
        %p155 = pneg %p41
      $region22: #{basic_block_forward.3} parent=19 // pred_check_branch
        %157 = sbr.rel (%p155) target = $region24
      $region23: #{basic_block_forward.3} parent=19 // pred_region
        %p158 = scmp.lt.s32.totalorder %s16, 1
        %s159 = scalar_select %p158, %s16, 1
        %s160 = smul.addr %s159, 32
        %s161 = smul.addr %s160, 4
        %s162 = scalar_lea.vmem %s0, %s161
      $region24: #{basic_block_forward.3} parent=19 // pred_fallthru
        _
      // Predicated region
      $region25: #{basic_block_forward.3} parent=19 // pred_check
        %p163 = pneg %p95
      $region26: #{basic_block_forward.3} parent=19 // pred_check_branch
        %165 = sbr.rel (%p163) target = $region28
      $region27: #{basic_block_forward.3} parent=19 // pred_region
        %p166 = scmp.lt.s32.totalorder %s16, 1
        %s167 = scalar_select %p166, %s16, 1
        %p168 = scmp.lt.s32.totalorder %s17, 0
        %s169 = scalar_select %p168, %s17, 0
        %s170 = smul.addr %s167, 32
        %s171 = sadd.s32 %s169, %s170
        %s172 = smul.addr %s171, 8
        %s173 = scalar_lea.vmem %s2, %s172
      $region28: #{basic_block_forward.3} parent=19 // pred_fallthru
        _
    $region20: #{basic_block_forward.3} parent=5 // pred_fallthru
      _
    %p174 = scmp.le.s32.totalorder 1, %s9
    %p175 = scmp.lt.s32.totalorder %s9, 3
    %p176 = pnand %p174, %p175
    %p177 = pneg %p176
    // Predicated region
    $region29: #{basic_block_forward.3} parent=5 // pred_check
      _
    $region30: #{basic_block_forward.3} parent=5 // pred_check_branch
      %179 = sbr.rel (%p176) target = $region32
    $region31: #{basic_block_forward.3} parent=5 // pred_region
      %s180 = ssub.s32 %s9, 1
      %p181 = scmp.lt.s32.totalorder %s18, 1
      %s182 = scalar_select %p181, %s18, 1
      %s183 = smul.addr %s182, 32
      %s184 = smul.addr %s183, 4
      %s185 = scalar_lea.vmem %s0, %s184
      %p186 = pneg %p47
      %p187 = pneg %p44
      %p188 = scmp.lt.s32.totalorder %s19, 0
      %s189 = scalar_select %p188, %s19, 0
      %s190 = smul.addr %s189, 4
      %s191 = scalar_lea.vmem %s1, %s190
      %p192 = pneg %p73
      %p193 = pneg %p70
      %p194 = scmp.lt.s32.totalorder %s18, 1
      %s195 = scalar_select %p194, %s18, 1
      %p196 = scmp.lt.s32.totalorder %s19, 0
      %s197 = scalar_select %p196, %s19, 0
      %s198 = smul.addr %s195, 32
      %s199 = sadd.s32 %s197, %s198
      %s200 = smul.addr %s199, 8
      %s201 = scalar_lea.vmem %s2, %s200
      %p202 = pneg %p101
      %p203 = pneg %p98
      %p204 = pneg %p129
      %p205 = pneg %p126
      %p206 = scmp.lt.s32.totalorder %s18, 1
      %s207 = scalar_select %p206, %s18, 1
      %p208 = scmp.lt.s32.totalorder %s19, 0
      %s209 = scalar_select %p208, %s19, 0
      %s210 = smul.addr %s207, 32
      %s211 = sadd.s32 %s209, %s210
      %s212 = smul.addr %s211, 8
      %s213 = scalar_lea.vmem %s3, %s212
      %p214 = scmp.lt.s32.totalorder %s18, 1
      %s215 = scalar_select %p214, %s18, 1
      %s216 = smul.addr %s215, 32
      %s217 = smul.addr %s216, 4
      %s218 = scalar_lea.vmem %s0, %s217
      %p219 = scmp.lt.s32.totalorder %s19, 0
      %s220 = scalar_select %p219, %s19, 0
      %s221 = smul.addr %s220, 4
      %s222 = scalar_lea.vmem %s1, %s221
      %p223 = scmp.lt.s32.totalorder %s18, 1
      %s224 = scalar_select %p223, %s18, 1
      %p225 = scmp.lt.s32.totalorder %s19, 0
      %s226 = scalar_select %p225, %s19, 0
      %s227 = smul.addr %s224, 32
      %s228 = sadd.s32 %s226, %s227
      %s229 = smul.addr %s228, 8
      %s230 = scalar_lea.vmem %s2, %s229
      %p231 = scmp.lt.s32.totalorder %s18, 1
      %s232 = scalar_select %p231, %s18, 1
      %p233 = scmp.lt.s32.totalorder %s19, 0
      %s234 = scalar_select %p233, %s19, 0
      %s235 = smul.addr %s232, 32
      %s236 = sadd.s32 %s234, %s235
      %s237 = smul.addr %s236, 8
      %s238 = scalar_lea.vmem %s3, %s237
      %p240 = scmp.eq.s32.totalorder %s19, 0
      // Predicated region
      $region33: #{basic_block_forward.3} parent=31 // pred_check
        %p241 = pneg %p240
      $region34: #{basic_block_forward.3} parent=31 // pred_check_branch
        %243 = sbr.rel (%p241) target = $region36
      $region35: #{basic_block_forward.3} parent=31 // pred_region
        %244 = vst [vmem:[#allocation2] sm:$0xf] 0
        %245 = vst [vmem:[#allocation2 + $0x4] sm:$0xf] 0
        %246 = vst [vmem:[#allocation2 + $0x8] sm:$0x1] 0
        %247 = vst [vmem:[#allocation2 + $0xc] sm:$0xf] 0
        %248 = vst [vmem:[#allocation2 + $0x10] sm:$0xf] 0
        %249 = vst [vmem:[#allocation2 + $0x14] sm:$0x1] 0
        %250 = vst [vmem:[#allocation2 + $0x18] sm:$0xf] 0
        %251 = vst [vmem:[#allocation2 + $0x1c] sm:$0xf] 0
        %252 = vst [vmem:[#allocation2 + $0x20] sm:$0x1] 0
        %253 = vst [vmem:[#allocation2 + $0x24] sm:$0xf] 0
        %254 = vst [vmem:[#allocation2 + $0x28] sm:$0xf] 0
        %255 = vst [vmem:[#allocation2 + $0x2c] sm:$0x1] 0
        %256 = vst [vmem:[#allocation2 + $0x30] sm:$0xf] 0
        %257 = vst [vmem:[#allocation2 + $0x34] sm:$0xf] 0
        %258 = vst [vmem:[#allocation2 + $0x38] sm:$0x1] 0
        %259 = vst [vmem:[#allocation2 + $0x3c] sm:$0xf] 0
        %260 = vst [vmem:[#allocation2 + $0x40] sm:$0xf] 0
        %261 = vst [vmem:[#allocation2 + $0x44] sm:$0x1] 0
        %262 = vst [vmem:[#allocation2 + $0x48] sm:$0xf] 0
        %263 = vst [vmem:[#allocation2 + $0x4c] sm:$0xf] 0
        %264 = vst [vmem:[#allocation2 + $0x50] sm:$0x1] 0
        %265 = vst [vmem:[#allocation2 + $0x54] sm:$0xf] 0
        %266 = vst [vmem:[#allocation2 + $0x58] sm:$0xf] 0
        %267 = vst [vmem:[#allocation2 + $0x5c] sm:$0x1] 0
        %268 = vst [vmem:[#allocation2 + $0x60] sm:$0xf] 0
        %269 = vst [vmem:[#allocation2 + $0x64] sm:$0xf] 0
        %270 = vst [vmem:[#allocation2 + $0x68] sm:$0x1] 0
        %271 = vst [vmem:[#allocation2 + $0x6c] sm:$0xf] 0
        %272 = vst [vmem:[#allocation2 + $0x70] sm:$0xf] 0
        %273 = vst [vmem:[#allocation2 + $0x74] sm:$0x1] 0
        %274 = vst [vmem:[#allocation2 + $0x78] sm:$0xf] 0
        %275 = vst [vmem:[#allocation2 + $0x7c] sm:$0xf] 0
        %276 = vst [vmem:[#allocation2 + $0x80] sm:$0x1] 0
        %277 = vst [vmem:[#allocation2 + $0x84] sm:$0xf] 0
        %278 = vst [vmem:[#allocation2 + $0x88] sm:$0xf] 0
        %279 = vst [vmem:[#allocation2 + $0x8c] sm:$0x1] 0
        %280 = vst [vmem:[#allocation2 + $0x90] sm:$0xf] 0
        %281 = vst [vmem:[#allocation2 + $0x94] sm:$0xf] 0
        %282 = vst [vmem:[#allocation2 + $0x98] sm:$0x1] 0
        %283 = vst [vmem:[#allocation2 + $0x9c] sm:$0xf] 0
        %284 = vst [vmem:[#allocation2 + $0xa0] sm:$0xf] 0
        %285 = vst [vmem:[#allocation2 + $0xa4] sm:$0x1] 0
        %286 = vst [vmem:[#allocation2 + $0xa8] sm:$0xf] 0
        %287 = vst [vmem:[#allocation2 + $0xac] sm:$0xf] 0
        %288 = vst [vmem:[#allocation2 + $0xb0] sm:$0x1] 0
        %289 = vst [vmem:[#allocation2 + $0xb4] sm:$0xf] 0
        %290 = vst [vmem:[#allocation2 + $0xb8] sm:$0xf] 0
        %291 = vst [vmem:[#allocation2 + $0xbc] sm:$0x1] 0
        %292 = vst [vmem:[#allocation2 + $0xc0] sm:$0xf] 0
        %293 = vst [vmem:[#allocation2 + $0xc4] sm:$0xf] 0
        %294 = vst [vmem:[#allocation2 + $0xc8] sm:$0x1] 0
        %295 = vst [vmem:[#allocation2 + $0xcc] sm:$0xf] 0
        %296 = vst [vmem:[#allocation2 + $0xd0] sm:$0xf] 0
        %297 = vst [vmem:[#allocation2 + $0xd4] sm:$0x1] 0
        %v298 = vld [vmem:[%s218] sm:$0xf]
        %v299 = vld [vmem:[%s218 + $0x4] sm:$0xf]
        %v300 = vld [vmem:[%s218 + $0x8] sm:$0xf]
        %v301 = vld [vmem:[%s218 + $0xc] sm:$0xf]
        %v302 = vld [vmem:[%s218 + $0x10] sm:$0xf]
        %v303 = vld [vmem:[%s218 + $0x14] sm:$0xf]
        %v304 = vld [vmem:[%s218 + $0x18] sm:$0xf]
        %v305 = vld [vmem:[%s218 + $0x1c] sm:$0xf]
        %v306 = vld [vmem:[%s218 + $0x20] sm:$0xf]
        %v307 = vld [vmem:[%s218 + $0x24] sm:$0xf]
        %v308 = vld [vmem:[%s218 + $0x28] sm:$0xf]
        %v309 = vld [vmem:[%s218 + $0x2c] sm:$0xf]
        %v310 = vld [vmem:[%s218 + $0x30] sm:$0xf]
        %v311 = vld [vmem:[%s218 + $0x34] sm:$0xf]
        %v312 = vld [vmem:[%s218 + $0x38] sm:$0xf]
        %v313 = vld [vmem:[%s218 + $0x3c] sm:$0xf]
        %v314 = vld [vmem:[%s218 + $0x40] sm:$0xf]
        %v315 = vld [vmem:[%s218 + $0x44] sm:$0xf]
        %v316 = vld [vmem:[%s218 + $0x48] sm:$0xf]
        %v317 = vld [vmem:[%s218 + $0x4c] sm:$0xf]
        %v318 = vld [vmem:[%s218 + $0x50] sm:$0xf]
        %v319 = vld [vmem:[%s218 + $0x54] sm:$0xf]
        %v320 = vld [vmem:[%s218 + $0x58] sm:$0xf]
        %v321 = vld [vmem:[%s218 + $0x5c] sm:$0xf]
        %v322 = vld [vmem:[%s218 + $0x60] sm:$0xf]
        %v323 = vld [vmem:[%s218 + $0x64] sm:$0xf]
        %v324 = vld [vmem:[%s218 + $0x68] sm:$0xf]
        %v325 = vld [vmem:[%s218 + $0x6c] sm:$0xf]
        %v326 = vld [vmem:[%s218 + $0x70] sm:$0xf]
        %v327 = vld [vmem:[%s218 + $0x74] sm:$0xf]
        %v328 = vld [vmem:[%s218 + $0x78] sm:$0xf]
        %v329 = vld [vmem:[%s218 + $0x7c] sm:$0xf]
        %vm330 = vsmask.f32 256
        %vm331 = vsmask.f32 4368
        %vm332 = vmor %vm330, %vm331
        %v334 = vshrl.u32 %v298, 16
        %v336 = vrot.slane %v334, 7
        %v337 = vshll.u32 %v298, 16
        %v339 = vor.u32 %v336, %v337
        %v340 = vrot.slane %v336, 4
        %v342 = vshrl.u32 %v299, 16
        %v344 = vrot.slane %v342, 7
        %v345 = vshll.u32 %v299, 16
        %v347 = vor.u32 %v344, %v345
        %v348 = vsel %vm332, %v340, %v347
        %v349 = vrot.slane %v344, 4
        %v351 = vshrl.u32 %v300, 16
        %v353 = vrot.slane %v351, 7
        %v354 = vshll.u32 %v300, 16
        %v356 = vor.u32 %v353, %v354
        %v357 = vrot.slane %v353, 4
        %v359 = vshrl.u32 %v301, 16
        %v361 = vrot.slane %v359, 7
        %v362 = vshll.u32 %v301, 16
        %v364 = vor.u32 %v361, %v362
        %v365 = vsel %vm332, %v357, %v364
        %v366 = vrot.slane %v361, 4
        %v368 = vshrl.u32 %v302, 16
        %v370 = vrot.slane %v368, 7
        %v371 = vshll.u32 %v302, 16
        %v373 = vor.u32 %v370, %v371
        %v374 = vrot.slane %v370, 4
        %v376 = vshrl.u32 %v303, 16
        %v378 = vrot.slane %v376, 7
        %v379 = vshll.u32 %v303, 16
        %v381 = vor.u32 %v378, %v379
        %v382 = vsel %vm332, %v374, %v381
        %v383 = vrot.slane %v378, 4
        %v385 = vshrl.u32 %v304, 16
        %v387 = vrot.slane %v385, 7
        %v388 = vshll.u32 %v304, 16
        %v390 = vor.u32 %v387, %v388
        %v391 = vrot.slane %v387, 4
        %v393 = vshrl.u32 %v305, 16
        %v395 = vrot.slane %v393, 7
        %v396 = vshll.u32 %v305, 16
        %v398 = vor.u32 %v395, %v396
        %v399 = vsel %vm332, %v391, %v398
        %v400 = vrot.slane %v395, 4
        %v402 = vshrl.u32 %v306, 16
        %v404 = vrot.slane %v402, 7
        %v405 = vshll.u32 %v306, 16
        %v407 = vor.u32 %v404, %v405
        %v408 = vrot.slane %v404, 4
        %v410 = vshrl.u32 %v307, 16
        %v412 = vrot.slane %v410, 7
        %v413 = vshll.u32 %v307, 16
        %v415 = vor.u32 %v412, %v413
        %v416 = vsel %vm332, %v408, %v415
        %v417 = vrot.slane %v412, 4
        %v419 = vshrl.u32 %v308, 16
        %v421 = vrot.slane %v419, 7
        %v422 = vshll.u32 %v308, 16
        %v424 = vor.u32 %v421, %v422
        %v425 = vrot.slane %v421, 4
        %v427 = vshrl.u32 %v309, 16
        %v429 = vrot.slane %v427, 7
        %v430 = vshll.u32 %v309, 16
        %v432 = vor.u32 %v429, %v430
        %v433 = vsel %vm332, %v425, %v432
        %v434 = vrot.slane %v429, 4
        %v436 = vshrl.u32 %v310, 16
        %v438 = vrot.slane %v436, 7
        %v439 = vshll.u32 %v310, 16
        %v441 = vor.u32 %v438, %v439
        %v442 = vrot.slane %v438, 4
        %v444 = vshrl.u32 %v311, 16
        %v446 = vrot.slane %v444, 7
        %v447 = vshll.u32 %v311, 16
        %v449 = vor.u32 %v446, %v447
        %v450 = vsel %vm332, %v442, %v449
        %v451 = vrot.slane %v446, 4
        %v453 = vshrl.u32 %v312, 16
        %v455 = vrot.slane %v453, 7
        %v456 = vshll.u32 %v312, 16
        %v458 = vor.u32 %v455, %v456
        %v459 = vrot.slane %v455, 4
        %v461 = vshrl.u32 %v313, 16
        %v463 = vrot.slane %v461, 7
        %v464 = vshll.u32 %v313, 16
        %v466 = vor.u32 %v463, %v464
        %v467 = vsel %vm332, %v459, %v466
        %v468 = vrot.slane %v463, 4
        %v470 = vshrl.u32 %v314, 16
        %v472 = vrot.slane %v470, 7
        %v473 = vshll.u32 %v314, 16
        %v475 = vor.u32 %v472, %v473
        %v476 = vrot.slane %v472, 4
        %v478 = vshrl.u32 %v315, 16
        %v480 = vrot.slane %v478, 7
        %v481 = vshll.u32 %v315, 16
        %v483 = vor.u32 %v480, %v481
        %v484 = vsel %vm332, %v476, %v483
        %v485 = vrot.slane %v480, 4
        %v487 = vshrl.u32 %v316, 16
        %v489 = vrot.slane %v487, 7
        %v490 = vshll.u32 %v316, 16
        %v492 = vor.u32 %v489, %v490
        %v493 = vrot.slane %v489, 4
        %v495 = vshrl.u32 %v317, 16
        %v497 = vrot.slane %v495, 7
        %v498 = vshll.u32 %v317, 16
        %v500 = vor.u32 %v497, %v498
        %v501 = vsel %vm332, %v493, %v500
        %v502 = vrot.slane %v497, 4
        %v504 = vshrl.u32 %v318, 16
        %v506 = vrot.slane %v504, 7
        %v507 = vshll.u32 %v318, 16
        %v509 = vor.u32 %v506, %v507
        %v510 = vrot.slane %v506, 4
        %v512 = vshrl.u32 %v319, 16
        %v514 = vrot.slane %v512, 7
        %v515 = vshll.u32 %v319, 16
        %v517 = vor.u32 %v514, %v515
        %v518 = vsel %vm332, %v510, %v517
        %v519 = vrot.slane %v514, 4
        %v521 = vshrl.u32 %v320, 16
        %v523 = vrot.slane %v521, 7
        %v524 = vshll.u32 %v320, 16
        %v526 = vor.u32 %v523, %v524
        %v527 = vrot.slane %v523, 4
        %v529 = vshrl.u32 %v321, 16
        %v531 = vrot.slane %v529, 7
        %v532 = vshll.u32 %v321, 16
        %v534 = vor.u32 %v531, %v532
        %v535 = vsel %vm332, %v527, %v534
        %v536 = vrot.slane %v531, 4
        %v538 = vshrl.u32 %v322, 16
        %v540 = vrot.slane %v538, 7
        %v541 = vshll.u32 %v322, 16
        %v543 = vor.u32 %v540, %v541
        %v544 = vrot.slane %v540, 4
        %v546 = vshrl.u32 %v323, 16
        %v548 = vrot.slane %v546, 7
        %v549 = vshll.u32 %v323, 16
        %v551 = vor.u32 %v548, %v549
        %v552 = vsel %vm332, %v544, %v551
        %v553 = vrot.slane %v548, 4
        %v555 = vshrl.u32 %v324, 16
        %v557 = vrot.slane %v555, 7
        %v558 = vshll.u32 %v324, 16
        %v560 = vor.u32 %v557, %v558
        %v561 = vrot.slane %v557, 4
        %v563 = vshrl.u32 %v325, 16
        %v565 = vrot.slane %v563, 7
        %v566 = vshll.u32 %v325, 16
        %v568 = vor.u32 %v565, %v566
        %v569 = vsel %vm332, %v561, %v568
        %v570 = vrot.slane %v565, 4
        %v572 = vshrl.u32 %v326, 16
        %v574 = vrot.slane %v572, 7
        %v575 = vshll.u32 %v326, 16
        %v577 = vor.u32 %v574, %v575
        %v578 = vrot.slane %v574, 4
        %v580 = vshrl.u32 %v327, 16
        %v582 = vrot.slane %v580, 7
        %v583 = vshll.u32 %v327, 16
        %v585 = vor.u32 %v582, %v583
        %v586 = vsel %vm332, %v578, %v585
        %v587 = vrot.slane %v582, 4
        %v589 = vshrl.u32 %v328, 16
        %v591 = vrot.slane %v589, 7
        %v592 = vshll.u32 %v328, 16
        %v594 = vor.u32 %v591, %v592
        %v595 = vrot.slane %v591, 4
        %v597 = vshrl.u32 %v329, 16
        %v599 = vrot.slane %v597, 7
        %v600 = vshll.u32 %v329, 16
        %v602 = vor.u32 %v599, %v600
        %v603 = vsel %vm332, %v595, %v602
        %v604 = vrot.slane %v599, 4
        %s653 = scalar_lea.vmem [#allocation2], 12
        %vm654 = vcmask 1043456
        %vm655 = vsmask.f32 7938
        %vm656 = vmand %vm654, %vm655
        %v657 = vld [vmem:[%s653] sm:$0xf]
        %v658 = vsel %vm656, %v339, %v657
        %659 = vst [vmem:[%s653] sm:$0xf] %v658
        %660 = vst [vmem:[%s653 + $0x4] sm:$0xf] %v348
        %vm661 = vcmask 1040384
        %vm662 = vmand %vm661, %vm330
        %v663 = vld [vmem:[%s653 + $0x8] sm:$0x1]
        %v664 = vsel %vm662, %v349, %v663
        %665 = vst [vmem:[%s653 + $0x8] sm:$0x1] %v664
        %v666 = vld [vmem:[%s653 + $0xc] sm:$0xf]
        %v667 = vsel %vm656, %v356, %v666
        %668 = vst [vmem:[%s653 + $0xc] sm:$0xf] %v667
        %669 = vst [vmem:[%s653 + $0x10] sm:$0xf] %v365
        %v670 = vld [vmem:[%s653 + $0x14] sm:$0x1]
        %v671 = vsel %vm662, %v366, %v670
        %672 = vst [vmem:[%s653 + $0x14] sm:$0x1] %v671
        %v673 = vld [vmem:[%s653 + $0x18] sm:$0xf]
        %v674 = vsel %vm656, %v373, %v673
        %675 = vst [vmem:[%s653 + $0x18] sm:$0xf] %v674
        %676 = vst [vmem:[%s653 + $0x1c] sm:$0xf] %v382
        %v677 = vld [vmem:[%s653 + $0x20] sm:$0x1]
        %v678 = vsel %vm662, %v383, %v677
        %679 = vst [vmem:[%s653 + $0x20] sm:$0x1] %v678
        %v680 = vld [vmem:[%s653 + $0x24] sm:$0xf]
        %v681 = vsel %vm656, %v390, %v680
        %682 = vst [vmem:[%s653 + $0x24] sm:$0xf] %v681
        %683 = vst [vmem:[%s653 + $0x28] sm:$0xf] %v399
        %v684 = vld [vmem:[%s653 + $0x2c] sm:$0x1]
        %v685 = vsel %vm662, %v400, %v684
        %686 = vst [vmem:[%s653 + $0x2c] sm:$0x1] %v685
        %v687 = vld [vmem:[%s653 + $0x30] sm:$0xf]
        %v688 = vsel %vm656, %v407, %v687
        %689 = vst [vmem:[%s653 + $0x30] sm:$0xf] %v688
        %690 = vst [vmem:[%s653 + $0x34] sm:$0xf] %v416
        %v691 = vld [vmem:[%s653 + $0x38] sm:$0x1]
        %v692 = vsel %vm662, %v417, %v691
        %693 = vst [vmem:[%s653 + $0x38] sm:$0x1] %v692
        %v694 = vld [vmem:[%s653 + $0x3c] sm:$0xf]
        %v695 = vsel %vm656, %v424, %v694
        %696 = vst [vmem:[%s653 + $0x3c] sm:$0xf] %v695
        %697 = vst [vmem:[%s653 + $0x40] sm:$0xf] %v433
        %v698 = vld [vmem:[%s653 + $0x44] sm:$0x1]
        %v699 = vsel %vm662, %v434, %v698
        %700 = vst [vmem:[%s653 + $0x44] sm:$0x1] %v699
        %v701 = vld [vmem:[%s653 + $0x48] sm:$0xf]
        %v702 = vsel %vm656, %v441, %v701
        %703 = vst [vmem:[%s653 + $0x48] sm:$0xf] %v702
        %704 = vst [vmem:[%s653 + $0x4c] sm:$0xf] %v450
        %v705 = vld [vmem:[%s653 + $0x50] sm:$0x1]
        %v706 = vsel %vm662, %v451, %v705
        %707 = vst [vmem:[%s653 + $0x50] sm:$0x1] %v706
        %v708 = vld [vmem:[%s653 + $0x54] sm:$0xf]
        %v709 = vsel %vm656, %v458, %v708
        %710 = vst [vmem:[%s653 + $0x54] sm:$0xf] %v709
        %711 = vst [vmem:[%s653 + $0x58] sm:$0xf] %v467
        %v712 = vld [vmem:[%s653 + $0x5c] sm:$0x1]
        %v713 = vsel %vm662, %v468, %v712
        %714 = vst [vmem:[%s653 + $0x5c] sm:$0x1] %v713
        %v715 = vld [vmem:[%s653 + $0x60] sm:$0xf]
        %v716 = vsel %vm656, %v475, %v715
        %717 = vst [vmem:[%s653 + $0x60] sm:$0xf] %v716
        %718 = vst [vmem:[%s653 + $0x64] sm:$0xf] %v484
        %v719 = vld [vmem:[%s653 + $0x68] sm:$0x1]
        %v720 = vsel %vm662, %v485, %v719
        %721 = vst [vmem:[%s653 + $0x68] sm:$0x1] %v720
        %v722 = vld [vmem:[%s653 + $0x6c] sm:$0xf]
        %v723 = vsel %vm656, %v492, %v722
        %724 = vst [vmem:[%s653 + $0x6c] sm:$0xf] %v723
        %725 = vst [vmem:[%s653 + $0x70] sm:$0xf] %v501
        %v726 = vld [vmem:[%s653 + $0x74] sm:$0x1]
        %v727 = vsel %vm662, %v502, %v726
        %728 = vst [vmem:[%s653 + $0x74] sm:$0x1] %v727
        %v729 = vld [vmem:[%s653 + $0x78] sm:$0xf]
        %v730 = vsel %vm656, %v509, %v729
        %731 = vst [vmem:[%s653 + $0x78] sm:$0xf] %v730
        %732 = vst [vmem:[%s653 + $0x7c] sm:$0xf] %v518
        %v733 = vld [vmem:[%s653 + $0x80] sm:$0x1]
        %v734 = vsel %vm662, %v519, %v733
        %735 = vst [vmem:[%s653 + $0x80] sm:$0x1] %v734
        %v736 = vld [vmem:[%s653 + $0x84] sm:$0xf]
        %v737 = vsel %vm656, %v526, %v736
        %738 = vst [vmem:[%s653 + $0x84] sm:$0xf] %v737
        %739 = vst [vmem:[%s653 + $0x88] sm:$0xf] %v535
        %v740 = vld [vmem:[%s653 + $0x8c] sm:$0x1]
        %v741 = vsel %vm662, %v536, %v740
        %742 = vst [vmem:[%s653 + $0x8c] sm:$0x1] %v741
        %v743 = vld [vmem:[%s653 + $0x90] sm:$0xf]
        %v744 = vsel %vm656, %v543, %v743
        %745 = vst [vmem:[%s653 + $0x90] sm:$0xf] %v744
        %746 = vst [vmem:[%s653 + $0x94] sm:$0xf] %v552
        %v747 = vld [vmem:[%s653 + $0x98] sm:$0x1]
        %v748 = vsel %vm662, %v553, %v747
        %749 = vst [vmem:[%s653 + $0x98] sm:$0x1] %v748
        %v750 = vld [vmem:[%s653 + $0x9c] sm:$0xf]
        %v751 = vsel %vm656, %v560, %v750
        %752 = vst [vmem:[%s653 + $0x9c] sm:$0xf] %v751
        %753 = vst [vmem:[%s653 + $0xa0] sm:$0xf] %v569
        %v754 = vld [vmem:[%s653 + $0xa4] sm:$0x1]
        %v755 = vsel %vm662, %v570, %v754
        %756 = vst [vmem:[%s653 + $0xa4] sm:$0x1] %v755
        %v757 = vld [vmem:[%s653 + $0xa8] sm:$0xf]
        %v758 = vsel %vm656, %v577, %v757
        %759 = vst [vmem:[%s653 + $0xa8] sm:$0xf] %v758
        %760 = vst [vmem:[%s653 + $0xac] sm:$0xf] %v586
        %v761 = vld [vmem:[%s653 + $0xb0] sm:$0x1]
        %v762 = vsel %vm662, %v587, %v761
        %763 = vst [vmem:[%s653 + $0xb0] sm:$0x1] %v762
        %v764 = vld [vmem:[%s653 + $0xb4] sm:$0xf]
        %v765 = vsel %vm656, %v594, %v764
        %766 = vst [vmem:[%s653 + $0xb4] sm:$0xf] %v765
        %767 = vst [vmem:[%s653 + $0xb8] sm:$0xf] %v603
        %v768 = vld [vmem:[%s653 + $0xbc] sm:$0x1]
        %v769 = vsel %vm662, %v604, %v768
        %770 = vst [vmem:[%s653 + $0xbc] sm:$0x1] %v769
        %v771 = vld [vmem:[#allocation2] sm:$0xf]
        %v772 = vld [vmem:[#allocation2 + $0x4] sm:$0xf]
        %v773 = vld [vmem:[#allocation2 + $0x8] sm:$0x1]
        %v774 = vld [vmem:[#allocation2 + $0xc] sm:$0xf]
        %v775 = vld [vmem:[#allocation2 + $0x10] sm:$0xf]
        %v776 = vld [vmem:[#allocation2 + $0x14] sm:$0x1]
        %v777 = vld [vmem:[#allocation2 + $0x18] sm:$0xf]
        %v778 = vld [vmem:[#allocation2 + $0x1c] sm:$0xf]
        %v779 = vld [vmem:[#allocation2 + $0x20] sm:$0x1]
        %v780 = vld [vmem:[#allocation2 + $0x24] sm:$0xf]
        %v781 = vld [vmem:[#allocation2 + $0x28] sm:$0xf]
        %v782 = vld [vmem:[#allocation2 + $0x2c] sm:$0x1]
        %v783 = vld [vmem:[#allocation2 + $0x30] sm:$0xf]
        %v784 = vld [vmem:[#allocation2 + $0x34] sm:$0xf]
        %v785 = vld [vmem:[#allocation2 + $0x38] sm:$0x1]
        %v786 = vld [vmem:[#allocation2 + $0x3c] sm:$0xf]
        %v787 = vld [vmem:[#allocation2 + $0x40] sm:$0xf]
        %v788 = vld [vmem:[#allocation2 + $0x44] sm:$0x1]
        %v789 = vld [vmem:[#allocation2 + $0x48] sm:$0xf]
        %v790 = vld [vmem:[#allocation2 + $0x4c] sm:$0xf]
        %v791 = vld [vmem:[#allocation2 + $0x50] sm:$0x1]
        %v792 = vld [vmem:[#allocation2 + $0x54] sm:$0xf]
        %v793 = vld [vmem:[#allocation2 + $0x58] sm:$0xf]
        %v794 = vld [vmem:[#allocation2 + $0x5c] sm:$0x1]
        %v795 = vld [vmem:[#allocation2 + $0x60] sm:$0xf]
        %v796 = vld [vmem:[#allocation2 + $0x64] sm:$0xf]
        %v797 = vld [vmem:[#allocation2 + $0x68] sm:$0x1]
        %v798 = vld [vmem:[#allocation2 + $0x6c] sm:$0xf]
        %v799 = vld [vmem:[#allocation2 + $0x70] sm:$0xf]
        %v800 = vld [vmem:[#allocation2 + $0x74] sm:$0x1]
        %v801 = vld [vmem:[#allocation2 + $0x78] sm:$0xf]
        %v802 = vld [vmem:[#allocation2 + $0x7c] sm:$0xf]
        %v803 = vld [vmem:[#allocation2 + $0x80] sm:$0x1]
        %v804 = vld [vmem:[#allocation2 + $0x84] sm:$0xf]
        %v805 = vld [vmem:[#allocation2 + $0x88] sm:$0xf]
        %v806 = vld [vmem:[#allocation2 + $0x8c] sm:$0x1]
        %v807 = vld [vmem:[#allocation2 + $0x90] sm:$0xf]
        %v808 = vld [vmem:[#allocation2 + $0x94] sm:$0xf]
        %v809 = vld [vmem:[#allocation2 + $0x98] sm:$0x1]
        %v810 = vld [vmem:[#allocation2 + $0x9c] sm:$0xf]
        %v811 = vld [vmem:[#allocation2 + $0xa0] sm:$0xf]
        %v812 = vld [vmem:[#allocation2 + $0xa4] sm:$0x1]
        %v813 = vld [vmem:[#allocation2 + $0xa8] sm:$0xf]
        %v814 = vld [vmem:[#allocation2 + $0xac] sm:$0xf]
        %v815 = vld [vmem:[#allocation2 + $0xb0] sm:$0x1]
        %v816 = vld [vmem:[#allocation2 + $0xb4] sm:$0xf]
        %v817 = vld [vmem:[#allocation2 + $0xb8] sm:$0xf]
        %v818 = vld [vmem:[#allocation2 + $0xbc] sm:$0x1]
        %v819 = vld [vmem:[#allocation2 + $0xc0] sm:$0xf]
        %v820 = vld [vmem:[#allocation2 + $0xc4] sm:$0xf]
        %v821 = vld [vmem:[#allocation2 + $0xc8] sm:$0x1]
        %v822 = vld [vmem:[#allocation2 + $0xcc] sm:$0xf]
        %v823 = vld [vmem:[#allocation2 + $0xd0] sm:$0xf]
        %v824 = vld [vmem:[#allocation2 + $0xd4] sm:$0x1]
        %825 = vst [vmem:[#allocation3] sm:$0xf] %v771
        %826 = vst [vmem:[#allocation3 + $0x24] sm:$0xf] %v772
        %827 = vst [vmem:[#allocation3 + $0x48] sm:$0xf] %v774
        %828 = vst [vmem:[#allocation3 + $0x6c] sm:$0xf] %v775
        %829 = vst [vmem:[#allocation3 + $0x90] sm:$0xf] %v777
        %830 = vst [vmem:[#allocation3 + $0xb4] sm:$0xf] %v778
        %831 = vst [vmem:[#allocation3 + $0xd8] sm:$0xf] %v780
        %832 = vst [vmem:[#allocation3 + $0xfc] sm:$0xf] %v781
        %833 = vst [vmem:[#allocation3 + $0x120] sm:$0xf] %v783
        %834 = vst [vmem:[#allocation3 + $0x144] sm:$0xf] %v784
        %835 = vst [vmem:[#allocation3 + $0x168] sm:$0xf] %v786
        %836 = vst [vmem:[#allocation3 + $0x18c] sm:$0xf] %v787
        %837 = vst [vmem:[#allocation3 + $0x1b0] sm:$0xf] %v789
        %838 = vst [vmem:[#allocation3 + $0x1d4] sm:$0xf] %v790
        %839 = vst [vmem:[#allocation3 + $0x1f8] sm:$0xf] %v792
        %840 = vst [vmem:[#allocation3 + $0x21c] sm:$0xf] %v793
        %841 = vst [vmem:[#allocation3 + $0x240] sm:$0xf] %v795
        %842 = vst [vmem:[#allocation3 + $0x264] sm:$0xf] %v796
        %843 = vst [vmem:[#allocation3 + $0x288] sm:$0xf] %v798
        %844 = vst [vmem:[#allocation3 + $0x2ac] sm:$0xf] %v799
        %845 = vst [vmem:[#allocation3 + $0x2d0] sm:$0xf] %v801
        %846 = vst [vmem:[#allocation3 + $0x2f4] sm:$0xf] %v802
        %847 = vst [vmem:[#allocation3 + $0x318] sm:$0xf] %v804
        %848 = vst [vmem:[#allocation3 + $0x33c] sm:$0xf] %v805
        %849 = vst [vmem:[#allocation3 + $0x360] sm:$0xf] %v807
        %850 = vst [vmem:[#allocation3 + $0x384] sm:$0xf] %v808
        %851 = vst [vmem:[#allocation3 + $0x3a8] sm:$0xf] %v810
        %852 = vst [vmem:[#allocation3 + $0x3cc] sm:$0xf] %v811
        %853 = vst [vmem:[#allocation3 + $0x3f0] sm:$0xf] %v813
        %854 = vst [vmem:[#allocation3 + $0x414] sm:$0xf] %v814
        %855 = vst [vmem:[#allocation3 + $0x438] sm:$0xf] %v816
        %856 = vst [vmem:[#allocation3 + $0x45c] sm:$0xf] %v817
        %vm857 = vsmask.f32 3328
        %vm858 = vsmask.f32 7440
        %vm859 = vmor %vm857, %vm858
        %v861 = vshrl.u32 %v771, 16
        %v863 = vrot.slane %v861, 4
        %v864 = vshll.u32 %v771, 16
        %v866 = vrot.slane %v864, 5
        %v867 = vor.u32 %v863, %v866
        %v868 = vrot.slane %v867, 4
        %v870 = vshll.u32 %v772, 16
        %v872 = vrot.slane %v870, 5
        %v873 = vsel %vm859, %v868, %v872
        %v874 = vshrl.u32 %v772, 16
        %v876 = vrot.slane %v874, 4
        %v877 = vor.u32 %v876, %v872
        %v878 = vrot.slane %v877, 4
        %v880 = vshll.u32 %v773, 16
        %v882 = vrot.slane %v880, 5
        %v883 = vsel %vm859, %v878, %v882
        %v885 = vshrl.u32 %v774, 16
        %v887 = vrot.slane %v885, 4
        %v888 = vshll.u32 %v774, 16
        %v890 = vrot.slane %v888, 5
        %v891 = vor.u32 %v887, %v890
        %v892 = vrot.slane %v891, 4
        %v894 = vshll.u32 %v775, 16
        %v896 = vrot.slane %v894, 5
        %v897 = vsel %vm859, %v892, %v896
        %v898 = vshrl.u32 %v775, 16
        %v900 = vrot.slane %v898, 4
        %v901 = vor.u32 %v900, %v896
        %v902 = vrot.slane %v901, 4
        %v904 = vshll.u32 %v776, 16
        %v906 = vrot.slane %v904, 5
        %v907 = vsel %vm859, %v902, %v906
        %v909 = vshrl.u32 %v777, 16
        %v911 = vrot.slane %v909, 4
        %v912 = vshll.u32 %v777, 16
        %v914 = vrot.slane %v912, 5
        %v915 = vor.u32 %v911, %v914
        %v916 = vrot.slane %v915, 4
        %v918 = vshll.u32 %v778, 16
        %v920 = vrot.slane %v918, 5
        %v921 = vsel %vm859, %v916, %v920
        %v922 = vshrl.u32 %v778, 16
        %v924 = vrot.slane %v922, 4
        %v925 = vor.u32 %v924, %v920
        %v926 = vrot.slane %v925, 4
        %v928 = vshll.u32 %v779, 16
        %v930 = vrot.slane %v928, 5
        %v931 = vsel %vm859, %v926, %v930
        %v933 = vshrl.u32 %v780, 16
        %v935 = vrot.slane %v933, 4
        %v936 = vshll.u32 %v780, 16
        %v938 = vrot.slane %v936, 5
        %v939 = vor.u32 %v935, %v938
        %v940 = vrot.slane %v939, 4
        %v942 = vshll.u32 %v781, 16
        %v944 = vrot.slane %v942, 5
        %v945 = vsel %vm859, %v940, %v944
        %v946 = vshrl.u32 %v781, 16
        %v948 = vrot.slane %v946, 4
        %v949 = vor.u32 %v948, %v944
        %v950 = vrot.slane %v949, 4
        %v952 = vshll.u32 %v782, 16
        %v954 = vrot.slane %v952, 5
        %v955 = vsel %vm859, %v950, %v954
        %v957 = vshrl.u32 %v783, 16
        %v959 = vrot.slane %v957, 4
        %v960 = vshll.u32 %v783, 16
        %v962 = vrot.slane %v960, 5
        %v963 = vor.u32 %v959, %v962
        %v964 = vrot.slane %v963, 4
        %v966 = vshll.u32 %v784, 16
        %v968 = vrot.slane %v966, 5
        %v969 = vsel %vm859, %v964, %v968
        %v970 = vshrl.u32 %v784, 16
        %v972 = vrot.slane %v970, 4
        %v973 = vor.u32 %v972, %v968
        %v974 = vrot.slane %v973, 4
        %v976 = vshll.u32 %v785, 16
        %v978 = vrot.slane %v976, 5
        %v979 = vsel %vm859, %v974, %v978
        %v981 = vshrl.u32 %v786, 16
        %v983 = vrot.slane %v981, 4
        %v984 = vshll.u32 %v786, 16
        %v986 = vrot.slane %v984, 5
        %v987 = vor.u32 %v983, %v986
        %v988 = vrot.slane %v987, 4
        %v990 = vshll.u32 %v787, 16
        %v992 = vrot.slane %v990, 5
        %v993 = vsel %vm859, %v988, %v992
        %v994 = vshrl.u32 %v787, 16
        %v996 = vrot.slane %v994, 4
        %v997 = vor.u32 %v996, %v992
        %v998 = vrot.slane %v997, 4
        %v1000 = vshll.u32 %v788, 16
        %v1002 = vrot.slane %v1000, 5
        %v1003 = vsel %vm859, %v998, %v1002
        %v1005 = vshrl.u32 %v789, 16
        %v1007 = vrot.slane %v1005, 4
        %v1008 = vshll.u32 %v789, 16
        %v1010 = vrot.slane %v1008, 5
        %v1011 = vor.u32 %v1007, %v1010
        %v1012 = vrot.slane %v1011, 4
        %v1014 = vshll.u32 %v790, 16
        %v1016 = vrot.slane %v1014, 5
        %v1017 = vsel %vm859, %v1012, %v1016
        %v1018 = vshrl.u32 %v790, 16
        %v1020 = vrot.slane %v1018, 4
        %v1021 = vor.u32 %v1020, %v1016
        %v1022 = vrot.slane %v1021, 4
        %v1024 = vshll.u32 %v791, 16
        %v1026 = vrot.slane %v1024, 5
        %v1027 = vsel %vm859, %v1022, %v1026
        %v1029 = vshrl.u32 %v792, 16
        %v1031 = vrot.slane %v1029, 4
        %v1032 = vshll.u32 %v792, 16
        %v1034 = vrot.slane %v1032, 5
        %v1035 = vor.u32 %v1031, %v1034
        %v1036 = vrot.slane %v1035, 4
        %v1038 = vshll.u32 %v793, 16
        %v1040 = vrot.slane %v1038, 5
        %v1041 = vsel %vm859, %v1036, %v1040
        %v1042 = vshrl.u32 %v793, 16
        %v1044 = vrot.slane %v1042, 4
        %v1045 = vor.u32 %v1044, %v1040
        %v1046 = vrot.slane %v1045, 4
        %v1048 = vshll.u32 %v794, 16
        %v1050 = vrot.slane %v1048, 5
        %v1051 = vsel %vm859, %v1046, %v1050
        %v1053 = vshrl.u32 %v795, 16
        %v1055 = vrot.slane %v1053, 4
        %v1056 = vshll.u32 %v795, 16
        %v1058 = vrot.slane %v1056, 5
        %v1059 = vor.u32 %v1055, %v1058
        %v1060 = vrot.slane %v1059, 4
        %v1062 = vshll.u32 %v796, 16
        %v1064 = vrot.slane %v1062, 5
        %v1065 = vsel %vm859, %v1060, %v1064
        %v1066 = vshrl.u32 %v796, 16
        %v1068 = vrot.slane %v1066, 4
        %v1069 = vor.u32 %v1068, %v1064
        %v1070 = vrot.slane %v1069, 4
        %v1072 = vshll.u32 %v797, 16
        %v1074 = vrot.slane %v1072, 5
        %v1075 = vsel %vm859, %v1070, %v1074
        %v1077 = vshrl.u32 %v798, 16
        %v1079 = vrot.slane %v1077, 4
        %v1080 = vshll.u32 %v798, 16
        %v1082 = vrot.slane %v1080, 5
        %v1083 = vor.u32 %v1079, %v1082
        %v1084 = vrot.slane %v1083, 4
        %v1086 = vshll.u32 %v799, 16
        %v1088 = vrot.slane %v1086, 5
        %v1089 = vsel %vm859, %v1084, %v1088
        %v1090 = vshrl.u32 %v799, 16
        %v1092 = vrot.slane %v1090, 4
        %v1093 = vor.u32 %v1092, %v1088
        %v1094 = vrot.slane %v1093, 4
        %v1096 = vshll.u32 %v800, 16
        %v1098 = vrot.slane %v1096, 5
        %v1099 = vsel %vm859, %v1094, %v1098
        %v1101 = vshrl.u32 %v801, 16
        %v1103 = vrot.slane %v1101, 4
        %v1104 = vshll.u32 %v801, 16
        %v1106 = vrot.slane %v1104, 5
        %v1107 = vor.u32 %v1103, %v1106
        %v1108 = vrot.slane %v1107, 4
        %v1110 = vshll.u32 %v802, 16
        %v1112 = vrot.slane %v1110, 5
        %v1113 = vsel %vm859, %v1108, %v1112
        %v1114 = vshrl.u32 %v802, 16
        %v1116 = vrot.slane %v1114, 4
        %v1117 = vor.u32 %v1116, %v1112
        %v1118 = vrot.slane %v1117, 4
        %v1120 = vshll.u32 %v803, 16
        %v1122 = vrot.slane %v1120, 5
        %v1123 = vsel %vm859, %v1118, %v1122
        %v1125 = vshrl.u32 %v804, 16
        %v1127 = vrot.slane %v1125, 4
        %v1128 = vshll.u32 %v804, 16
        %v1130 = vrot.slane %v1128, 5
        %v1131 = vor.u32 %v1127, %v1130
        %v1132 = vrot.slane %v1131, 4
        %v1134 = vshll.u32 %v805, 16
        %v1136 = vrot.slane %v1134, 5
        %v1137 = vsel %vm859, %v1132, %v1136
        %v1138 = vshrl.u32 %v805, 16
        %v1140 = vrot.slane %v1138, 4
        %v1141 = vor.u32 %v1140, %v1136
        %v1142 = vrot.slane %v1141, 4
        %v1144 = vshll.u32 %v806, 16
        %v1146 = vrot.slane %v1144, 5
        %v1147 = vsel %vm859, %v1142, %v1146
        %v1149 = vshrl.u32 %v807, 16
        %v1151 = vrot.slane %v1149, 4
        %v1152 = vshll.u32 %v807, 16
        %v1154 = vrot.slane %v1152, 5
        %v1155 = vor.u32 %v1151, %v1154
        %v1156 = vrot.slane %v1155, 4
        %v1158 = vshll.u32 %v808, 16
        %v1160 = vrot.slane %v1158, 5
        %v1161 = vsel %vm859, %v1156, %v1160
        %v1162 = vshrl.u32 %v808, 16
        %v1164 = vrot.slane %v1162, 4
        %v1165 = vor.u32 %v1164, %v1160
        %v1166 = vrot.slane %v1165, 4
        %v1168 = vshll.u32 %v809, 16
        %v1170 = vrot.slane %v1168, 5
        %v1171 = vsel %vm859, %v1166, %v1170
        %v1173 = vshrl.u32 %v810, 16
        %v1175 = vrot.slane %v1173, 4
        %v1176 = vshll.u32 %v810, 16
        %v1178 = vrot.slane %v1176, 5
        %v1179 = vor.u32 %v1175, %v1178
        %v1180 = vrot.slane %v1179, 4
        %v1182 = vshll.u32 %v811, 16
        %v1184 = vrot.slane %v1182, 5
        %v1185 = vsel %vm859, %v1180, %v1184
        %v1186 = vshrl.u32 %v811, 16
        %v1188 = vrot.slane %v1186, 4
        %v1189 = vor.u32 %v1188, %v1184
        %v1190 = vrot.slane %v1189, 4
        %v1192 = vshll.u32 %v812, 16
        %v1194 = vrot.slane %v1192, 5
        %v1195 = vsel %vm859, %v1190, %v1194
        %v1197 = vshrl.u32 %v813, 16
        %v1199 = vrot.slane %v1197, 4
        %v1200 = vshll.u32 %v813, 16
        %v1202 = vrot.slane %v1200, 5
        %v1203 = vor.u32 %v1199, %v1202
        %v1204 = vrot.slane %v1203, 4
        %v1206 = vshll.u32 %v814, 16
        %v1208 = vrot.slane %v1206, 5
        %v1209 = vsel %vm859, %v1204, %v1208
        %v1210 = vshrl.u32 %v814, 16
        %v1212 = vrot.slane %v1210, 4
        %v1213 = vor.u32 %v1212, %v1208
        %v1214 = vrot.slane %v1213, 4
        %v1216 = vshll.u32 %v815, 16
        %v1218 = vrot.slane %v1216, 5
        %v1219 = vsel %vm859, %v1214, %v1218
        %v1221 = vshrl.u32 %v816, 16
        %v1223 = vrot.slane %v1221, 4
        %v1224 = vshll.u32 %v816, 16
        %v1226 = vrot.slane %v1224, 5
        %v1227 = vor.u32 %v1223, %v1226
        %v1228 = vrot.slane %v1227, 4
        %v1230 = vshll.u32 %v817, 16
        %v1232 = vrot.slane %v1230, 5
        %v1233 = vsel %vm859, %v1228, %v1232
        %v1234 = vshrl.u32 %v817, 16
        %v1236 = vrot.slane %v1234, 4
        %v1237 = vor.u32 %v1236, %v1232
        %v1238 = vrot.slane %v1237, 4
        %v1240 = vshll.u32 %v818, 16
        %v1242 = vrot.slane %v1240, 5
        %v1243 = vsel %vm859, %v1238, %v1242
        %1276 = vst [vmem:[#allocation3 + $0x4] sm:$0xf] %v873
        %1277 = vst [vmem:[#allocation3 + $0x28] sm:$0xf] %v883
        %1278 = vst [vmem:[#allocation3 + $0x4c] sm:$0xf] %v897
        %1279 = vst [vmem:[#allocation3 + $0x70] sm:$0xf] %v907
        %1280 = vst [vmem:[#allocation3 + $0x94] sm:$0xf] %v921
        %1281 = vst [vmem:[#allocation3 + $0xb8] sm:$0xf] %v931
        %1282 = vst [vmem:[#allocation3 + $0xdc] sm:$0xf] %v945
        %1283 = vst [vmem:[#allocation3 + $0x100] sm:$0xf] %v955
        %1284 = vst [vmem:[#allocation3 + $0x124] sm:$0xf] %v969
        %1285 = vst [vmem:[#allocation3 + $0x148] sm:$0xf] %v979
        %1286 = vst [vmem:[#allocation3 + $0x16c] sm:$0xf] %v993
        %1287 = vst [vmem:[#allocation3 + $0x190] sm:$0xf] %v1003
        %1288 = vst [vmem:[#allocation3 + $0x1b4] sm:$0xf] %v1017
        %1289 = vst [vmem:[#allocation3 + $0x1d8] sm:$0xf] %v1027
        %1290 = vst [vmem:[#allocation3 + $0x1fc] sm:$0xf] %v1041
        %1291 = vst [vmem:[#allocation3 + $0x220] sm:$0xf] %v1051
        %1292 = vst [vmem:[#allocation3 + $0x244] sm:$0xf] %v1065
        %1293 = vst [vmem:[#allocation3 + $0x268] sm:$0xf] %v1075
        %1294 = vst [vmem:[#allocation3 + $0x28c] sm:$0xf] %v1089
        %1295 = vst [vmem:[#allocation3 + $0x2b0] sm:$0xf] %v1099
        %1296 = vst [vmem:[#allocation3 + $0x2d4] sm:$0xf] %v1113
        %1297 = vst [vmem:[#allocation3 + $0x2f8] sm:$0xf] %v1123
        %1298 = vst [vmem:[#allocation3 + $0x31c] sm:$0xf] %v1137
        %1299 = vst [vmem:[#allocation3 + $0x340] sm:$0xf] %v1147
        %1300 = vst [vmem:[#allocation3 + $0x364] sm:$0xf] %v1161
        %1301 = vst [vmem:[#allocation3 + $0x388] sm:$0xf] %v1171
        %1302 = vst [vmem:[#allocation3 + $0x3ac] sm:$0xf] %v1185
        %1303 = vst [vmem:[#allocation3 + $0x3d0] sm:$0xf] %v1195
        %1304 = vst [vmem:[#allocation3 + $0x3f4] sm:$0xf] %v1209
        %1305 = vst [vmem:[#allocation3 + $0x418] sm:$0xf] %v1219
        %1306 = vst [vmem:[#allocation3 + $0x43c] sm:$0xf] %v1233
        %1307 = vst [vmem:[#allocation3 + $0x460] sm:$0xf] %v1243
        %vm1356 = vcmask 1042432
        %vm1357 = vcmask 1046532
        %vm1358 = vmor %vm1356, %vm1357
        %v1359 = vrot.slane %v771, 5
        %v1360 = vrot.slane %v1359, 4
        %v1361 = vrot.slane %v772, 5
        %v1362 = vsel %vm1358, %v1360, %v1361
        %v1363 = vrot.slane %v1361, 4
        %v1364 = vrot.slane %v773, 5
        %v1365 = vsel %vm1358, %v1363, %v1364
        %v1366 = vrot.slane %v774, 5
        %v1367 = vrot.slane %v1366, 4
        %v1368 = vrot.slane %v775, 5
        %v1369 = vsel %vm1358, %v1367, %v1368
        %v1370 = vrot.slane %v1368, 4
        %v1371 = vrot.slane %v776, 5
        %v1372 = vsel %vm1358, %v1370, %v1371
        %v1373 = vrot.slane %v777, 5
        %v1374 = vrot.slane %v1373, 4
        %v1375 = vrot.slane %v778, 5
        %v1376 = vsel %vm1358, %v1374, %v1375
        %v1377 = vrot.slane %v1375, 4
        %v1378 = vrot.slane %v779, 5
        %v1379 = vsel %vm1358, %v1377, %v1378
        %v1380 = vrot.slane %v780, 5
        %v1381 = vrot.slane %v1380, 4
        %v1382 = vrot.slane %v781, 5
        %v1383 = vsel %vm1358, %v1381, %v1382
        %v1384 = vrot.slane %v1382, 4
        %v1385 = vrot.slane %v782, 5
        %v1386 = vsel %vm1358, %v1384, %v1385
        %v1387 = vrot.slane %v783, 5
        %v1388 = vrot.slane %v1387, 4
        %v1389 = vrot.slane %v784, 5
        %v1390 = vsel %vm1358, %v1388, %v1389
        %v1391 = vrot.slane %v1389, 4
        %v1392 = vrot.slane %v785, 5
        %v1393 = vsel %vm1358, %v1391, %v1392
        %v1394 = vrot.slane %v786, 5
        %v1395 = vrot.slane %v1394, 4
        %v1396 = vrot.slane %v787, 5
        %v1397 = vsel %vm1358, %v1395, %v1396
        %v1398 = vrot.slane %v1396, 4
        %v1399 = vrot.slane %v788, 5
        %v1400 = vsel %vm1358, %v1398, %v1399
        %v1401 = vrot.slane %v789, 5
        %v1402 = vrot.slane %v1401, 4
        %v1403 = vrot.slane %v790, 5
        %v1404 = vsel %vm1358, %v1402, %v1403
        %v1405 = vrot.slane %v1403, 4
        %v1406 = vrot.slane %v791, 5
        %v1407 = vsel %vm1358, %v1405, %v1406
        %v1408 = vrot.slane %v792, 5
        %v1409 = vrot.slane %v1408, 4
        %v1410 = vrot.slane %v793, 5
        %v1411 = vsel %vm1358, %v1409, %v1410
        %v1412 = vrot.slane %v1410, 4
        %v1413 = vrot.slane %v794, 5
        %v1414 = vsel %vm1358, %v1412, %v1413
        %v1415 = vrot.slane %v795, 5
        %v1416 = vrot.slane %v1415, 4
        %v1417 = vrot.slane %v796, 5
        %v1418 = vsel %vm1358, %v1416, %v1417
        %v1419 = vrot.slane %v1417, 4
        %v1420 = vrot.slane %v797, 5
        %v1421 = vsel %vm1358, %v1419, %v1420
        %v1422 = vrot.slane %v798, 5
        %v1423 = vrot.slane %v1422, 4
        %v1424 = vrot.slane %v799, 5
        %v1425 = vsel %vm1358, %v1423, %v1424
        %v1426 = vrot.slane %v1424, 4
        %v1427 = vrot.slane %v800, 5
        %v1428 = vsel %vm1358, %v1426, %v1427
        %v1429 = vrot.slane %v801, 5
        %v1430 = vrot.slane %v1429, 4
        %v1431 = vrot.slane %v802, 5
        %v1432 = vsel %vm1358, %v1430, %v1431
        %v1433 = vrot.slane %v1431, 4
        %v1434 = vrot.slane %v803, 5
        %v1435 = vsel %vm1358, %v1433, %v1434
        %v1436 = vrot.slane %v804, 5
        %v1437 = vrot.slane %v1436, 4
        %v1438 = vrot.slane %v805, 5
        %v1439 = vsel %vm1358, %v1437, %v1438
        %v1440 = vrot.slane %v1438, 4
        %v1441 = vrot.slane %v806, 5
        %v1442 = vsel %vm1358, %v1440, %v1441
        %v1443 = vrot.slane %v807, 5
        %v1444 = vrot.slane %v1443, 4
        %v1445 = vrot.slane %v808, 5
        %v1446 = vsel %vm1358, %v1444, %v1445
        %v1447 = vrot.slane %v1445, 4
        %v1448 = vrot.slane %v809, 5
        %v1449 = vsel %vm1358, %v1447, %v1448
        %v1450 = vrot.slane %v810, 5
        %v1451 = vrot.slane %v1450, 4
        %v1452 = vrot.slane %v811, 5
        %v1453 = vsel %vm1358, %v1451, %v1452
        %v1454 = vrot.slane %v1452, 4
        %v1455 = vrot.slane %v812, 5
        %v1456 = vsel %vm1358, %v1454, %v1455
        %v1457 = vrot.slane %v813, 5
        %v1458 = vrot.slane %v1457, 4
        %v1459 = vrot.slane %v814, 5
        %v1460 = vsel %vm1358, %v1458, %v1459
        %v1461 = vrot.slane %v1459, 4
        %v1462 = vrot.slane %v815, 5
        %v1463 = vsel %vm1358, %v1461, %v1462
        %v1464 = vrot.slane %v816, 5
        %v1465 = vrot.slane %v1464, 4
        %v1466 = vrot.slane %v817, 5
        %v1467 = vsel %vm1358, %v1465, %v1466
        %v1468 = vrot.slane %v1466, 4
        %v1469 = vrot.slane %v818, 5
        %v1470 = vsel %vm1358, %v1468, %v1469
        %1503 = vst [vmem:[#allocation3 + $0x8] sm:$0xf] %v1362
        %1504 = vst [vmem:[#allocation3 + $0x2c] sm:$0xf] %v1365
        %1505 = vst [vmem:[#allocation3 + $0x50] sm:$0xf] %v1369
        %1506 = vst [vmem:[#allocation3 + $0x74] sm:$0xf] %v1372
        %1507 = vst [vmem:[#allocation3 + $0x98] sm:$0xf] %v1376
        %1508 = vst [vmem:[#allocation3 + $0xbc] sm:$0xf] %v1379
        %1509 = vst [vmem:[#allocation3 + $0xe0] sm:$0xf] %v1383
        %1510 = vst [vmem:[#allocation3 + $0x104] sm:$0xf] %v1386
        %1511 = vst [vmem:[#allocation3 + $0x128] sm:$0xf] %v1390
        %1512 = vst [vmem:[#allocation3 + $0x14c] sm:$0xf] %v1393
        %1513 = vst [vmem:[#allocation3 + $0x170] sm:$0xf] %v1397
        %1514 = vst [vmem:[#allocation3 + $0x194] sm:$0xf] %v1400
        %1515 = vst [vmem:[#allocation3 + $0x1b8] sm:$0xf] %v1404
        %1516 = vst [vmem:[#allocation3 + $0x1dc] sm:$0xf] %v1407
        %1517 = vst [vmem:[#allocation3 + $0x200] sm:$0xf] %v1411
        %1518 = vst [vmem:[#allocation3 + $0x224] sm:$0xf] %v1414
        %1519 = vst [vmem:[#allocation3 + $0x248] sm:$0xf] %v1418
        %1520 = vst [vmem:[#allocation3 + $0x26c] sm:$0xf] %v1421
        %1521 = vst [vmem:[#allocation3 + $0x290] sm:$0xf] %v1425
        %1522 = vst [vmem:[#allocation3 + $0x2b4] sm:$0xf] %v1428
        %1523 = vst [vmem:[#allocation3 + $0x2d8] sm:$0xf] %v1432
        %1524 = vst [vmem:[#allocation3 + $0x2fc] sm:$0xf] %v1435
        %1525 = vst [vmem:[#allocation3 + $0x320] sm:$0xf] %v1439
        %1526 = vst [vmem:[#allocation3 + $0x344] sm:$0xf] %v1442
        %1527 = vst [vmem:[#allocation3 + $0x368] sm:$0xf] %v1446
        %1528 = vst [vmem:[#allocation3 + $0x38c] sm:$0xf] %v1449
        %1529 = vst [vmem:[#allocation3 + $0x3b0] sm:$0xf] %v1453
        %1530 = vst [vmem:[#allocation3 + $0x3d4] sm:$0xf] %v1456
        %1531 = vst [vmem:[#allocation3 + $0x3f8] sm:$0xf] %v1460
        %1532 = vst [vmem:[#allocation3 + $0x41c] sm:$0xf] %v1463
        %1533 = vst [vmem:[#allocation3 + $0x440] sm:$0xf] %v1467
        %1534 = vst [vmem:[#allocation3 + $0x464] sm:$0xf] %v1470
        %1535 = vst [vmem:[#allocation3 + $0xc] sm:$0xf] %v774
        %1536 = vst [vmem:[#allocation3 + $0x30] sm:$0xf] %v775
        %1537 = vst [vmem:[#allocation3 + $0x54] sm:$0xf] %v777
        %1538 = vst [vmem:[#allocation3 + $0x78] sm:$0xf] %v778
        %1539 = vst [vmem:[#allocation3 + $0x9c] sm:$0xf] %v780
        %1540 = vst [vmem:[#allocation3 + $0xc0] sm:$0xf] %v781
        %1541 = vst [vmem:[#allocation3 + $0xe4] sm:$0xf] %v783
        %1542 = vst [vmem:[#allocation3 + $0x108] sm:$0xf] %v784
        %1543 = vst [vmem:[#allocation3 + $0x12c] sm:$0xf] %v786
        %1544 = vst [vmem:[#allocation3 + $0x150] sm:$0xf] %v787
        %1545 = vst [vmem:[#allocation3 + $0x174] sm:$0xf] %v789
        %1546 = vst [vmem:[#allocation3 + $0x198] sm:$0xf] %v790
        %1547 = vst [vmem:[#allocation3 + $0x1bc] sm:$0xf] %v792
        %1548 = vst [vmem:[#allocation3 + $0x1e0] sm:$0xf] %v793
        %1549 = vst [vmem:[#allocation3 + $0x204] sm:$0xf] %v795
        %1550 = vst [vmem:[#allocation3 + $0x228] sm:$0xf] %v796
        %1551 = vst [vmem:[#allocation3 + $0x24c] sm:$0xf] %v798
        %1552 = vst [vmem:[#allocation3 + $0x270] sm:$0xf] %v799
        %1553 = vst [vmem:[#allocation3 + $0x294] sm:$0xf] %v801
        %1554 = vst [vmem:[#allocation3 + $0x2b8] sm:$0xf] %v802
        %1555 = vst [vmem:[#allocation3 + $0x2dc] sm:$0xf] %v804
        %1556 = vst [vmem:[#allocation3 + $0x300] sm:$0xf] %v805
        %1557 = vst [vmem:[#allocation3 + $0x324] sm:$0xf] %v807
        %1558 = vst [vmem:[#allocation3 + $0x348] sm:$0xf] %v808
        %1559 = vst [vmem:[#allocation3 + $0x36c] sm:$0xf] %v810
        %1560 = vst [vmem:[#allocation3 + $0x390] sm:$0xf] %v811
        %1561 = vst [vmem:[#allocation3 + $0x3b4] sm:$0xf] %v813
        %1562 = vst [vmem:[#allocation3 + $0x3d8] sm:$0xf] %v814
        %1563 = vst [vmem:[#allocation3 + $0x3fc] sm:$0xf] %v816
        %1564 = vst [vmem:[#allocation3 + $0x420] sm:$0xf] %v817
        %1565 = vst [vmem:[#allocation3 + $0x444] sm:$0xf] %v819
        %1566 = vst [vmem:[#allocation3 + $0x468] sm:$0xf] %v820
        %v1568 = vshrl.u32 %v819, 16
        %v1570 = vrot.slane %v1568, 4
        %v1571 = vshll.u32 %v819, 16
        %v1573 = vrot.slane %v1571, 5
        %v1574 = vor.u32 %v1570, %v1573
        %v1575 = vrot.slane %v1574, 4
        %v1577 = vshll.u32 %v820, 16
        %v1579 = vrot.slane %v1577, 5
        %v1580 = vsel %vm859, %v1575, %v1579
        %v1581 = vshrl.u32 %v820, 16
        %v1583 = vrot.slane %v1581, 4
        %v1584 = vor.u32 %v1583, %v1579
        %v1585 = vrot.slane %v1584, 4
        %v1587 = vshll.u32 %v821, 16
        %v1589 = vrot.slane %v1587, 5
        %v1590 = vsel %vm859, %v1585, %v1589
        %1593 = vst [vmem:[#allocation3 + $0x10] sm:$0xf] %v897
        %1594 = vst [vmem:[#allocation3 + $0x34] sm:$0xf] %v907
        %1595 = vst [vmem:[#allocation3 + $0x58] sm:$0xf] %v921
        %1596 = vst [vmem:[#allocation3 + $0x7c] sm:$0xf] %v931
        %1597 = vst [vmem:[#allocation3 + $0xa0] sm:$0xf] %v945
        %1598 = vst [vmem:[#allocation3 + $0xc4] sm:$0xf] %v955
        %1599 = vst [vmem:[#allocation3 + $0xe8] sm:$0xf] %v969
        %1600 = vst [vmem:[#allocation3 + $0x10c] sm:$0xf] %v979
        %1601 = vst [vmem:[#allocation3 + $0x130] sm:$0xf] %v993
        %1602 = vst [vmem:[#allocation3 + $0x154] sm:$0xf] %v1003
        %1603 = vst [vmem:[#allocation3 + $0x178] sm:$0xf] %v1017
        %1604 = vst [vmem:[#allocation3 + $0x19c] sm:$0xf] %v1027
        %1605 = vst [vmem:[#allocation3 + $0x1c0] sm:$0xf] %v1041
        %1606 = vst [vmem:[#allocation3 + $0x1e4] sm:$0xf] %v1051
        %1607 = vst [vmem:[#allocation3 + $0x208] sm:$0xf] %v1065
        %1608 = vst [vmem:[#allocation3 + $0x22c] sm:$0xf] %v1075
        %1609 = vst [vmem:[#allocation3 + $0x250] sm:$0xf] %v1089
        %1610 = vst [vmem:[#allocation3 + $0x274] sm:$0xf] %v1099
        %1611 = vst [vmem:[#allocation3 + $0x298] sm:$0xf] %v1113
        %1612 = vst [vmem:[#allocation3 + $0x2bc] sm:$0xf] %v1123
        %1613 = vst [vmem:[#allocation3 + $0x2e0] sm:$0xf] %v1137
        %1614 = vst [vmem:[#allocation3 + $0x304] sm:$0xf] %v1147
        %1615 = vst [vmem:[#allocation3 + $0x328] sm:$0xf] %v1161
        %1616 = vst [vmem:[#allocation3 + $0x34c] sm:$0xf] %v1171
        %1617 = vst [vmem:[#allocation3 + $0x370] sm:$0xf] %v1185
        %1618 = vst [vmem:[#allocation3 + $0x394] sm:$0xf] %v1195
        %1619 = vst [vmem:[#allocation3 + $0x3b8] sm:$0xf] %v1209
        %1620 = vst [vmem:[#allocation3 + $0x3dc] sm:$0xf] %v1219
        %1621 = vst [vmem:[#allocation3 + $0x400] sm:$0xf] %v1233
        %1622 = vst [vmem:[#allocation3 + $0x424] sm:$0xf] %v1243
        %1623 = vst [vmem:[#allocation3 + $0x448] sm:$0xf] %v1580
        %1624 = vst [vmem:[#allocation3 + $0x46c] sm:$0xf] %v1590
        %v1628 = vrot.slane %v819, 5
        %v1629 = vrot.slane %v1628, 4
        %v1630 = vrot.slane %v820, 5
        %v1631 = vsel %vm1358, %v1629, %v1630
        %v1632 = vrot.slane %v1630, 4
        %v1633 = vrot.slane %v821, 5
        %v1634 = vsel %vm1358, %v1632, %v1633
        %1637 = vst [vmem:[#allocation3 + $0x14] sm:$0xf] %v1369
        %1638 = vst [vmem:[#allocation3 + $0x38] sm:$0xf] %v1372
        %1639 = vst [vmem:[#allocation3 + $0x5c] sm:$0xf] %v1376
        %1640 = vst [vmem:[#allocation3 + $0x80] sm:$0xf] %v1379
        %1641 = vst [vmem:[#allocation3 + $0xa4] sm:$0xf] %v1383
        %1642 = vst [vmem:[#allocation3 + $0xc8] sm:$0xf] %v1386
        %1643 = vst [vmem:[#allocation3 + $0xec] sm:$0xf] %v1390
        %1644 = vst [vmem:[#allocation3 + $0x110] sm:$0xf] %v1393
        %1645 = vst [vmem:[#allocation3 + $0x134] sm:$0xf] %v1397
        %1646 = vst [vmem:[#allocation3 + $0x158] sm:$0xf] %v1400
        %1647 = vst [vmem:[#allocation3 + $0x17c] sm:$0xf] %v1404
        %1648 = vst [vmem:[#allocation3 + $0x1a0] sm:$0xf] %v1407
        %1649 = vst [vmem:[#allocation3 + $0x1c4] sm:$0xf] %v1411
        %1650 = vst [vmem:[#allocation3 + $0x1e8] sm:$0xf] %v1414
        %1651 = vst [vmem:[#allocation3 + $0x20c] sm:$0xf] %v1418
        %1652 = vst [vmem:[#allocation3 + $0x230] sm:$0xf] %v1421
        %1653 = vst [vmem:[#allocation3 + $0x254] sm:$0xf] %v1425
        %1654 = vst [vmem:[#allocation3 + $0x278] sm:$0xf] %v1428
        %1655 = vst [vmem:[#allocation3 + $0x29c] sm:$0xf] %v1432
        %1656 = vst [vmem:[#allocation3 + $0x2c0] sm:$0xf] %v1435
        %1657 = vst [vmem:[#allocation3 + $0x2e4] sm:$0xf] %v1439
        %1658 = vst [vmem:[#allocation3 + $0x308] sm:$0xf] %v1442
        %1659 = vst [vmem:[#allocation3 + $0x32c] sm:$0xf] %v1446
        %1660 = vst [vmem:[#allocation3 + $0x350] sm:$0xf] %v1449
        %1661 = vst [vmem:[#allocation3 + $0x374] sm:$0xf] %v1453
        %1662 = vst [vmem:[#allocation3 + $0x398] sm:$0xf] %v1456
        %1663 = vst [vmem:[#allocation3 + $0x3bc] sm:$0xf] %v1460
        %1664 = vst [vmem:[#allocation3 + $0x3e0] sm:$0xf] %v1463
        %1665 = vst [vmem:[#allocation3 + $0x404] sm:$0xf] %v1467
        %1666 = vst [vmem:[#allocation3 + $0x428] sm:$0xf] %v1470
        %1667 = vst [vmem:[#allocation3 + $0x44c] sm:$0xf] %v1631
        %1668 = vst [vmem:[#allocation3 + $0x470] sm:$0xf] %v1634
        %1669 = vst [vmem:[#allocation3 + $0x18] sm:$0xf] %v777
        %1670 = vst [vmem:[#allocation3 + $0x3c] sm:$0xf] %v778
        %1671 = vst [vmem:[#allocation3 + $0x60] sm:$0xf] %v780
        %1672 = vst [vmem:[#allocation3 + $0x84] sm:$0xf] %v781
        %1673 = vst [vmem:[#allocation3 + $0xa8] sm:$0xf] %v783
        %1674 = vst [vmem:[#allocation3 + $0xcc] sm:$0xf] %v784
        %1675 = vst [vmem:[#allocation3 + $0xf0] sm:$0xf] %v786
        %1676 = vst [vmem:[#allocation3 + $0x114] sm:$0xf] %v787
        %1677 = vst [vmem:[#allocation3 + $0x138] sm:$0xf] %v789
        %1678 = vst [vmem:[#allocation3 + $0x15c] sm:$0xf] %v790
        %1679 = vst [vmem:[#allocation3 + $0x180] sm:$0xf] %v792
        %1680 = vst [vmem:[#allocation3 + $0x1a4] sm:$0xf] %v793
        %1681 = vst [vmem:[#allocation3 + $0x1c8] sm:$0xf] %v795
        %1682 = vst [vmem:[#allocation3 + $0x1ec] sm:$0xf] %v796
        %1683 = vst [vmem:[#allocation3 + $0x210] sm:$0xf] %v798
        %1684 = vst [vmem:[#allocation3 + $0x234] sm:$0xf] %v799
        %1685 = vst [vmem:[#allocation3 + $0x258] sm:$0xf] %v801
        %1686 = vst [vmem:[#allocation3 + $0x27c] sm:$0xf] %v802
        %1687 = vst [vmem:[#allocation3 + $0x2a0] sm:$0xf] %v804
        %1688 = vst [vmem:[#allocation3 + $0x2c4] sm:$0xf] %v805
        %1689 = vst [vmem:[#allocation3 + $0x2e8] sm:$0xf] %v807
        %1690 = vst [vmem:[#allocation3 + $0x30c] sm:$0xf] %v808
        %1691 = vst [vmem:[#allocation3 + $0x330] sm:$0xf] %v810
        %1692 = vst [vmem:[#allocation3 + $0x354] sm:$0xf] %v811
        %1693 = vst [vmem:[#allocation3 + $0x378] sm:$0xf] %v813
        %1694 = vst [vmem:[#allocation3 + $0x39c] sm:$0xf] %v814
        %1695 = vst [vmem:[#allocation3 + $0x3c0] sm:$0xf] %v816
        %1696 = vst [vmem:[#allocation3 + $0x3e4] sm:$0xf] %v817
        %1697 = vst [vmem:[#allocation3 + $0x408] sm:$0xf] %v819
        %1698 = vst [vmem:[#allocation3 + $0x42c] sm:$0xf] %v820
        %1699 = vst [vmem:[#allocation3 + $0x450] sm:$0xf] %v822
        %1700 = vst [vmem:[#allocation3 + $0x474] sm:$0xf] %v823
        %v1702 = vshrl.u32 %v822, 16
        %v1704 = vrot.slane %v1702, 4
        %v1705 = vshll.u32 %v822, 16
        %v1707 = vrot.slane %v1705, 5
        %v1708 = vor.u32 %v1704, %v1707
        %v1709 = vrot.slane %v1708, 4
        %v1711 = vshll.u32 %v823, 16
        %v1713 = vrot.slane %v1711, 5
        %v1714 = vsel %vm859, %v1709, %v1713
        %v1715 = vshrl.u32 %v823, 16
        %v1717 = vrot.slane %v1715, 4
        %v1718 = vor.u32 %v1717, %v1713
        %v1719 = vrot.slane %v1718, 4
        %v1721 = vshll.u32 %v824, 16
        %v1723 = vrot.slane %v1721, 5
        %v1724 = vsel %vm859, %v1719, %v1723
        %1727 = vst [vmem:[#allocation3 + $0x1c] sm:$0xf] %v921
        %1728 = vst [vmem:[#allocation3 + $0x40] sm:$0xf] %v931
        %1729 = vst [vmem:[#allocation3 + $0x64] sm:$0xf] %v945
        %1730 = vst [vmem:[#allocation3 + $0x88] sm:$0xf] %v955
        %1731 = vst [vmem:[#allocation3 + $0xac] sm:$0xf] %v969
        %1732 = vst [vmem:[#allocation3 + $0xd0] sm:$0xf] %v979
        %1733 = vst [vmem:[#allocation3 + $0xf4] sm:$0xf] %v993
        %1734 = vst [vmem:[#allocation3 + $0x118] sm:$0xf] %v1003
        %1735 = vst [vmem:[#allocation3 + $0x13c] sm:$0xf] %v1017
        %1736 = vst [vmem:[#allocation3 + $0x160] sm:$0xf] %v1027
        %1737 = vst [vmem:[#allocation3 + $0x184] sm:$0xf] %v1041
        %1738 = vst [vmem:[#allocation3 + $0x1a8] sm:$0xf] %v1051
        %1739 = vst [vmem:[#allocation3 + $0x1cc] sm:$0xf] %v1065
        %1740 = vst [vmem:[#allocation3 + $0x1f0] sm:$0xf] %v1075
        %1741 = vst [vmem:[#allocation3 + $0x214] sm:$0xf] %v1089
        %1742 = vst [vmem:[#allocation3 + $0x238] sm:$0xf] %v1099
        %1743 = vst [vmem:[#allocation3 + $0x25c] sm:$0xf] %v1113
        %1744 = vst [vmem:[#allocation3 + $0x280] sm:$0xf] %v1123
        %1745 = vst [vmem:[#allocation3 + $0x2a4] sm:$0xf] %v1137
        %1746 = vst [vmem:[#allocation3 + $0x2c8] sm:$0xf] %v1147
        %1747 = vst [vmem:[#allocation3 + $0x2ec] sm:$0xf] %v1161
        %1748 = vst [vmem:[#allocation3 + $0x310] sm:$0xf] %v1171
        %1749 = vst [vmem:[#allocation3 + $0x334] sm:$0xf] %v1185
        %1750 = vst [vmem:[#allocation3 + $0x358] sm:$0xf] %v1195
        %1751 = vst [vmem:[#allocation3 + $0x37c] sm:$0xf] %v1209
        %1752 = vst [vmem:[#allocation3 + $0x3a0] sm:$0xf] %v1219
        %1753 = vst [vmem:[#allocation3 + $0x3c4] sm:$0xf] %v1233
        %1754 = vst [vmem:[#allocation3 + $0x3e8] sm:$0xf] %v1243
        %1755 = vst [vmem:[#allocation3 + $0x40c] sm:$0xf] %v1580
        %1756 = vst [vmem:[#allocation3 + $0x430] sm:$0xf] %v1590
        %1757 = vst [vmem:[#allocation3 + $0x454] sm:$0xf] %v1714
        %1758 = vst [vmem:[#allocation3 + $0x478] sm:$0xf] %v1724
        %v1762 = vrot.slane %v822, 5
        %v1763 = vrot.slane %v1762, 4
        %v1764 = vrot.slane %v823, 5
        %v1765 = vsel %vm1358, %v1763, %v1764
        %v1766 = vrot.slane %v1764, 4
        %v1767 = vrot.slane %v824, 5
        %v1768 = vsel %vm1358, %v1766, %v1767
        %1771 = vst [vmem:[#allocation3 + $0x20] sm:$0xf] %v1376
        %1772 = vst [vmem:[#allocation3 + $0x44] sm:$0xf] %v1379
        %1773 = vst [vmem:[#allocation3 + $0x68] sm:$0xf] %v1383
        %1774 = vst [vmem:[#allocation3 + $0x8c] sm:$0xf] %v1386
        %1775 = vst [vmem:[#allocation3 + $0xb0] sm:$0xf] %v1390
        %1776 = vst [vmem:[#allocation3 + $0xd4] sm:$0xf] %v1393
        %1777 = vst [vmem:[#allocation3 + $0xf8] sm:$0xf] %v1397
        %1778 = vst [vmem:[#allocation3 + $0x11c] sm:$0xf] %v1400
        %1779 = vst [vmem:[#allocation3 + $0x140] sm:$0xf] %v1404
        %1780 = vst [vmem:[#allocation3 + $0x164] sm:$0xf] %v1407
        %1781 = vst [vmem:[#allocation3 + $0x188] sm:$0xf] %v1411
        %1782 = vst [vmem:[#allocation3 + $0x1ac] sm:$0xf] %v1414
        %1783 = vst [vmem:[#allocation3 + $0x1d0] sm:$0xf] %v1418
        %1784 = vst [vmem:[#allocation3 + $0x1f4] sm:$0xf] %v1421
        %1785 = vst [vmem:[#allocation3 + $0x218] sm:$0xf] %v1425
        %1786 = vst [vmem:[#allocation3 + $0x23c] sm:$0xf] %v1428
        %1787 = vst [vmem:[#allocation3 + $0x260] sm:$0xf] %v1432
        %1788 = vst [vmem:[#allocation3 + $0x284] sm:$0xf] %v1435
        %1789 = vst [vmem:[#allocation3 + $0x2a8] sm:$0xf] %v1439
        %1790 = vst [vmem:[#allocation3 + $0x2cc] sm:$0xf] %v1442
        %1791 = vst [vmem:[#allocation3 + $0x2f0] sm:$0xf] %v1446
        %1792 = vst [vmem:[#allocation3 + $0x314] sm:$0xf] %v1449
        %1793 = vst [vmem:[#allocation3 + $0x338] sm:$0xf] %v1453
        %1794 = vst [vmem:[#allocation3 + $0x35c] sm:$0xf] %v1456
        %1795 = vst [vmem:[#allocation3 + $0x380] sm:$0xf] %v1460
        %1796 = vst [vmem:[#allocation3 + $0x3a4] sm:$0xf] %v1463
        %1797 = vst [vmem:[#allocation3 + $0x3c8] sm:$0xf] %v1467
        %1798 = vst [vmem:[#allocation3 + $0x3ec] sm:$0xf] %v1470
        %1799 = vst [vmem:[#allocation3 + $0x410] sm:$0xf] %v1631
        %1800 = vst [vmem:[#allocation3 + $0x434] sm:$0xf] %v1634
        %1801 = vst [vmem:[#allocation3 + $0x458] sm:$0xf] %v1765
        %1802 = vst [vmem:[#allocation3 + $0x47c] sm:$0xf] %v1768
      $region36: #{basic_block_forward.3} parent=31 // pred_fallthru
        _
      %v1803 = vld [vmem:[#allocation3] sm:$0xff]
      %v1804 = vld [vmem:[#allocation3 + $0x8] sm:$0xff]
      %v1805 = vld [vmem:[#allocation3 + $0x10] sm:$0xff]
      %v1806 = vld [vmem:[#allocation3 + $0x18] sm:$0xff]
      %v1807 = vld [vmem:[#allocation3 + $0x20] sm:$0xf]
      %v1808 = vld [vmem:[#allocation3 + $0x24] sm:$0xff]
      %v1809 = vld [vmem:[#allocation3 + $0x2c] sm:$0xff]
      %v1810 = vld [vmem:[#allocation3 + $0x34] sm:$0xff]
      %v1811 = vld [vmem:[#allocation3 + $0x3c] sm:$0xff]
      %v1812 = vld [vmem:[#allocation3 + $0x44] sm:$0xf]
      %v1813 = vld [vmem:[#allocation3 + $0x48] sm:$0xff]
      %v1814 = vld [vmem:[#allocation3 + $0x50] sm:$0xff]
      %v1815 = vld [vmem:[#allocation3 + $0x58] sm:$0xff]
      %v1816 = vld [vmem:[#allocation3 + $0x60] sm:$0xff]
      %v1817 = vld [vmem:[#allocation3 + $0x68] sm:$0xf]
      %v1818 = vld [vmem:[#allocation3 + $0x6c] sm:$0xff]
      %v1819 = vld [vmem:[#allocation3 + $0x74] sm:$0xff]
      %v1820 = vld [vmem:[#allocation3 + $0x7c] sm:$0xff]
      %v1821 = vld [vmem:[#allocation3 + $0x84] sm:$0xff]
      %v1822 = vld [vmem:[#allocation3 + $0x8c] sm:$0xf]
      %v1823 = vld [vmem:[#allocation3 + $0x90] sm:$0xff]
      %v1824 = vld [vmem:[#allocation3 + $0x98] sm:$0xff]
      %v1825 = vld [vmem:[#allocation3 + $0xa0] sm:$0xff]
      %v1826 = vld [vmem:[#allocation3 + $0xa8] sm:$0xff]
      %v1827 = vld [vmem:[#allocation3 + $0xb0] sm:$0xf]
      %v1828 = vld [vmem:[#allocation3 + $0xb4] sm:$0xff]
      %v1829 = vld [vmem:[#allocation3 + $0xbc] sm:$0xff]
      %v1830 = vld [vmem:[#allocation3 + $0xc4] sm:$0xff]
      %v1831 = vld [vmem:[#allocation3 + $0xcc] sm:$0xff]
      %v1832 = vld [vmem:[#allocation3 + $0xd4] sm:$0xf]
      %v1833 = vld [vmem:[#allocation3 + $0xd8] sm:$0xff]
      %v1834 = vld [vmem:[#allocation3 + $0xe0] sm:$0xff]
      %v1835 = vld [vmem:[#allocation3 + $0xe8] sm:$0xff]
      %v1836 = vld [vmem:[#allocation3 + $0xf0] sm:$0xff]
      %v1837 = vld [vmem:[#allocation3 + $0xf8] sm:$0xf]
      %v1838 = vld [vmem:[#allocation3 + $0xfc] sm:$0xff]
      %v1839 = vld [vmem:[#allocation3 + $0x104] sm:$0xff]
      %v1840 = vld [vmem:[#allocation3 + $0x10c] sm:$0xff]
      %v1841 = vld [vmem:[#allocation3 + $0x114] sm:$0xff]
      %v1842 = vld [vmem:[#allocation3 + $0x11c] sm:$0xf]
      %v1843 = vld [vmem:[#allocation3 + $0x120] sm:$0xff]
      %v1844 = vld [vmem:[#allocation3 + $0x128] sm:$0xff]
      %v1845 = vld [vmem:[#allocation3 + $0x130] sm:$0xff]
      %v1846 = vld [vmem:[#allocation3 + $0x138] sm:$0xff]
      %v1847 = vld [vmem:[#allocation3 + $0x140] sm:$0xf]
      %v1848 = vld [vmem:[#allocation3 + $0x144] sm:$0xff]
      %v1849 = vld [vmem:[#allocation3 + $0x14c] sm:$0xff]
      %v1850 = vld [vmem:[#allocation3 + $0x154] sm:$0xff]
      %v1851 = vld [vmem:[#allocation3 + $0x15c] sm:$0xff]
      %v1852 = vld [vmem:[#allocation3 + $0x164] sm:$0xf]
      %v1853 = vld [vmem:[#allocation3 + $0x168] sm:$0xff]
      %v1854 = vld [vmem:[#allocation3 + $0x170] sm:$0xff]
      %v1855 = vld [vmem:[#allocation3 + $0x178] sm:$0xff]
      %v1856 = vld [vmem:[#allocation3 + $0x180] sm:$0xff]
      %v1857 = vld [vmem:[#allocation3 + $0x188] sm:$0xf]
      %v1858 = vld [vmem:[#allocation3 + $0x18c] sm:$0xff]
      %v1859 = vld [vmem:[#allocation3 + $0x194] sm:$0xff]
      %v1860 = vld [vmem:[#allocation3 + $0x19c] sm:$0xff]
      %v1861 = vld [vmem:[#allocation3 + $0x1a4] sm:$0xff]
      %v1862 = vld [vmem:[#allocation3 + $0x1ac] sm:$0xf]
      %v1863 = vld [vmem:[#allocation3 + $0x1b0] sm:$0xff]
      %v1864 = vld [vmem:[#allocation3 + $0x1b8] sm:$0xff]
      %v1865 = vld [vmem:[#allocation3 + $0x1c0] sm:$0xff]
      %v1866 = vld [vmem:[#allocation3 + $0x1c8] sm:$0xff]
      %v1867 = vld [vmem:[#allocation3 + $0x1d0] sm:$0xf]
      %v1868 = vld [vmem:[#allocation3 + $0x1d4] sm:$0xff]
      %v1869 = vld [vmem:[#allocation3 + $0x1dc] sm:$0xff]
      %v1870 = vld [vmem:[#allocation3 + $0x1e4] sm:$0xff]
      %v1871 = vld [vmem:[#allocation3 + $0x1ec] sm:$0xff]
      %v1872 = vld [vmem:[#allocation3 + $0x1f4] sm:$0xf]
      %v1873 = vld [vmem:[#allocation3 + $0x1f8] sm:$0xff]
      %v1874 = vld [vmem:[#allocation3 + $0x200] sm:$0xff]
      %v1875 = vld [vmem:[#allocation3 + $0x208] sm:$0xff]
      %v1876 = vld [vmem:[#allocation3 + $0x210] sm:$0xff]
      %v1877 = vld [vmem:[#allocation3 + $0x218] sm:$0xf]
      %v1878 = vld [vmem:[#allocation3 + $0x21c] sm:$0xff]
      %v1879 = vld [vmem:[#allocation3 + $0x224] sm:$0xff]
      %v1880 = vld [vmem:[#allocation3 + $0x22c] sm:$0xff]
      %v1881 = vld [vmem:[#allocation3 + $0x234] sm:$0xff]
      %v1882 = vld [vmem:[#allocation3 + $0x23c] sm:$0xf]
      %v1883 = vld [vmem:[#allocation3 + $0x240] sm:$0xff]
      %v1884 = vld [vmem:[#allocation3 + $0x248] sm:$0xff]
      %v1885 = vld [vmem:[#allocation3 + $0x250] sm:$0xff]
      %v1886 = vld [vmem:[#allocation3 + $0x258] sm:$0xff]
      %v1887 = vld [vmem:[#allocation3 + $0x260] sm:$0xf]
      %v1888 = vld [vmem:[#allocation3 + $0x264] sm:$0xff]
      %v1889 = vld [vmem:[#allocation3 + $0x26c] sm:$0xff]
      %v1890 = vld [vmem:[#allocation3 + $0x274] sm:$0xff]
      %v1891 = vld [vmem:[#allocation3 + $0x27c] sm:$0xff]
      %v1892 = vld [vmem:[#allocation3 + $0x284] sm:$0xf]
      %v1893 = vld [vmem:[#allocation3 + $0x288] sm:$0xff]
      %v1894 = vld [vmem:[#allocation3 + $0x290] sm:$0xff]
      %v1895 = vld [vmem:[#allocation3 + $0x298] sm:$0xff]
      %v1896 = vld [vmem:[#allocation3 + $0x2a0] sm:$0xff]
      %v1897 = vld [vmem:[#allocation3 + $0x2a8] sm:$0xf]
      %v1898 = vld [vmem:[#allocation3 + $0x2ac] sm:$0xff]
      %v1899 = vld [vmem:[#allocation3 + $0x2b4] sm:$0xff]
      %v1900 = vld [vmem:[#allocation3 + $0x2bc] sm:$0xff]
      %v1901 = vld [vmem:[#allocation3 + $0x2c4] sm:$0xff]
      %v1902 = vld [vmem:[#allocation3 + $0x2cc] sm:$0xf]
      %v1903 = vld [vmem:[#allocation3 + $0x2d0] sm:$0xff]
      %v1904 = vld [vmem:[#allocation3 + $0x2d8] sm:$0xff]
      %v1905 = vld [vmem:[#allocation3 + $0x2e0] sm:$0xff]
      %v1906 = vld [vmem:[#allocation3 + $0x2e8] sm:$0xff]
      %v1907 = vld [vmem:[#allocation3 + $0x2f0] sm:$0xf]
      %v1908 = vld [vmem:[#allocation3 + $0x2f4] sm:$0xff]
      %v1909 = vld [vmem:[#allocation3 + $0x2fc] sm:$0xff]
      %v1910 = vld [vmem:[#allocation3 + $0x304] sm:$0xff]
      %v1911 = vld [vmem:[#allocation3 + $0x30c] sm:$0xff]
      %v1912 = vld [vmem:[#allocation3 + $0x314] sm:$0xf]
      %v1913 = vld [vmem:[#allocation3 + $0x318] sm:$0xff]
      %v1914 = vld [vmem:[#allocation3 + $0x320] sm:$0xff]
      %v1915 = vld [vmem:[#allocation3 + $0x328] sm:$0xff]
      %v1916 = vld [vmem:[#allocation3 + $0x330] sm:$0xff]
      %v1917 = vld [vmem:[#allocation3 + $0x338] sm:$0xf]
      %v1918 = vld [vmem:[#allocation3 + $0x33c] sm:$0xff]
      %v1919 = vld [vmem:[#allocation3 + $0x344] sm:$0xff]
      %v1920 = vld [vmem:[#allocation3 + $0x34c] sm:$0xff]
      %v1921 = vld [vmem:[#allocation3 + $0x354] sm:$0xff]
      %v1922 = vld [vmem:[#allocation3 + $0x35c] sm:$0xf]
      %v1923 = vld [vmem:[#allocation3 + $0x360] sm:$0xff]
      %v1924 = vld [vmem:[#allocation3 + $0x368] sm:$0xff]
      %v1925 = vld [vmem:[#allocation3 + $0x370] sm:$0xff]
      %v1926 = vld [vmem:[#allocation3 + $0x378] sm:$0xff]
      %v1927 = vld [vmem:[#allocation3 + $0x380] sm:$0xf]
      %v1928 = vld [vmem:[#allocation3 + $0x384] sm:$0xff]
      %v1929 = vld [vmem:[#allocation3 + $0x38c] sm:$0xff]
      %v1930 = vld [vmem:[#allocation3 + $0x394] sm:$0xff]
      %v1931 = vld [vmem:[#allocation3 + $0x39c] sm:$0xff]
      %v1932 = vld [vmem:[#allocation3 + $0x3a4] sm:$0xf]
      %v1933 = vld [vmem:[#allocation3 + $0x3a8] sm:$0xff]
      %v1934 = vld [vmem:[#allocation3 + $0x3b0] sm:$0xff]
      %v1935 = vld [vmem:[#allocation3 + $0x3b8] sm:$0xff]
      %v1936 = vld [vmem:[#allocation3 + $0x3c0] sm:$0xff]
      %v1937 = vld [vmem:[#allocation3 + $0x3c8] sm:$0xf]
      %v1938 = vld [vmem:[#allocation3 + $0x3cc] sm:$0xff]
      %v1939 = vld [vmem:[#allocation3 + $0x3d4] sm:$0xff]
      %v1940 = vld [vmem:[#allocation3 + $0x3dc] sm:$0xff]
      %v1941 = vld [vmem:[#allocation3 + $0x3e4] sm:$0xff]
      %v1942 = vld [vmem:[#allocation3 + $0x3ec] sm:$0xf]
      %v1943 = vld [vmem:[#allocation3 + $0x3f0] sm:$0xff]
      %v1944 = vld [vmem:[#allocation3 + $0x3f8] sm:$0xff]
      %v1945 = vld [vmem:[#allocation3 + $0x400] sm:$0xff]
      %v1946 = vld [vmem:[#allocation3 + $0x408] sm:$0xff]
      %v1947 = vld [vmem:[#allocation3 + $0x410] sm:$0xf]
      %v1948 = vld [vmem:[#allocation3 + $0x414] sm:$0xff]
      %v1949 = vld [vmem:[#allocation3 + $0x41c] sm:$0xff]
      %v1950 = vld [vmem:[#allocation3 + $0x424] sm:$0xff]
      %v1951 = vld [vmem:[#allocation3 + $0x42c] sm:$0xff]
      %v1952 = vld [vmem:[#allocation3 + $0x434] sm:$0xf]
      %v1953 = vld [vmem:[#allocation3 + $0x438] sm:$0xff]
      %v1954 = vld [vmem:[#allocation3 + $0x440] sm:$0xff]
      %v1955 = vld [vmem:[#allocation3 + $0x448] sm:$0xff]
      %v1956 = vld [vmem:[#allocation3 + $0x450] sm:$0xff]
      %v1957 = vld [vmem:[#allocation3 + $0x458] sm:$0xf]
      %v1958 = vld [vmem:[#allocation3 + $0x45c] sm:$0xff]
      %v1959 = vld [vmem:[#allocation3 + $0x464] sm:$0xff]
      %v1960 = vld [vmem:[#allocation3 + $0x46c] sm:$0xff]
      %v1961 = vld [vmem:[#allocation3 + $0x474] sm:$0xff]
      %v1962 = vld [vmem:[#allocation3 + $0x47c] sm:$0xf]
      %v1963 = vld [vmem:[%s222] sm:$0xf]
      %v1964 = vld [vmem:[%s222 + $0x4] sm:$0xf]
      %v1965 = vld [vmem:[%s222 + $0x8] sm:$0xf]
      %v1966 = vld [vmem:[%s222 + $0xc] sm:$0xf]
      %v1967 = vld [vmem:[%s222 + $0x10] sm:$0xf]
      %v1968 = vld [vmem:[%s222 + $0x14] sm:$0xf]
      %v1969 = vld [vmem:[%s222 + $0x18] sm:$0xf]
      %v1970 = vld [vmem:[%s222 + $0x1c] sm:$0xf]
      %v1971 = vld [vmem:[%s222 + $0x20] sm:$0xf]
      %v1972 = vld [vmem:[%s222 + $0x24] sm:$0xf]
      %v1973 = vld [vmem:[%s222 + $0x28] sm:$0xf]
      %v1974 = vld [vmem:[%s222 + $0x2c] sm:$0xf]
      %v1975 = vld [vmem:[%s222 + $0x30] sm:$0xf]
      %v1976 = vld [vmem:[%s222 + $0x34] sm:$0xf]
      %v1977 = vld [vmem:[%s222 + $0x38] sm:$0xf]
      %v1978 = vld [vmem:[%s222 + $0x3c] sm:$0xf]
      %v1979 = vld [vmem:[%s222 + $0x40] sm:$0xf]
      %v1980 = vld [vmem:[%s222 + $0x44] sm:$0xf]
      %v1981 = vld [vmem:[%s222 + $0x48] sm:$0xf]
      %v1982 = vld [vmem:[%s222 + $0x4c] sm:$0xf]
      %v1983 = vld [vmem:[%s222 + $0x50] sm:$0xf]
      %v1984 = vld [vmem:[%s222 + $0x54] sm:$0xf]
      %v1985 = vld [vmem:[%s222 + $0x58] sm:$0xf]
      %v1986 = vld [vmem:[%s222 + $0x5c] sm:$0xf]
      %v1987 = vld [vmem:[%s222 + $0x60] sm:$0xf]
      %v1988 = vld [vmem:[%s222 + $0x64] sm:$0xf]
      %v1989 = vld [vmem:[%s222 + $0x68] sm:$0xf]
      %v1990 = vld [vmem:[%s222 + $0x6c] sm:$0xf]
      %v1991 = vld [vmem:[%s222 + $0x70] sm:$0xf]
      %v1992 = vld [vmem:[%s222 + $0x74] sm:$0xf]
      %v1993 = vld [vmem:[%s222 + $0x78] sm:$0xf]
      %v1994 = vld [vmem:[%s222 + $0x7c] sm:$0xf]
      %v1995 = vld [vmem:[%s222 + $0x80] sm:$0xf]
      %v1996 = vld [vmem:[%s222 + $0x84] sm:$0xf]
      %v1997 = vld [vmem:[%s222 + $0x88] sm:$0xf]
      %v1998 = vld [vmem:[%s222 + $0x8c] sm:$0xf]
      %v1999 = vld [vmem:[%s222 + $0x90] sm:$0xf]
      %v2000 = vld [vmem:[%s222 + $0x94] sm:$0xf]
      %v2001 = vld [vmem:[%s222 + $0x98] sm:$0xf]
      %v2002 = vld [vmem:[%s222 + $0x9c] sm:$0xf]
      %v2003 = vld [vmem:[%s222 + $0xa0] sm:$0xf]
      %v2004 = vld [vmem:[%s222 + $0xa4] sm:$0xf]
      %v2005 = vld [vmem:[%s222 + $0xa8] sm:$0xf]
      %v2006 = vld [vmem:[%s222 + $0xac] sm:$0xf]
      %v2007 = vld [vmem:[%s222 + $0xb0] sm:$0xf]
      %v2008 = vld [vmem:[%s222 + $0xb4] sm:$0xf]
      %v2009 = vld [vmem:[%s222 + $0xb8] sm:$0xf]
      %v2010 = vld [vmem:[%s222 + $0xbc] sm:$0xf]
      %v2011 = vld [vmem:[%s222 + $0xc0] sm:$0xf]
      %v2012 = vld [vmem:[%s222 + $0xc4] sm:$0xf]
      %v2013 = vld [vmem:[%s222 + $0xc8] sm:$0xf]
      %v2014 = vld [vmem:[%s222 + $0xcc] sm:$0xf]
      %v2015 = vld [vmem:[%s222 + $0xd0] sm:$0xf]
      %v2016 = vld [vmem:[%s222 + $0xd4] sm:$0xf]
      %v2017 = vld [vmem:[%s222 + $0xd8] sm:$0xf]
      %v2018 = vld [vmem:[%s222 + $0xdc] sm:$0xf]
      %v2019 = vld [vmem:[%s222 + $0xe0] sm:$0xf]
      %v2020 = vld [vmem:[%s222 + $0xe4] sm:$0xf]
      %v2021 = vld [vmem:[%s222 + $0xe8] sm:$0xf]
      %v2022 = vld [vmem:[%s222 + $0xec] sm:$0xf]
      %v2023 = vld [vmem:[%s222 + $0xf0] sm:$0xf]
      %v2024 = vld [vmem:[%s222 + $0xf4] sm:$0xf]
      %v2025 = vld [vmem:[%s222 + $0xf8] sm:$0xf]
      %v2026 = vld [vmem:[%s222 + $0xfc] sm:$0xf]
      %v2027 = vld [vmem:[%s222 + $0x100] sm:$0xf]
      %v2028 = vld [vmem:[%s222 + $0x104] sm:$0xf]
      %v2029 = vld [vmem:[%s222 + $0x108] sm:$0xf]
      %v2030 = vld [vmem:[%s222 + $0x10c] sm:$0xf]
      %v2031 = vld [vmem:[%s222 + $0x110] sm:$0xf]
      %v2032 = vld [vmem:[%s222 + $0x114] sm:$0xf]
      %v2033 = vld [vmem:[%s222 + $0x118] sm:$0xf]
      %v2034 = vld [vmem:[%s222 + $0x11c] sm:$0xf]
      %v2035 = vld [vmem:[%s222 + $0x120] sm:$0xf]
      %v2036 = vld [vmem:[%s222 + $0x124] sm:$0xf]
      %v2037 = vld [vmem:[%s222 + $0x128] sm:$0xf]
      %v2038 = vld [vmem:[%s222 + $0x12c] sm:$0xf]
      %v2039 = vld [vmem:[%s222 + $0x130] sm:$0xf]
      %v2040 = vld [vmem:[%s222 + $0x134] sm:$0xf]
      %v2041 = vld [vmem:[%s222 + $0x138] sm:$0xf]
      %v2042 = vld [vmem:[%s222 + $0x13c] sm:$0xf]
      %v2043 = vld [vmem:[%s222 + $0x140] sm:$0xf]
      %v2044 = vld [vmem:[%s222 + $0x144] sm:$0xf]
      %v2045 = vld [vmem:[%s222 + $0x148] sm:$0xf]
      %v2046 = vld [vmem:[%s222 + $0x14c] sm:$0xf]
      %v2047 = vld [vmem:[%s222 + $0x150] sm:$0xf]
      %v2048 = vld [vmem:[%s222 + $0x154] sm:$0xf]
      %v2049 = vld [vmem:[%s222 + $0x158] sm:$0xf]
      %v2050 = vld [vmem:[%s222 + $0x15c] sm:$0xf]
      %v2051 = vld [vmem:[%s222 + $0x160] sm:$0xf]
      %v2052 = vld [vmem:[%s222 + $0x164] sm:$0xf]
      %v2053 = vld [vmem:[%s222 + $0x168] sm:$0xf]
      %v2054 = vld [vmem:[%s222 + $0x16c] sm:$0xf]
      %v2055 = vld [vmem:[%s222 + $0x170] sm:$0xf]
      %v2056 = vld [vmem:[%s222 + $0x174] sm:$0xf]
      %v2057 = vld [vmem:[%s222 + $0x178] sm:$0xf]
      %v2058 = vld [vmem:[%s222 + $0x17c] sm:$0xf]
      %v2059 = vld [vmem:[%s222 + $0x180] sm:$0xf]
      %v2060 = vld [vmem:[%s222 + $0x184] sm:$0xf]
      %v2061 = vld [vmem:[%s222 + $0x188] sm:$0xf]
      %v2062 = vld [vmem:[%s222 + $0x18c] sm:$0xf]
      %v2063 = vld [vmem:[%s222 + $0x190] sm:$0xf]
      %v2064 = vld [vmem:[%s222 + $0x194] sm:$0xf]
      %v2065 = vld [vmem:[%s222 + $0x198] sm:$0xf]
      %v2066 = vld [vmem:[%s222 + $0x19c] sm:$0xf]
      %v2067 = vld [vmem:[%s222 + $0x1a0] sm:$0xf]
      %v2068 = vld [vmem:[%s222 + $0x1a4] sm:$0xf]
      %v2069 = vld [vmem:[%s222 + $0x1a8] sm:$0xf]
      %v2070 = vld [vmem:[%s222 + $0x1ac] sm:$0xf]
      %v2071 = vld [vmem:[%s222 + $0x1b0] sm:$0xf]
      %v2072 = vld [vmem:[%s222 + $0x1b4] sm:$0xf]
      %v2073 = vld [vmem:[%s222 + $0x1b8] sm:$0xf]
      %v2074 = vld [vmem:[%s222 + $0x1bc] sm:$0xf]
      %v2075 = vld [vmem:[%s222 + $0x1c0] sm:$0xf]
      %v2076 = vld [vmem:[%s222 + $0x1c4] sm:$0xf]
      %v2077 = vld [vmem:[%s222 + $0x1c8] sm:$0xf]
      %v2078 = vld [vmem:[%s222 + $0x1cc] sm:$0xf]
      %v2079 = vld [vmem:[%s222 + $0x1d0] sm:$0xf]
      %v2080 = vld [vmem:[%s222 + $0x1d4] sm:$0xf]
      %v2081 = vld [vmem:[%s222 + $0x1d8] sm:$0xf]
      %v2082 = vld [vmem:[%s222 + $0x1dc] sm:$0xf]
      %v2083 = vld [vmem:[%s222 + $0x1e0] sm:$0xf]
      %v2084 = vld [vmem:[%s222 + $0x1e4] sm:$0xf]
      %v2085 = vld [vmem:[%s222 + $0x1e8] sm:$0xf]
      %v2086 = vld [vmem:[%s222 + $0x1ec] sm:$0xf]
      %v2087 = vld [vmem:[%s222 + $0x1f0] sm:$0xf]
      %v2088 = vld [vmem:[%s222 + $0x1f4] sm:$0xf]
      %v2089 = vld [vmem:[%s222 + $0x1f8] sm:$0xf]
      %v2090 = vld [vmem:[%s222 + $0x1fc] sm:$0xf]
      %v2091 = vld [vmem:[%s222 + $0x200] sm:$0xf]
      %v2092 = vld [vmem:[%s222 + $0x204] sm:$0xf]
      %v2093 = vld [vmem:[%s222 + $0x208] sm:$0xf]
      %v2094 = vld [vmem:[%s222 + $0x20c] sm:$0xf]
      %v2095 = vld [vmem:[%s222 + $0x210] sm:$0xf]
      %v2096 = vld [vmem:[%s222 + $0x214] sm:$0xf]
      %v2097 = vld [vmem:[%s222 + $0x218] sm:$0xf]
      %v2098 = vld [vmem:[%s222 + $0x21c] sm:$0xf]
      %v2099 = vld [vmem:[%s222 + $0x220] sm:$0xf]
      %v2100 = vld [vmem:[%s222 + $0x224] sm:$0xf]
      %v2101 = vld [vmem:[%s222 + $0x228] sm:$0xf]
      %v2102 = vld [vmem:[%s222 + $0x22c] sm:$0xf]
      %v2103 = vld [vmem:[%s222 + $0x230] sm:$0xf]
      %v2104 = vld [vmem:[%s222 + $0x234] sm:$0xf]
      %v2105 = vld [vmem:[%s222 + $0x238] sm:$0xf]
      %v2106 = vld [vmem:[%s222 + $0x23c] sm:$0xf]
      %v2267 = vunpack.c.l.b16 %v1803
      %v2268 = vunpack.c.h.b16 %v1803
      %v2269 = vunpack.c.l.b16 %v1804
      %v2270 = vunpack.c.h.b16 %v1804
      %v2271 = vunpack.c.l.b16 %v1805
      %v2272 = vunpack.c.h.b16 %v1805
      %v2273 = vunpack.c.l.b16 %v1806
      %v2274 = vunpack.c.h.b16 %v1806
      %v2275 = vunpack.c.l.b16 %v1807
      %v2276 = vunpack.c.l.b16 %v1808
      %v2277 = vunpack.c.h.b16 %v1808
      %v2278 = vunpack.c.l.b16 %v1809
      %v2279 = vunpack.c.h.b16 %v1809
      %v2280 = vunpack.c.l.b16 %v1810
      %v2281 = vunpack.c.h.b16 %v1810
      %v2282 = vunpack.c.l.b16 %v1811
      %v2283 = vunpack.c.h.b16 %v1811
      %v2284 = vunpack.c.l.b16 %v1812
      %v2285 = vunpack.c.l.b16 %v1813
      %v2286 = vunpack.c.h.b16 %v1813
      %v2287 = vunpack.c.l.b16 %v1814
      %v2288 = vunpack.c.h.b16 %v1814
      %v2289 = vunpack.c.l.b16 %v1815
      %v2290 = vunpack.c.h.b16 %v1815
      %v2291 = vunpack.c.l.b16 %v1816
      %v2292 = vunpack.c.h.b16 %v1816
      %v2293 = vunpack.c.l.b16 %v1817
      %v2294 = vunpack.c.l.b16 %v1818
      %v2295 = vunpack.c.h.b16 %v1818
      %v2296 = vunpack.c.l.b16 %v1819
      %v2297 = vunpack.c.h.b16 %v1819
      %v2298 = vunpack.c.l.b16 %v1820
      %v2299 = vunpack.c.h.b16 %v1820
      %v2300 = vunpack.c.l.b16 %v1821
      %v2301 = vunpack.c.h.b16 %v1821
      %v2302 = vunpack.c.l.b16 %v1822
      %v2303 = vunpack.c.l.b16 %v1823
      %v2304 = vunpack.c.h.b16 %v1823
      %v2305 = vunpack.c.l.b16 %v1824
      %v2306 = vunpack.c.h.b16 %v1824
      %v2307 = vunpack.c.l.b16 %v1825
      %v2308 = vunpack.c.h.b16 %v1825
      %v2309 = vunpack.c.l.b16 %v1826
      %v2310 = vunpack.c.h.b16 %v1826
      %v2311 = vunpack.c.l.b16 %v1827
      %v2312 = vunpack.c.l.b16 %v1828
      %v2313 = vunpack.c.h.b16 %v1828
      %v2314 = vunpack.c.l.b16 %v1829
      %v2315 = vunpack.c.h.b16 %v1829
      %v2316 = vunpack.c.l.b16 %v1830
      %v2317 = vunpack.c.h.b16 %v1830
      %v2318 = vunpack.c.l.b16 %v1831
      %v2319 = vunpack.c.h.b16 %v1831
      %v2320 = vunpack.c.l.b16 %v1832
      %v2321 = vunpack.c.l.b16 %v1833
      %v2322 = vunpack.c.h.b16 %v1833
      %v2323 = vunpack.c.l.b16 %v1834
      %v2324 = vunpack.c.h.b16 %v1834
      %v2325 = vunpack.c.l.b16 %v1835
      %v2326 = vunpack.c.h.b16 %v1835
      %v2327 = vunpack.c.l.b16 %v1836
      %v2328 = vunpack.c.h.b16 %v1836
      %v2329 = vunpack.c.l.b16 %v1837
      %v2330 = vunpack.c.l.b16 %v1838
      %v2331 = vunpack.c.h.b16 %v1838
      %v2332 = vunpack.c.l.b16 %v1839
      %v2333 = vunpack.c.h.b16 %v1839
      %v2334 = vunpack.c.l.b16 %v1840
      %v2335 = vunpack.c.h.b16 %v1840
      %v2336 = vunpack.c.l.b16 %v1841
      %v2337 = vunpack.c.h.b16 %v1841
      %v2338 = vunpack.c.l.b16 %v1842
      %v2339 = vunpack.c.l.b16 %v1843
      %v2340 = vunpack.c.h.b16 %v1843
      %v2341 = vunpack.c.l.b16 %v1844
      %v2342 = vunpack.c.h.b16 %v1844
      %v2343 = vunpack.c.l.b16 %v1845
      %v2344 = vunpack.c.h.b16 %v1845
      %v2345 = vunpack.c.l.b16 %v1846
      %v2346 = vunpack.c.h.b16 %v1846
      %v2347 = vunpack.c.l.b16 %v1847
      %v2348 = vunpack.c.l.b16 %v1848
      %v2349 = vunpack.c.h.b16 %v1848
      %v2350 = vunpack.c.l.b16 %v1849
      %v2351 = vunpack.c.h.b16 %v1849
      %v2352 = vunpack.c.l.b16 %v1850
      %v2353 = vunpack.c.h.b16 %v1850
      %v2354 = vunpack.c.l.b16 %v1851
      %v2355 = vunpack.c.h.b16 %v1851
      %v2356 = vunpack.c.l.b16 %v1852
      %v2357 = vunpack.c.l.b16 %v1853
      %v2358 = vunpack.c.h.b16 %v1853
      %v2359 = vunpack.c.l.b16 %v1854
      %v2360 = vunpack.c.h.b16 %v1854
      %v2361 = vunpack.c.l.b16 %v1855
      %v2362 = vunpack.c.h.b16 %v1855
      %v2363 = vunpack.c.l.b16 %v1856
      %v2364 = vunpack.c.h.b16 %v1856
      %v2365 = vunpack.c.l.b16 %v1857
      %v2366 = vunpack.c.l.b16 %v1858
      %v2367 = vunpack.c.h.b16 %v1858
      %v2368 = vunpack.c.l.b16 %v1859
      %v2369 = vunpack.c.h.b16 %v1859
      %v2370 = vunpack.c.l.b16 %v1860
      %v2371 = vunpack.c.h.b16 %v1860
      %v2372 = vunpack.c.l.b16 %v1861
      %v2373 = vunpack.c.h.b16 %v1861
      %v2374 = vunpack.c.l.b16 %v1862
      %v2375 = vunpack.c.l.b16 %v1863
      %v2376 = vunpack.c.h.b16 %v1863
      %v2377 = vunpack.c.l.b16 %v1864
      %v2378 = vunpack.c.h.b16 %v1864
      %v2379 = vunpack.c.l.b16 %v1865
      %v2380 = vunpack.c.h.b16 %v1865
      %v2381 = vunpack.c.l.b16 %v1866
      %v2382 = vunpack.c.h.b16 %v1866
      %v2383 = vunpack.c.l.b16 %v1867
      %v2384 = vunpack.c.l.b16 %v1868
      %v2385 = vunpack.c.h.b16 %v1868
      %v2386 = vunpack.c.l.b16 %v1869
      %v2387 = vunpack.c.h.b16 %v1869
      %v2388 = vunpack.c.l.b16 %v1870
      %v2389 = vunpack.c.h.b16 %v1870
      %v2390 = vunpack.c.l.b16 %v1871
      %v2391 = vunpack.c.h.b16 %v1871
      %v2392 = vunpack.c.l.b16 %v1872
      %v2393 = vunpack.c.l.b16 %v1873
      %v2394 = vunpack.c.h.b16 %v1873
      %v2395 = vunpack.c.l.b16 %v1874
      %v2396 = vunpack.c.h.b16 %v1874
      %v2397 = vunpack.c.l.b16 %v1875
      %v2398 = vunpack.c.h.b16 %v1875
      %v2399 = vunpack.c.l.b16 %v1876
      %v2400 = vunpack.c.h.b16 %v1876
      %v2401 = vunpack.c.l.b16 %v1877
      %v2402 = vunpack.c.l.b16 %v1878
      %v2403 = vunpack.c.h.b16 %v1878
      %v2404 = vunpack.c.l.b16 %v1879
      %v2405 = vunpack.c.h.b16 %v1879
      %v2406 = vunpack.c.l.b16 %v1880
      %v2407 = vunpack.c.h.b16 %v1880
      %v2408 = vunpack.c.l.b16 %v1881
      %v2409 = vunpack.c.h.b16 %v1881
      %v2410 = vunpack.c.l.b16 %v1882
      %v2411 = vunpack.c.l.b16 %v1883
      %v2412 = vunpack.c.h.b16 %v1883
      %v2413 = vunpack.c.l.b16 %v1884
      %v2414 = vunpack.c.h.b16 %v1884
      %v2415 = vunpack.c.l.b16 %v1885
      %v2416 = vunpack.c.h.b16 %v1885
      %v2417 = vunpack.c.l.b16 %v1886
      %v2418 = vunpack.c.h.b16 %v1886
      %v2419 = vunpack.c.l.b16 %v1887
      %v2420 = vunpack.c.l.b16 %v1888
      %v2421 = vunpack.c.h.b16 %v1888
      %v2422 = vunpack.c.l.b16 %v1889
      %v2423 = vunpack.c.h.b16 %v1889
      %v2424 = vunpack.c.l.b16 %v1890
      %v2425 = vunpack.c.h.b16 %v1890
      %v2426 = vunpack.c.l.b16 %v1891
      %v2427 = vunpack.c.h.b16 %v1891
      %v2428 = vunpack.c.l.b16 %v1892
      %v2429 = vunpack.c.l.b16 %v1893
      %v2430 = vunpack.c.h.b16 %v1893
      %v2431 = vunpack.c.l.b16 %v1894
      %v2432 = vunpack.c.h.b16 %v1894
      %v2433 = vunpack.c.l.b16 %v1895
      %v2434 = vunpack.c.h.b16 %v1895
      %v2435 = vunpack.c.l.b16 %v1896
      %v2436 = vunpack.c.h.b16 %v1896
      %v2437 = vunpack.c.l.b16 %v1897
      %v2438 = vunpack.c.l.b16 %v1898
      %v2439 = vunpack.c.h.b16 %v1898
      %v2440 = vunpack.c.l.b16 %v1899
      %v2441 = vunpack.c.h.b16 %v1899
      %v2442 = vunpack.c.l.b16 %v1900
      %v2443 = vunpack.c.h.b16 %v1900
      %v2444 = vunpack.c.l.b16 %v1901
      %v2445 = vunpack.c.h.b16 %v1901
      %v2446 = vunpack.c.l.b16 %v1902
      %v2447 = vunpack.c.l.b16 %v1903
      %v2448 = vunpack.c.h.b16 %v1903
      %v2449 = vunpack.c.l.b16 %v1904
      %v2450 = vunpack.c.h.b16 %v1904
      %v2451 = vunpack.c.l.b16 %v1905
      %v2452 = vunpack.c.h.b16 %v1905
      %v2453 = vunpack.c.l.b16 %v1906
      %v2454 = vunpack.c.h.b16 %v1906
      %v2455 = vunpack.c.l.b16 %v1907
      %v2456 = vunpack.c.l.b16 %v1908
      %v2457 = vunpack.c.h.b16 %v1908
      %v2458 = vunpack.c.l.b16 %v1909
      %v2459 = vunpack.c.h.b16 %v1909
      %v2460 = vunpack.c.l.b16 %v1910
      %v2461 = vunpack.c.h.b16 %v1910
      %v2462 = vunpack.c.l.b16 %v1911
      %v2463 = vunpack.c.h.b16 %v1911
      %v2464 = vunpack.c.l.b16 %v1912
      %v2465 = vunpack.c.l.b16 %v1913
      %v2466 = vunpack.c.h.b16 %v1913
      %v2467 = vunpack.c.l.b16 %v1914
      %v2468 = vunpack.c.h.b16 %v1914
      %v2469 = vunpack.c.l.b16 %v1915
      %v2470 = vunpack.c.h.b16 %v1915
      %v2471 = vunpack.c.l.b16 %v1916
      %v2472 = vunpack.c.h.b16 %v1916
      %v2473 = vunpack.c.l.b16 %v1917
      %v2474 = vunpack.c.l.b16 %v1918
      %v2475 = vunpack.c.h.b16 %v1918
      %v2476 = vunpack.c.l.b16 %v1919
      %v2477 = vunpack.c.h.b16 %v1919
      %v2478 = vunpack.c.l.b16 %v1920
      %v2479 = vunpack.c.h.b16 %v1920
      %v2480 = vunpack.c.l.b16 %v1921
      %v2481 = vunpack.c.h.b16 %v1921
      %v2482 = vunpack.c.l.b16 %v1922
      %v2483 = vunpack.c.l.b16 %v1923
      %v2484 = vunpack.c.h.b16 %v1923
      %v2485 = vunpack.c.l.b16 %v1924
      %v2486 = vunpack.c.h.b16 %v1924
      %v2487 = vunpack.c.l.b16 %v1925
      %v2488 = vunpack.c.h.b16 %v1925
      %v2489 = vunpack.c.l.b16 %v1926
      %v2490 = vunpack.c.h.b16 %v1926
      %v2491 = vunpack.c.l.b16 %v1927
      %v2492 = vunpack.c.l.b16 %v1928
      %v2493 = vunpack.c.h.b16 %v1928
      %v2494 = vunpack.c.l.b16 %v1929
      %v2495 = vunpack.c.h.b16 %v1929
      %v2496 = vunpack.c.l.b16 %v1930
      %v2497 = vunpack.c.h.b16 %v1930
      %v2498 = vunpack.c.l.b16 %v1931
      %v2499 = vunpack.c.h.b16 %v1931
      %v2500 = vunpack.c.l.b16 %v1932
      %v2501 = vunpack.c.l.b16 %v1933
      %v2502 = vunpack.c.h.b16 %v1933
      %v2503 = vunpack.c.l.b16 %v1934
      %v2504 = vunpack.c.h.b16 %v1934
      %v2505 = vunpack.c.l.b16 %v1935
      %v2506 = vunpack.c.h.b16 %v1935
      %v2507 = vunpack.c.l.b16 %v1936
      %v2508 = vunpack.c.h.b16 %v1936
      %v2509 = vunpack.c.l.b16 %v1937
      %v2510 = vunpack.c.l.b16 %v1938
      %v2511 = vunpack.c.h.b16 %v1938
      %v2512 = vunpack.c.l.b16 %v1939
      %v2513 = vunpack.c.h.b16 %v1939
      %v2514 = vunpack.c.l.b16 %v1940
      %v2515 = vunpack.c.h.b16 %v1940
      %v2516 = vunpack.c.l.b16 %v1941
      %v2517 = vunpack.c.h.b16 %v1941
      %v2518 = vunpack.c.l.b16 %v1942
      %v2519 = vunpack.c.l.b16 %v1943
      %v2520 = vunpack.c.h.b16 %v1943
      %v2521 = vunpack.c.l.b16 %v1944
      %v2522 = vunpack.c.h.b16 %v1944
      %v2523 = vunpack.c.l.b16 %v1945
      %v2524 = vunpack.c.h.b16 %v1945
      %v2525 = vunpack.c.l.b16 %v1946
      %v2526 = vunpack.c.h.b16 %v1946
      %v2527 = vunpack.c.l.b16 %v1947
      %v2528 = vunpack.c.l.b16 %v1948
      %v2529 = vunpack.c.h.b16 %v1948
      %v2530 = vunpack.c.l.b16 %v1949
      %v2531 = vunpack.c.h.b16 %v1949
      %v2532 = vunpack.c.l.b16 %v1950
      %v2533 = vunpack.c.h.b16 %v1950
      %v2534 = vunpack.c.l.b16 %v1951
      %v2535 = vunpack.c.h.b16 %v1951
      %v2536 = vunpack.c.l.b16 %v1952
      %v2537 = vunpack.c.l.b16 %v1953
      %v2538 = vunpack.c.h.b16 %v1953
      %v2539 = vunpack.c.l.b16 %v1954
      %v2540 = vunpack.c.h.b16 %v1954
      %v2541 = vunpack.c.l.b16 %v1955
      %v2542 = vunpack.c.h.b16 %v1955
      %v2543 = vunpack.c.l.b16 %v1956
      %v2544 = vunpack.c.h.b16 %v1956
      %v2545 = vunpack.c.l.b16 %v1957
      %v2546 = vunpack.c.l.b16 %v1958
      %v2547 = vunpack.c.h.b16 %v1958
      %v2548 = vunpack.c.l.b16 %v1959
      %v2549 = vunpack.c.h.b16 %v1959
      %v2550 = vunpack.c.l.b16 %v1960
      %v2551 = vunpack.c.h.b16 %v1960
      %v2552 = vunpack.c.l.b16 %v1961
      %v2553 = vunpack.c.h.b16 %v1961
      %v2554 = vunpack.c.l.b16 %v1962
      %v2555 = vpack.c.b16 %v2276, %v2267
      %v2556 = vpack.c.b16 %v2277, %v2268
      %v2557 = vpack.c.b16 %v2278, %v2269
      %v2558 = vpack.c.b16 %v2279, %v2270
      %v2559 = vpack.c.b16 %v2280, %v2271
      %v2560 = vpack.c.b16 %v2281, %v2272
      %v2561 = vpack.c.b16 %v2282, %v2273
      %v2562 = vpack.c.b16 %v2283, %v2274
      %v2563 = vpack.c.b16 %v2284, %v2275
      %v2564 = vpack.c.b16 %v2294, %v2285
      %v2565 = vpack.c.b16 %v2295, %v2286
      %v2566 = vpack.c.b16 %v2296, %v2287
      %v2567 = vpack.c.b16 %v2297, %v2288
      %v2568 = vpack.c.b16 %v2298, %v2289
      %v2569 = vpack.c.b16 %v2299, %v2290
      %v2570 = vpack.c.b16 %v2300, %v2291
      %v2571 = vpack.c.b16 %v2301, %v2292
      %v2572 = vpack.c.b16 %v2302, %v2293
      %v2573 = vpack.c.b16 %v2312, %v2303
      %v2574 = vpack.c.b16 %v2313, %v2304
      %v2575 = vpack.c.b16 %v2314, %v2305
      %v2576 = vpack.c.b16 %v2315, %v2306
      %v2577 = vpack.c.b16 %v2316, %v2307
      %v2578 = vpack.c.b16 %v2317, %v2308
      %v2579 = vpack.c.b16 %v2318, %v2309
      %v2580 = vpack.c.b16 %v2319, %v2310
      %v2581 = vpack.c.b16 %v2320, %v2311
      %v2582 = vpack.c.b16 %v2330, %v2321
      %v2583 = vpack.c.b16 %v2331, %v2322
      %v2584 = vpack.c.b16 %v2332, %v2323
      %v2585 = vpack.c.b16 %v2333, %v2324
      %v2586 = vpack.c.b16 %v2334, %v2325
      %v2587 = vpack.c.b16 %v2335, %v2326
      %v2588 = vpack.c.b16 %v2336, %v2327
      %v2589 = vpack.c.b16 %v2337, %v2328
      %v2590 = vpack.c.b16 %v2338, %v2329
      %v2591 = vpack.c.b16 %v2348, %v2339
      %v2592 = vpack.c.b16 %v2349, %v2340
      %v2593 = vpack.c.b16 %v2350, %v2341
      %v2594 = vpack.c.b16 %v2351, %v2342
      %v2595 = vpack.c.b16 %v2352, %v2343
      %v2596 = vpack.c.b16 %v2353, %v2344
      %v2597 = vpack.c.b16 %v2354, %v2345
      %v2598 = vpack.c.b16 %v2355, %v2346
      %v2599 = vpack.c.b16 %v2356, %v2347
      %v2600 = vpack.c.b16 %v2366, %v2357
      %v2601 = vpack.c.b16 %v2367, %v2358
      %v2602 = vpack.c.b16 %v2368, %v2359
      %v2603 = vpack.c.b16 %v2369, %v2360
      %v2604 = vpack.c.b16 %v2370, %v2361
      %v2605 = vpack.c.b16 %v2371, %v2362
      %v2606 = vpack.c.b16 %v2372, %v2363
      %v2607 = vpack.c.b16 %v2373, %v2364
      %v2608 = vpack.c.b16 %v2374, %v2365
      %v2609 = vpack.c.b16 %v2384, %v2375
      %v2610 = vpack.c.b16 %v2385, %v2376
      %v2611 = vpack.c.b16 %v2386, %v2377
      %v2612 = vpack.c.b16 %v2387, %v2378
      %v2613 = vpack.c.b16 %v2388, %v2379
      %v2614 = vpack.c.b16 %v2389, %v2380
      %v2615 = vpack.c.b16 %v2390, %v2381
      %v2616 = vpack.c.b16 %v2391, %v2382
      %v2617 = vpack.c.b16 %v2392, %v2383
      %v2618 = vpack.c.b16 %v2402, %v2393
      %v2619 = vpack.c.b16 %v2403, %v2394
      %v2620 = vpack.c.b16 %v2404, %v2395
      %v2621 = vpack.c.b16 %v2405, %v2396
      %v2622 = vpack.c.b16 %v2406, %v2397
      %v2623 = vpack.c.b16 %v2407, %v2398
      %v2624 = vpack.c.b16 %v2408, %v2399
      %v2625 = vpack.c.b16 %v2409, %v2400
      %v2626 = vpack.c.b16 %v2410, %v2401
      %v2627 = vpack.c.b16 %v2420, %v2411
      %v2628 = vpack.c.b16 %v2421, %v2412
      %v2629 = vpack.c.b16 %v2422, %v2413
      %v2630 = vpack.c.b16 %v2423, %v2414
      %v2631 = vpack.c.b16 %v2424, %v2415
      %v2632 = vpack.c.b16 %v2425, %v2416
      %v2633 = vpack.c.b16 %v2426, %v2417
      %v2634 = vpack.c.b16 %v2427, %v2418
      %v2635 = vpack.c.b16 %v2428, %v2419
      %v2636 = vpack.c.b16 %v2438, %v2429
      %v2637 = vpack.c.b16 %v2439, %v2430
      %v2638 = vpack.c.b16 %v2440, %v2431
      %v2639 = vpack.c.b16 %v2441, %v2432
      %v2640 = vpack.c.b16 %v2442, %v2433
      %v2641 = vpack.c.b16 %v2443, %v2434
      %v2642 = vpack.c.b16 %v2444, %v2435
      %v2643 = vpack.c.b16 %v2445, %v2436
      %v2644 = vpack.c.b16 %v2446, %v2437
      %v2645 = vpack.c.b16 %v2456, %v2447
      %v2646 = vpack.c.b16 %v2457, %v2448
      %v2647 = vpack.c.b16 %v2458, %v2449
      %v2648 = vpack.c.b16 %v2459, %v2450
      %v2649 = vpack.c.b16 %v2460, %v2451
      %v2650 = vpack.c.b16 %v2461, %v2452
      %v2651 = vpack.c.b16 %v2462, %v2453
      %v2652 = vpack.c.b16 %v2463, %v2454
      %v2653 = vpack.c.b16 %v2464, %v2455
      %v2654 = vpack.c.b16 %v2474, %v2465
      %v2655 = vpack.c.b16 %v2475, %v2466
      %v2656 = vpack.c.b16 %v2476, %v2467
      %v2657 = vpack.c.b16 %v2477, %v2468
      %v2658 = vpack.c.b16 %v2478, %v2469
      %v2659 = vpack.c.b16 %v2479, %v2470
      %v2660 = vpack.c.b16 %v2480, %v2471
      %v2661 = vpack.c.b16 %v2481, %v2472
      %v2662 = vpack.c.b16 %v2482, %v2473
      %v2663 = vpack.c.b16 %v2492, %v2483
      %v2664 = vpack.c.b16 %v2493, %v2484
      %v2665 = vpack.c.b16 %v2494, %v2485
      %v2666 = vpack.c.b16 %v2495, %v2486
      %v2667 = vpack.c.b16 %v2496, %v2487
      %v2668 = vpack.c.b16 %v2497, %v2488
      %v2669 = vpack.c.b16 %v2498, %v2489
      %v2670 = vpack.c.b16 %v2499, %v2490
      %v2671 = vpack.c.b16 %v2500, %v2491
      %v2672 = vpack.c.b16 %v2510, %v2501
      %v2673 = vpack.c.b16 %v2511, %v2502
      %v2674 = vpack.c.b16 %v2512, %v2503
      %v2675 = vpack.c.b16 %v2513, %v2504
      %v2676 = vpack.c.b16 %v2514, %v2505
      %v2677 = vpack.c.b16 %v2515, %v2506
      %v2678 = vpack.c.b16 %v2516, %v2507
      %v2679 = vpack.c.b16 %v2517, %v2508
      %v2680 = vpack.c.b16 %v2518, %v2509
      %v2681 = vpack.c.b16 %v2528, %v2519
      %v2682 = vpack.c.b16 %v2529, %v2520
      %v2683 = vpack.c.b16 %v2530, %v2521
      %v2684 = vpack.c.b16 %v2531, %v2522
      %v2685 = vpack.c.b16 %v2532, %v2523
      %v2686 = vpack.c.b16 %v2533, %v2524
      %v2687 = vpack.c.b16 %v2534, %v2525
      %v2688 = vpack.c.b16 %v2535, %v2526
      %v2689 = vpack.c.b16 %v2536, %v2527
      %v2690 = vpack.c.b16 %v2546, %v2537
      %v2691 = vpack.c.b16 %v2547, %v2538
      %v2692 = vpack.c.b16 %v2548, %v2539
      %v2693 = vpack.c.b16 %v2549, %v2540
      %v2694 = vpack.c.b16 %v2550, %v2541
      %v2695 = vpack.c.b16 %v2551, %v2542
      %v2696 = vpack.c.b16 %v2552, %v2543
      %v2697 = vpack.c.b16 %v2553, %v2544
      %v2698 = vpack.c.b16 %v2554, %v2545
      %v2987 = vunpack.c.l.b16 %v1963
      %v2988 = vunpack.c.l.b16 %v1964
      %v2989 = vunpack.c.l.b16 %v1965
      %v2990 = vunpack.c.l.b16 %v1966
      %v2991 = vunpack.c.l.b16 %v1967
      %v2992 = vunpack.c.l.b16 %v1968
      %v2993 = vunpack.c.l.b16 %v1969
      %v2994 = vunpack.c.l.b16 %v1970
      %v2995 = vunpack.c.l.b16 %v1971
      %v2996 = vunpack.c.l.b16 %v1972
      %v2997 = vunpack.c.l.b16 %v1973
      %v2998 = vunpack.c.l.b16 %v1974
      %v2999 = vunpack.c.l.b16 %v1975
      %v3000 = vunpack.c.l.b16 %v1976
      %v3001 = vunpack.c.l.b16 %v1977
      %v3002 = vunpack.c.l.b16 %v1978
      %v3003 = vunpack.c.l.b16 %v1979
      %v3004 = vunpack.c.l.b16 %v1980
      %v3005 = vunpack.c.l.b16 %v1981
      %v3006 = vunpack.c.l.b16 %v1982
      %v3007 = vunpack.c.l.b16 %v1983
      %v3008 = vunpack.c.l.b16 %v1984
      %v3009 = vunpack.c.l.b16 %v1985
      %v3010 = vunpack.c.l.b16 %v1986
      %v3011 = vunpack.c.l.b16 %v1987
      %v3012 = vunpack.c.l.b16 %v1988
      %v3013 = vunpack.c.l.b16 %v1989
      %v3014 = vunpack.c.l.b16 %v1990
      %v3015 = vunpack.c.l.b16 %v1991
      %v3016 = vunpack.c.l.b16 %v1992
      %v3017 = vunpack.c.l.b16 %v1993
      %v3018 = vunpack.c.l.b16 %v1994
      %v3019 = vunpack.c.l.b16 %v1995
      %v3020 = vunpack.c.l.b16 %v1996
      %v3021 = vunpack.c.l.b16 %v1997
      %v3022 = vunpack.c.l.b16 %v1998
      %v3023 = vunpack.c.l.b16 %v1999
      %v3024 = vunpack.c.l.b16 %v2000
      %v3025 = vunpack.c.l.b16 %v2001
      %v3026 = vunpack.c.l.b16 %v2002
      %v3027 = vunpack.c.l.b16 %v2003
      %v3028 = vunpack.c.l.b16 %v2004
      %v3029 = vunpack.c.l.b16 %v2005
      %v3030 = vunpack.c.l.b16 %v2006
      %v3031 = vunpack.c.l.b16 %v2007
      %v3032 = vunpack.c.l.b16 %v2008
      %v3033 = vunpack.c.l.b16 %v2009
      %v3034 = vunpack.c.l.b16 %v2010
      %v3035 = vunpack.c.l.b16 %v2011
      %v3036 = vunpack.c.l.b16 %v2012
      %v3037 = vunpack.c.l.b16 %v2013
      %v3038 = vunpack.c.l.b16 %v2014
      %v3039 = vunpack.c.l.b16 %v2015
      %v3040 = vunpack.c.l.b16 %v2016
      %v3041 = vunpack.c.l.b16 %v2017
      %v3042 = vunpack.c.l.b16 %v2018
      %v3043 = vunpack.c.l.b16 %v2019
      %v3044 = vunpack.c.l.b16 %v2020
      %v3045 = vunpack.c.l.b16 %v2021
      %v3046 = vunpack.c.l.b16 %v2022
      %v3047 = vunpack.c.l.b16 %v2023
      %v3048 = vunpack.c.l.b16 %v2024
      %v3049 = vunpack.c.l.b16 %v2025
      %v3050 = vunpack.c.l.b16 %v2026
      %v3051 = vunpack.c.l.b16 %v2027
      %v3052 = vunpack.c.l.b16 %v2028
      %v3053 = vunpack.c.l.b16 %v2029
      %v3054 = vunpack.c.l.b16 %v2030
      %v3055 = vunpack.c.l.b16 %v2031
      %v3056 = vunpack.c.l.b16 %v2032
      %v3057 = vunpack.c.l.b16 %v2033
      %v3058 = vunpack.c.l.b16 %v2034
      %v3059 = vunpack.c.l.b16 %v2035
      %v3060 = vunpack.c.l.b16 %v2036
      %v3061 = vunpack.c.l.b16 %v2037
      %v3062 = vunpack.c.l.b16 %v2038
      %v3063 = vunpack.c.l.b16 %v2039
      %v3064 = vunpack.c.l.b16 %v2040
      %v3065 = vunpack.c.l.b16 %v2041
      %v3066 = vunpack.c.l.b16 %v2042
      %v3067 = vunpack.c.l.b16 %v2043
      %v3068 = vunpack.c.l.b16 %v2044
      %v3069 = vunpack.c.l.b16 %v2045
      %v3070 = vunpack.c.l.b16 %v2046
      %v3071 = vunpack.c.l.b16 %v2047
      %v3072 = vunpack.c.l.b16 %v2048
      %v3073 = vunpack.c.l.b16 %v2049
      %v3074 = vunpack.c.l.b16 %v2050
      %v3075 = vunpack.c.l.b16 %v2051
      %v3076 = vunpack.c.l.b16 %v2052
      %v3077 = vunpack.c.l.b16 %v2053
      %v3078 = vunpack.c.l.b16 %v2054
      %v3079 = vunpack.c.l.b16 %v2055
      %v3080 = vunpack.c.l.b16 %v2056
      %v3081 = vunpack.c.l.b16 %v2057
      %v3082 = vunpack.c.l.b16 %v2058
      %v3083 = vunpack.c.l.b16 %v2059
      %v3084 = vunpack.c.l.b16 %v2060
      %v3085 = vunpack.c.l.b16 %v2061
      %v3086 = vunpack.c.l.b16 %v2062
      %v3087 = vunpack.c.l.b16 %v2063
      %v3088 = vunpack.c.l.b16 %v2064
      %v3089 = vunpack.c.l.b16 %v2065
      %v3090 = vunpack.c.l.b16 %v2066
      %v3091 = vunpack.c.l.b16 %v2067
      %v3092 = vunpack.c.l.b16 %v2068
      %v3093 = vunpack.c.l.b16 %v2069
      %v3094 = vunpack.c.l.b16 %v2070
      %v3095 = vunpack.c.l.b16 %v2071
      %v3096 = vunpack.c.l.b16 %v2072
      %v3097 = vunpack.c.l.b16 %v2073
      %v3098 = vunpack.c.l.b16 %v2074
      %v3099 = vunpack.c.l.b16 %v2075
      %v3100 = vunpack.c.l.b16 %v2076
      %v3101 = vunpack.c.l.b16 %v2077
      %v3102 = vunpack.c.l.b16 %v2078
      %v3103 = vunpack.c.l.b16 %v2079
      %v3104 = vunpack.c.l.b16 %v2080
      %v3105 = vunpack.c.l.b16 %v2081
      %v3106 = vunpack.c.l.b16 %v2082
      %v3107 = vunpack.c.l.b16 %v2083
      %v3108 = vunpack.c.l.b16 %v2084
      %v3109 = vunpack.c.l.b16 %v2085
      %v3110 = vunpack.c.l.b16 %v2086
      %v3111 = vunpack.c.l.b16 %v2087
      %v3112 = vunpack.c.l.b16 %v2088
      %v3113 = vunpack.c.l.b16 %v2089
      %v3114 = vunpack.c.l.b16 %v2090
      %v3115 = vunpack.c.l.b16 %v2091
      %v3116 = vunpack.c.l.b16 %v2092
      %v3117 = vunpack.c.l.b16 %v2093
      %v3118 = vunpack.c.l.b16 %v2094
      %v3119 = vunpack.c.l.b16 %v2095
      %v3120 = vunpack.c.l.b16 %v2096
      %v3121 = vunpack.c.l.b16 %v2097
      %v3122 = vunpack.c.l.b16 %v2098
      %v3123 = vunpack.c.l.b16 %v2099
      %v3124 = vunpack.c.l.b16 %v2100
      %v3125 = vunpack.c.l.b16 %v2101
      %v3126 = vunpack.c.l.b16 %v2102
      %v3127 = vunpack.c.l.b16 %v2103
      %v3128 = vunpack.c.l.b16 %v2104
      %v3129 = vunpack.c.l.b16 %v2105
      %v3130 = vunpack.c.l.b16 %v2106
      %v3131 = vpack.c.b16 %v2988, %v2987
      %v3132 = vpack.c.b16 %v2990, %v2989
      %v3133 = vpack.c.b16 %v2992, %v2991
      %v3134 = vpack.c.b16 %v2994, %v2993
      %v3135 = vpack.c.b16 %v2996, %v2995
      %v3136 = vpack.c.b16 %v2998, %v2997
      %v3137 = vpack.c.b16 %v3000, %v2999
      %v3138 = vpack.c.b16 %v3002, %v3001
      %v3139 = vpack.c.b16 %v3004, %v3003
      %v3140 = vpack.c.b16 %v3006, %v3005
      %v3141 = vpack.c.b16 %v3008, %v3007
      %v3142 = vpack.c.b16 %v3010, %v3009
      %v3143 = vpack.c.b16 %v3012, %v3011
      %v3144 = vpack.c.b16 %v3014, %v3013
      %v3145 = vpack.c.b16 %v3016, %v3015
      %v3146 = vpack.c.b16 %v3018, %v3017
      %v3147 = vpack.c.b16 %v3020, %v3019
      %v3148 = vpack.c.b16 %v3022, %v3021
      %v3149 = vpack.c.b16 %v3024, %v3023
      %v3150 = vpack.c.b16 %v3026, %v3025
      %v3151 = vpack.c.b16 %v3028, %v3027
      %v3152 = vpack.c.b16 %v3030, %v3029
      %v3153 = vpack.c.b16 %v3032, %v3031
      %v3154 = vpack.c.b16 %v3034, %v3033
      %v3155 = vpack.c.b16 %v3036, %v3035
      %v3156 = vpack.c.b16 %v3038, %v3037
      %v3157 = vpack.c.b16 %v3040, %v3039
      %v3158 = vpack.c.b16 %v3042, %v3041
      %v3159 = vpack.c.b16 %v3044, %v3043
      %v3160 = vpack.c.b16 %v3046, %v3045
      %v3161 = vpack.c.b16 %v3048, %v3047
      %v3162 = vpack.c.b16 %v3050, %v3049
      %v3163 = vpack.c.b16 %v3052, %v3051
      %v3164 = vpack.c.b16 %v3054, %v3053
      %v3165 = vpack.c.b16 %v3056, %v3055
      %v3166 = vpack.c.b16 %v3058, %v3057
      %v3167 = vpack.c.b16 %v3060, %v3059
      %v3168 = vpack.c.b16 %v3062, %v3061
      %v3169 = vpack.c.b16 %v3064, %v3063
      %v3170 = vpack.c.b16 %v3066, %v3065
      %v3171 = vpack.c.b16 %v3068, %v3067
      %v3172 = vpack.c.b16 %v3070, %v3069
      %v3173 = vpack.c.b16 %v3072, %v3071
      %v3174 = vpack.c.b16 %v3074, %v3073
      %v3175 = vpack.c.b16 %v3076, %v3075
      %v3176 = vpack.c.b16 %v3078, %v3077
      %v3177 = vpack.c.b16 %v3080, %v3079
      %v3178 = vpack.c.b16 %v3082, %v3081
      %v3179 = vpack.c.b16 %v3084, %v3083
      %v3180 = vpack.c.b16 %v3086, %v3085
      %v3181 = vpack.c.b16 %v3088, %v3087
      %v3182 = vpack.c.b16 %v3090, %v3089
      %v3183 = vpack.c.b16 %v3092, %v3091
      %v3184 = vpack.c.b16 %v3094, %v3093
      %v3185 = vpack.c.b16 %v3096, %v3095
      %v3186 = vpack.c.b16 %v3098, %v3097
      %v3187 = vpack.c.b16 %v3100, %v3099
      %v3188 = vpack.c.b16 %v3102, %v3101
      %v3189 = vpack.c.b16 %v3104, %v3103
      %v3190 = vpack.c.b16 %v3106, %v3105
      %v3191 = vpack.c.b16 %v3108, %v3107
      %v3192 = vpack.c.b16 %v3110, %v3109
      %v3193 = vpack.c.b16 %v3112, %v3111
      %v3194 = vpack.c.b16 %v3114, %v3113
      %v3195 = vpack.c.b16 %v3116, %v3115
      %v3196 = vpack.c.b16 %v3118, %v3117
      %v3197 = vpack.c.b16 %v3120, %v3119
      %v3198 = vpack.c.b16 %v3122, %v3121
      %v3199 = vpack.c.b16 %v3124, %v3123
      %v3200 = vpack.c.b16 %v3126, %v3125
      %v3201 = vpack.c.b16 %v3128, %v3127
      %v3202 = vpack.c.b16 %v3130, %v3129
      %3275 = vmatpush.bf16.msra.mxu0 %v3138
      %3276 = vmatpush.bf16.msra.mxu0 %v3137
      %3277 = vmatpush.bf16.msra.mxu0 %v3136
      %3278 = vmatpush.bf16.msra.mxu0 %v3135
      %3279 = vmatpush.bf16.msra.mxu0 %v3134
      %3280 = vmatpush.bf16.msra.mxu0 %v3133
      %3281 = vmatpush.bf16.msra.mxu0 %v3132
      %3282 = vmatpush.bf16.msra.mxu0 %v3131
      %3283 = vmatmul.bf16.gmra.mxu0 %v2555
      %v3284 = vpop.f32.mrf.mxu0
      %v3285 = vadd.f32 0.0, %v3284
      %v3286 = vpop.f32.mrf.mxu0
      %v3287 = vadd.f32 0.0, %v3286
      %3288 = vmatmul.bf16.gmra.mxu0 %v2564
      %v3289 = vpop.f32.mrf.mxu0
      %v3290 = vadd.f32 0.0, %v3289
      %v3291 = vpop.f32.mrf.mxu0
      %v3292 = vadd.f32 0.0, %v3291
      %3293 = vmatmul.bf16.gmra.mxu0 %v2573
      %v3294 = vpop.f32.mrf.mxu0
      %v3295 = vadd.f32 0.0, %v3294
      %v3296 = vpop.f32.mrf.mxu0
      %v3297 = vadd.f32 0.0, %v3296
      %3298 = vmatmul.bf16.gmra.mxu0 %v2582
      %v3299 = vpop.f32.mrf.mxu0
      %v3300 = vadd.f32 0.0, %v3299
      %v3301 = vpop.f32.mrf.mxu0
      %v3302 = vadd.f32 0.0, %v3301
      %3303 = vmatmul.bf16.gmra.mxu0 %v2591
      %v3304 = vpop.f32.mrf.mxu0
      %v3305 = vadd.f32 0.0, %v3304
      %v3306 = vpop.f32.mrf.mxu0
      %v3307 = vadd.f32 0.0, %v3306
      %3308 = vmatmul.bf16.gmra.mxu0 %v2600
      %v3309 = vpop.f32.mrf.mxu0
      %v3310 = vadd.f32 0.0, %v3309
      %v3311 = vpop.f32.mrf.mxu0
      %v3312 = vadd.f32 0.0, %v3311
      %3313 = vmatmul.bf16.gmra.mxu0 %v2609
      %v3314 = vpop.f32.mrf.mxu0
      %v3315 = vadd.f32 0.0, %v3314
      %v3316 = vpop.f32.mrf.mxu0
      %v3317 = vadd.f32 0.0, %v3316
      %3318 = vmatmul.bf16.gmra.mxu0 %v2618
      %v3319 = vpop.f32.mrf.mxu0
      %v3320 = vadd.f32 0.0, %v3319
      %v3321 = vpop.f32.mrf.mxu0
      %v3322 = vadd.f32 0.0, %v3321
      %3323 = vmatmul.bf16.gmra.mxu0 %v2627
      %v3324 = vpop.f32.mrf.mxu0
      %v3325 = vadd.f32 0.0, %v3324
      %v3326 = vpop.f32.mrf.mxu0
      %v3327 = vadd.f32 0.0, %v3326
      %3328 = vmatmul.bf16.gmra.mxu0 %v2636
      %v3329 = vpop.f32.mrf.mxu0
      %v3330 = vadd.f32 0.0, %v3329
      %v3331 = vpop.f32.mrf.mxu0
      %v3332 = vadd.f32 0.0, %v3331
      %3333 = vmatmul.bf16.gmra.mxu0 %v2645
      %v3334 = vpop.f32.mrf.mxu0
      %v3335 = vadd.f32 0.0, %v3334
      %v3336 = vpop.f32.mrf.mxu0
      %v3337 = vadd.f32 0.0, %v3336
      %3338 = vmatmul.bf16.gmra.mxu0 %v2654
      %v3339 = vpop.f32.mrf.mxu0
      %v3340 = vadd.f32 0.0, %v3339
      %v3341 = vpop.f32.mrf.mxu0
      %v3342 = vadd.f32 0.0, %v3341
      %3343 = vmatmul.bf16.gmra.mxu0 %v2663
      %v3344 = vpop.f32.mrf.mxu0
      %v3345 = vadd.f32 0.0, %v3344
      %v3346 = vpop.f32.mrf.mxu0
      %v3347 = vadd.f32 0.0, %v3346
      %3348 = vmatmul.bf16.gmra.mxu0 %v2672
      %v3349 = vpop.f32.mrf.mxu0
      %v3350 = vadd.f32 0.0, %v3349
      %v3351 = vpop.f32.mrf.mxu0
      %v3352 = vadd.f32 0.0, %v3351
      %3353 = vmatmul.bf16.gmra.mxu0 %v2681
      %v3354 = vpop.f32.mrf.mxu0
      %v3355 = vadd.f32 0.0, %v3354
      %v3356 = vpop.f32.mrf.mxu0
      %v3357 = vadd.f32 0.0, %v3356
      %3358 = vmatmul.bf16.gmra.mxu0 %v2690
      %v3359 = vpop.f32.mrf.mxu0
      %v3360 = vadd.f32 0.0, %v3359
      %v3361 = vpop.f32.mrf.mxu0
      %v3362 = vadd.f32 0.0, %v3361
      %3363 = vdwg.mxu0
      %3364 = vmatpush.bf16.msra.mxu0 %v3146
      %3365 = vmatpush.bf16.msra.mxu0 %v3145
      %3366 = vmatpush.bf16.msra.mxu0 %v3144
      %3367 = vmatpush.bf16.msra.mxu0 %v3143
      %3368 = vmatpush.bf16.msra.mxu0 %v3142
      %3369 = vmatpush.bf16.msra.mxu0 %v3141
      %3370 = vmatpush.bf16.msra.mxu0 %v3140
      %3371 = vmatpush.bf16.msra.mxu0 %v3139
      %3372 = vmatmul.bf16.gmra.mxu0 %v2556
      %v3373 = vpop.f32.mrf.mxu0
      %v3374 = vadd.f32 %v3285, %v3373
      %v3375 = vpop.f32.mrf.mxu0
      %v3376 = vadd.f32 %v3287, %v3375
      %3377 = vmatmul.bf16.gmra.mxu0 %v2565
      %v3378 = vpop.f32.mrf.mxu0
      %v3379 = vadd.f32 %v3290, %v3378
      %v3380 = vpop.f32.mrf.mxu0
      %v3381 = vadd.f32 %v3292, %v3380
      %3382 = vmatmul.bf16.gmra.mxu0 %v2574
      %v3383 = vpop.f32.mrf.mxu0
      %v3384 = vadd.f32 %v3295, %v3383
      %v3385 = vpop.f32.mrf.mxu0
      %v3386 = vadd.f32 %v3297, %v3385
      %3387 = vmatmul.bf16.gmra.mxu0 %v2583
      %v3388 = vpop.f32.mrf.mxu0
      %v3389 = vadd.f32 %v3300, %v3388
      %v3390 = vpop.f32.mrf.mxu0
      %v3391 = vadd.f32 %v3302, %v3390
      %3392 = vmatmul.bf16.gmra.mxu0 %v2592
      %v3393 = vpop.f32.mrf.mxu0
      %v3394 = vadd.f32 %v3305, %v3393
      %v3395 = vpop.f32.mrf.mxu0
      %v3396 = vadd.f32 %v3307, %v3395
      %3397 = vmatmul.bf16.gmra.mxu0 %v2601
      %v3398 = vpop.f32.mrf.mxu0
      %v3399 = vadd.f32 %v3310, %v3398
      %v3400 = vpop.f32.mrf.mxu0
      %v3401 = vadd.f32 %v3312, %v3400
      %3402 = vmatmul.bf16.gmra.mxu0 %v2610
      %v3403 = vpop.f32.mrf.mxu0
      %v3404 = vadd.f32 %v3315, %v3403
      %v3405 = vpop.f32.mrf.mxu0
      %v3406 = vadd.f32 %v3317, %v3405
      %3407 = vmatmul.bf16.gmra.mxu0 %v2619
      %v3408 = vpop.f32.mrf.mxu0
      %v3409 = vadd.f32 %v3320, %v3408
      %v3410 = vpop.f32.mrf.mxu0
      %v3411 = vadd.f32 %v3322, %v3410
      %3412 = vmatmul.bf16.gmra.mxu0 %v2628
      %v3413 = vpop.f32.mrf.mxu0
      %v3414 = vadd.f32 %v3325, %v3413
      %v3415 = vpop.f32.mrf.mxu0
      %v3416 = vadd.f32 %v3327, %v3415
      %3417 = vmatmul.bf16.gmra.mxu0 %v2637
      %v3418 = vpop.f32.mrf.mxu0
      %v3419 = vadd.f32 %v3330, %v3418
      %v3420 = vpop.f32.mrf.mxu0
      %v3421 = vadd.f32 %v3332, %v3420
      %3422 = vmatmul.bf16.gmra.mxu0 %v2646
      %v3423 = vpop.f32.mrf.mxu0
      %v3424 = vadd.f32 %v3335, %v3423
      %v3425 = vpop.f32.mrf.mxu0
      %v3426 = vadd.f32 %v3337, %v3425
      %3427 = vmatmul.bf16.gmra.mxu0 %v2655
      %v3428 = vpop.f32.mrf.mxu0
      %v3429 = vadd.f32 %v3340, %v3428
      %v3430 = vpop.f32.mrf.mxu0
      %v3431 = vadd.f32 %v3342, %v3430
      %3432 = vmatmul.bf16.gmra.mxu0 %v2664
      %v3433 = vpop.f32.mrf.mxu0
      %v3434 = vadd.f32 %v3345, %v3433
      %v3435 = vpop.f32.mrf.mxu0
      %v3436 = vadd.f32 %v3347, %v3435
      %3437 = vmatmul.bf16.gmra.mxu0 %v2673
      %v3438 = vpop.f32.mrf.mxu0
      %v3439 = vadd.f32 %v3350, %v3438
      %v3440 = vpop.f32.mrf.mxu0
      %v3441 = vadd.f32 %v3352, %v3440
      %3442 = vmatmul.bf16.gmra.mxu0 %v2682
      %v3443 = vpop.f32.mrf.mxu0
      %v3444 = vadd.f32 %v3355, %v3443
      %v3445 = vpop.f32.mrf.mxu0
      %v3446 = vadd.f32 %v3357, %v3445
      %3447 = vmatmul.bf16.gmra.mxu0 %v2691
      %v3448 = vpop.f32.mrf.mxu0
      %v3449 = vadd.f32 %v3360, %v3448
      %v3450 = vpop.f32.mrf.mxu0
      %v3451 = vadd.f32 %v3362, %v3450
      %3452 = vdwg.mxu0
      %3453 = vmatpush.bf16.msra.mxu0 %v3154
      %3454 = vmatpush.bf16.msra.mxu0 %v3153
      %3455 = vmatpush.bf16.msra.mxu0 %v3152
      %3456 = vmatpush.bf16.msra.mxu0 %v3151
      %3457 = vmatpush.bf16.msra.mxu0 %v3150
      %3458 = vmatpush.bf16.msra.mxu0 %v3149
      %3459 = vmatpush.bf16.msra.mxu0 %v3148
      %3460 = vmatpush.bf16.msra.mxu0 %v3147
      %3461 = vmatmul.bf16.gmra.mxu0 %v2557
      %v3462 = vpop.f32.mrf.mxu0
      %v3463 = vadd.f32 %v3374, %v3462
      %v3464 = vpop.f32.mrf.mxu0
      %v3465 = vadd.f32 %v3376, %v3464
      %3466 = vmatmul.bf16.gmra.mxu0 %v2566
      %v3467 = vpop.f32.mrf.mxu0
      %v3468 = vadd.f32 %v3379, %v3467
      %v3469 = vpop.f32.mrf.mxu0
      %v3470 = vadd.f32 %v3381, %v3469
      %3471 = vmatmul.bf16.gmra.mxu0 %v2575
      %v3472 = vpop.f32.mrf.mxu0
      %v3473 = vadd.f32 %v3384, %v3472
      %v3474 = vpop.f32.mrf.mxu0
      %v3475 = vadd.f32 %v3386, %v3474
      %3476 = vmatmul.bf16.gmra.mxu0 %v2584
      %v3477 = vpop.f32.mrf.mxu0
      %v3478 = vadd.f32 %v3389, %v3477
      %v3479 = vpop.f32.mrf.mxu0
      %v3480 = vadd.f32 %v3391, %v3479
      %3481 = vmatmul.bf16.gmra.mxu0 %v2593
      %v3482 = vpop.f32.mrf.mxu0
      %v3483 = vadd.f32 %v3394, %v3482
      %v3484 = vpop.f32.mrf.mxu0
      %v3485 = vadd.f32 %v3396, %v3484
      %3486 = vmatmul.bf16.gmra.mxu0 %v2602
      %v3487 = vpop.f32.mrf.mxu0
      %v3488 = vadd.f32 %v3399, %v3487
      %v3489 = vpop.f32.mrf.mxu0
      %v3490 = vadd.f32 %v3401, %v3489
      %3491 = vmatmul.bf16.gmra.mxu0 %v2611
      %v3492 = vpop.f32.mrf.mxu0
      %v3493 = vadd.f32 %v3404, %v3492
      %v3494 = vpop.f32.mrf.mxu0
      %v3495 = vadd.f32 %v3406, %v3494
      %3496 = vmatmul.bf16.gmra.mxu0 %v2620
      %v3497 = vpop.f32.mrf.mxu0
      %v3498 = vadd.f32 %v3409, %v3497
      %v3499 = vpop.f32.mrf.mxu0
      %v3500 = vadd.f32 %v3411, %v3499
      %3501 = vmatmul.bf16.gmra.mxu0 %v2629
      %v3502 = vpop.f32.mrf.mxu0
      %v3503 = vadd.f32 %v3414, %v3502
      %v3504 = vpop.f32.mrf.mxu0
      %v3505 = vadd.f32 %v3416, %v3504
      %3506 = vmatmul.bf16.gmra.mxu0 %v2638
      %v3507 = vpop.f32.mrf.mxu0
      %v3508 = vadd.f32 %v3419, %v3507
      %v3509 = vpop.f32.mrf.mxu0
      %v3510 = vadd.f32 %v3421, %v3509
      %3511 = vmatmul.bf16.gmra.mxu0 %v2647
      %v3512 = vpop.f32.mrf.mxu0
      %v3513 = vadd.f32 %v3424, %v3512
      %v3514 = vpop.f32.mrf.mxu0
      %v3515 = vadd.f32 %v3426, %v3514
      %3516 = vmatmul.bf16.gmra.mxu0 %v2656
      %v3517 = vpop.f32.mrf.mxu0
      %v3518 = vadd.f32 %v3429, %v3517
      %v3519 = vpop.f32.mrf.mxu0
      %v3520 = vadd.f32 %v3431, %v3519
      %3521 = vmatmul.bf16.gmra.mxu0 %v2665
      %v3522 = vpop.f32.mrf.mxu0
      %v3523 = vadd.f32 %v3434, %v3522
      %v3524 = vpop.f32.mrf.mxu0
      %v3525 = vadd.f32 %v3436, %v3524
      %3526 = vmatmul.bf16.gmra.mxu0 %v2674
      %v3527 = vpop.f32.mrf.mxu0
      %v3528 = vadd.f32 %v3439, %v3527
      %v3529 = vpop.f32.mrf.mxu0
      %v3530 = vadd.f32 %v3441, %v3529
      %3531 = vmatmul.bf16.gmra.mxu0 %v2683
      %v3532 = vpop.f32.mrf.mxu0
      %v3533 = vadd.f32 %v3444, %v3532
      %v3534 = vpop.f32.mrf.mxu0
      %v3535 = vadd.f32 %v3446, %v3534
      %3536 = vmatmul.bf16.gmra.mxu0 %v2692
      %v3537 = vpop.f32.mrf.mxu0
      %v3538 = vadd.f32 %v3449, %v3537
      %v3539 = vpop.f32.mrf.mxu0
      %v3540 = vadd.f32 %v3451, %v3539
      %3541 = vdwg.mxu0
      %3542 = vmatpush.bf16.msra.mxu0 %v3162
      %3543 = vmatpush.bf16.msra.mxu0 %v3161
      %3544 = vmatpush.bf16.msra.mxu0 %v3160
      %3545 = vmatpush.bf16.msra.mxu0 %v3159
      %3546 = vmatpush.bf16.msra.mxu0 %v3158
      %3547 = vmatpush.bf16.msra.mxu0 %v3157
      %3548 = vmatpush.bf16.msra.mxu0 %v3156
      %3549 = vmatpush.bf16.msra.mxu0 %v3155
      %3550 = vmatmul.bf16.gmra.mxu0 %v2558
      %v3551 = vpop.f32.mrf.mxu0
      %v3552 = vadd.f32 %v3463, %v3551
      %v3553 = vpop.f32.mrf.mxu0
      %v3554 = vadd.f32 %v3465, %v3553
      %3555 = vmatmul.bf16.gmra.mxu0 %v2567
      %v3556 = vpop.f32.mrf.mxu0
      %v3557 = vadd.f32 %v3468, %v3556
      %v3558 = vpop.f32.mrf.mxu0
      %v3559 = vadd.f32 %v3470, %v3558
      %3560 = vmatmul.bf16.gmra.mxu0 %v2576
      %v3561 = vpop.f32.mrf.mxu0
      %v3562 = vadd.f32 %v3473, %v3561
      %v3563 = vpop.f32.mrf.mxu0
      %v3564 = vadd.f32 %v3475, %v3563
      %3565 = vmatmul.bf16.gmra.mxu0 %v2585
      %v3566 = vpop.f32.mrf.mxu0
      %v3567 = vadd.f32 %v3478, %v3566
      %v3568 = vpop.f32.mrf.mxu0
      %v3569 = vadd.f32 %v3480, %v3568
      %3570 = vmatmul.bf16.gmra.mxu0 %v2594
      %v3571 = vpop.f32.mrf.mxu0
      %v3572 = vadd.f32 %v3483, %v3571
      %v3573 = vpop.f32.mrf.mxu0
      %v3574 = vadd.f32 %v3485, %v3573
      %3575 = vmatmul.bf16.gmra.mxu0 %v2603
      %v3576 = vpop.f32.mrf.mxu0
      %v3577 = vadd.f32 %v3488, %v3576
      %v3578 = vpop.f32.mrf.mxu0
      %v3579 = vadd.f32 %v3490, %v3578
      %3580 = vmatmul.bf16.gmra.mxu0 %v2612
      %v3581 = vpop.f32.mrf.mxu0
      %v3582 = vadd.f32 %v3493, %v3581
      %v3583 = vpop.f32.mrf.mxu0
      %v3584 = vadd.f32 %v3495, %v3583
      %3585 = vmatmul.bf16.gmra.mxu0 %v2621
      %v3586 = vpop.f32.mrf.mxu0
      %v3587 = vadd.f32 %v3498, %v3586
      %v3588 = vpop.f32.mrf.mxu0
      %v3589 = vadd.f32 %v3500, %v3588
      %3590 = vmatmul.bf16.gmra.mxu0 %v2630
      %v3591 = vpop.f32.mrf.mxu0
      %v3592 = vadd.f32 %v3503, %v3591
      %v3593 = vpop.f32.mrf.mxu0
      %v3594 = vadd.f32 %v3505, %v3593
      %3595 = vmatmul.bf16.gmra.mxu0 %v2639
      %v3596 = vpop.f32.mrf.mxu0
      %v3597 = vadd.f32 %v3508, %v3596
      %v3598 = vpop.f32.mrf.mxu0
      %v3599 = vadd.f32 %v3510, %v3598
      %3600 = vmatmul.bf16.gmra.mxu0 %v2648
      %v3601 = vpop.f32.mrf.mxu0
      %v3602 = vadd.f32 %v3513, %v3601
      %v3603 = vpop.f32.mrf.mxu0
      %v3604 = vadd.f32 %v3515, %v3603
      %3605 = vmatmul.bf16.gmra.mxu0 %v2657
      %v3606 = vpop.f32.mrf.mxu0
      %v3607 = vadd.f32 %v3518, %v3606
      %v3608 = vpop.f32.mrf.mxu0
      %v3609 = vadd.f32 %v3520, %v3608
      %3610 = vmatmul.bf16.gmra.mxu0 %v2666
      %v3611 = vpop.f32.mrf.mxu0
      %v3612 = vadd.f32 %v3523, %v3611
      %v3613 = vpop.f32.mrf.mxu0
      %v3614 = vadd.f32 %v3525, %v3613
      %3615 = vmatmul.bf16.gmra.mxu0 %v2675
      %v3616 = vpop.f32.mrf.mxu0
      %v3617 = vadd.f32 %v3528, %v3616
      %v3618 = vpop.f32.mrf.mxu0
      %v3619 = vadd.f32 %v3530, %v3618
      %3620 = vmatmul.bf16.gmra.mxu0 %v2684
      %v3621 = vpop.f32.mrf.mxu0
      %v3622 = vadd.f32 %v3533, %v3621
      %v3623 = vpop.f32.mrf.mxu0
      %v3624 = vadd.f32 %v3535, %v3623
      %3625 = vmatmul.bf16.gmra.mxu0 %v2693
      %v3626 = vpop.f32.mrf.mxu0
      %v3627 = vadd.f32 %v3538, %v3626
      %v3628 = vpop.f32.mrf.mxu0
      %v3629 = vadd.f32 %v3540, %v3628
      %3630 = vdwg.mxu0
      %3631 = vmatpush.bf16.msra.mxu0 %v3170
      %3632 = vmatpush.bf16.msra.mxu0 %v3169
      %3633 = vmatpush.bf16.msra.mxu0 %v3168
      %3634 = vmatpush.bf16.msra.mxu0 %v3167
      %3635 = vmatpush.bf16.msra.mxu0 %v3166
      %3636 = vmatpush.bf16.msra.mxu0 %v3165
      %3637 = vmatpush.bf16.msra.mxu0 %v3164
      %3638 = vmatpush.bf16.msra.mxu0 %v3163
      %3639 = vmatmul.bf16.gmra.mxu0 %v2559
      %v3640 = vpop.f32.mrf.mxu0
      %v3641 = vadd.f32 %v3552, %v3640
      %v3642 = vpop.f32.mrf.mxu0
      %v3643 = vadd.f32 %v3554, %v3642
      %3644 = vmatmul.bf16.gmra.mxu0 %v2568
      %v3645 = vpop.f32.mrf.mxu0
      %v3646 = vadd.f32 %v3557, %v3645
      %v3647 = vpop.f32.mrf.mxu0
      %v3648 = vadd.f32 %v3559, %v3647
      %3649 = vmatmul.bf16.gmra.mxu0 %v2577
      %v3650 = vpop.f32.mrf.mxu0
      %v3651 = vadd.f32 %v3562, %v3650
      %v3652 = vpop.f32.mrf.mxu0
      %v3653 = vadd.f32 %v3564, %v3652
      %3654 = vmatmul.bf16.gmra.mxu0 %v2586
      %v3655 = vpop.f32.mrf.mxu0
      %v3656 = vadd.f32 %v3567, %v3655
      %v3657 = vpop.f32.mrf.mxu0
      %v3658 = vadd.f32 %v3569, %v3657
      %3659 = vmatmul.bf16.gmra.mxu0 %v2595
      %v3660 = vpop.f32.mrf.mxu0
      %v3661 = vadd.f32 %v3572, %v3660
      %v3662 = vpop.f32.mrf.mxu0
      %v3663 = vadd.f32 %v3574, %v3662
      %3664 = vmatmul.bf16.gmra.mxu0 %v2604
      %v3665 = vpop.f32.mrf.mxu0
      %v3666 = vadd.f32 %v3577, %v3665
      %v3667 = vpop.f32.mrf.mxu0
      %v3668 = vadd.f32 %v3579, %v3667
      %3669 = vmatmul.bf16.gmra.mxu0 %v2613
      %v3670 = vpop.f32.mrf.mxu0
      %v3671 = vadd.f32 %v3582, %v3670
      %v3672 = vpop.f32.mrf.mxu0
      %v3673 = vadd.f32 %v3584, %v3672
      %3674 = vmatmul.bf16.gmra.mxu0 %v2622
      %v3675 = vpop.f32.mrf.mxu0
      %v3676 = vadd.f32 %v3587, %v3675
      %v3677 = vpop.f32.mrf.mxu0
      %v3678 = vadd.f32 %v3589, %v3677
      %3679 = vmatmul.bf16.gmra.mxu0 %v2631
      %v3680 = vpop.f32.mrf.mxu0
      %v3681 = vadd.f32 %v3592, %v3680
      %v3682 = vpop.f32.mrf.mxu0
      %v3683 = vadd.f32 %v3594, %v3682
      %3684 = vmatmul.bf16.gmra.mxu0 %v2640
      %v3685 = vpop.f32.mrf.mxu0
      %v3686 = vadd.f32 %v3597, %v3685
      %v3687 = vpop.f32.mrf.mxu0
      %v3688 = vadd.f32 %v3599, %v3687
      %3689 = vmatmul.bf16.gmra.mxu0 %v2649
      %v3690 = vpop.f32.mrf.mxu0
      %v3691 = vadd.f32 %v3602, %v3690
      %v3692 = vpop.f32.mrf.mxu0
      %v3693 = vadd.f32 %v3604, %v3692
      %3694 = vmatmul.bf16.gmra.mxu0 %v2658
      %v3695 = vpop.f32.mrf.mxu0
      %v3696 = vadd.f32 %v3607, %v3695
      %v3697 = vpop.f32.mrf.mxu0
      %v3698 = vadd.f32 %v3609, %v3697
      %3699 = vmatmul.bf16.gmra.mxu0 %v2667
      %v3700 = vpop.f32.mrf.mxu0
      %v3701 = vadd.f32 %v3612, %v3700
      %v3702 = vpop.f32.mrf.mxu0
      %v3703 = vadd.f32 %v3614, %v3702
      %3704 = vmatmul.bf16.gmra.mxu0 %v2676
      %v3705 = vpop.f32.mrf.mxu0
      %v3706 = vadd.f32 %v3617, %v3705
      %v3707 = vpop.f32.mrf.mxu0
      %v3708 = vadd.f32 %v3619, %v3707
      %3709 = vmatmul.bf16.gmra.mxu0 %v2685
      %v3710 = vpop.f32.mrf.mxu0
      %v3711 = vadd.f32 %v3622, %v3710
      %v3712 = vpop.f32.mrf.mxu0
      %v3713 = vadd.f32 %v3624, %v3712
      %3714 = vmatmul.bf16.gmra.mxu0 %v2694
      %v3715 = vpop.f32.mrf.mxu0
      %v3716 = vadd.f32 %v3627, %v3715
      %v3717 = vpop.f32.mrf.mxu0
      %v3718 = vadd.f32 %v3629, %v3717
      %3719 = vdwg.mxu0
      %3720 = vmatpush.bf16.msra.mxu0 %v3178
      %3721 = vmatpush.bf16.msra.mxu0 %v3177
      %3722 = vmatpush.bf16.msra.mxu0 %v3176
      %3723 = vmatpush.bf16.msra.mxu0 %v3175
      %3724 = vmatpush.bf16.msra.mxu0 %v3174
      %3725 = vmatpush.bf16.msra.mxu0 %v3173
      %3726 = vmatpush.bf16.msra.mxu0 %v3172
      %3727 = vmatpush.bf16.msra.mxu0 %v3171
      %3728 = vmatmul.bf16.gmra.mxu0 %v2560
      %v3729 = vpop.f32.mrf.mxu0
      %v3730 = vadd.f32 %v3641, %v3729
      %v3731 = vpop.f32.mrf.mxu0
      %v3732 = vadd.f32 %v3643, %v3731
      %3733 = vmatmul.bf16.gmra.mxu0 %v2569
      %v3734 = vpop.f32.mrf.mxu0
      %v3735 = vadd.f32 %v3646, %v3734
      %v3736 = vpop.f32.mrf.mxu0
      %v3737 = vadd.f32 %v3648, %v3736
      %3738 = vmatmul.bf16.gmra.mxu0 %v2578
      %v3739 = vpop.f32.mrf.mxu0
      %v3740 = vadd.f32 %v3651, %v3739
      %v3741 = vpop.f32.mrf.mxu0
      %v3742 = vadd.f32 %v3653, %v3741
      %3743 = vmatmul.bf16.gmra.mxu0 %v2587
      %v3744 = vpop.f32.mrf.mxu0
      %v3745 = vadd.f32 %v3656, %v3744
      %v3746 = vpop.f32.mrf.mxu0
      %v3747 = vadd.f32 %v3658, %v3746
      %3748 = vmatmul.bf16.gmra.mxu0 %v2596
      %v3749 = vpop.f32.mrf.mxu0
      %v3750 = vadd.f32 %v3661, %v3749
      %v3751 = vpop.f32.mrf.mxu0
      %v3752 = vadd.f32 %v3663, %v3751
      %3753 = vmatmul.bf16.gmra.mxu0 %v2605
      %v3754 = vpop.f32.mrf.mxu0
      %v3755 = vadd.f32 %v3666, %v3754
      %v3756 = vpop.f32.mrf.mxu0
      %v3757 = vadd.f32 %v3668, %v3756
      %3758 = vmatmul.bf16.gmra.mxu0 %v2614
      %v3759 = vpop.f32.mrf.mxu0
      %v3760 = vadd.f32 %v3671, %v3759
      %v3761 = vpop.f32.mrf.mxu0
      %v3762 = vadd.f32 %v3673, %v3761
      %3763 = vmatmul.bf16.gmra.mxu0 %v2623
      %v3764 = vpop.f32.mrf.mxu0
      %v3765 = vadd.f32 %v3676, %v3764
      %v3766 = vpop.f32.mrf.mxu0
      %v3767 = vadd.f32 %v3678, %v3766
      %3768 = vmatmul.bf16.gmra.mxu0 %v2632
      %v3769 = vpop.f32.mrf.mxu0
      %v3770 = vadd.f32 %v3681, %v3769
      %v3771 = vpop.f32.mrf.mxu0
      %v3772 = vadd.f32 %v3683, %v3771
      %3773 = vmatmul.bf16.gmra.mxu0 %v2641
      %v3774 = vpop.f32.mrf.mxu0
      %v3775 = vadd.f32 %v3686, %v3774
      %v3776 = vpop.f32.mrf.mxu0
      %v3777 = vadd.f32 %v3688, %v3776
      %3778 = vmatmul.bf16.gmra.mxu0 %v2650
      %v3779 = vpop.f32.mrf.mxu0
      %v3780 = vadd.f32 %v3691, %v3779
      %v3781 = vpop.f32.mrf.mxu0
      %v3782 = vadd.f32 %v3693, %v3781
      %3783 = vmatmul.bf16.gmra.mxu0 %v2659
      %v3784 = vpop.f32.mrf.mxu0
      %v3785 = vadd.f32 %v3696, %v3784
      %v3786 = vpop.f32.mrf.mxu0
      %v3787 = vadd.f32 %v3698, %v3786
      %3788 = vmatmul.bf16.gmra.mxu0 %v2668
      %v3789 = vpop.f32.mrf.mxu0
      %v3790 = vadd.f32 %v3701, %v3789
      %v3791 = vpop.f32.mrf.mxu0
      %v3792 = vadd.f32 %v3703, %v3791
      %3793 = vmatmul.bf16.gmra.mxu0 %v2677
      %v3794 = vpop.f32.mrf.mxu0
      %v3795 = vadd.f32 %v3706, %v3794
      %v3796 = vpop.f32.mrf.mxu0
      %v3797 = vadd.f32 %v3708, %v3796
      %3798 = vmatmul.bf16.gmra.mxu0 %v2686
      %v3799 = vpop.f32.mrf.mxu0
      %v3800 = vadd.f32 %v3711, %v3799
      %v3801 = vpop.f32.mrf.mxu0
      %v3802 = vadd.f32 %v3713, %v3801
      %3803 = vmatmul.bf16.gmra.mxu0 %v2695
      %v3804 = vpop.f32.mrf.mxu0
      %v3805 = vadd.f32 %v3716, %v3804
      %v3806 = vpop.f32.mrf.mxu0
      %v3807 = vadd.f32 %v3718, %v3806
      %3808 = vdwg.mxu0
      %3809 = vmatpush.bf16.msra.mxu0 %v3186
      %3810 = vmatpush.bf16.msra.mxu0 %v3185
      %3811 = vmatpush.bf16.msra.mxu0 %v3184
      %3812 = vmatpush.bf16.msra.mxu0 %v3183
      %3813 = vmatpush.bf16.msra.mxu0 %v3182
      %3814 = vmatpush.bf16.msra.mxu0 %v3181
      %3815 = vmatpush.bf16.msra.mxu0 %v3180
      %3816 = vmatpush.bf16.msra.mxu0 %v3179
      %3817 = vmatmul.bf16.gmra.mxu0 %v2561
      %v3818 = vpop.f32.mrf.mxu0
      %v3819 = vadd.f32 %v3730, %v3818
      %v3820 = vpop.f32.mrf.mxu0
      %v3821 = vadd.f32 %v3732, %v3820
      %3822 = vmatmul.bf16.gmra.mxu0 %v2570
      %v3823 = vpop.f32.mrf.mxu0
      %v3824 = vadd.f32 %v3735, %v3823
      %v3825 = vpop.f32.mrf.mxu0
      %v3826 = vadd.f32 %v3737, %v3825
      %3827 = vmatmul.bf16.gmra.mxu0 %v2579
      %v3828 = vpop.f32.mrf.mxu0
      %v3829 = vadd.f32 %v3740, %v3828
      %v3830 = vpop.f32.mrf.mxu0
      %v3831 = vadd.f32 %v3742, %v3830
      %3832 = vmatmul.bf16.gmra.mxu0 %v2588
      %v3833 = vpop.f32.mrf.mxu0
      %v3834 = vadd.f32 %v3745, %v3833
      %v3835 = vpop.f32.mrf.mxu0
      %v3836 = vadd.f32 %v3747, %v3835
      %3837 = vmatmul.bf16.gmra.mxu0 %v2597
      %v3838 = vpop.f32.mrf.mxu0
      %v3839 = vadd.f32 %v3750, %v3838
      %v3840 = vpop.f32.mrf.mxu0
      %v3841 = vadd.f32 %v3752, %v3840
      %3842 = vmatmul.bf16.gmra.mxu0 %v2606
      %v3843 = vpop.f32.mrf.mxu0
      %v3844 = vadd.f32 %v3755, %v3843
      %v3845 = vpop.f32.mrf.mxu0
      %v3846 = vadd.f32 %v3757, %v3845
      %3847 = vmatmul.bf16.gmra.mxu0 %v2615
      %v3848 = vpop.f32.mrf.mxu0
      %v3849 = vadd.f32 %v3760, %v3848
      %v3850 = vpop.f32.mrf.mxu0
      %v3851 = vadd.f32 %v3762, %v3850
      %3852 = vmatmul.bf16.gmra.mxu0 %v2624
      %v3853 = vpop.f32.mrf.mxu0
      %v3854 = vadd.f32 %v3765, %v3853
      %v3855 = vpop.f32.mrf.mxu0
      %v3856 = vadd.f32 %v3767, %v3855
      %3857 = vmatmul.bf16.gmra.mxu0 %v2633
      %v3858 = vpop.f32.mrf.mxu0
      %v3859 = vadd.f32 %v3770, %v3858
      %v3860 = vpop.f32.mrf.mxu0
      %v3861 = vadd.f32 %v3772, %v3860
      %3862 = vmatmul.bf16.gmra.mxu0 %v2642
      %v3863 = vpop.f32.mrf.mxu0
      %v3864 = vadd.f32 %v3775, %v3863
      %v3865 = vpop.f32.mrf.mxu0
      %v3866 = vadd.f32 %v3777, %v3865
      %3867 = vmatmul.bf16.gmra.mxu0 %v2651
      %v3868 = vpop.f32.mrf.mxu0
      %v3869 = vadd.f32 %v3780, %v3868
      %v3870 = vpop.f32.mrf.mxu0
      %v3871 = vadd.f32 %v3782, %v3870
      %3872 = vmatmul.bf16.gmra.mxu0 %v2660
      %v3873 = vpop.f32.mrf.mxu0
      %v3874 = vadd.f32 %v3785, %v3873
      %v3875 = vpop.f32.mrf.mxu0
      %v3876 = vadd.f32 %v3787, %v3875
      %3877 = vmatmul.bf16.gmra.mxu0 %v2669
      %v3878 = vpop.f32.mrf.mxu0
      %v3879 = vadd.f32 %v3790, %v3878
      %v3880 = vpop.f32.mrf.mxu0
      %v3881 = vadd.f32 %v3792, %v3880
      %3882 = vmatmul.bf16.gmra.mxu0 %v2678
      %v3883 = vpop.f32.mrf.mxu0
      %v3884 = vadd.f32 %v3795, %v3883
      %v3885 = vpop.f32.mrf.mxu0
      %v3886 = vadd.f32 %v3797, %v3885
      %3887 = vmatmul.bf16.gmra.mxu0 %v2687
      %v3888 = vpop.f32.mrf.mxu0
      %v3889 = vadd.f32 %v3800, %v3888
      %v3890 = vpop.f32.mrf.mxu0
      %v3891 = vadd.f32 %v3802, %v3890
      %3892 = vmatmul.bf16.gmra.mxu0 %v2696
      %v3893 = vpop.f32.mrf.mxu0
      %v3894 = vadd.f32 %v3805, %v3893
      %v3895 = vpop.f32.mrf.mxu0
      %v3896 = vadd.f32 %v3807, %v3895
      %3897 = vdwg.mxu0
      %3898 = vmatpush.bf16.msra.mxu0 %v3194
      %3899 = vmatpush.bf16.msra.mxu0 %v3193
      %3900 = vmatpush.bf16.msra.mxu0 %v3192
      %3901 = vmatpush.bf16.msra.mxu0 %v3191
      %3902 = vmatpush.bf16.msra.mxu0 %v3190
      %3903 = vmatpush.bf16.msra.mxu0 %v3189
      %3904 = vmatpush.bf16.msra.mxu0 %v3188
      %3905 = vmatpush.bf16.msra.mxu0 %v3187
      %3906 = vmatmul.bf16.gmra.mxu0 %v2562
      %v3907 = vpop.f32.mrf.mxu0
      %v3908 = vadd.f32 %v3819, %v3907
      %v3909 = vpop.f32.mrf.mxu0
      %v3910 = vadd.f32 %v3821, %v3909
      %3911 = vmatmul.bf16.gmra.mxu0 %v2571
      %v3912 = vpop.f32.mrf.mxu0
      %v3913 = vadd.f32 %v3824, %v3912
      %v3914 = vpop.f32.mrf.mxu0
      %v3915 = vadd.f32 %v3826, %v3914
      %3916 = vmatmul.bf16.gmra.mxu0 %v2580
      %v3917 = vpop.f32.mrf.mxu0
      %v3918 = vadd.f32 %v3829, %v3917
      %v3919 = vpop.f32.mrf.mxu0
      %v3920 = vadd.f32 %v3831, %v3919
      %3921 = vmatmul.bf16.gmra.mxu0 %v2589
      %v3922 = vpop.f32.mrf.mxu0
      %v3923 = vadd.f32 %v3834, %v3922
      %v3924 = vpop.f32.mrf.mxu0
      %v3925 = vadd.f32 %v3836, %v3924
      %3926 = vmatmul.bf16.gmra.mxu0 %v2598
      %v3927 = vpop.f32.mrf.mxu0
      %v3928 = vadd.f32 %v3839, %v3927
      %v3929 = vpop.f32.mrf.mxu0
      %v3930 = vadd.f32 %v3841, %v3929
      %3931 = vmatmul.bf16.gmra.mxu0 %v2607
      %v3932 = vpop.f32.mrf.mxu0
      %v3933 = vadd.f32 %v3844, %v3932
      %v3934 = vpop.f32.mrf.mxu0
      %v3935 = vadd.f32 %v3846, %v3934
      %3936 = vmatmul.bf16.gmra.mxu0 %v2616
      %v3937 = vpop.f32.mrf.mxu0
      %v3938 = vadd.f32 %v3849, %v3937
      %v3939 = vpop.f32.mrf.mxu0
      %v3940 = vadd.f32 %v3851, %v3939
      %3941 = vmatmul.bf16.gmra.mxu0 %v2625
      %v3942 = vpop.f32.mrf.mxu0
      %v3943 = vadd.f32 %v3854, %v3942
      %v3944 = vpop.f32.mrf.mxu0
      %v3945 = vadd.f32 %v3856, %v3944
      %3946 = vmatmul.bf16.gmra.mxu0 %v2634
      %v3947 = vpop.f32.mrf.mxu0
      %v3948 = vadd.f32 %v3859, %v3947
      %v3949 = vpop.f32.mrf.mxu0
      %v3950 = vadd.f32 %v3861, %v3949
      %3951 = vmatmul.bf16.gmra.mxu0 %v2643
      %v3952 = vpop.f32.mrf.mxu0
      %v3953 = vadd.f32 %v3864, %v3952
      %v3954 = vpop.f32.mrf.mxu0
      %v3955 = vadd.f32 %v3866, %v3954
      %3956 = vmatmul.bf16.gmra.mxu0 %v2652
      %v3957 = vpop.f32.mrf.mxu0
      %v3958 = vadd.f32 %v3869, %v3957
      %v3959 = vpop.f32.mrf.mxu0
      %v3960 = vadd.f32 %v3871, %v3959
      %3961 = vmatmul.bf16.gmra.mxu0 %v2661
      %v3962 = vpop.f32.mrf.mxu0
      %v3963 = vadd.f32 %v3874, %v3962
      %v3964 = vpop.f32.mrf.mxu0
      %v3965 = vadd.f32 %v3876, %v3964
      %3966 = vmatmul.bf16.gmra.mxu0 %v2670
      %v3967 = vpop.f32.mrf.mxu0
      %v3968 = vadd.f32 %v3879, %v3967
      %v3969 = vpop.f32.mrf.mxu0
      %v3970 = vadd.f32 %v3881, %v3969
      %3971 = vmatmul.bf16.gmra.mxu0 %v2679
      %v3972 = vpop.f32.mrf.mxu0
      %v3973 = vadd.f32 %v3884, %v3972
      %v3974 = vpop.f32.mrf.mxu0
      %v3975 = vadd.f32 %v3886, %v3974
      %3976 = vmatmul.bf16.gmra.mxu0 %v2688
      %v3977 = vpop.f32.mrf.mxu0
      %v3978 = vadd.f32 %v3889, %v3977
      %v3979 = vpop.f32.mrf.mxu0
      %v3980 = vadd.f32 %v3891, %v3979
      %3981 = vmatmul.bf16.gmra.mxu0 %v2697
      %v3982 = vpop.f32.mrf.mxu0
      %v3983 = vadd.f32 %v3894, %v3982
      %v3984 = vpop.f32.mrf.mxu0
      %v3985 = vadd.f32 %v3896, %v3984
      %3986 = vdwg.mxu0
      %3987 = vmatpush.bf16.msra.mxu0 %v3202
      %3988 = vmatpush.bf16.msra.mxu0 %v3201
      %3989 = vmatpush.bf16.msra.mxu0 %v3200
      %3990 = vmatpush.bf16.msra.mxu0 %v3199
      %3991 = vmatpush.bf16.msra.mxu0 %v3198
      %3992 = vmatpush.bf16.msra.mxu0 %v3197
      %3993 = vmatpush.bf16.msra.mxu0 %v3196
      %3994 = vmatpush.bf16.msra.mxu0 %v3195
      %3995 = vmatmul.bf16.gmra.mxu0 %v2563
      %v3996 = vpop.f32.mrf.mxu0
      %v3997 = vadd.f32 %v3908, %v3996
      %v3998 = vpop.f32.mrf.mxu0
      %v3999 = vadd.f32 %v3910, %v3998
      %4000 = vmatmul.bf16.gmra.mxu0 %v2572
      %v4001 = vpop.f32.mrf.mxu0
      %v4002 = vadd.f32 %v3913, %v4001
      %v4003 = vpop.f32.mrf.mxu0
      %v4004 = vadd.f32 %v3915, %v4003
      %4005 = vmatmul.bf16.gmra.mxu0 %v2581
      %v4006 = vpop.f32.mrf.mxu0
      %v4007 = vadd.f32 %v3918, %v4006
      %v4008 = vpop.f32.mrf.mxu0
      %v4009 = vadd.f32 %v3920, %v4008
      %4010 = vmatmul.bf16.gmra.mxu0 %v2590
      %v4011 = vpop.f32.mrf.mxu0
      %v4012 = vadd.f32 %v3923, %v4011
      %v4013 = vpop.f32.mrf.mxu0
      %v4014 = vadd.f32 %v3925, %v4013
      %4015 = vmatmul.bf16.gmra.mxu0 %v2599
      %v4016 = vpop.f32.mrf.mxu0
      %v4017 = vadd.f32 %v3928, %v4016
      %v4018 = vpop.f32.mrf.mxu0
      %v4019 = vadd.f32 %v3930, %v4018
      %4020 = vmatmul.bf16.gmra.mxu0 %v2608
      %v4021 = vpop.f32.mrf.mxu0
      %v4022 = vadd.f32 %v3933, %v4021
      %v4023 = vpop.f32.mrf.mxu0
      %v4024 = vadd.f32 %v3935, %v4023
      %4025 = vmatmul.bf16.gmra.mxu0 %v2617
      %v4026 = vpop.f32.mrf.mxu0
      %v4027 = vadd.f32 %v3938, %v4026
      %v4028 = vpop.f32.mrf.mxu0
      %v4029 = vadd.f32 %v3940, %v4028
      %4030 = vmatmul.bf16.gmra.mxu0 %v2626
      %v4031 = vpop.f32.mrf.mxu0
      %v4032 = vadd.f32 %v3943, %v4031
      %v4033 = vpop.f32.mrf.mxu0
      %v4034 = vadd.f32 %v3945, %v4033
      %4035 = vmatmul.bf16.gmra.mxu0 %v2635
      %v4036 = vpop.f32.mrf.mxu0
      %v4037 = vadd.f32 %v3948, %v4036
      %v4038 = vpop.f32.mrf.mxu0
      %v4039 = vadd.f32 %v3950, %v4038
      %4040 = vmatmul.bf16.gmra.mxu0 %v2644
      %v4041 = vpop.f32.mrf.mxu0
      %v4042 = vadd.f32 %v3953, %v4041
      %v4043 = vpop.f32.mrf.mxu0
      %v4044 = vadd.f32 %v3955, %v4043
      %4045 = vmatmul.bf16.gmra.mxu0 %v2653
      %v4046 = vpop.f32.mrf.mxu0
      %v4047 = vadd.f32 %v3958, %v4046
      %v4048 = vpop.f32.mrf.mxu0
      %v4049 = vadd.f32 %v3960, %v4048
      %4050 = vmatmul.bf16.gmra.mxu0 %v2662
      %v4051 = vpop.f32.mrf.mxu0
      %v4052 = vadd.f32 %v3963, %v4051
      %v4053 = vpop.f32.mrf.mxu0
      %v4054 = vadd.f32 %v3965, %v4053
      %4055 = vmatmul.bf16.gmra.mxu0 %v2671
      %v4056 = vpop.f32.mrf.mxu0
      %v4057 = vadd.f32 %v3968, %v4056
      %v4058 = vpop.f32.mrf.mxu0
      %v4059 = vadd.f32 %v3970, %v4058
      %4060 = vmatmul.bf16.gmra.mxu0 %v2680
      %v4061 = vpop.f32.mrf.mxu0
      %v4062 = vadd.f32 %v3973, %v4061
      %v4063 = vpop.f32.mrf.mxu0
      %v4064 = vadd.f32 %v3975, %v4063
      %4065 = vmatmul.bf16.gmra.mxu0 %v2689
      %v4066 = vpop.f32.mrf.mxu0
      %v4067 = vadd.f32 %v3978, %v4066
      %v4068 = vpop.f32.mrf.mxu0
      %v4069 = vadd.f32 %v3980, %v4068
      %4070 = vmatmul.bf16.gmra.mxu0 %v2698
      %v4071 = vpop.f32.mrf.mxu0
      %v4072 = vadd.f32 %v3983, %v4071
      %v4073 = vpop.f32.mrf.mxu0
      %v4074 = vadd.f32 %v3985, %v4073
      %4075 = vdwg.mxu0
      %v4076 = vld [vmem:[%s230] sm:$0xff]
      %v4077 = vld [vmem:[%s230 + $0x8] sm:$0xff]
      %v4078 = vld [vmem:[%s230 + $0x10] sm:$0xff]
      %v4079 = vld [vmem:[%s230 + $0x18] sm:$0xff]
      %v4080 = vld [vmem:[%s230 + $0x20] sm:$0xff]
      %v4081 = vld [vmem:[%s230 + $0x28] sm:$0xff]
      %v4082 = vld [vmem:[%s230 + $0x30] sm:$0xff]
      %v4083 = vld [vmem:[%s230 + $0x38] sm:$0xff]
      %v4084 = vld [vmem:[%s230 + $0x40] sm:$0xff]
      %v4085 = vld [vmem:[%s230 + $0x48] sm:$0xff]
      %v4086 = vld [vmem:[%s230 + $0x50] sm:$0xff]
      %v4087 = vld [vmem:[%s230 + $0x58] sm:$0xff]
      %v4088 = vld [vmem:[%s230 + $0x60] sm:$0xff]
      %v4089 = vld [vmem:[%s230 + $0x68] sm:$0xff]
      %v4090 = vld [vmem:[%s230 + $0x70] sm:$0xff]
      %v4091 = vld [vmem:[%s230 + $0x78] sm:$0xff]
      %v4092 = vld [vmem:[%s230 + $0x80] sm:$0xff]
      %v4093 = vld [vmem:[%s230 + $0x88] sm:$0xff]
      %v4094 = vld [vmem:[%s230 + $0x90] sm:$0xff]
      %v4095 = vld [vmem:[%s230 + $0x98] sm:$0xff]
      %v4096 = vld [vmem:[%s230 + $0xa0] sm:$0xff]
      %v4097 = vld [vmem:[%s230 + $0xa8] sm:$0xff]
      %v4098 = vld [vmem:[%s230 + $0xb0] sm:$0xff]
      %v4099 = vld [vmem:[%s230 + $0xb8] sm:$0xff]
      %v4100 = vld [vmem:[%s230 + $0xc0] sm:$0xff]
      %v4101 = vld [vmem:[%s230 + $0xc8] sm:$0xff]
      %v4102 = vld [vmem:[%s230 + $0xd0] sm:$0xff]
      %v4103 = vld [vmem:[%s230 + $0xd8] sm:$0xff]
      %v4104 = vld [vmem:[%s230 + $0xe0] sm:$0xff]
      %v4105 = vld [vmem:[%s230 + $0xe8] sm:$0xff]
      %v4106 = vld [vmem:[%s230 + $0xf0] sm:$0xff]
      %v4107 = vld [vmem:[%s230 + $0xf8] sm:$0xff]
      %v4108 = vadd.f32 %v3997, %v4076
      %v4109 = vadd.f32 %v3999, %v4077
      %v4110 = vadd.f32 %v4002, %v4078
      %v4111 = vadd.f32 %v4004, %v4079
      %v4112 = vadd.f32 %v4007, %v4080
      %v4113 = vadd.f32 %v4009, %v4081
      %v4114 = vadd.f32 %v4012, %v4082
      %v4115 = vadd.f32 %v4014, %v4083
      %v4116 = vadd.f32 %v4017, %v4084
      %v4117 = vadd.f32 %v4019, %v4085
      %v4118 = vadd.f32 %v4022, %v4086
      %v4119 = vadd.f32 %v4024, %v4087
      %v4120 = vadd.f32 %v4027, %v4088
      %v4121 = vadd.f32 %v4029, %v4089
      %v4122 = vadd.f32 %v4032, %v4090
      %v4123 = vadd.f32 %v4034, %v4091
      %v4124 = vadd.f32 %v4037, %v4092
      %v4125 = vadd.f32 %v4039, %v4093
      %v4126 = vadd.f32 %v4042, %v4094
      %v4127 = vadd.f32 %v4044, %v4095
      %v4128 = vadd.f32 %v4047, %v4096
      %v4129 = vadd.f32 %v4049, %v4097
      %v4130 = vadd.f32 %v4052, %v4098
      %v4131 = vadd.f32 %v4054, %v4099
      %v4132 = vadd.f32 %v4057, %v4100
      %v4133 = vadd.f32 %v4059, %v4101
      %v4134 = vadd.f32 %v4062, %v4102
      %v4135 = vadd.f32 %v4064, %v4103
      %v4136 = vadd.f32 %v4067, %v4104
      %v4137 = vadd.f32 %v4069, %v4105
      %v4138 = vadd.f32 %v4072, %v4106
      %v4139 = vadd.f32 %v4074, %v4107
      %4140 = vst [vmem:[%s238] sm:$0xff] %v4108
      %4141 = vst [vmem:[%s238 + $0x8] sm:$0xff] %v4109
      %4142 = vst [vmem:[%s238 + $0x10] sm:$0xff] %v4110
      %4143 = vst [vmem:[%s238 + $0x18] sm:$0xff] %v4111
      %4144 = vst [vmem:[%s238 + $0x20] sm:$0xff] %v4112
      %4145 = vst [vmem:[%s238 + $0x28] sm:$0xff] %v4113
      %4146 = vst [vmem:[%s238 + $0x30] sm:$0xff] %v4114
      %4147 = vst [vmem:[%s238 + $0x38] sm:$0xff] %v4115
      %4148 = vst [vmem:[%s238 + $0x40] sm:$0xff] %v4116
      %4149 = vst [vmem:[%s238 + $0x48] sm:$0xff] %v4117
      %4150 = vst [vmem:[%s238 + $0x50] sm:$0xff] %v4118
      %4151 = vst [vmem:[%s238 + $0x58] sm:$0xff] %v4119
      %4152 = vst [vmem:[%s238 + $0x60] sm:$0xff] %v4120
      %4153 = vst [vmem:[%s238 + $0x68] sm:$0xff] %v4121
      %4154 = vst [vmem:[%s238 + $0x70] sm:$0xff] %v4122
      %4155 = vst [vmem:[%s238 + $0x78] sm:$0xff] %v4123
      %4156 = vst [vmem:[%s238 + $0x80] sm:$0xff] %v4124
      %4157 = vst [vmem:[%s238 + $0x88] sm:$0xff] %v4125
      %4158 = vst [vmem:[%s238 + $0x90] sm:$0xff] %v4126
      %4159 = vst [vmem:[%s238 + $0x98] sm:$0xff] %v4127
      %4160 = vst [vmem:[%s238 + $0xa0] sm:$0xff] %v4128
      %4161 = vst [vmem:[%s238 + $0xa8] sm:$0xff] %v4129
      %4162 = vst [vmem:[%s238 + $0xb0] sm:$0xff] %v4130
      %4163 = vst [vmem:[%s238 + $0xb8] sm:$0xff] %v4131
      %4164 = vst [vmem:[%s238 + $0xc0] sm:$0xff] %v4132
      %4165 = vst [vmem:[%s238 + $0xc8] sm:$0xff] %v4133
      %4166 = vst [vmem:[%s238 + $0xd0] sm:$0xff] %v4134
      %4167 = vst [vmem:[%s238 + $0xd8] sm:$0xff] %v4135
      %4168 = vst [vmem:[%s238 + $0xe0] sm:$0xff] %v4136
      %4169 = vst [vmem:[%s238 + $0xe8] sm:$0xff] %v4137
      %4170 = vst [vmem:[%s238 + $0xf0] sm:$0xff] %v4138
      %4171 = vst [vmem:[%s238 + $0xf8] sm:$0xff] %v4139
      %p4172 = scmp.lt.s32.totalorder %s18, 1
      %s4173 = scalar_select %p4172, %s18, 1
      %p4174 = scmp.lt.s32.totalorder %s19, 0
      %s4175 = scalar_select %p4174, %s19, 0
      %s4176 = smul.addr %s4173, 32
      %s4177 = sadd.s32 %s4175, %s4176
      %s4178 = smul.addr %s4177, 8
      %s4179 = scalar_lea.vmem %s3, %s4178
      // Predicated region
      $region37: #{basic_block_forward.3} parent=31 // pred_check
        %p4180 = pneg %p126
      $region38: #{basic_block_forward.3} parent=31 // pred_check_branch
        %4182 = sbr.rel (%p4180) target = $region40
      $region39: #{basic_block_forward.3} parent=31 // pred_region
        _
      $region40: #{basic_block_forward.3} parent=31 // pred_fallthru
        _
    $region32: #{basic_block_forward.3} parent=5 // pred_fallthru
      _
    %p4183 = scmp.le.s32.totalorder 2, %s9
    // Predicated region
    $region41: #{basic_block_forward.3} parent=5 // pred_check
      %p4184 = pneg %p4183
    $region42: #{basic_block_forward.3} parent=5 // pred_check_branch
      %4186 = sbr.rel (%p4184) target = $region44
    $region43: #{basic_block_forward.3} parent=5 // pred_region
      %s4187 = ssub.s32 %s9, 2
      // Predicated region
      $region45: #{basic_block_forward.3} parent=43 // pred_check
        %p4188 = pneg %p132
      $region46: #{basic_block_forward.3} parent=43 // pred_check_branch
        %4190 = sbr.rel (%p4188) target = $region48
      $region47: #{basic_block_forward.3} parent=43 // pred_region
        %p4191 = scmp.lt.s32.totalorder %s20, 1
        %s4192 = scalar_select %p4191, %s20, 1
        %p4193 = scmp.lt.s32.totalorder %s21, 0
        %s4194 = scalar_select %p4193, %s21, 0
        %s4195 = smul.addr %s4192, 32
        %s4196 = sadd.s32 %s4194, %s4195
        %s4197 = smul.addr %s4196, 8
        %s4198 = scalar_lea.vmem %s3, %s4197
      $region48: #{basic_block_forward.3} parent=43 // pred_fallthru
        _
    $region44: #{basic_block_forward.3} parent=5 // pred_fallthru
      _
  $region6: #{basic_block_forward.3} parent=0 // loop_footer
    %s13 = sadd.s32 1, %s9
  $region7: #{basic_block_forward.3} parent=0 // loop_footer_branch
    %8 = sbr.rel target = $region3
  $region8: #{basic_block_forward.3} parent=0 // loop_exit
    _

// kernel: basic_block_forward.2
$region0: #{basic_block_forward.2}
  #allocation0 [shape = 'u32[]', space=smem, size = 0x4, offset = 0x4, fixed_abs, tag = 'smem constant byte address 0x4 - core index']
  #allocation1 [shape = 'u32[72,128]{1,0:T(1,128)}', space=vmem, size = 0x9000, scoped, tag = 'internal scratch']
  #allocation2 [shape = 'bf16[18,18,128]{2,1,0:T(8,128)(2,1)}', space=vmem, size = 0x1b000, scoped, tag = 'scratch operand']
  #allocation3 [shape = 'bf16[16,16,1152]{2,1,0:T(8,128)(2,1)}', space=vmem, size = 0x90000, scoped, tag = 'scratch operand']
  %s0 = inlined_call_operand.vmem [shape: f32[2,16,16,128], index: 0, kind: input, shape index: {}]
  %s1 = inlined_call_operand.vmem [shape: bf16[1152,128], index: 1, kind: input, shape index: {}]
  %s2 = inlined_call_operand.vmem [shape: f32[1,128], index: 2, kind: input, shape index: {}]
  %s3 = inlined_call_operand.vmem [shape: f32[1,128], index: 3, kind: input, shape index: {}]
  %s4 = inlined_call_operand.vmem [shape: f32[1,128], index: 4, kind: input, shape index: {}]
  %s5 = inlined_call_operand.vmem [shape: f32[1,128], index: 5, kind: input, shape index: {}]
  %s6 = inlined_call_operand.vmem [shape: bf16[2,16,16,128], index: 6, kind: output, shape index: {}]
  %s7 = sld [smem:[#allocation0]]
  $region61: #{basic_block_forward.2} parent=0
    _
  %s9 = ssub.s32 1, %s7
  %s10 = scalar_select 0, %s9, %s7
  loop: start=0, step=1, limit=4
  $region2: #{basic_block_forward.2} parent=0 // loop_pre_header
    _
  $region3: #{basic_block_forward.2} parent=0 // loop_header
    %s12 = sphi 0, %s16
    %p13 = scmp.ge.s32.totalorder %s12, 4
    %s19 = sphi 0, %s31
    %s20 = sphi 0, %s27
    %s21 = sphi 0, %s19
    %s22 = sphi 0, %s20
    %s23 = sphi 0, %s21
    %s24 = sphi 0, %s22
    %s34 = sphi 0, %s36
    %s37 = sphi 0, %s34
    %s38 = sphi 0, %s37
    %s54 = sphi 0, %s38
    %s60 = sphi 0, %s62
    %s63 = sphi 0, %s60
    %s64 = sphi 0, %s63
    %s80 = sphi 0, %s64
    %s84 = sphi 0, %s84
    %s86 = sphi 0, %s84
    %s87 = sphi 0, %s86
    %s101 = sphi 0, %s87
    %s105 = sphi 0, %s105
    %s107 = sphi 0, %s105
    %s108 = sphi 0, %s107
    %s122 = sphi 0, %s108
    %s128 = sphi 0, %s130
    %s131 = sphi 0, %s128
    %s132 = sphi 0, %s131
    %s148 = sphi 0, %s132
    %s154 = sphi 0, %s156
    %s157 = sphi 0, %s154
    %s158 = sphi 0, %s157
    %s174 = sphi 0, %s158
    %s182 = sphi 0, %s184
    %s185 = sphi 0, %s182
    %s186 = sphi 0, %s185
    %s202 = sphi 0, %s186
  $region4: #{basic_block_forward.2} parent=0 // loop_header_branch
    %15 = sbr.rel (%p13) target = $region8
  $region5: #{basic_block_forward.2} parent=0 // loop_body
    %s17 = ssub.s32 %s12, 1
    %s18 = ssub.s32 %s12, 2
    %s25 = sadd.s32 1, %s20
    %p26 = scmp.ge.s32.totalorder %s25, 1
    %s27 = scalar_select %p26, 0, %s25
    %s28 = sadd.s32 1, %s19
    %s29 = scalar_select %p26, %s28, %s19
    %p30 = scmp.ge.s32.totalorder %s29, 2
    %s31 = scalar_select %p30, 0, %s29
    %s32 = ssub.s32 %s19, %s31
    %p33 = scmp.eq.s32.totalorder %s32, 0
    %s35 = sadd.s32 %s34, 1
    %s36 = scalar_select %p33, %s34, %s35
    %p39 = pneg %p33
    %p40 = scmp.eq.s32.totalorder %s12, 1
    %p41 = por %p39, %p40
    %p42 = scmp.ne.s32.totalorder %s34, %s37
    %p43 = scmp.eq.s32.totalorder %s12, 0
    %p44 = por %p42, %p43
    %p45 = scmp.ne.s32.totalorder %s34, %s37
    %p46 = scmp.eq.s32.totalorder %s17, 1
    %p47 = por %p45, %p46
    %p48 = scmp.ne.s32.totalorder %s37, %s38
    %p49 = scmp.eq.s32.totalorder %s17, 0
    %p50 = por %p48, %p49
    %p51 = scmp.ne.s32.totalorder %s37, %s38
    %p52 = scmp.eq.s32.totalorder %s18, 1
    %p53 = por %p51, %p52
    %p55 = scmp.ne.s32.totalorder %s38, %s54
    %p56 = scmp.eq.s32.totalorder %s18, 0
    %p57 = por %p55, %p56
    %s58 = ssub.s32 %s20, %s27
    %p59 = scmp.eq.s32.totalorder %s58, 0
    %s61 = sadd.s32 %s60, 1
    %s62 = scalar_select %p59, %s60, %s61
    %p65 = pneg %p59
    %p66 = scmp.eq.s32.totalorder %s12, 1
    %p67 = por %p65, %p66
    %p68 = scmp.ne.s32.totalorder %s60, %s63
    %p69 = scmp.eq.s32.totalorder %s12, 0
    %p70 = por %p68, %p69
    %p71 = scmp.ne.s32.totalorder %s60, %s63
    %p72 = scmp.eq.s32.totalorder %s17, 1
    %p73 = por %p71, %p72
    %p74 = scmp.ne.s32.totalorder %s63, %s64
    %p75 = scmp.eq.s32.totalorder %s17, 0
    %p76 = por %p74, %p75
    %p77 = scmp.ne.s32.totalorder %s63, %s64
    %p78 = scmp.eq.s32.totalorder %s18, 1
    %p79 = por %p77, %p78
    %p81 = scmp.ne.s32.totalorder %s64, %s80
    %p82 = scmp.eq.s32.totalorder %s18, 0
    %p83 = por %p81, %p82
    %s85 = sadd.s32 %s84, 1
    %p88 = scmp.eq.s32.totalorder %s12, 1
    %p89 = scmp.ne.s32.totalorder %s84, %s86
    %p90 = scmp.eq.s32.totalorder %s12, 0
    %p91 = por %p89, %p90
    %p92 = scmp.ne.s32.totalorder %s84, %s86
    %p93 = scmp.eq.s32.totalorder %s17, 1
    %p94 = por %p92, %p93
    %p95 = scmp.ne.s32.totalorder %s86, %s87
    %p96 = scmp.eq.s32.totalorder %s17, 0
    %p97 = por %p95, %p96
    %p98 = scmp.ne.s32.totalorder %s86, %s87
    %p99 = scmp.eq.s32.totalorder %s18, 1
    %p100 = por %p98, %p99
    %p102 = scmp.ne.s32.totalorder %s87, %s101
    %p103 = scmp.eq.s32.totalorder %s18, 0
    %p104 = por %p102, %p103
    %s106 = sadd.s32 %s105, 1
    %p109 = scmp.eq.s32.totalorder %s12, 1
    %p110 = scmp.ne.s32.totalorder %s105, %s107
    %p111 = scmp.eq.s32.totalorder %s12, 0
    %p112 = por %p110, %p111
    %p113 = scmp.ne.s32.totalorder %s105, %s107
    %p114 = scmp.eq.s32.totalorder %s17, 1
    %p115 = por %p113, %p114
    %p116 = scmp.ne.s32.totalorder %s107, %s108
    %p117 = scmp.eq.s32.totalorder %s17, 0
    %p118 = por %p116, %p117
    %p119 = scmp.ne.s32.totalorder %s107, %s108
    %p120 = scmp.eq.s32.totalorder %s18, 1
    %p121 = por %p119, %p120
    %p123 = scmp.ne.s32.totalorder %s108, %s122
    %p124 = scmp.eq.s32.totalorder %s18, 0
    %p125 = por %p123, %p124
    %s126 = ssub.s32 %s20, %s27
    %p127 = scmp.eq.s32.totalorder %s126, 0
    %s129 = sadd.s32 %s128, 1
    %s130 = scalar_select %p127, %s128, %s129
    %p133 = pneg %p127
    %p134 = scmp.eq.s32.totalorder %s12, 1
    %p135 = por %p133, %p134
    %p136 = scmp.ne.s32.totalorder %s128, %s131
    %p137 = scmp.eq.s32.totalorder %s12, 0
    %p138 = por %p136, %p137
    %p139 = scmp.ne.s32.totalorder %s128, %s131
    %p140 = scmp.eq.s32.totalorder %s17, 1
    %p141 = por %p139, %p140
    %p142 = scmp.ne.s32.totalorder %s131, %s132
    %p143 = scmp.eq.s32.totalorder %s17, 0
    %p144 = por %p142, %p143
    %p145 = scmp.ne.s32.totalorder %s131, %s132
    %p146 = scmp.eq.s32.totalorder %s18, 1
    %p147 = por %p145, %p146
    %p149 = scmp.ne.s32.totalorder %s132, %s148
    %p150 = scmp.eq.s32.totalorder %s18, 0
    %p151 = por %p149, %p150
    %s152 = ssub.s32 %s20, %s27
    %p153 = scmp.eq.s32.totalorder %s152, 0
    %s155 = sadd.s32 %s154, 1
    %s156 = scalar_select %p153, %s154, %s155
    %p159 = pneg %p153
    %p160 = scmp.eq.s32.totalorder %s12, 1
    %p161 = por %p159, %p160
    %p162 = scmp.ne.s32.totalorder %s154, %s157
    %p163 = scmp.eq.s32.totalorder %s12, 0
    %p164 = por %p162, %p163
    %p165 = scmp.ne.s32.totalorder %s154, %s157
    %p166 = scmp.eq.s32.totalorder %s17, 1
    %p167 = por %p165, %p166
    %p168 = scmp.ne.s32.totalorder %s157, %s158
    %p169 = scmp.eq.s32.totalorder %s17, 0
    %p170 = por %p168, %p169
    %p171 = scmp.ne.s32.totalorder %s157, %s158
    %p172 = scmp.eq.s32.totalorder %s18, 1
    %p173 = por %p171, %p172
    %p175 = scmp.ne.s32.totalorder %s158, %s174
    %p176 = scmp.eq.s32.totalorder %s18, 0
    %p177 = por %p175, %p176
    %s178 = ssub.s32 %s19, %s31
    %s179 = ssub.s32 %s20, %s27
    %s180 = sor.u32 %s178, %s179
    %p181 = scmp.eq.s32.totalorder %s180, 0
    %s183 = sadd.s32 %s182, 1
    %s184 = scalar_select %p181, %s182, %s183
    %p187 = pneg %p181
    %p188 = scmp.eq.s32.totalorder %s12, 1
    %p189 = por %p187, %p188
    %p190 = scmp.ne.s32.totalorder %s182, %s185
    %p191 = scmp.eq.s32.totalorder %s12, 0
    %p192 = por %p190, %p191
    %p193 = scmp.ne.s32.totalorder %s182, %s185
    %p194 = scmp.eq.s32.totalorder %s17, 1
    %p195 = por %p193, %p194
    %p196 = scmp.ne.s32.totalorder %s185, %s186
    %p197 = scmp.eq.s32.totalorder %s17, 0
    %p198 = por %p196, %p197
    %p199 = scmp.ne.s32.totalorder %s185, %s186
    %p200 = scmp.eq.s32.totalorder %s18, 1
    %p201 = por %p199, %p200
    %p203 = scmp.ne.s32.totalorder %s186, %s202
    %p204 = scmp.eq.s32.totalorder %s18, 0
    %p205 = por %p203, %p204
    %p206 = scmp.le.s32.totalorder 1, %s12
    %p207 = scmp.lt.s32.totalorder %s12, 3
    %p208 = pnand %p206, %p207
    %p209 = pneg %p208
    // Predicated region
    $region9: #{basic_block_forward.2} parent=5 // pred_check
      _
    $region10: #{basic_block_forward.2} parent=5 // pred_check_branch
      %211 = sbr.rel (%p208) target = $region12
    $region11: #{basic_block_forward.2} parent=5 // pred_region
      %s212 = ssub.s32 %s12, 1
      // Predicated region
      $region13: #{basic_block_forward.2} parent=11 // pred_check
        %p213 = pneg %p76
      $region14: #{basic_block_forward.2} parent=11 // pred_check_branch
        %215 = sbr.rel (%p213) target = $region16
      $region15: #{basic_block_forward.2} parent=11 // pred_region
        %p216 = scmp.lt.s32.totalorder %s22, 0
        %s217 = scalar_select %p216, %s22, 0
        %s218 = smul.addr %s217, 4
        %s219 = scalar_lea.vmem %s1, %s218
      $region16: #{basic_block_forward.2} parent=11 // pred_fallthru
        _
      // Predicated region
      $region17: #{basic_block_forward.2} parent=11 // pred_check
        %p220 = pneg %p97
      $region18: #{basic_block_forward.2} parent=11 // pred_check_branch
        %222 = sbr.rel (%p220) target = $region20
      $region19: #{basic_block_forward.2} parent=11 // pred_region
        _
      $region20: #{basic_block_forward.2} parent=11 // pred_fallthru
        _
      // Predicated region
      $region21: #{basic_block_forward.2} parent=11 // pred_check
        %p223 = pneg %p118
      $region22: #{basic_block_forward.2} parent=11 // pred_check_branch
        %225 = sbr.rel (%p223) target = $region24
      $region23: #{basic_block_forward.2} parent=11 // pred_region
        _
      $region24: #{basic_block_forward.2} parent=11 // pred_fallthru
        _
      // Predicated region
      $region25: #{basic_block_forward.2} parent=11 // pred_check
        %p226 = pneg %p144
      $region26: #{basic_block_forward.2} parent=11 // pred_check_branch
        %228 = sbr.rel (%p226) target = $region28
      $region27: #{basic_block_forward.2} parent=11 // pred_region
        %p229 = scmp.lt.s32.totalorder %s22, 0
        %s230 = scalar_select %p229, %s22, 0
        %s231 = scalar_lea.vmem %s4, %s230
      $region28: #{basic_block_forward.2} parent=11 // pred_fallthru
        _
      // Predicated region
      $region29: #{basic_block_forward.2} parent=11 // pred_check
        %p232 = pneg %p170
      $region30: #{basic_block_forward.2} parent=11 // pred_check_branch
        %234 = sbr.rel (%p232) target = $region32
      $region31: #{basic_block_forward.2} parent=11 // pred_region
        %p235 = scmp.lt.s32.totalorder %s22, 0
        %s236 = scalar_select %p235, %s22, 0
        %s237 = scalar_lea.vmem %s5, %s236
      $region32: #{basic_block_forward.2} parent=11 // pred_fallthru
        _
    $region12: #{basic_block_forward.2} parent=5 // pred_fallthru
      _
    %p238 = scmp.lt.s32.totalorder %s12, 2
    // Predicated region
    $region33: #{basic_block_forward.2} parent=5 // pred_check
      %p239 = pneg %p238
    $region34: #{basic_block_forward.2} parent=5 // pred_check_branch
      %241 = sbr.rel (%p239) target = $region36
    $region35: #{basic_block_forward.2} parent=5 // pred_region
      // Predicated region
      $region37: #{basic_block_forward.2} parent=35 // pred_check
        %p242 = pneg %p44
      $region38: #{basic_block_forward.2} parent=35 // pred_check_branch
        %244 = sbr.rel (%p242) target = $region40
      $region39: #{basic_block_forward.2} parent=35 // pred_region
        %p245 = scmp.lt.s32.totalorder %s19, 1
        %s246 = scalar_select %p245, %s19, 1
        %s247 = smul.addr %s246, 32
        %s248 = smul.addr %s247, 8
        %s249 = scalar_lea.vmem %s0, %s248
      $region40: #{basic_block_forward.2} parent=35 // pred_fallthru
        _
    $region36: #{basic_block_forward.2} parent=5 // pred_fallthru
      _
    %p250 = scmp.le.s32.totalorder 1, %s12
    %p251 = scmp.lt.s32.totalorder %s12, 3
    %p252 = pnand %p250, %p251
    %p253 = pneg %p252
    // Predicated region
    $region41: #{basic_block_forward.2} parent=5 // pred_check
      _
    $region42: #{basic_block_forward.2} parent=5 // pred_check_branch
      %255 = sbr.rel (%p252) target = $region44
    $region43: #{basic_block_forward.2} parent=5 // pred_region
      %s256 = ssub.s32 %s12, 1
      %p257 = scmp.lt.s32.totalorder %s21, 1
      %s258 = scalar_select %p257, %s21, 1
      %s259 = smul.addr %s258, 32
      %s260 = smul.addr %s259, 8
      %s261 = scalar_lea.vmem %s0, %s260
      %p262 = pneg %p50
      %p263 = pneg %p47
      %p264 = scmp.lt.s32.totalorder %s22, 0
      %s265 = scalar_select %p264, %s22, 0
      %s266 = smul.addr %s265, 4
      %s267 = scalar_lea.vmem %s1, %s266
      %p268 = pneg %p76
      %p269 = pneg %p73
      %p270 = pneg %p97
      %p271 = pneg %p94
      %p272 = pneg %p118
      %p273 = pneg %p115
      %p274 = scmp.lt.s32.totalorder %s22, 0
      %s275 = scalar_select %p274, %s22, 0
      %s276 = scalar_lea.vmem %s4, %s275
      %p277 = pneg %p144
      %p278 = pneg %p141
      %p279 = scmp.lt.s32.totalorder %s22, 0
      %s280 = scalar_select %p279, %s22, 0
      %s281 = scalar_lea.vmem %s5, %s280
      %p282 = pneg %p170
      %p283 = pneg %p167
      %p284 = pneg %p198
      %p285 = pneg %p195
      %p286 = scmp.lt.s32.totalorder %s21, 1
      %s287 = scalar_select %p286, %s21, 1
      %p288 = scmp.lt.s32.totalorder %s22, 0
      %s289 = scalar_select %p288, %s22, 0
      %s290 = smul.addr %s287, 32
      %s291 = sadd.s32 %s289, %s290
      %s292 = smul.addr %s291, 4
      %s293 = scalar_lea.vmem %s6, %s292
      %p294 = scmp.lt.s32.totalorder %s21, 1
      %s295 = scalar_select %p294, %s21, 1
      %s296 = smul.addr %s295, 32
      %s297 = smul.addr %s296, 8
      %s298 = scalar_lea.vmem %s0, %s297
      %p299 = scmp.lt.s32.totalorder %s22, 0
      %s300 = scalar_select %p299, %s22, 0
      %s301 = smul.addr %s300, 4
      %s302 = scalar_lea.vmem %s1, %s301
      %p303 = scmp.lt.s32.totalorder %s22, 0
      %s304 = scalar_select %p303, %s22, 0
      %s305 = scalar_lea.vmem %s4, %s304
      %p306 = scmp.lt.s32.totalorder %s22, 0
      %s307 = scalar_select %p306, %s22, 0
      %s308 = scalar_lea.vmem %s5, %s307
      %p309 = scmp.lt.s32.totalorder %s21, 1
      %s310 = scalar_select %p309, %s21, 1
      %p311 = scmp.lt.s32.totalorder %s22, 0
      %s312 = scalar_select %p311, %s22, 0
      %s313 = smul.addr %s310, 32
      %s314 = sadd.s32 %s312, %s313
      %s315 = smul.addr %s314, 4
      %s316 = scalar_lea.vmem %s6, %s315
      %p318 = scmp.eq.s32.totalorder %s22, 0
      // Predicated region
      $region45: #{basic_block_forward.2} parent=43 // pred_check
        %p319 = pneg %p318
      $region46: #{basic_block_forward.2} parent=43 // pred_check_branch
        %321 = sbr.rel (%p319) target = $region48
      $region47: #{basic_block_forward.2} parent=43 // pred_region
        %322 = vst [vmem:[#allocation2] sm:$0xf] 0
        %323 = vst [vmem:[#allocation2 + $0x4] sm:$0xf] 0
        %324 = vst [vmem:[#allocation2 + $0x8] sm:$0x1] 0
        %325 = vst [vmem:[#allocation2 + $0xc] sm:$0xf] 0
        %326 = vst [vmem:[#allocation2 + $0x10] sm:$0xf] 0
        %327 = vst [vmem:[#allocation2 + $0x14] sm:$0x1] 0
        %328 = vst [vmem:[#allocation2 + $0x18] sm:$0xf] 0
        %329 = vst [vmem:[#allocation2 + $0x1c] sm:$0xf] 0
        %330 = vst [vmem:[#allocation2 + $0x20] sm:$0x1] 0
        %331 = vst [vmem:[#allocation2 + $0x24] sm:$0xf] 0
        %332 = vst [vmem:[#allocation2 + $0x28] sm:$0xf] 0
        %333 = vst [vmem:[#allocation2 + $0x2c] sm:$0x1] 0
        %334 = vst [vmem:[#allocation2 + $0x30] sm:$0xf] 0
        %335 = vst [vmem:[#allocation2 + $0x34] sm:$0xf] 0
        %336 = vst [vmem:[#allocation2 + $0x38] sm:$0x1] 0
        %337 = vst [vmem:[#allocation2 + $0x3c] sm:$0xf] 0
        %338 = vst [vmem:[#allocation2 + $0x40] sm:$0xf] 0
        %339 = vst [vmem:[#allocation2 + $0x44] sm:$0x1] 0
        %340 = vst [vmem:[#allocation2 + $0x48] sm:$0xf] 0
        %341 = vst [vmem:[#allocation2 + $0x4c] sm:$0xf] 0
        %342 = vst [vmem:[#allocation2 + $0x50] sm:$0x1] 0
        %343 = vst [vmem:[#allocation2 + $0x54] sm:$0xf] 0
        %344 = vst [vmem:[#allocation2 + $0x58] sm:$0xf] 0
        %345 = vst [vmem:[#allocation2 + $0x5c] sm:$0x1] 0
        %346 = vst [vmem:[#allocation2 + $0x60] sm:$0xf] 0
        %347 = vst [vmem:[#allocation2 + $0x64] sm:$0xf] 0
        %348 = vst [vmem:[#allocation2 + $0x68] sm:$0x1] 0
        %349 = vst [vmem:[#allocation2 + $0x6c] sm:$0xf] 0
        %350 = vst [vmem:[#allocation2 + $0x70] sm:$0xf] 0
        %351 = vst [vmem:[#allocation2 + $0x74] sm:$0x1] 0
        %352 = vst [vmem:[#allocation2 + $0x78] sm:$0xf] 0
        %353 = vst [vmem:[#allocation2 + $0x7c] sm:$0xf] 0
        %354 = vst [vmem:[#allocation2 + $0x80] sm:$0x1] 0
        %355 = vst [vmem:[#allocation2 + $0x84] sm:$0xf] 0
        %356 = vst [vmem:[#allocation2 + $0x88] sm:$0xf] 0
        %357 = vst [vmem:[#allocation2 + $0x8c] sm:$0x1] 0
        %358 = vst [vmem:[#allocation2 + $0x90] sm:$0xf] 0
        %359 = vst [vmem:[#allocation2 + $0x94] sm:$0xf] 0
        %360 = vst [vmem:[#allocation2 + $0x98] sm:$0x1] 0
        %361 = vst [vmem:[#allocation2 + $0x9c] sm:$0xf] 0
        %362 = vst [vmem:[#allocation2 + $0xa0] sm:$0xf] 0
        %363 = vst [vmem:[#allocation2 + $0xa4] sm:$0x1] 0
        %364 = vst [vmem:[#allocation2 + $0xa8] sm:$0xf] 0
        %365 = vst [vmem:[#allocation2 + $0xac] sm:$0xf] 0
        %366 = vst [vmem:[#allocation2 + $0xb0] sm:$0x1] 0
        %367 = vst [vmem:[#allocation2 + $0xb4] sm:$0xf] 0
        %368 = vst [vmem:[#allocation2 + $0xb8] sm:$0xf] 0
        %369 = vst [vmem:[#allocation2 + $0xbc] sm:$0x1] 0
        %370 = vst [vmem:[#allocation2 + $0xc0] sm:$0xf] 0
        %371 = vst [vmem:[#allocation2 + $0xc4] sm:$0xf] 0
        %372 = vst [vmem:[#allocation2 + $0xc8] sm:$0x1] 0
        %373 = vst [vmem:[#allocation2 + $0xcc] sm:$0xf] 0
        %374 = vst [vmem:[#allocation2 + $0xd0] sm:$0xf] 0
        %375 = vst [vmem:[#allocation2 + $0xd4] sm:$0x1] 0
        %v376 = vld [vmem:[%s298] sm:$0xff]
        %v377 = vld [vmem:[%s298 + $0x8] sm:$0xff]
        %v378 = vld [vmem:[%s298 + $0x10] sm:$0xff]
        %v379 = vld [vmem:[%s298 + $0x18] sm:$0xff]
        %v380 = vld [vmem:[%s298 + $0x20] sm:$0xff]
        %v381 = vld [vmem:[%s298 + $0x28] sm:$0xff]
        %v382 = vld [vmem:[%s298 + $0x30] sm:$0xff]
        %v383 = vld [vmem:[%s298 + $0x38] sm:$0xff]
        %v384 = vld [vmem:[%s298 + $0x40] sm:$0xff]
        %v385 = vld [vmem:[%s298 + $0x48] sm:$0xff]
        %v386 = vld [vmem:[%s298 + $0x50] sm:$0xff]
        %v387 = vld [vmem:[%s298 + $0x58] sm:$0xff]
        %v388 = vld [vmem:[%s298 + $0x60] sm:$0xff]
        %v389 = vld [vmem:[%s298 + $0x68] sm:$0xff]
        %v390 = vld [vmem:[%s298 + $0x70] sm:$0xff]
        %v391 = vld [vmem:[%s298 + $0x78] sm:$0xff]
        %v392 = vld [vmem:[%s298 + $0x80] sm:$0xff]
        %v393 = vld [vmem:[%s298 + $0x88] sm:$0xff]
        %v394 = vld [vmem:[%s298 + $0x90] sm:$0xff]
        %v395 = vld [vmem:[%s298 + $0x98] sm:$0xff]
        %v396 = vld [vmem:[%s298 + $0xa0] sm:$0xff]
        %v397 = vld [vmem:[%s298 + $0xa8] sm:$0xff]
        %v398 = vld [vmem:[%s298 + $0xb0] sm:$0xff]
        %v399 = vld [vmem:[%s298 + $0xb8] sm:$0xff]
        %v400 = vld [vmem:[%s298 + $0xc0] sm:$0xff]
        %v401 = vld [vmem:[%s298 + $0xc8] sm:$0xff]
        %v402 = vld [vmem:[%s298 + $0xd0] sm:$0xff]
        %v403 = vld [vmem:[%s298 + $0xd8] sm:$0xff]
        %v404 = vld [vmem:[%s298 + $0xe0] sm:$0xff]
        %v405 = vld [vmem:[%s298 + $0xe8] sm:$0xff]
        %v406 = vld [vmem:[%s298 + $0xf0] sm:$0xff]
        %v407 = vld [vmem:[%s298 + $0xf8] sm:$0xff]
        %v408 = vld [vmem:[%s2] sm:$0x1]
        %v410 = vperm.slane %v408, 0
        %v412 = vmul.f32 %v376, %v410
        %v413 = vmul.f32 %v377, %v410
        %v414 = vmul.f32 %v378, %v410
        %v415 = vmul.f32 %v379, %v410
        %v416 = vmul.f32 %v380, %v410
        %v417 = vmul.f32 %v381, %v410
        %v418 = vmul.f32 %v382, %v410
        %v419 = vmul.f32 %v383, %v410
        %v420 = vmul.f32 %v384, %v410
        %v421 = vmul.f32 %v385, %v410
        %v422 = vmul.f32 %v386, %v410
        %v423 = vmul.f32 %v387, %v410
        %v424 = vmul.f32 %v388, %v410
        %v425 = vmul.f32 %v389, %v410
        %v426 = vmul.f32 %v390, %v410
        %v427 = vmul.f32 %v391, %v410
        %v428 = vmul.f32 %v392, %v410
        %v429 = vmul.f32 %v393, %v410
        %v430 = vmul.f32 %v394, %v410
        %v431 = vmul.f32 %v395, %v410
        %v432 = vmul.f32 %v396, %v410
        %v433 = vmul.f32 %v397, %v410
        %v434 = vmul.f32 %v398, %v410
        %v435 = vmul.f32 %v399, %v410
        %v436 = vmul.f32 %v400, %v410
        %v437 = vmul.f32 %v401, %v410
        %v438 = vmul.f32 %v402, %v410
        %v439 = vmul.f32 %v403, %v410
        %v440 = vmul.f32 %v404, %v410
        %v441 = vmul.f32 %v405, %v410
        %v442 = vmul.f32 %v406, %v410
        %v443 = vmul.f32 %v407, %v410
        %v444 = vld [vmem:[%s3] sm:$0x1]
        %v446 = vperm.slane %v444, 0
        %v448 = vadd.f32 %v412, %v446
        %v449 = vadd.f32 %v413, %v446
        %v450 = vadd.f32 %v414, %v446
        %v451 = vadd.f32 %v415, %v446
        %v452 = vadd.f32 %v416, %v446
        %v453 = vadd.f32 %v417, %v446
        %v454 = vadd.f32 %v418, %v446
        %v455 = vadd.f32 %v419, %v446
        %v456 = vadd.f32 %v420, %v446
        %v457 = vadd.f32 %v421, %v446
        %v458 = vadd.f32 %v422, %v446
        %v459 = vadd.f32 %v423, %v446
        %v460 = vadd.f32 %v424, %v446
        %v461 = vadd.f32 %v425, %v446
        %v462 = vadd.f32 %v426, %v446
        %v463 = vadd.f32 %v427, %v446
        %v464 = vadd.f32 %v428, %v446
        %v465 = vadd.f32 %v429, %v446
        %v466 = vadd.f32 %v430, %v446
        %v467 = vadd.f32 %v431, %v446
        %v468 = vadd.f32 %v432, %v446
        %v469 = vadd.f32 %v433, %v446
        %v470 = vadd.f32 %v434, %v446
        %v471 = vadd.f32 %v435, %v446
        %v472 = vadd.f32 %v436, %v446
        %v473 = vadd.f32 %v437, %v446
        %v474 = vadd.f32 %v438, %v446
        %v475 = vadd.f32 %v439, %v446
        %v476 = vadd.f32 %v440, %v446
        %v477 = vadd.f32 %v441, %v446
        %v478 = vadd.f32 %v442, %v446
        %v479 = vadd.f32 %v443, %v446
        %v480 = vmax.f32 %v448, 0.0
        %v481 = vmax.f32 %v449, 0.0
        %v482 = vmax.f32 %v450, 0.0
        %v483 = vmax.f32 %v451, 0.0
        %v484 = vmax.f32 %v452, 0.0
        %v485 = vmax.f32 %v453, 0.0
        %v486 = vmax.f32 %v454, 0.0
        %v487 = vmax.f32 %v455, 0.0
        %v488 = vmax.f32 %v456, 0.0
        %v489 = vmax.f32 %v457, 0.0
        %v490 = vmax.f32 %v458, 0.0
        %v491 = vmax.f32 %v459, 0.0
        %v492 = vmax.f32 %v460, 0.0
        %v493 = vmax.f32 %v461, 0.0
        %v494 = vmax.f32 %v462, 0.0
        %v495 = vmax.f32 %v463, 0.0
        %v496 = vmax.f32 %v464, 0.0
        %v497 = vmax.f32 %v465, 0.0
        %v498 = vmax.f32 %v466, 0.0
        %v499 = vmax.f32 %v467, 0.0
        %v500 = vmax.f32 %v468, 0.0
        %v501 = vmax.f32 %v469, 0.0
        %v502 = vmax.f32 %v470, 0.0
        %v503 = vmax.f32 %v471, 0.0
        %v504 = vmax.f32 %v472, 0.0
        %v505 = vmax.f32 %v473, 0.0
        %v506 = vmax.f32 %v474, 0.0
        %v507 = vmax.f32 %v475, 0.0
        %v508 = vmax.f32 %v476, 0.0
        %v509 = vmax.f32 %v477, 0.0
        %v510 = vmax.f32 %v478, 0.0
        %v511 = vmax.f32 %v479, 0.0
        %v512 = vpack.c.bf16 %v480, %v480
        %v513 = vpack.c.bf16 %v481, %v481
        %v514 = vpack.c.bf16 %v482, %v482
        %v515 = vpack.c.bf16 %v483, %v483
        %v516 = vpack.c.bf16 %v484, %v484
        %v517 = vpack.c.bf16 %v485, %v485
        %v518 = vpack.c.bf16 %v486, %v486
        %v519 = vpack.c.bf16 %v487, %v487
        %v520 = vpack.c.bf16 %v488, %v488
        %v521 = vpack.c.bf16 %v489, %v489
        %v522 = vpack.c.bf16 %v490, %v490
        %v523 = vpack.c.bf16 %v491, %v491
        %v524 = vpack.c.bf16 %v492, %v492
        %v525 = vpack.c.bf16 %v493, %v493
        %v526 = vpack.c.bf16 %v494, %v494
        %v527 = vpack.c.bf16 %v495, %v495
        %v528 = vpack.c.bf16 %v496, %v496
        %v529 = vpack.c.bf16 %v497, %v497
        %v530 = vpack.c.bf16 %v498, %v498
        %v531 = vpack.c.bf16 %v499, %v499
        %v532 = vpack.c.bf16 %v500, %v500
        %v533 = vpack.c.bf16 %v501, %v501
        %v534 = vpack.c.bf16 %v502, %v502
        %v535 = vpack.c.bf16 %v503, %v503
        %v536 = vpack.c.bf16 %v504, %v504
        %v537 = vpack.c.bf16 %v505, %v505
        %v538 = vpack.c.bf16 %v506, %v506
        %v539 = vpack.c.bf16 %v507, %v507
        %v540 = vpack.c.bf16 %v508, %v508
        %v541 = vpack.c.bf16 %v509, %v509
        %v542 = vpack.c.bf16 %v510, %v510
        %v543 = vpack.c.bf16 %v511, %v511
        %vm544 = vsmask.f32 256
        %vm545 = vsmask.f32 4368
        %vm546 = vmor %vm544, %vm545
        %v548 = vshrl.u32 %v512, 16
        %v550 = vrot.slane %v548, 7
        %v551 = vshll.u32 %v512, 16
        %v553 = vor.u32 %v550, %v551
        %v554 = vrot.slane %v550, 4
        %v556 = vshrl.u32 %v513, 16
        %v558 = vrot.slane %v556, 7
        %v559 = vshll.u32 %v513, 16
        %v561 = vor.u32 %v558, %v559
        %v562 = vsel %vm546, %v554, %v561
        %v563 = vrot.slane %v558, 4
        %v565 = vshrl.u32 %v514, 16
        %v567 = vrot.slane %v565, 7
        %v568 = vshll.u32 %v514, 16
        %v570 = vor.u32 %v567, %v568
        %v571 = vrot.slane %v567, 4
        %v573 = vshrl.u32 %v515, 16
        %v575 = vrot.slane %v573, 7
        %v576 = vshll.u32 %v515, 16
        %v578 = vor.u32 %v575, %v576
        %v579 = vsel %vm546, %v571, %v578
        %v580 = vrot.slane %v575, 4
        %v582 = vshrl.u32 %v516, 16
        %v584 = vrot.slane %v582, 7
        %v585 = vshll.u32 %v516, 16
        %v587 = vor.u32 %v584, %v585
        %v588 = vrot.slane %v584, 4
        %v590 = vshrl.u32 %v517, 16
        %v592 = vrot.slane %v590, 7
        %v593 = vshll.u32 %v517, 16
        %v595 = vor.u32 %v592, %v593
        %v596 = vsel %vm546, %v588, %v595
        %v597 = vrot.slane %v592, 4
        %v599 = vshrl.u32 %v518, 16
        %v601 = vrot.slane %v599, 7
        %v602 = vshll.u32 %v518, 16
        %v604 = vor.u32 %v601, %v602
        %v605 = vrot.slane %v601, 4
        %v607 = vshrl.u32 %v519, 16
        %v609 = vrot.slane %v607, 7
        %v610 = vshll.u32 %v519, 16
        %v612 = vor.u32 %v609, %v610
        %v613 = vsel %vm546, %v605, %v612
        %v614 = vrot.slane %v609, 4
        %v616 = vshrl.u32 %v520, 16
        %v618 = vrot.slane %v616, 7
        %v619 = vshll.u32 %v520, 16
        %v621 = vor.u32 %v618, %v619
        %v622 = vrot.slane %v618, 4
        %v624 = vshrl.u32 %v521, 16
        %v626 = vrot.slane %v624, 7
        %v627 = vshll.u32 %v521, 16
        %v629 = vor.u32 %v626, %v627
        %v630 = vsel %vm546, %v622, %v629
        %v631 = vrot.slane %v626, 4
        %v633 = vshrl.u32 %v522, 16
        %v635 = vrot.slane %v633, 7
        %v636 = vshll.u32 %v522, 16
        %v638 = vor.u32 %v635, %v636
        %v639 = vrot.slane %v635, 4
        %v641 = vshrl.u32 %v523, 16
        %v643 = vrot.slane %v641, 7
        %v644 = vshll.u32 %v523, 16
        %v646 = vor.u32 %v643, %v644
        %v647 = vsel %vm546, %v639, %v646
        %v648 = vrot.slane %v643, 4
        %v650 = vshrl.u32 %v524, 16
        %v652 = vrot.slane %v650, 7
        %v653 = vshll.u32 %v524, 16
        %v655 = vor.u32 %v652, %v653
        %v656 = vrot.slane %v652, 4
        %v658 = vshrl.u32 %v525, 16
        %v660 = vrot.slane %v658, 7
        %v661 = vshll.u32 %v525, 16
        %v663 = vor.u32 %v660, %v661
        %v664 = vsel %vm546, %v656, %v663
        %v665 = vrot.slane %v660, 4
        %v667 = vshrl.u32 %v526, 16
        %v669 = vrot.slane %v667, 7
        %v670 = vshll.u32 %v526, 16
        %v672 = vor.u32 %v669, %v670
        %v673 = vrot.slane %v669, 4
        %v675 = vshrl.u32 %v527, 16
        %v677 = vrot.slane %v675, 7
        %v678 = vshll.u32 %v527, 16
        %v680 = vor.u32 %v677, %v678
        %v681 = vsel %vm546, %v673, %v680
        %v682 = vrot.slane %v677, 4
        %v684 = vshrl.u32 %v528, 16
        %v686 = vrot.slane %v684, 7
        %v687 = vshll.u32 %v528, 16
        %v689 = vor.u32 %v686, %v687
        %v690 = vrot.slane %v686, 4
        %v692 = vshrl.u32 %v529, 16
        %v694 = vrot.slane %v692, 7
        %v695 = vshll.u32 %v529, 16
        %v697 = vor.u32 %v694, %v695
        %v698 = vsel %vm546, %v690, %v697
        %v699 = vrot.slane %v694, 4
        %v701 = vshrl.u32 %v530, 16
        %v703 = vrot.slane %v701, 7
        %v704 = vshll.u32 %v530, 16
        %v706 = vor.u32 %v703, %v704
        %v707 = vrot.slane %v703, 4
        %v709 = vshrl.u32 %v531, 16
        %v711 = vrot.slane %v709, 7
        %v712 = vshll.u32 %v531, 16
        %v714 = vor.u32 %v711, %v712
        %v715 = vsel %vm546, %v707, %v714
        %v716 = vrot.slane %v711, 4
        %v718 = vshrl.u32 %v532, 16
        %v720 = vrot.slane %v718, 7
        %v721 = vshll.u32 %v532, 16
        %v723 = vor.u32 %v720, %v721
        %v724 = vrot.slane %v720, 4
        %v726 = vshrl.u32 %v533, 16
        %v728 = vrot.slane %v726, 7
        %v729 = vshll.u32 %v533, 16
        %v731 = vor.u32 %v728, %v729
        %v732 = vsel %vm546, %v724, %v731
        %v733 = vrot.slane %v728, 4
        %v735 = vshrl.u32 %v534, 16
        %v737 = vrot.slane %v735, 7
        %v738 = vshll.u32 %v534, 16
        %v740 = vor.u32 %v737, %v738
        %v741 = vrot.slane %v737, 4
        %v743 = vshrl.u32 %v535, 16
        %v745 = vrot.slane %v743, 7
        %v746 = vshll.u32 %v535, 16
        %v748 = vor.u32 %v745, %v746
        %v749 = vsel %vm546, %v741, %v748
        %v750 = vrot.slane %v745, 4
        %v752 = vshrl.u32 %v536, 16
        %v754 = vrot.slane %v752, 7
        %v755 = vshll.u32 %v536, 16
        %v757 = vor.u32 %v754, %v755
        %v758 = vrot.slane %v754, 4
        %v760 = vshrl.u32 %v537, 16
        %v762 = vrot.slane %v760, 7
        %v763 = vshll.u32 %v537, 16
        %v765 = vor.u32 %v762, %v763
        %v766 = vsel %vm546, %v758, %v765
        %v767 = vrot.slane %v762, 4
        %v769 = vshrl.u32 %v538, 16
        %v771 = vrot.slane %v769, 7
        %v772 = vshll.u32 %v538, 16
        %v774 = vor.u32 %v771, %v772
        %v775 = vrot.slane %v771, 4
        %v777 = vshrl.u32 %v539, 16
        %v779 = vrot.slane %v777, 7
        %v780 = vshll.u32 %v539, 16
        %v782 = vor.u32 %v779, %v780
        %v783 = vsel %vm546, %v775, %v782
        %v784 = vrot.slane %v779, 4
        %v786 = vshrl.u32 %v540, 16
        %v788 = vrot.slane %v786, 7
        %v789 = vshll.u32 %v540, 16
        %v791 = vor.u32 %v788, %v789
        %v792 = vrot.slane %v788, 4
        %v794 = vshrl.u32 %v541, 16
        %v796 = vrot.slane %v794, 7
        %v797 = vshll.u32 %v541, 16
        %v799 = vor.u32 %v796, %v797
        %v800 = vsel %vm546, %v792, %v799
        %v801 = vrot.slane %v796, 4
        %v803 = vshrl.u32 %v542, 16
        %v805 = vrot.slane %v803, 7
        %v806 = vshll.u32 %v542, 16
        %v808 = vor.u32 %v805, %v806
        %v809 = vrot.slane %v805, 4
        %v811 = vshrl.u32 %v543, 16
        %v813 = vrot.slane %v811, 7
        %v814 = vshll.u32 %v543, 16
        %v816 = vor.u32 %v813, %v814
        %v817 = vsel %vm546, %v809, %v816
        %v818 = vrot.slane %v813, 4
        %s867 = scalar_lea.vmem [#allocation2], 12
        %vm868 = vcmask 1043456
        %vm869 = vsmask.f32 7938
        %vm870 = vmand %vm868, %vm869
        %v871 = vld [vmem:[%s867] sm:$0xf]
        %v872 = vsel %vm870, %v553, %v871
        %873 = vst [vmem:[%s867] sm:$0xf] %v872
        %874 = vst [vmem:[%s867 + $0x4] sm:$0xf] %v562
        %vm875 = vcmask 1040384
        %vm876 = vmand %vm875, %vm544
        %v877 = vld [vmem:[%s867 + $0x8] sm:$0x1]
        %v878 = vsel %vm876, %v563, %v877
        %879 = vst [vmem:[%s867 + $0x8] sm:$0x1] %v878
        %v880 = vld [vmem:[%s867 + $0xc] sm:$0xf]
        %v881 = vsel %vm870, %v570, %v880
        %882 = vst [vmem:[%s867 + $0xc] sm:$0xf] %v881
        %883 = vst [vmem:[%s867 + $0x10] sm:$0xf] %v579
        %v884 = vld [vmem:[%s867 + $0x14] sm:$0x1]
        %v885 = vsel %vm876, %v580, %v884
        %886 = vst [vmem:[%s867 + $0x14] sm:$0x1] %v885
        %v887 = vld [vmem:[%s867 + $0x18] sm:$0xf]
        %v888 = vsel %vm870, %v587, %v887
        %889 = vst [vmem:[%s867 + $0x18] sm:$0xf] %v888
        %890 = vst [vmem:[%s867 + $0x1c] sm:$0xf] %v596
        %v891 = vld [vmem:[%s867 + $0x20] sm:$0x1]
        %v892 = vsel %vm876, %v597, %v891
        %893 = vst [vmem:[%s867 + $0x20] sm:$0x1] %v892
        %v894 = vld [vmem:[%s867 + $0x24] sm:$0xf]
        %v895 = vsel %vm870, %v604, %v894
        %896 = vst [vmem:[%s867 + $0x24] sm:$0xf] %v895
        %897 = vst [vmem:[%s867 + $0x28] sm:$0xf] %v613
        %v898 = vld [vmem:[%s867 + $0x2c] sm:$0x1]
        %v899 = vsel %vm876, %v614, %v898
        %900 = vst [vmem:[%s867 + $0x2c] sm:$0x1] %v899
        %v901 = vld [vmem:[%s867 + $0x30] sm:$0xf]
        %v902 = vsel %vm870, %v621, %v901
        %903 = vst [vmem:[%s867 + $0x30] sm:$0xf] %v902
        %904 = vst [vmem:[%s867 + $0x34] sm:$0xf] %v630
        %v905 = vld [vmem:[%s867 + $0x38] sm:$0x1]
        %v906 = vsel %vm876, %v631, %v905
        %907 = vst [vmem:[%s867 + $0x38] sm:$0x1] %v906
        %v908 = vld [vmem:[%s867 + $0x3c] sm:$0xf]
        %v909 = vsel %vm870, %v638, %v908
        %910 = vst [vmem:[%s867 + $0x3c] sm:$0xf] %v909
        %911 = vst [vmem:[%s867 + $0x40] sm:$0xf] %v647
        %v912 = vld [vmem:[%s867 + $0x44] sm:$0x1]
        %v913 = vsel %vm876, %v648, %v912
        %914 = vst [vmem:[%s867 + $0x44] sm:$0x1] %v913
        %v915 = vld [vmem:[%s867 + $0x48] sm:$0xf]
        %v916 = vsel %vm870, %v655, %v915
        %917 = vst [vmem:[%s867 + $0x48] sm:$0xf] %v916
        %918 = vst [vmem:[%s867 + $0x4c] sm:$0xf] %v664
        %v919 = vld [vmem:[%s867 + $0x50] sm:$0x1]
        %v920 = vsel %vm876, %v665, %v919
        %921 = vst [vmem:[%s867 + $0x50] sm:$0x1] %v920
        %v922 = vld [vmem:[%s867 + $0x54] sm:$0xf]
        %v923 = vsel %vm870, %v672, %v922
        %924 = vst [vmem:[%s867 + $0x54] sm:$0xf] %v923
        %925 = vst [vmem:[%s867 + $0x58] sm:$0xf] %v681
        %v926 = vld [vmem:[%s867 + $0x5c] sm:$0x1]
        %v927 = vsel %vm876, %v682, %v926
        %928 = vst [vmem:[%s867 + $0x5c] sm:$0x1] %v927
        %v929 = vld [vmem:[%s867 + $0x60] sm:$0xf]
        %v930 = vsel %vm870, %v689, %v929
        %931 = vst [vmem:[%s867 + $0x60] sm:$0xf] %v930
        %932 = vst [vmem:[%s867 + $0x64] sm:$0xf] %v698
        %v933 = vld [vmem:[%s867 + $0x68] sm:$0x1]
        %v934 = vsel %vm876, %v699, %v933
        %935 = vst [vmem:[%s867 + $0x68] sm:$0x1] %v934
        %v936 = vld [vmem:[%s867 + $0x6c] sm:$0xf]
        %v937 = vsel %vm870, %v706, %v936
        %938 = vst [vmem:[%s867 + $0x6c] sm:$0xf] %v937
        %939 = vst [vmem:[%s867 + $0x70] sm:$0xf] %v715
        %v940 = vld [vmem:[%s867 + $0x74] sm:$0x1]
        %v941 = vsel %vm876, %v716, %v940
        %942 = vst [vmem:[%s867 + $0x74] sm:$0x1] %v941
        %v943 = vld [vmem:[%s867 + $0x78] sm:$0xf]
        %v944 = vsel %vm870, %v723, %v943
        %945 = vst [vmem:[%s867 + $0x78] sm:$0xf] %v944
        %946 = vst [vmem:[%s867 + $0x7c] sm:$0xf] %v732
        %v947 = vld [vmem:[%s867 + $0x80] sm:$0x1]
        %v948 = vsel %vm876, %v733, %v947
        %949 = vst [vmem:[%s867 + $0x80] sm:$0x1] %v948
        %v950 = vld [vmem:[%s867 + $0x84] sm:$0xf]
        %v951 = vsel %vm870, %v740, %v950
        %952 = vst [vmem:[%s867 + $0x84] sm:$0xf] %v951
        %953 = vst [vmem:[%s867 + $0x88] sm:$0xf] %v749
        %v954 = vld [vmem:[%s867 + $0x8c] sm:$0x1]
        %v955 = vsel %vm876, %v750, %v954
        %956 = vst [vmem:[%s867 + $0x8c] sm:$0x1] %v955
        %v957 = vld [vmem:[%s867 + $0x90] sm:$0xf]
        %v958 = vsel %vm870, %v757, %v957
        %959 = vst [vmem:[%s867 + $0x90] sm:$0xf] %v958
        %960 = vst [vmem:[%s867 + $0x94] sm:$0xf] %v766
        %v961 = vld [vmem:[%s867 + $0x98] sm:$0x1]
        %v962 = vsel %vm876, %v767, %v961
        %963 = vst [vmem:[%s867 + $0x98] sm:$0x1] %v962
        %v964 = vld [vmem:[%s867 + $0x9c] sm:$0xf]
        %v965 = vsel %vm870, %v774, %v964
        %966 = vst [vmem:[%s867 + $0x9c] sm:$0xf] %v965
        %967 = vst [vmem:[%s867 + $0xa0] sm:$0xf] %v783
        %v968 = vld [vmem:[%s867 + $0xa4] sm:$0x1]
        %v969 = vsel %vm876, %v784, %v968
        %970 = vst [vmem:[%s867 + $0xa4] sm:$0x1] %v969
        %v971 = vld [vmem:[%s867 + $0xa8] sm:$0xf]
        %v972 = vsel %vm870, %v791, %v971
        %973 = vst [vmem:[%s867 + $0xa8] sm:$0xf] %v972
        %974 = vst [vmem:[%s867 + $0xac] sm:$0xf] %v800
        %v975 = vld [vmem:[%s867 + $0xb0] sm:$0x1]
        %v976 = vsel %vm876, %v801, %v975
        %977 = vst [vmem:[%s867 + $0xb0] sm:$0x1] %v976
        %v978 = vld [vmem:[%s867 + $0xb4] sm:$0xf]
        %v979 = vsel %vm870, %v808, %v978
        %980 = vst [vmem:[%s867 + $0xb4] sm:$0xf] %v979
        %981 = vst [vmem:[%s867 + $0xb8] sm:$0xf] %v817
        %v982 = vld [vmem:[%s867 + $0xbc] sm:$0x1]
        %v983 = vsel %vm876, %v818, %v982
        %984 = vst [vmem:[%s867 + $0xbc] sm:$0x1] %v983
        %v985 = vld [vmem:[#allocation2] sm:$0xf]
        %v986 = vld [vmem:[#allocation2 + $0x4] sm:$0xf]
        %v987 = vld [vmem:[#allocation2 + $0x8] sm:$0x1]
        %v988 = vld [vmem:[#allocation2 + $0xc] sm:$0xf]
        %v989 = vld [vmem:[#allocation2 + $0x10] sm:$0xf]
        %v990 = vld [vmem:[#allocation2 + $0x14] sm:$0x1]
        %v991 = vld [vmem:[#allocation2 + $0x18] sm:$0xf]
        %v992 = vld [vmem:[#allocation2 + $0x1c] sm:$0xf]
        %v993 = vld [vmem:[#allocation2 + $0x20] sm:$0x1]
        %v994 = vld [vmem:[#allocation2 + $0x24] sm:$0xf]
        %v995 = vld [vmem:[#allocation2 + $0x28] sm:$0xf]
        %v996 = vld [vmem:[#allocation2 + $0x2c] sm:$0x1]
        %v997 = vld [vmem:[#allocation2 + $0x30] sm:$0xf]
        %v998 = vld [vmem:[#allocation2 + $0x34] sm:$0xf]
        %v999 = vld [vmem:[#allocation2 + $0x38] sm:$0x1]
        %v1000 = vld [vmem:[#allocation2 + $0x3c] sm:$0xf]
        %v1001 = vld [vmem:[#allocation2 + $0x40] sm:$0xf]
        %v1002 = vld [vmem:[#allocation2 + $0x44] sm:$0x1]
        %v1003 = vld [vmem:[#allocation2 + $0x48] sm:$0xf]
        %v1004 = vld [vmem:[#allocation2 + $0x4c] sm:$0xf]
        %v1005 = vld [vmem:[#allocation2 + $0x50] sm:$0x1]
        %v1006 = vld [vmem:[#allocation2 + $0x54] sm:$0xf]
        %v1007 = vld [vmem:[#allocation2 + $0x58] sm:$0xf]
        %v1008 = vld [vmem:[#allocation2 + $0x5c] sm:$0x1]
        %v1009 = vld [vmem:[#allocation2 + $0x60] sm:$0xf]
        %v1010 = vld [vmem:[#allocation2 + $0x64] sm:$0xf]
        %v1011 = vld [vmem:[#allocation2 + $0x68] sm:$0x1]
        %v1012 = vld [vmem:[#allocation2 + $0x6c] sm:$0xf]
        %v1013 = vld [vmem:[#allocation2 + $0x70] sm:$0xf]
        %v1014 = vld [vmem:[#allocation2 + $0x74] sm:$0x1]
        %v1015 = vld [vmem:[#allocation2 + $0x78] sm:$0xf]
        %v1016 = vld [vmem:[#allocation2 + $0x7c] sm:$0xf]
        %v1017 = vld [vmem:[#allocation2 + $0x80] sm:$0x1]
        %v1018 = vld [vmem:[#allocation2 + $0x84] sm:$0xf]
        %v1019 = vld [vmem:[#allocation2 + $0x88] sm:$0xf]
        %v1020 = vld [vmem:[#allocation2 + $0x8c] sm:$0x1]
        %v1021 = vld [vmem:[#allocation2 + $0x90] sm:$0xf]
        %v1022 = vld [vmem:[#allocation2 + $0x94] sm:$0xf]
        %v1023 = vld [vmem:[#allocation2 + $0x98] sm:$0x1]
        %v1024 = vld [vmem:[#allocation2 + $0x9c] sm:$0xf]
        %v1025 = vld [vmem:[#allocation2 + $0xa0] sm:$0xf]
        %v1026 = vld [vmem:[#allocation2 + $0xa4] sm:$0x1]
        %v1027 = vld [vmem:[#allocation2 + $0xa8] sm:$0xf]
        %v1028 = vld [vmem:[#allocation2 + $0xac] sm:$0xf]
        %v1029 = vld [vmem:[#allocation2 + $0xb0] sm:$0x1]
        %v1030 = vld [vmem:[#allocation2 + $0xb4] sm:$0xf]
        %v1031 = vld [vmem:[#allocation2 + $0xb8] sm:$0xf]
        %v1032 = vld [vmem:[#allocation2 + $0xbc] sm:$0x1]
        %v1033 = vld [vmem:[#allocation2 + $0xc0] sm:$0xf]
        %v1034 = vld [vmem:[#allocation2 + $0xc4] sm:$0xf]
        %v1035 = vld [vmem:[#allocation2 + $0xc8] sm:$0x1]
        %v1036 = vld [vmem:[#allocation2 + $0xcc] sm:$0xf]
        %v1037 = vld [vmem:[#allocation2 + $0xd0] sm:$0xf]
        %v1038 = vld [vmem:[#allocation2 + $0xd4] sm:$0x1]
        %1039 = vst [vmem:[#allocation3] sm:$0xf] %v985
        %1040 = vst [vmem:[#allocation3 + $0x24] sm:$0xf] %v986
        %1041 = vst [vmem:[#allocation3 + $0x48] sm:$0xf] %v988
        %1042 = vst [vmem:[#allocation3 + $0x6c] sm:$0xf] %v989
        %1043 = vst [vmem:[#allocation3 + $0x90] sm:$0xf] %v991
        %1044 = vst [vmem:[#allocation3 + $0xb4] sm:$0xf] %v992
        %1045 = vst [vmem:[#allocation3 + $0xd8] sm:$0xf] %v994
        %1046 = vst [vmem:[#allocation3 + $0xfc] sm:$0xf] %v995
        %1047 = vst [vmem:[#allocation3 + $0x120] sm:$0xf] %v997
        %1048 = vst [vmem:[#allocation3 + $0x144] sm:$0xf] %v998
        %1049 = vst [vmem:[#allocation3 + $0x168] sm:$0xf] %v1000
        %1050 = vst [vmem:[#allocation3 + $0x18c] sm:$0xf] %v1001
        %1051 = vst [vmem:[#allocation3 + $0x1b0] sm:$0xf] %v1003
        %1052 = vst [vmem:[#allocation3 + $0x1d4] sm:$0xf] %v1004
        %1053 = vst [vmem:[#allocation3 + $0x1f8] sm:$0xf] %v1006
        %1054 = vst [vmem:[#allocation3 + $0x21c] sm:$0xf] %v1007
        %1055 = vst [vmem:[#allocation3 + $0x240] sm:$0xf] %v1009
        %1056 = vst [vmem:[#allocation3 + $0x264] sm:$0xf] %v1010
        %1057 = vst [vmem:[#allocation3 + $0x288] sm:$0xf] %v1012
        %1058 = vst [vmem:[#allocation3 + $0x2ac] sm:$0xf] %v1013
        %1059 = vst [vmem:[#allocation3 + $0x2d0] sm:$0xf] %v1015
        %1060 = vst [vmem:[#allocation3 + $0x2f4] sm:$0xf] %v1016
        %1061 = vst [vmem:[#allocation3 + $0x318] sm:$0xf] %v1018
        %1062 = vst [vmem:[#allocation3 + $0x33c] sm:$0xf] %v1019
        %1063 = vst [vmem:[#allocation3 + $0x360] sm:$0xf] %v1021
        %1064 = vst [vmem:[#allocation3 + $0x384] sm:$0xf] %v1022
        %1065 = vst [vmem:[#allocation3 + $0x3a8] sm:$0xf] %v1024
        %1066 = vst [vmem:[#allocation3 + $0x3cc] sm:$0xf] %v1025
        %1067 = vst [vmem:[#allocation3 + $0x3f0] sm:$0xf] %v1027
        %1068 = vst [vmem:[#allocation3 + $0x414] sm:$0xf] %v1028
        %1069 = vst [vmem:[#allocation3 + $0x438] sm:$0xf] %v1030
        %1070 = vst [vmem:[#allocation3 + $0x45c] sm:$0xf] %v1031
        %vm1071 = vsmask.f32 3328
        %vm1072 = vsmask.f32 7440
        %vm1073 = vmor %vm1071, %vm1072
        %v1075 = vshrl.u32 %v985, 16
        %v1077 = vrot.slane %v1075, 4
        %v1078 = vshll.u32 %v985, 16
        %v1080 = vrot.slane %v1078, 5
        %v1081 = vor.u32 %v1077, %v1080
        %v1082 = vrot.slane %v1081, 4
        %v1084 = vshll.u32 %v986, 16
        %v1086 = vrot.slane %v1084, 5
        %v1087 = vsel %vm1073, %v1082, %v1086
        %v1088 = vshrl.u32 %v986, 16
        %v1090 = vrot.slane %v1088, 4
        %v1091 = vor.u32 %v1090, %v1086
        %v1092 = vrot.slane %v1091, 4
        %v1094 = vshll.u32 %v987, 16
        %v1096 = vrot.slane %v1094, 5
        %v1097 = vsel %vm1073, %v1092, %v1096
        %v1099 = vshrl.u32 %v988, 16
        %v1101 = vrot.slane %v1099, 4
        %v1102 = vshll.u32 %v988, 16
        %v1104 = vrot.slane %v1102, 5
        %v1105 = vor.u32 %v1101, %v1104
        %v1106 = vrot.slane %v1105, 4
        %v1108 = vshll.u32 %v989, 16
        %v1110 = vrot.slane %v1108, 5
        %v1111 = vsel %vm1073, %v1106, %v1110
        %v1112 = vshrl.u32 %v989, 16
        %v1114 = vrot.slane %v1112, 4
        %v1115 = vor.u32 %v1114, %v1110
        %v1116 = vrot.slane %v1115, 4
        %v1118 = vshll.u32 %v990, 16
        %v1120 = vrot.slane %v1118, 5
        %v1121 = vsel %vm1073, %v1116, %v1120
        %v1123 = vshrl.u32 %v991, 16
        %v1125 = vrot.slane %v1123, 4
        %v1126 = vshll.u32 %v991, 16
        %v1128 = vrot.slane %v1126, 5
        %v1129 = vor.u32 %v1125, %v1128
        %v1130 = vrot.slane %v1129, 4
        %v1132 = vshll.u32 %v992, 16
        %v1134 = vrot.slane %v1132, 5
        %v1135 = vsel %vm1073, %v1130, %v1134
        %v1136 = vshrl.u32 %v992, 16
        %v1138 = vrot.slane %v1136, 4
        %v1139 = vor.u32 %v1138, %v1134
        %v1140 = vrot.slane %v1139, 4
        %v1142 = vshll.u32 %v993, 16
        %v1144 = vrot.slane %v1142, 5
        %v1145 = vsel %vm1073, %v1140, %v1144
        %v1147 = vshrl.u32 %v994, 16
        %v1149 = vrot.slane %v1147, 4
        %v1150 = vshll.u32 %v994, 16
        %v1152 = vrot.slane %v1150, 5
        %v1153 = vor.u32 %v1149, %v1152
        %v1154 = vrot.slane %v1153, 4
        %v1156 = vshll.u32 %v995, 16
        %v1158 = vrot.slane %v1156, 5
        %v1159 = vsel %vm1073, %v1154, %v1158
        %v1160 = vshrl.u32 %v995, 16
        %v1162 = vrot.slane %v1160, 4
        %v1163 = vor.u32 %v1162, %v1158
        %v1164 = vrot.slane %v1163, 4
        %v1166 = vshll.u32 %v996, 16
        %v1168 = vrot.slane %v1166, 5
        %v1169 = vsel %vm1073, %v1164, %v1168
        %v1171 = vshrl.u32 %v997, 16
        %v1173 = vrot.slane %v1171, 4
        %v1174 = vshll.u32 %v997, 16
        %v1176 = vrot.slane %v1174, 5
        %v1177 = vor.u32 %v1173, %v1176
        %v1178 = vrot.slane %v1177, 4
        %v1180 = vshll.u32 %v998, 16
        %v1182 = vrot.slane %v1180, 5
        %v1183 = vsel %vm1073, %v1178, %v1182
        %v1184 = vshrl.u32 %v998, 16
        %v1186 = vrot.slane %v1184, 4
        %v1187 = vor.u32 %v1186, %v1182
        %v1188 = vrot.slane %v1187, 4
        %v1190 = vshll.u32 %v999, 16
        %v1192 = vrot.slane %v1190, 5
        %v1193 = vsel %vm1073, %v1188, %v1192
        %v1195 = vshrl.u32 %v1000, 16
        %v1197 = vrot.slane %v1195, 4
        %v1198 = vshll.u32 %v1000, 16
        %v1200 = vrot.slane %v1198, 5
        %v1201 = vor.u32 %v1197, %v1200
        %v1202 = vrot.slane %v1201, 4
        %v1204 = vshll.u32 %v1001, 16
        %v1206 = vrot.slane %v1204, 5
        %v1207 = vsel %vm1073, %v1202, %v1206
        %v1208 = vshrl.u32 %v1001, 16
        %v1210 = vrot.slane %v1208, 4
        %v1211 = vor.u32 %v1210, %v1206
        %v1212 = vrot.slane %v1211, 4
        %v1214 = vshll.u32 %v1002, 16
        %v1216 = vrot.slane %v1214, 5
        %v1217 = vsel %vm1073, %v1212, %v1216
        %v1219 = vshrl.u32 %v1003, 16
        %v1221 = vrot.slane %v1219, 4
        %v1222 = vshll.u32 %v1003, 16
        %v1224 = vrot.slane %v1222, 5
        %v1225 = vor.u32 %v1221, %v1224
        %v1226 = vrot.slane %v1225, 4
        %v1228 = vshll.u32 %v1004, 16
        %v1230 = vrot.slane %v1228, 5
        %v1231 = vsel %vm1073, %v1226, %v1230
        %v1232 = vshrl.u32 %v1004, 16
        %v1234 = vrot.slane %v1232, 4
        %v1235 = vor.u32 %v1234, %v1230
        %v1236 = vrot.slane %v1235, 4
        %v1238 = vshll.u32 %v1005, 16
        %v1240 = vrot.slane %v1238, 5
        %v1241 = vsel %vm1073, %v1236, %v1240
        %v1243 = vshrl.u32 %v1006, 16
        %v1245 = vrot.slane %v1243, 4
        %v1246 = vshll.u32 %v1006, 16
        %v1248 = vrot.slane %v1246, 5
        %v1249 = vor.u32 %v1245, %v1248
        %v1250 = vrot.slane %v1249, 4
        %v1252 = vshll.u32 %v1007, 16
        %v1254 = vrot.slane %v1252, 5
        %v1255 = vsel %vm1073, %v1250, %v1254
        %v1256 = vshrl.u32 %v1007, 16
        %v1258 = vrot.slane %v1256, 4
        %v1259 = vor.u32 %v1258, %v1254
        %v1260 = vrot.slane %v1259, 4
        %v1262 = vshll.u32 %v1008, 16
        %v1264 = vrot.slane %v1262, 5
        %v1265 = vsel %vm1073, %v1260, %v1264
        %v1267 = vshrl.u32 %v1009, 16
        %v1269 = vrot.slane %v1267, 4
        %v1270 = vshll.u32 %v1009, 16
        %v1272 = vrot.slane %v1270, 5
        %v1273 = vor.u32 %v1269, %v1272
        %v1274 = vrot.slane %v1273, 4
        %v1276 = vshll.u32 %v1010, 16
        %v1278 = vrot.slane %v1276, 5
        %v1279 = vsel %vm1073, %v1274, %v1278
        %v1280 = vshrl.u32 %v1010, 16
        %v1282 = vrot.slane %v1280, 4
        %v1283 = vor.u32 %v1282, %v1278
        %v1284 = vrot.slane %v1283, 4
        %v1286 = vshll.u32 %v1011, 16
        %v1288 = vrot.slane %v1286, 5
        %v1289 = vsel %vm1073, %v1284, %v1288
        %v1291 = vshrl.u32 %v1012, 16
        %v1293 = vrot.slane %v1291, 4
        %v1294 = vshll.u32 %v1012, 16
        %v1296 = vrot.slane %v1294, 5
        %v1297 = vor.u32 %v1293, %v1296
        %v1298 = vrot.slane %v1297, 4
        %v1300 = vshll.u32 %v1013, 16
        %v1302 = vrot.slane %v1300, 5
        %v1303 = vsel %vm1073, %v1298, %v1302
        %v1304 = vshrl.u32 %v1013, 16
        %v1306 = vrot.slane %v1304, 4
        %v1307 = vor.u32 %v1306, %v1302
        %v1308 = vrot.slane %v1307, 4
        %v1310 = vshll.u32 %v1014, 16
        %v1312 = vrot.slane %v1310, 5
        %v1313 = vsel %vm1073, %v1308, %v1312
        %v1315 = vshrl.u32 %v1015, 16
        %v1317 = vrot.slane %v1315, 4
        %v1318 = vshll.u32 %v1015, 16
        %v1320 = vrot.slane %v1318, 5
        %v1321 = vor.u32 %v1317, %v1320
        %v1322 = vrot.slane %v1321, 4
        %v1324 = vshll.u32 %v1016, 16
        %v1326 = vrot.slane %v1324, 5
        %v1327 = vsel %vm1073, %v1322, %v1326
        %v1328 = vshrl.u32 %v1016, 16
        %v1330 = vrot.slane %v1328, 4
        %v1331 = vor.u32 %v1330, %v1326
        %v1332 = vrot.slane %v1331, 4
        %v1334 = vshll.u32 %v1017, 16
        %v1336 = vrot.slane %v1334, 5
        %v1337 = vsel %vm1073, %v1332, %v1336
        %v1339 = vshrl.u32 %v1018, 16
        %v1341 = vrot.slane %v1339, 4
        %v1342 = vshll.u32 %v1018, 16
        %v1344 = vrot.slane %v1342, 5
        %v1345 = vor.u32 %v1341, %v1344
        %v1346 = vrot.slane %v1345, 4
        %v1348 = vshll.u32 %v1019, 16
        %v1350 = vrot.slane %v1348, 5
        %v1351 = vsel %vm1073, %v1346, %v1350
        %v1352 = vshrl.u32 %v1019, 16
        %v1354 = vrot.slane %v1352, 4
        %v1355 = vor.u32 %v1354, %v1350
        %v1356 = vrot.slane %v1355, 4
        %v1358 = vshll.u32 %v1020, 16
        %v1360 = vrot.slane %v1358, 5
        %v1361 = vsel %vm1073, %v1356, %v1360
        %v1363 = vshrl.u32 %v1021, 16
        %v1365 = vrot.slane %v1363, 4
        %v1366 = vshll.u32 %v1021, 16
        %v1368 = vrot.slane %v1366, 5
        %v1369 = vor.u32 %v1365, %v1368
        %v1370 = vrot.slane %v1369, 4
        %v1372 = vshll.u32 %v1022, 16
        %v1374 = vrot.slane %v1372, 5
        %v1375 = vsel %vm1073, %v1370, %v1374
        %v1376 = vshrl.u32 %v1022, 16
        %v1378 = vrot.slane %v1376, 4
        %v1379 = vor.u32 %v1378, %v1374
        %v1380 = vrot.slane %v1379, 4
        %v1382 = vshll.u32 %v1023, 16
        %v1384 = vrot.slane %v1382, 5
        %v1385 = vsel %vm1073, %v1380, %v1384
        %v1387 = vshrl.u32 %v1024, 16
        %v1389 = vrot.slane %v1387, 4
        %v1390 = vshll.u32 %v1024, 16
        %v1392 = vrot.slane %v1390, 5
        %v1393 = vor.u32 %v1389, %v1392
        %v1394 = vrot.slane %v1393, 4
        %v1396 = vshll.u32 %v1025, 16
        %v1398 = vrot.slane %v1396, 5
        %v1399 = vsel %vm1073, %v1394, %v1398
        %v1400 = vshrl.u32 %v1025, 16
        %v1402 = vrot.slane %v1400, 4
        %v1403 = vor.u32 %v1402, %v1398
        %v1404 = vrot.slane %v1403, 4
        %v1406 = vshll.u32 %v1026, 16
        %v1408 = vrot.slane %v1406, 5
        %v1409 = vsel %vm1073, %v1404, %v1408
        %v1411 = vshrl.u32 %v1027, 16
        %v1413 = vrot.slane %v1411, 4
        %v1414 = vshll.u32 %v1027, 16
        %v1416 = vrot.slane %v1414, 5
        %v1417 = vor.u32 %v1413, %v1416
        %v1418 = vrot.slane %v1417, 4
        %v1420 = vshll.u32 %v1028, 16
        %v1422 = vrot.slane %v1420, 5
        %v1423 = vsel %vm1073, %v1418, %v1422
        %v1424 = vshrl.u32 %v1028, 16
        %v1426 = vrot.slane %v1424, 4
        %v1427 = vor.u32 %v1426, %v1422
        %v1428 = vrot.slane %v1427, 4
        %v1430 = vshll.u32 %v1029, 16
        %v1432 = vrot.slane %v1430, 5
        %v1433 = vsel %vm1073, %v1428, %v1432
        %v1435 = vshrl.u32 %v1030, 16
        %v1437 = vrot.slane %v1435, 4
        %v1438 = vshll.u32 %v1030, 16
        %v1440 = vrot.slane %v1438, 5
        %v1441 = vor.u32 %v1437, %v1440
        %v1442 = vrot.slane %v1441, 4
        %v1444 = vshll.u32 %v1031, 16
        %v1446 = vrot.slane %v1444, 5
        %v1447 = vsel %vm1073, %v1442, %v1446
        %v1448 = vshrl.u32 %v1031, 16
        %v1450 = vrot.slane %v1448, 4
        %v1451 = vor.u32 %v1450, %v1446
        %v1452 = vrot.slane %v1451, 4
        %v1454 = vshll.u32 %v1032, 16
        %v1456 = vrot.slane %v1454, 5
        %v1457 = vsel %vm1073, %v1452, %v1456
        %1490 = vst [vmem:[#allocation3 + $0x4] sm:$0xf] %v1087
        %1491 = vst [vmem:[#allocation3 + $0x28] sm:$0xf] %v1097
        %1492 = vst [vmem:[#allocation3 + $0x4c] sm:$0xf] %v1111
        %1493 = vst [vmem:[#allocation3 + $0x70] sm:$0xf] %v1121
        %1494 = vst [vmem:[#allocation3 + $0x94] sm:$0xf] %v1135
        %1495 = vst [vmem:[#allocation3 + $0xb8] sm:$0xf] %v1145
        %1496 = vst [vmem:[#allocation3 + $0xdc] sm:$0xf] %v1159
        %1497 = vst [vmem:[#allocation3 + $0x100] sm:$0xf] %v1169
        %1498 = vst [vmem:[#allocation3 + $0x124] sm:$0xf] %v1183
        %1499 = vst [vmem:[#allocation3 + $0x148] sm:$0xf] %v1193
        %1500 = vst [vmem:[#allocation3 + $0x16c] sm:$0xf] %v1207
        %1501 = vst [vmem:[#allocation3 + $0x190] sm:$0xf] %v1217
        %1502 = vst [vmem:[#allocation3 + $0x1b4] sm:$0xf] %v1231
        %1503 = vst [vmem:[#allocation3 + $0x1d8] sm:$0xf] %v1241
        %1504 = vst [vmem:[#allocation3 + $0x1fc] sm:$0xf] %v1255
        %1505 = vst [vmem:[#allocation3 + $0x220] sm:$0xf] %v1265
        %1506 = vst [vmem:[#allocation3 + $0x244] sm:$0xf] %v1279
        %1507 = vst [vmem:[#allocation3 + $0x268] sm:$0xf] %v1289
        %1508 = vst [vmem:[#allocation3 + $0x28c] sm:$0xf] %v1303
        %1509 = vst [vmem:[#allocation3 + $0x2b0] sm:$0xf] %v1313
        %1510 = vst [vmem:[#allocation3 + $0x2d4] sm:$0xf] %v1327
        %1511 = vst [vmem:[#allocation3 + $0x2f8] sm:$0xf] %v1337
        %1512 = vst [vmem:[#allocation3 + $0x31c] sm:$0xf] %v1351
        %1513 = vst [vmem:[#allocation3 + $0x340] sm:$0xf] %v1361
        %1514 = vst [vmem:[#allocation3 + $0x364] sm:$0xf] %v1375
        %1515 = vst [vmem:[#allocation3 + $0x388] sm:$0xf] %v1385
        %1516 = vst [vmem:[#allocation3 + $0x3ac] sm:$0xf] %v1399
        %1517 = vst [vmem:[#allocation3 + $0x3d0] sm:$0xf] %v1409
        %1518 = vst [vmem:[#allocation3 + $0x3f4] sm:$0xf] %v1423
        %1519 = vst [vmem:[#allocation3 + $0x418] sm:$0xf] %v1433
        %1520 = vst [vmem:[#allocation3 + $0x43c] sm:$0xf] %v1447
        %1521 = vst [vmem:[#allocation3 + $0x460] sm:$0xf] %v1457
        %vm1570 = vcmask 1042432
        %vm1571 = vcmask 1046532
        %vm1572 = vmor %vm1570, %vm1571
        %v1573 = vrot.slane %v985, 5
        %v1574 = vrot.slane %v1573, 4
        %v1575 = vrot.slane %v986, 5
        %v1576 = vsel %vm1572, %v1574, %v1575
        %v1577 = vrot.slane %v1575, 4
        %v1578 = vrot.slane %v987, 5
        %v1579 = vsel %vm1572, %v1577, %v1578
        %v1580 = vrot.slane %v988, 5
        %v1581 = vrot.slane %v1580, 4
        %v1582 = vrot.slane %v989, 5
        %v1583 = vsel %vm1572, %v1581, %v1582
        %v1584 = vrot.slane %v1582, 4
        %v1585 = vrot.slane %v990, 5
        %v1586 = vsel %vm1572, %v1584, %v1585
        %v1587 = vrot.slane %v991, 5
        %v1588 = vrot.slane %v1587, 4
        %v1589 = vrot.slane %v992, 5
        %v1590 = vsel %vm1572, %v1588, %v1589
        %v1591 = vrot.slane %v1589, 4
        %v1592 = vrot.slane %v993, 5
        %v1593 = vsel %vm1572, %v1591, %v1592
        %v1594 = vrot.slane %v994, 5
        %v1595 = vrot.slane %v1594, 4
        %v1596 = vrot.slane %v995, 5
        %v1597 = vsel %vm1572, %v1595, %v1596
        %v1598 = vrot.slane %v1596, 4
        %v1599 = vrot.slane %v996, 5
        %v1600 = vsel %vm1572, %v1598, %v1599
        %v1601 = vrot.slane %v997, 5
        %v1602 = vrot.slane %v1601, 4
        %v1603 = vrot.slane %v998, 5
        %v1604 = vsel %vm1572, %v1602, %v1603
        %v1605 = vrot.slane %v1603, 4
        %v1606 = vrot.slane %v999, 5
        %v1607 = vsel %vm1572, %v1605, %v1606
        %v1608 = vrot.slane %v1000, 5
        %v1609 = vrot.slane %v1608, 4
        %v1610 = vrot.slane %v1001, 5
        %v1611 = vsel %vm1572, %v1609, %v1610
        %v1612 = vrot.slane %v1610, 4
        %v1613 = vrot.slane %v1002, 5
        %v1614 = vsel %vm1572, %v1612, %v1613
        %v1615 = vrot.slane %v1003, 5
        %v1616 = vrot.slane %v1615, 4
        %v1617 = vrot.slane %v1004, 5
        %v1618 = vsel %vm1572, %v1616, %v1617
        %v1619 = vrot.slane %v1617, 4
        %v1620 = vrot.slane %v1005, 5
        %v1621 = vsel %vm1572, %v1619, %v1620
        %v1622 = vrot.slane %v1006, 5
        %v1623 = vrot.slane %v1622, 4
        %v1624 = vrot.slane %v1007, 5
        %v1625 = vsel %vm1572, %v1623, %v1624
        %v1626 = vrot.slane %v1624, 4
        %v1627 = vrot.slane %v1008, 5
        %v1628 = vsel %vm1572, %v1626, %v1627
        %v1629 = vrot.slane %v1009, 5
        %v1630 = vrot.slane %v1629, 4
        %v1631 = vrot.slane %v1010, 5
        %v1632 = vsel %vm1572, %v1630, %v1631
        %v1633 = vrot.slane %v1631, 4
        %v1634 = vrot.slane %v1011, 5
        %v1635 = vsel %vm1572, %v1633, %v1634
        %v1636 = vrot.slane %v1012, 5
        %v1637 = vrot.slane %v1636, 4
        %v1638 = vrot.slane %v1013, 5
        %v1639 = vsel %vm1572, %v1637, %v1638
        %v1640 = vrot.slane %v1638, 4
        %v1641 = vrot.slane %v1014, 5
        %v1642 = vsel %vm1572, %v1640, %v1641
        %v1643 = vrot.slane %v1015, 5
        %v1644 = vrot.slane %v1643, 4
        %v1645 = vrot.slane %v1016, 5
        %v1646 = vsel %vm1572, %v1644, %v1645
        %v1647 = vrot.slane %v1645, 4
        %v1648 = vrot.slane %v1017, 5
        %v1649 = vsel %vm1572, %v1647, %v1648
        %v1650 = vrot.slane %v1018, 5
        %v1651 = vrot.slane %v1650, 4
        %v1652 = vrot.slane %v1019, 5
        %v1653 = vsel %vm1572, %v1651, %v1652
        %v1654 = vrot.slane %v1652, 4
        %v1655 = vrot.slane %v1020, 5
        %v1656 = vsel %vm1572, %v1654, %v1655
        %v1657 = vrot.slane %v1021, 5
        %v1658 = vrot.slane %v1657, 4
        %v1659 = vrot.slane %v1022, 5
        %v1660 = vsel %vm1572, %v1658, %v1659
        %v1661 = vrot.slane %v1659, 4
        %v1662 = vrot.slane %v1023, 5
        %v1663 = vsel %vm1572, %v1661, %v1662
        %v1664 = vrot.slane %v1024, 5
        %v1665 = vrot.slane %v1664, 4
        %v1666 = vrot.slane %v1025, 5
        %v1667 = vsel %vm1572, %v1665, %v1666
        %v1668 = vrot.slane %v1666, 4
        %v1669 = vrot.slane %v1026, 5
        %v1670 = vsel %vm1572, %v1668, %v1669
        %v1671 = vrot.slane %v1027, 5
        %v1672 = vrot.slane %v1671, 4
        %v1673 = vrot.slane %v1028, 5
        %v1674 = vsel %vm1572, %v1672, %v1673
        %v1675 = vrot.slane %v1673, 4
        %v1676 = vrot.slane %v1029, 5
        %v1677 = vsel %vm1572, %v1675, %v1676
        %v1678 = vrot.slane %v1030, 5
        %v1679 = vrot.slane %v1678, 4
        %v1680 = vrot.slane %v1031, 5
        %v1681 = vsel %vm1572, %v1679, %v1680
        %v1682 = vrot.slane %v1680, 4
        %v1683 = vrot.slane %v1032, 5
        %v1684 = vsel %vm1572, %v1682, %v1683
        %1717 = vst [vmem:[#allocation3 + $0x8] sm:$0xf] %v1576
        %1718 = vst [vmem:[#allocation3 + $0x2c] sm:$0xf] %v1579
        %1719 = vst [vmem:[#allocation3 + $0x50] sm:$0xf] %v1583
        %1720 = vst [vmem:[#allocation3 + $0x74] sm:$0xf] %v1586
        %1721 = vst [vmem:[#allocation3 + $0x98] sm:$0xf] %v1590
        %1722 = vst [vmem:[#allocation3 + $0xbc] sm:$0xf] %v1593
        %1723 = vst [vmem:[#allocation3 + $0xe0] sm:$0xf] %v1597
        %1724 = vst [vmem:[#allocation3 + $0x104] sm:$0xf] %v1600
        %1725 = vst [vmem:[#allocation3 + $0x128] sm:$0xf] %v1604
        %1726 = vst [vmem:[#allocation3 + $0x14c] sm:$0xf] %v1607
        %1727 = vst [vmem:[#allocation3 + $0x170] sm:$0xf] %v1611
        %1728 = vst [vmem:[#allocation3 + $0x194] sm:$0xf] %v1614
        %1729 = vst [vmem:[#allocation3 + $0x1b8] sm:$0xf] %v1618
        %1730 = vst [vmem:[#allocation3 + $0x1dc] sm:$0xf] %v1621
        %1731 = vst [vmem:[#allocation3 + $0x200] sm:$0xf] %v1625
        %1732 = vst [vmem:[#allocation3 + $0x224] sm:$0xf] %v1628
        %1733 = vst [vmem:[#allocation3 + $0x248] sm:$0xf] %v1632
        %1734 = vst [vmem:[#allocation3 + $0x26c] sm:$0xf] %v1635
        %1735 = vst [vmem:[#allocation3 + $0x290] sm:$0xf] %v1639
        %1736 = vst [vmem:[#allocation3 + $0x2b4] sm:$0xf] %v1642
        %1737 = vst [vmem:[#allocation3 + $0x2d8] sm:$0xf] %v1646
        %1738 = vst [vmem:[#allocation3 + $0x2fc] sm:$0xf] %v1649
        %1739 = vst [vmem:[#allocation3 + $0x320] sm:$0xf] %v1653
        %1740 = vst [vmem:[#allocation3 + $0x344] sm:$0xf] %v1656
        %1741 = vst [vmem:[#allocation3 + $0x368] sm:$0xf] %v1660
        %1742 = vst [vmem:[#allocation3 + $0x38c] sm:$0xf] %v1663
        %1743 = vst [vmem:[#allocation3 + $0x3b0] sm:$0xf] %v1667
        %1744 = vst [vmem:[#allocation3 + $0x3d4] sm:$0xf] %v1670
        %1745 = vst [vmem:[#allocation3 + $0x3f8] sm:$0xf] %v1674
        %1746 = vst [vmem:[#allocation3 + $0x41c] sm:$0xf] %v1677
        %1747 = vst [vmem:[#allocation3 + $0x440] sm:$0xf] %v1681
        %1748 = vst [vmem:[#allocation3 + $0x464] sm:$0xf] %v1684
        %1749 = vst [vmem:[#allocation3 + $0xc] sm:$0xf] %v988
        %1750 = vst [vmem:[#allocation3 + $0x30] sm:$0xf] %v989
        %1751 = vst [vmem:[#allocation3 + $0x54] sm:$0xf] %v991
        %1752 = vst [vmem:[#allocation3 + $0x78] sm:$0xf] %v992
        %1753 = vst [vmem:[#allocation3 + $0x9c] sm:$0xf] %v994
        %1754 = vst [vmem:[#allocation3 + $0xc0] sm:$0xf] %v995
        %1755 = vst [vmem:[#allocation3 + $0xe4] sm:$0xf] %v997
        %1756 = vst [vmem:[#allocation3 + $0x108] sm:$0xf] %v998
        %1757 = vst [vmem:[#allocation3 + $0x12c] sm:$0xf] %v1000
        %1758 = vst [vmem:[#allocation3 + $0x150] sm:$0xf] %v1001
        %1759 = vst [vmem:[#allocation3 + $0x174] sm:$0xf] %v1003
        %1760 = vst [vmem:[#allocation3 + $0x198] sm:$0xf] %v1004
        %1761 = vst [vmem:[#allocation3 + $0x1bc] sm:$0xf] %v1006
        %1762 = vst [vmem:[#allocation3 + $0x1e0] sm:$0xf] %v1007
        %1763 = vst [vmem:[#allocation3 + $0x204] sm:$0xf] %v1009
        %1764 = vst [vmem:[#allocation3 + $0x228] sm:$0xf] %v1010
        %1765 = vst [vmem:[#allocation3 + $0x24c] sm:$0xf] %v1012
        %1766 = vst [vmem:[#allocation3 + $0x270] sm:$0xf] %v1013
        %1767 = vst [vmem:[#allocation3 + $0x294] sm:$0xf] %v1015
        %1768 = vst [vmem:[#allocation3 + $0x2b8] sm:$0xf] %v1016
        %1769 = vst [vmem:[#allocation3 + $0x2dc] sm:$0xf] %v1018
        %1770 = vst [vmem:[#allocation3 + $0x300] sm:$0xf] %v1019
        %1771 = vst [vmem:[#allocation3 + $0x324] sm:$0xf] %v1021
        %1772 = vst [vmem:[#allocation3 + $0x348] sm:$0xf] %v1022
        %1773 = vst [vmem:[#allocation3 + $0x36c] sm:$0xf] %v1024
        %1774 = vst [vmem:[#allocation3 + $0x390] sm:$0xf] %v1025
        %1775 = vst [vmem:[#allocation3 + $0x3b4] sm:$0xf] %v1027
        %1776 = vst [vmem:[#allocation3 + $0x3d8] sm:$0xf] %v1028
        %1777 = vst [vmem:[#allocation3 + $0x3fc] sm:$0xf] %v1030
        %1778 = vst [vmem:[#allocation3 + $0x420] sm:$0xf] %v1031
        %1779 = vst [vmem:[#allocation3 + $0x444] sm:$0xf] %v1033
        %1780 = vst [vmem:[#allocation3 + $0x468] sm:$0xf] %v1034
        %v1782 = vshrl.u32 %v1033, 16
        %v1784 = vrot.slane %v1782, 4
        %v1785 = vshll.u32 %v1033, 16
        %v1787 = vrot.slane %v1785, 5
        %v1788 = vor.u32 %v1784, %v1787
        %v1789 = vrot.slane %v1788, 4
        %v1791 = vshll.u32 %v1034, 16
        %v1793 = vrot.slane %v1791, 5
        %v1794 = vsel %vm1073, %v1789, %v1793
        %v1795 = vshrl.u32 %v1034, 16
        %v1797 = vrot.slane %v1795, 4
        %v1798 = vor.u32 %v1797, %v1793
        %v1799 = vrot.slane %v1798, 4
        %v1801 = vshll.u32 %v1035, 16
        %v1803 = vrot.slane %v1801, 5
        %v1804 = vsel %vm1073, %v1799, %v1803
        %1807 = vst [vmem:[#allocation3 + $0x10] sm:$0xf] %v1111
        %1808 = vst [vmem:[#allocation3 + $0x34] sm:$0xf] %v1121
        %1809 = vst [vmem:[#allocation3 + $0x58] sm:$0xf] %v1135
        %1810 = vst [vmem:[#allocation3 + $0x7c] sm:$0xf] %v1145
        %1811 = vst [vmem:[#allocation3 + $0xa0] sm:$0xf] %v1159
        %1812 = vst [vmem:[#allocation3 + $0xc4] sm:$0xf] %v1169
        %1813 = vst [vmem:[#allocation3 + $0xe8] sm:$0xf] %v1183
        %1814 = vst [vmem:[#allocation3 + $0x10c] sm:$0xf] %v1193
        %1815 = vst [vmem:[#allocation3 + $0x130] sm:$0xf] %v1207
        %1816 = vst [vmem:[#allocation3 + $0x154] sm:$0xf] %v1217
        %1817 = vst [vmem:[#allocation3 + $0x178] sm:$0xf] %v1231
        %1818 = vst [vmem:[#allocation3 + $0x19c] sm:$0xf] %v1241
        %1819 = vst [vmem:[#allocation3 + $0x1c0] sm:$0xf] %v1255
        %1820 = vst [vmem:[#allocation3 + $0x1e4] sm:$0xf] %v1265
        %1821 = vst [vmem:[#allocation3 + $0x208] sm:$0xf] %v1279
        %1822 = vst [vmem:[#allocation3 + $0x22c] sm:$0xf] %v1289
        %1823 = vst [vmem:[#allocation3 + $0x250] sm:$0xf] %v1303
        %1824 = vst [vmem:[#allocation3 + $0x274] sm:$0xf] %v1313
        %1825 = vst [vmem:[#allocation3 + $0x298] sm:$0xf] %v1327
        %1826 = vst [vmem:[#allocation3 + $0x2bc] sm:$0xf] %v1337
        %1827 = vst [vmem:[#allocation3 + $0x2e0] sm:$0xf] %v1351
        %1828 = vst [vmem:[#allocation3 + $0x304] sm:$0xf] %v1361
        %1829 = vst [vmem:[#allocation3 + $0x328] sm:$0xf] %v1375
        %1830 = vst [vmem:[#allocation3 + $0x34c] sm:$0xf] %v1385
        %1831 = vst [vmem:[#allocation3 + $0x370] sm:$0xf] %v1399
        %1832 = vst [vmem:[#allocation3 + $0x394] sm:$0xf] %v1409
        %1833 = vst [vmem:[#allocation3 + $0x3b8] sm:$0xf] %v1423
        %1834 = vst [vmem:[#allocation3 + $0x3dc] sm:$0xf] %v1433
        %1835 = vst [vmem:[#allocation3 + $0x400] sm:$0xf] %v1447
        %1836 = vst [vmem:[#allocation3 + $0x424] sm:$0xf] %v1457
        %1837 = vst [vmem:[#allocation3 + $0x448] sm:$0xf] %v1794
        %1838 = vst [vmem:[#allocation3 + $0x46c] sm:$0xf] %v1804
        %v1842 = vrot.slane %v1033, 5
        %v1843 = vrot.slane %v1842, 4
        %v1844 = vrot.slane %v1034, 5
        %v1845 = vsel %vm1572, %v1843, %v1844
        %v1846 = vrot.slane %v1844, 4
        %v1847 = vrot.slane %v1035, 5
        %v1848 = vsel %vm1572, %v1846, %v1847
        %1851 = vst [vmem:[#allocation3 + $0x14] sm:$0xf] %v1583
        %1852 = vst [vmem:[#allocation3 + $0x38] sm:$0xf] %v1586
        %1853 = vst [vmem:[#allocation3 + $0x5c] sm:$0xf] %v1590
        %1854 = vst [vmem:[#allocation3 + $0x80] sm:$0xf] %v1593
        %1855 = vst [vmem:[#allocation3 + $0xa4] sm:$0xf] %v1597
        %1856 = vst [vmem:[#allocation3 + $0xc8] sm:$0xf] %v1600
        %1857 = vst [vmem:[#allocation3 + $0xec] sm:$0xf] %v1604
        %1858 = vst [vmem:[#allocation3 + $0x110] sm:$0xf] %v1607
        %1859 = vst [vmem:[#allocation3 + $0x134] sm:$0xf] %v1611
        %1860 = vst [vmem:[#allocation3 + $0x158] sm:$0xf] %v1614
        %1861 = vst [vmem:[#allocation3 + $0x17c] sm:$0xf] %v1618
        %1862 = vst [vmem:[#allocation3 + $0x1a0] sm:$0xf] %v1621
        %1863 = vst [vmem:[#allocation3 + $0x1c4] sm:$0xf] %v1625
        %1864 = vst [vmem:[#allocation3 + $0x1e8] sm:$0xf] %v1628
        %1865 = vst [vmem:[#allocation3 + $0x20c] sm:$0xf] %v1632
        %1866 = vst [vmem:[#allocation3 + $0x230] sm:$0xf] %v1635
        %1867 = vst [vmem:[#allocation3 + $0x254] sm:$0xf] %v1639
        %1868 = vst [vmem:[#allocation3 + $0x278] sm:$0xf] %v1642
        %1869 = vst [vmem:[#allocation3 + $0x29c] sm:$0xf] %v1646
        %1870 = vst [vmem:[#allocation3 + $0x2c0] sm:$0xf] %v1649
        %1871 = vst [vmem:[#allocation3 + $0x2e4] sm:$0xf] %v1653
        %1872 = vst [vmem:[#allocation3 + $0x308] sm:$0xf] %v1656
        %1873 = vst [vmem:[#allocation3 + $0x32c] sm:$0xf] %v1660
        %1874 = vst [vmem:[#allocation3 + $0x350] sm:$0xf] %v1663
        %1875 = vst [vmem:[#allocation3 + $0x374] sm:$0xf] %v1667
        %1876 = vst [vmem:[#allocation3 + $0x398] sm:$0xf] %v1670
        %1877 = vst [vmem:[#allocation3 + $0x3bc] sm:$0xf] %v1674
        %1878 = vst [vmem:[#allocation3 + $0x3e0] sm:$0xf] %v1677
        %1879 = vst [vmem:[#allocation3 + $0x404] sm:$0xf] %v1681
        %1880 = vst [vmem:[#allocation3 + $0x428] sm:$0xf] %v1684
        %1881 = vst [vmem:[#allocation3 + $0x44c] sm:$0xf] %v1845
        %1882 = vst [vmem:[#allocation3 + $0x470] sm:$0xf] %v1848
        %1883 = vst [vmem:[#allocation3 + $0x18] sm:$0xf] %v991
        %1884 = vst [vmem:[#allocation3 + $0x3c] sm:$0xf] %v992
        %1885 = vst [vmem:[#allocation3 + $0x60] sm:$0xf] %v994
        %1886 = vst [vmem:[#allocation3 + $0x84] sm:$0xf] %v995
        %1887 = vst [vmem:[#allocation3 + $0xa8] sm:$0xf] %v997
        %1888 = vst [vmem:[#allocation3 + $0xcc] sm:$0xf] %v998
        %1889 = vst [vmem:[#allocation3 + $0xf0] sm:$0xf] %v1000
        %1890 = vst [vmem:[#allocation3 + $0x114] sm:$0xf] %v1001
        %1891 = vst [vmem:[#allocation3 + $0x138] sm:$0xf] %v1003
        %1892 = vst [vmem:[#allocation3 + $0x15c] sm:$0xf] %v1004
        %1893 = vst [vmem:[#allocation3 + $0x180] sm:$0xf] %v1006
        %1894 = vst [vmem:[#allocation3 + $0x1a4] sm:$0xf] %v1007
        %1895 = vst [vmem:[#allocation3 + $0x1c8] sm:$0xf] %v1009
        %1896 = vst [vmem:[#allocation3 + $0x1ec] sm:$0xf] %v1010
        %1897 = vst [vmem:[#allocation3 + $0x210] sm:$0xf] %v1012
        %1898 = vst [vmem:[#allocation3 + $0x234] sm:$0xf] %v1013
        %1899 = vst [vmem:[#allocation3 + $0x258] sm:$0xf] %v1015
        %1900 = vst [vmem:[#allocation3 + $0x27c] sm:$0xf] %v1016
        %1901 = vst [vmem:[#allocation3 + $0x2a0] sm:$0xf] %v1018
        %1902 = vst [vmem:[#allocation3 + $0x2c4] sm:$0xf] %v1019
        %1903 = vst [vmem:[#allocation3 + $0x2e8] sm:$0xf] %v1021
        %1904 = vst [vmem:[#allocation3 + $0x30c] sm:$0xf] %v1022
        %1905 = vst [vmem:[#allocation3 + $0x330] sm:$0xf] %v1024
        %1906 = vst [vmem:[#allocation3 + $0x354] sm:$0xf] %v1025
        %1907 = vst [vmem:[#allocation3 + $0x378] sm:$0xf] %v1027
        %1908 = vst [vmem:[#allocation3 + $0x39c] sm:$0xf] %v1028
        %1909 = vst [vmem:[#allocation3 + $0x3c0] sm:$0xf] %v1030
        %1910 = vst [vmem:[#allocation3 + $0x3e4] sm:$0xf] %v1031
        %1911 = vst [vmem:[#allocation3 + $0x408] sm:$0xf] %v1033
        %1912 = vst [vmem:[#allocation3 + $0x42c] sm:$0xf] %v1034
        %1913 = vst [vmem:[#allocation3 + $0x450] sm:$0xf] %v1036
        %1914 = vst [vmem:[#allocation3 + $0x474] sm:$0xf] %v1037
        %v1916 = vshrl.u32 %v1036, 16
        %v1918 = vrot.slane %v1916, 4
        %v1919 = vshll.u32 %v1036, 16
        %v1921 = vrot.slane %v1919, 5
        %v1922 = vor.u32 %v1918, %v1921
        %v1923 = vrot.slane %v1922, 4
        %v1925 = vshll.u32 %v1037, 16
        %v1927 = vrot.slane %v1925, 5
        %v1928 = vsel %vm1073, %v1923, %v1927
        %v1929 = vshrl.u32 %v1037, 16
        %v1931 = vrot.slane %v1929, 4
        %v1932 = vor.u32 %v1931, %v1927
        %v1933 = vrot.slane %v1932, 4
        %v1935 = vshll.u32 %v1038, 16
        %v1937 = vrot.slane %v1935, 5
        %v1938 = vsel %vm1073, %v1933, %v1937
        %1941 = vst [vmem:[#allocation3 + $0x1c] sm:$0xf] %v1135
        %1942 = vst [vmem:[#allocation3 + $0x40] sm:$0xf] %v1145
        %1943 = vst [vmem:[#allocation3 + $0x64] sm:$0xf] %v1159
        %1944 = vst [vmem:[#allocation3 + $0x88] sm:$0xf] %v1169
        %1945 = vst [vmem:[#allocation3 + $0xac] sm:$0xf] %v1183
        %1946 = vst [vmem:[#allocation3 + $0xd0] sm:$0xf] %v1193
        %1947 = vst [vmem:[#allocation3 + $0xf4] sm:$0xf] %v1207
        %1948 = vst [vmem:[#allocation3 + $0x118] sm:$0xf] %v1217
        %1949 = vst [vmem:[#allocation3 + $0x13c] sm:$0xf] %v1231
        %1950 = vst [vmem:[#allocation3 + $0x160] sm:$0xf] %v1241
        %1951 = vst [vmem:[#allocation3 + $0x184] sm:$0xf] %v1255
        %1952 = vst [vmem:[#allocation3 + $0x1a8] sm:$0xf] %v1265
        %1953 = vst [vmem:[#allocation3 + $0x1cc] sm:$0xf] %v1279
        %1954 = vst [vmem:[#allocation3 + $0x1f0] sm:$0xf] %v1289
        %1955 = vst [vmem:[#allocation3 + $0x214] sm:$0xf] %v1303
        %1956 = vst [vmem:[#allocation3 + $0x238] sm:$0xf] %v1313
        %1957 = vst [vmem:[#allocation3 + $0x25c] sm:$0xf] %v1327
        %1958 = vst [vmem:[#allocation3 + $0x280] sm:$0xf] %v1337
        %1959 = vst [vmem:[#allocation3 + $0x2a4] sm:$0xf] %v1351
        %1960 = vst [vmem:[#allocation3 + $0x2c8] sm:$0xf] %v1361
        %1961 = vst [vmem:[#allocation3 + $0x2ec] sm:$0xf] %v1375
        %1962 = vst [vmem:[#allocation3 + $0x310] sm:$0xf] %v1385
        %1963 = vst [vmem:[#allocation3 + $0x334] sm:$0xf] %v1399
        %1964 = vst [vmem:[#allocation3 + $0x358] sm:$0xf] %v1409
        %1965 = vst [vmem:[#allocation3 + $0x37c] sm:$0xf] %v1423
        %1966 = vst [vmem:[#allocation3 + $0x3a0] sm:$0xf] %v1433
        %1967 = vst [vmem:[#allocation3 + $0x3c4] sm:$0xf] %v1447
        %1968 = vst [vmem:[#allocation3 + $0x3e8] sm:$0xf] %v1457
        %1969 = vst [vmem:[#allocation3 + $0x40c] sm:$0xf] %v1794
        %1970 = vst [vmem:[#allocation3 + $0x430] sm:$0xf] %v1804
        %1971 = vst [vmem:[#allocation3 + $0x454] sm:$0xf] %v1928
        %1972 = vst [vmem:[#allocation3 + $0x478] sm:$0xf] %v1938
        %v1976 = vrot.slane %v1036, 5
        %v1977 = vrot.slane %v1976, 4
        %v1978 = vrot.slane %v1037, 5
        %v1979 = vsel %vm1572, %v1977, %v1978
        %v1980 = vrot.slane %v1978, 4
        %v1981 = vrot.slane %v1038, 5
        %v1982 = vsel %vm1572, %v1980, %v1981
        %1985 = vst [vmem:[#allocation3 + $0x20] sm:$0xf] %v1590
        %1986 = vst [vmem:[#allocation3 + $0x44] sm:$0xf] %v1593
        %1987 = vst [vmem:[#allocation3 + $0x68] sm:$0xf] %v1597
        %1988 = vst [vmem:[#allocation3 + $0x8c] sm:$0xf] %v1600
        %1989 = vst [vmem:[#allocation3 + $0xb0] sm:$0xf] %v1604
        %1990 = vst [vmem:[#allocation3 + $0xd4] sm:$0xf] %v1607
        %1991 = vst [vmem:[#allocation3 + $0xf8] sm:$0xf] %v1611
        %1992 = vst [vmem:[#allocation3 + $0x11c] sm:$0xf] %v1614
        %1993 = vst [vmem:[#allocation3 + $0x140] sm:$0xf] %v1618
        %1994 = vst [vmem:[#allocation3 + $0x164] sm:$0xf] %v1621
        %1995 = vst [vmem:[#allocation3 + $0x188] sm:$0xf] %v1625
        %1996 = vst [vmem:[#allocation3 + $0x1ac] sm:$0xf] %v1628
        %1997 = vst [vmem:[#allocation3 + $0x1d0] sm:$0xf] %v1632
        %1998 = vst [vmem:[#allocation3 + $0x1f4] sm:$0xf] %v1635
        %1999 = vst [vmem:[#allocation3 + $0x218] sm:$0xf] %v1639
        %2000 = vst [vmem:[#allocation3 + $0x23c] sm:$0xf] %v1642
        %2001 = vst [vmem:[#allocation3 + $0x260] sm:$0xf] %v1646
        %2002 = vst [vmem:[#allocation3 + $0x284] sm:$0xf] %v1649
        %2003 = vst [vmem:[#allocation3 + $0x2a8] sm:$0xf] %v1653
        %2004 = vst [vmem:[#allocation3 + $0x2cc] sm:$0xf] %v1656
        %2005 = vst [vmem:[#allocation3 + $0x2f0] sm:$0xf] %v1660
        %2006 = vst [vmem:[#allocation3 + $0x314] sm:$0xf] %v1663
        %2007 = vst [vmem:[#allocation3 + $0x338] sm:$0xf] %v1667
        %2008 = vst [vmem:[#allocation3 + $0x35c] sm:$0xf] %v1670
        %2009 = vst [vmem:[#allocation3 + $0x380] sm:$0xf] %v1674
        %2010 = vst [vmem:[#allocation3 + $0x3a4] sm:$0xf] %v1677
        %2011 = vst [vmem:[#allocation3 + $0x3c8] sm:$0xf] %v1681
        %2012 = vst [vmem:[#allocation3 + $0x3ec] sm:$0xf] %v1684
        %2013 = vst [vmem:[#allocation3 + $0x410] sm:$0xf] %v1845
        %2014 = vst [vmem:[#allocation3 + $0x434] sm:$0xf] %v1848
        %2015 = vst [vmem:[#allocation3 + $0x458] sm:$0xf] %v1979
        %2016 = vst [vmem:[#allocation3 + $0x47c] sm:$0xf] %v1982
      $region48: #{basic_block_forward.2} parent=43 // pred_fallthru
        _
      %v2017 = vld [vmem:[#allocation3] sm:$0xff]
      %v2018 = vld [vmem:[#allocation3 + $0x8] sm:$0xff]
      %v2019 = vld [vmem:[#allocation3 + $0x10] sm:$0xff]
      %v2020 = vld [vmem:[#allocation3 + $0x18] sm:$0xff]
      %v2021 = vld [vmem:[#allocation3 + $0x20] sm:$0xf]
      %v2022 = vld [vmem:[#allocation3 + $0x24] sm:$0xff]
      %v2023 = vld [vmem:[#allocation3 + $0x2c] sm:$0xff]
      %v2024 = vld [vmem:[#allocation3 + $0x34] sm:$0xff]
      %v2025 = vld [vmem:[#allocation3 + $0x3c] sm:$0xff]
      %v2026 = vld [vmem:[#allocation3 + $0x44] sm:$0xf]
      %v2027 = vld [vmem:[#allocation3 + $0x48] sm:$0xff]
      %v2028 = vld [vmem:[#allocation3 + $0x50] sm:$0xff]
      %v2029 = vld [vmem:[#allocation3 + $0x58] sm:$0xff]
      %v2030 = vld [vmem:[#allocation3 + $0x60] sm:$0xff]
      %v2031 = vld [vmem:[#allocation3 + $0x68] sm:$0xf]
      %v2032 = vld [vmem:[#allocation3 + $0x6c] sm:$0xff]
      %v2033 = vld [vmem:[#allocation3 + $0x74] sm:$0xff]
      %v2034 = vld [vmem:[#allocation3 + $0x7c] sm:$0xff]
      %v2035 = vld [vmem:[#allocation3 + $0x84] sm:$0xff]
      %v2036 = vld [vmem:[#allocation3 + $0x8c] sm:$0xf]
      %v2037 = vld [vmem:[#allocation3 + $0x90] sm:$0xff]
      %v2038 = vld [vmem:[#allocation3 + $0x98] sm:$0xff]
      %v2039 = vld [vmem:[#allocation3 + $0xa0] sm:$0xff]
      %v2040 = vld [vmem:[#allocation3 + $0xa8] sm:$0xff]
      %v2041 = vld [vmem:[#allocation3 + $0xb0] sm:$0xf]
      %v2042 = vld [vmem:[#allocation3 + $0xb4] sm:$0xff]
      %v2043 = vld [vmem:[#allocation3 + $0xbc] sm:$0xff]
      %v2044 = vld [vmem:[#allocation3 + $0xc4] sm:$0xff]
      %v2045 = vld [vmem:[#allocation3 + $0xcc] sm:$0xff]
      %v2046 = vld [vmem:[#allocation3 + $0xd4] sm:$0xf]
      %v2047 = vld [vmem:[#allocation3 + $0xd8] sm:$0xff]
      %v2048 = vld [vmem:[#allocation3 + $0xe0] sm:$0xff]
      %v2049 = vld [vmem:[#allocation3 + $0xe8] sm:$0xff]
      %v2050 = vld [vmem:[#allocation3 + $0xf0] sm:$0xff]
      %v2051 = vld [vmem:[#allocation3 + $0xf8] sm:$0xf]
      %v2052 = vld [vmem:[#allocation3 + $0xfc] sm:$0xff]
      %v2053 = vld [vmem:[#allocation3 + $0x104] sm:$0xff]
      %v2054 = vld [vmem:[#allocation3 + $0x10c] sm:$0xff]
      %v2055 = vld [vmem:[#allocation3 + $0x114] sm:$0xff]
      %v2056 = vld [vmem:[#allocation3 + $0x11c] sm:$0xf]
      %v2057 = vld [vmem:[#allocation3 + $0x120] sm:$0xff]
      %v2058 = vld [vmem:[#allocation3 + $0x128] sm:$0xff]
      %v2059 = vld [vmem:[#allocation3 + $0x130] sm:$0xff]
      %v2060 = vld [vmem:[#allocation3 + $0x138] sm:$0xff]
      %v2061 = vld [vmem:[#allocation3 + $0x140] sm:$0xf]
      %v2062 = vld [vmem:[#allocation3 + $0x144] sm:$0xff]
      %v2063 = vld [vmem:[#allocation3 + $0x14c] sm:$0xff]
      %v2064 = vld [vmem:[#allocation3 + $0x154] sm:$0xff]
      %v2065 = vld [vmem:[#allocation3 + $0x15c] sm:$0xff]
      %v2066 = vld [vmem:[#allocation3 + $0x164] sm:$0xf]
      %v2067 = vld [vmem:[#allocation3 + $0x168] sm:$0xff]
      %v2068 = vld [vmem:[#allocation3 + $0x170] sm:$0xff]
      %v2069 = vld [vmem:[#allocation3 + $0x178] sm:$0xff]
      %v2070 = vld [vmem:[#allocation3 + $0x180] sm:$0xff]
      %v2071 = vld [vmem:[#allocation3 + $0x188] sm:$0xf]
      %v2072 = vld [vmem:[#allocation3 + $0x18c] sm:$0xff]
      %v2073 = vld [vmem:[#allocation3 + $0x194] sm:$0xff]
      %v2074 = vld [vmem:[#allocation3 + $0x19c] sm:$0xff]
      %v2075 = vld [vmem:[#allocation3 + $0x1a4] sm:$0xff]
      %v2076 = vld [vmem:[#allocation3 + $0x1ac] sm:$0xf]
      %v2077 = vld [vmem:[#allocation3 + $0x1b0] sm:$0xff]
      %v2078 = vld [vmem:[#allocation3 + $0x1b8] sm:$0xff]
      %v2079 = vld [vmem:[#allocation3 + $0x1c0] sm:$0xff]
      %v2080 = vld [vmem:[#allocation3 + $0x1c8] sm:$0xff]
      %v2081 = vld [vmem:[#allocation3 + $0x1d0] sm:$0xf]
      %v2082 = vld [vmem:[#allocation3 + $0x1d4] sm:$0xff]
      %v2083 = vld [vmem:[#allocation3 + $0x1dc] sm:$0xff]
      %v2084 = vld [vmem:[#allocation3 + $0x1e4] sm:$0xff]
      %v2085 = vld [vmem:[#allocation3 + $0x1ec] sm:$0xff]
      %v2086 = vld [vmem:[#allocation3 + $0x1f4] sm:$0xf]
      %v2087 = vld [vmem:[#allocation3 + $0x1f8] sm:$0xff]
      %v2088 = vld [vmem:[#allocation3 + $0x200] sm:$0xff]
      %v2089 = vld [vmem:[#allocation3 + $0x208] sm:$0xff]
      %v2090 = vld [vmem:[#allocation3 + $0x210] sm:$0xff]
      %v2091 = vld [vmem:[#allocation3 + $0x218] sm:$0xf]
      %v2092 = vld [vmem:[#allocation3 + $0x21c] sm:$0xff]
      %v2093 = vld [vmem:[#allocation3 + $0x224] sm:$0xff]
      %v2094 = vld [vmem:[#allocation3 + $0x22c] sm:$0xff]
      %v2095 = vld [vmem:[#allocation3 + $0x234] sm:$0xff]
      %v2096 = vld [vmem:[#allocation3 + $0x23c] sm:$0xf]
      %v2097 = vld [vmem:[#allocation3 + $0x240] sm:$0xff]
      %v2098 = vld [vmem:[#allocation3 + $0x248] sm:$0xff]
      %v2099 = vld [vmem:[#allocation3 + $0x250] sm:$0xff]
      %v2100 = vld [vmem:[#allocation3 + $0x258] sm:$0xff]
      %v2101 = vld [vmem:[#allocation3 + $0x260] sm:$0xf]
      %v2102 = vld [vmem:[#allocation3 + $0x264] sm:$0xff]
      %v2103 = vld [vmem:[#allocation3 + $0x26c] sm:$0xff]
      %v2104 = vld [vmem:[#allocation3 + $0x274] sm:$0xff]
      %v2105 = vld [vmem:[#allocation3 + $0x27c] sm:$0xff]
      %v2106 = vld [vmem:[#allocation3 + $0x284] sm:$0xf]
      %v2107 = vld [vmem:[#allocation3 + $0x288] sm:$0xff]
      %v2108 = vld [vmem:[#allocation3 + $0x290] sm:$0xff]
      %v2109 = vld [vmem:[#allocation3 + $0x298] sm:$0xff]
      %v2110 = vld [vmem:[#allocation3 + $0x2a0] sm:$0xff]
      %v2111 = vld [vmem:[#allocation3 + $0x2a8] sm:$0xf]
      %v2112 = vld [vmem:[#allocation3 + $0x2ac] sm:$0xff]
      %v2113 = vld [vmem:[#allocation3 + $0x2b4] sm:$0xff]
      %v2114 = vld [vmem:[#allocation3 + $0x2bc] sm:$0xff]
      %v2115 = vld [vmem:[#allocation3 + $0x2c4] sm:$0xff]
      %v2116 = vld [vmem:[#allocation3 + $0x2cc] sm:$0xf]
      %v2117 = vld [vmem:[#allocation3 + $0x2d0] sm:$0xff]
      %v2118 = vld [vmem:[#allocation3 + $0x2d8] sm:$0xff]
      %v2119 = vld [vmem:[#allocation3 + $0x2e0] sm:$0xff]
      %v2120 = vld [vmem:[#allocation3 + $0x2e8] sm:$0xff]
      %v2121 = vld [vmem:[#allocation3 + $0x2f0] sm:$0xf]
      %v2122 = vld [vmem:[#allocation3 + $0x2f4] sm:$0xff]
      %v2123 = vld [vmem:[#allocation3 + $0x2fc] sm:$0xff]
      %v2124 = vld [vmem:[#allocation3 + $0x304] sm:$0xff]
      %v2125 = vld [vmem:[#allocation3 + $0x30c] sm:$0xff]
      %v2126 = vld [vmem:[#allocation3 + $0x314] sm:$0xf]
      %v2127 = vld [vmem:[#allocation3 + $0x318] sm:$0xff]
      %v2128 = vld [vmem:[#allocation3 + $0x320] sm:$0xff]
      %v2129 = vld [vmem:[#allocation3 + $0x328] sm:$0xff]
      %v2130 = vld [vmem:[#allocation3 + $0x330] sm:$0xff]
      %v2131 = vld [vmem:[#allocation3 + $0x338] sm:$0xf]
      %v2132 = vld [vmem:[#allocation3 + $0x33c] sm:$0xff]
      %v2133 = vld [vmem:[#allocation3 + $0x344] sm:$0xff]
      %v2134 = vld [vmem:[#allocation3 + $0x34c] sm:$0xff]
      %v2135 = vld [vmem:[#allocation3 + $0x354] sm:$0xff]
      %v2136 = vld [vmem:[#allocation3 + $0x35c] sm:$0xf]
      %v2137 = vld [vmem:[#allocation3 + $0x360] sm:$0xff]
      %v2138 = vld [vmem:[#allocation3 + $0x368] sm:$0xff]
      %v2139 = vld [vmem:[#allocation3 + $0x370] sm:$0xff]
      %v2140 = vld [vmem:[#allocation3 + $0x378] sm:$0xff]
      %v2141 = vld [vmem:[#allocation3 + $0x380] sm:$0xf]
      %v2142 = vld [vmem:[#allocation3 + $0x384] sm:$0xff]
      %v2143 = vld [vmem:[#allocation3 + $0x38c] sm:$0xff]
      %v2144 = vld [vmem:[#allocation3 + $0x394] sm:$0xff]
      %v2145 = vld [vmem:[#allocation3 + $0x39c] sm:$0xff]
      %v2146 = vld [vmem:[#allocation3 + $0x3a4] sm:$0xf]
      %v2147 = vld [vmem:[#allocation3 + $0x3a8] sm:$0xff]
      %v2148 = vld [vmem:[#allocation3 + $0x3b0] sm:$0xff]
      %v2149 = vld [vmem:[#allocation3 + $0x3b8] sm:$0xff]
      %v2150 = vld [vmem:[#allocation3 + $0x3c0] sm:$0xff]
      %v2151 = vld [vmem:[#allocation3 + $0x3c8] sm:$0xf]
      %v2152 = vld [vmem:[#allocation3 + $0x3cc] sm:$0xff]
      %v2153 = vld [vmem:[#allocation3 + $0x3d4] sm:$0xff]
      %v2154 = vld [vmem:[#allocation3 + $0x3dc] sm:$0xff]
      %v2155 = vld [vmem:[#allocation3 + $0x3e4] sm:$0xff]
      %v2156 = vld [vmem:[#allocation3 + $0x3ec] sm:$0xf]
      %v2157 = vld [vmem:[#allocation3 + $0x3f0] sm:$0xff]
      %v2158 = vld [vmem:[#allocation3 + $0x3f8] sm:$0xff]
      %v2159 = vld [vmem:[#allocation3 + $0x400] sm:$0xff]
      %v2160 = vld [vmem:[#allocation3 + $0x408] sm:$0xff]
      %v2161 = vld [vmem:[#allocation3 + $0x410] sm:$0xf]
      %v2162 = vld [vmem:[#allocation3 + $0x414] sm:$0xff]
      %v2163 = vld [vmem:[#allocation3 + $0x41c] sm:$0xff]
      %v2164 = vld [vmem:[#allocation3 + $0x424] sm:$0xff]
      %v2165 = vld [vmem:[#allocation3 + $0x42c] sm:$0xff]
      %v2166 = vld [vmem:[#allocation3 + $0x434] sm:$0xf]
      %v2167 = vld [vmem:[#allocation3 + $0x438] sm:$0xff]
      %v2168 = vld [vmem:[#allocation3 + $0x440] sm:$0xff]
      %v2169 = vld [vmem:[#allocation3 + $0x448] sm:$0xff]
      %v2170 = vld [vmem:[#allocation3 + $0x450] sm:$0xff]
      %v2171 = vld [vmem:[#allocation3 + $0x458] sm:$0xf]
      %v2172 = vld [vmem:[#allocation3 + $0x45c] sm:$0xff]
      %v2173 = vld [vmem:[#allocation3 + $0x464] sm:$0xff]
      %v2174 = vld [vmem:[#allocation3 + $0x46c] sm:$0xff]
      %v2175 = vld [vmem:[#allocation3 + $0x474] sm:$0xff]
      %v2176 = vld [vmem:[#allocation3 + $0x47c] sm:$0xf]
      %v2177 = vld [vmem:[%s302] sm:$0xf]
      %v2178 = vld [vmem:[%s302 + $0x4] sm:$0xf]
      %v2179 = vld [vmem:[%s302 + $0x8] sm:$0xf]
      %v2180 = vld [vmem:[%s302 + $0xc] sm:$0xf]
      %v2181 = vld [vmem:[%s302 + $0x10] sm:$0xf]
      %v2182 = vld [vmem:[%s302 + $0x14] sm:$0xf]
      %v2183 = vld [vmem:[%s302 + $0x18] sm:$0xf]
      %v2184 = vld [vmem:[%s302 + $0x1c] sm:$0xf]
      %v2185 = vld [vmem:[%s302 + $0x20] sm:$0xf]
      %v2186 = vld [vmem:[%s302 + $0x24] sm:$0xf]
      %v2187 = vld [vmem:[%s302 + $0x28] sm:$0xf]
      %v2188 = vld [vmem:[%s302 + $0x2c] sm:$0xf]
      %v2189 = vld [vmem:[%s302 + $0x30] sm:$0xf]
      %v2190 = vld [vmem:[%s302 + $0x34] sm:$0xf]
      %v2191 = vld [vmem:[%s302 + $0x38] sm:$0xf]
      %v2192 = vld [vmem:[%s302 + $0x3c] sm:$0xf]
      %v2193 = vld [vmem:[%s302 + $0x40] sm:$0xf]
      %v2194 = vld [vmem:[%s302 + $0x44] sm:$0xf]
      %v2195 = vld [vmem:[%s302 + $0x48] sm:$0xf]
      %v2196 = vld [vmem:[%s302 + $0x4c] sm:$0xf]
      %v2197 = vld [vmem:[%s302 + $0x50] sm:$0xf]
      %v2198 = vld [vmem:[%s302 + $0x54] sm:$0xf]
      %v2199 = vld [vmem:[%s302 + $0x58] sm:$0xf]
      %v2200 = vld [vmem:[%s302 + $0x5c] sm:$0xf]
      %v2201 = vld [vmem:[%s302 + $0x60] sm:$0xf]
      %v2202 = vld [vmem:[%s302 + $0x64] sm:$0xf]
      %v2203 = vld [vmem:[%s302 + $0x68] sm:$0xf]
      %v2204 = vld [vmem:[%s302 + $0x6c] sm:$0xf]
      %v2205 = vld [vmem:[%s302 + $0x70] sm:$0xf]
      %v2206 = vld [vmem:[%s302 + $0x74] sm:$0xf]
      %v2207 = vld [vmem:[%s302 + $0x78] sm:$0xf]
      %v2208 = vld [vmem:[%s302 + $0x7c] sm:$0xf]
      %v2209 = vld [vmem:[%s302 + $0x80] sm:$0xf]
      %v2210 = vld [vmem:[%s302 + $0x84] sm:$0xf]
      %v2211 = vld [vmem:[%s302 + $0x88] sm:$0xf]
      %v2212 = vld [vmem:[%s302 + $0x8c] sm:$0xf]
      %v2213 = vld [vmem:[%s302 + $0x90] sm:$0xf]
      %v2214 = vld [vmem:[%s302 + $0x94] sm:$0xf]
      %v2215 = vld [vmem:[%s302 + $0x98] sm:$0xf]
      %v2216 = vld [vmem:[%s302 + $0x9c] sm:$0xf]
      %v2217 = vld [vmem:[%s302 + $0xa0] sm:$0xf]
      %v2218 = vld [vmem:[%s302 + $0xa4] sm:$0xf]
      %v2219 = vld [vmem:[%s302 + $0xa8] sm:$0xf]
      %v2220 = vld [vmem:[%s302 + $0xac] sm:$0xf]
      %v2221 = vld [vmem:[%s302 + $0xb0] sm:$0xf]
      %v2222 = vld [vmem:[%s302 + $0xb4] sm:$0xf]
      %v2223 = vld [vmem:[%s302 + $0xb8] sm:$0xf]
      %v2224 = vld [vmem:[%s302 + $0xbc] sm:$0xf]
      %v2225 = vld [vmem:[%s302 + $0xc0] sm:$0xf]
      %v2226 = vld [vmem:[%s302 + $0xc4] sm:$0xf]
      %v2227 = vld [vmem:[%s302 + $0xc8] sm:$0xf]
      %v2228 = vld [vmem:[%s302 + $0xcc] sm:$0xf]
      %v2229 = vld [vmem:[%s302 + $0xd0] sm:$0xf]
      %v2230 = vld [vmem:[%s302 + $0xd4] sm:$0xf]
      %v2231 = vld [vmem:[%s302 + $0xd8] sm:$0xf]
      %v2232 = vld [vmem:[%s302 + $0xdc] sm:$0xf]
      %v2233 = vld [vmem:[%s302 + $0xe0] sm:$0xf]
      %v2234 = vld [vmem:[%s302 + $0xe4] sm:$0xf]
      %v2235 = vld [vmem:[%s302 + $0xe8] sm:$0xf]
      %v2236 = vld [vmem:[%s302 + $0xec] sm:$0xf]
      %v2237 = vld [vmem:[%s302 + $0xf0] sm:$0xf]
      %v2238 = vld [vmem:[%s302 + $0xf4] sm:$0xf]
      %v2239 = vld [vmem:[%s302 + $0xf8] sm:$0xf]
      %v2240 = vld [vmem:[%s302 + $0xfc] sm:$0xf]
      %v2241 = vld [vmem:[%s302 + $0x100] sm:$0xf]
      %v2242 = vld [vmem:[%s302 + $0x104] sm:$0xf]
      %v2243 = vld [vmem:[%s302 + $0x108] sm:$0xf]
      %v2244 = vld [vmem:[%s302 + $0x10c] sm:$0xf]
      %v2245 = vld [vmem:[%s302 + $0x110] sm:$0xf]
      %v2246 = vld [vmem:[%s302 + $0x114] sm:$0xf]
      %v2247 = vld [vmem:[%s302 + $0x118] sm:$0xf]
      %v2248 = vld [vmem:[%s302 + $0x11c] sm:$0xf]
      %v2249 = vld [vmem:[%s302 + $0x120] sm:$0xf]
      %v2250 = vld [vmem:[%s302 + $0x124] sm:$0xf]
      %v2251 = vld [vmem:[%s302 + $0x128] sm:$0xf]
      %v2252 = vld [vmem:[%s302 + $0x12c] sm:$0xf]
      %v2253 = vld [vmem:[%s302 + $0x130] sm:$0xf]
      %v2254 = vld [vmem:[%s302 + $0x134] sm:$0xf]
      %v2255 = vld [vmem:[%s302 + $0x138] sm:$0xf]
      %v2256 = vld [vmem:[%s302 + $0x13c] sm:$0xf]
      %v2257 = vld [vmem:[%s302 + $0x140] sm:$0xf]
      %v2258 = vld [vmem:[%s302 + $0x144] sm:$0xf]
      %v2259 = vld [vmem:[%s302 + $0x148] sm:$0xf]
      %v2260 = vld [vmem:[%s302 + $0x14c] sm:$0xf]
      %v2261 = vld [vmem:[%s302 + $0x150] sm:$0xf]
      %v2262 = vld [vmem:[%s302 + $0x154] sm:$0xf]
      %v2263 = vld [vmem:[%s302 + $0x158] sm:$0xf]
      %v2264 = vld [vmem:[%s302 + $0x15c] sm:$0xf]
      %v2265 = vld [vmem:[%s302 + $0x160] sm:$0xf]
      %v2266 = vld [vmem:[%s302 + $0x164] sm:$0xf]
      %v2267 = vld [vmem:[%s302 + $0x168] sm:$0xf]
      %v2268 = vld [vmem:[%s302 + $0x16c] sm:$0xf]
      %v2269 = vld [vmem:[%s302 + $0x170] sm:$0xf]
      %v2270 = vld [vmem:[%s302 + $0x174] sm:$0xf]
      %v2271 = vld [vmem:[%s302 + $0x178] sm:$0xf]
      %v2272 = vld [vmem:[%s302 + $0x17c] sm:$0xf]
      %v2273 = vld [vmem:[%s302 + $0x180] sm:$0xf]
      %v2274 = vld [vmem:[%s302 + $0x184] sm:$0xf]
      %v2275 = vld [vmem:[%s302 + $0x188] sm:$0xf]
      %v2276 = vld [vmem:[%s302 + $0x18c] sm:$0xf]
      %v2277 = vld [vmem:[%s302 + $0x190] sm:$0xf]
      %v2278 = vld [vmem:[%s302 + $0x194] sm:$0xf]
      %v2279 = vld [vmem:[%s302 + $0x198] sm:$0xf]
      %v2280 = vld [vmem:[%s302 + $0x19c] sm:$0xf]
      %v2281 = vld [vmem:[%s302 + $0x1a0] sm:$0xf]
      %v2282 = vld [vmem:[%s302 + $0x1a4] sm:$0xf]
      %v2283 = vld [vmem:[%s302 + $0x1a8] sm:$0xf]
      %v2284 = vld [vmem:[%s302 + $0x1ac] sm:$0xf]
      %v2285 = vld [vmem:[%s302 + $0x1b0] sm:$0xf]
      %v2286 = vld [vmem:[%s302 + $0x1b4] sm:$0xf]
      %v2287 = vld [vmem:[%s302 + $0x1b8] sm:$0xf]
      %v2288 = vld [vmem:[%s302 + $0x1bc] sm:$0xf]
      %v2289 = vld [vmem:[%s302 + $0x1c0] sm:$0xf]
      %v2290 = vld [vmem:[%s302 + $0x1c4] sm:$0xf]
      %v2291 = vld [vmem:[%s302 + $0x1c8] sm:$0xf]
      %v2292 = vld [vmem:[%s302 + $0x1cc] sm:$0xf]
      %v2293 = vld [vmem:[%s302 + $0x1d0] sm:$0xf]
      %v2294 = vld [vmem:[%s302 + $0x1d4] sm:$0xf]
      %v2295 = vld [vmem:[%s302 + $0x1d8] sm:$0xf]
      %v2296 = vld [vmem:[%s302 + $0x1dc] sm:$0xf]
      %v2297 = vld [vmem:[%s302 + $0x1e0] sm:$0xf]
      %v2298 = vld [vmem:[%s302 + $0x1e4] sm:$0xf]
      %v2299 = vld [vmem:[%s302 + $0x1e8] sm:$0xf]
      %v2300 = vld [vmem:[%s302 + $0x1ec] sm:$0xf]
      %v2301 = vld [vmem:[%s302 + $0x1f0] sm:$0xf]
      %v2302 = vld [vmem:[%s302 + $0x1f4] sm:$0xf]
      %v2303 = vld [vmem:[%s302 + $0x1f8] sm:$0xf]
      %v2304 = vld [vmem:[%s302 + $0x1fc] sm:$0xf]
      %v2305 = vld [vmem:[%s302 + $0x200] sm:$0xf]
      %v2306 = vld [vmem:[%s302 + $0x204] sm:$0xf]
      %v2307 = vld [vmem:[%s302 + $0x208] sm:$0xf]
      %v2308 = vld [vmem:[%s302 + $0x20c] sm:$0xf]
      %v2309 = vld [vmem:[%s302 + $0x210] sm:$0xf]
      %v2310 = vld [vmem:[%s302 + $0x214] sm:$0xf]
      %v2311 = vld [vmem:[%s302 + $0x218] sm:$0xf]
      %v2312 = vld [vmem:[%s302 + $0x21c] sm:$0xf]
      %v2313 = vld [vmem:[%s302 + $0x220] sm:$0xf]
      %v2314 = vld [vmem:[%s302 + $0x224] sm:$0xf]
      %v2315 = vld [vmem:[%s302 + $0x228] sm:$0xf]
      %v2316 = vld [vmem:[%s302 + $0x22c] sm:$0xf]
      %v2317 = vld [vmem:[%s302 + $0x230] sm:$0xf]
      %v2318 = vld [vmem:[%s302 + $0x234] sm:$0xf]
      %v2319 = vld [vmem:[%s302 + $0x238] sm:$0xf]
      %v2320 = vld [vmem:[%s302 + $0x23c] sm:$0xf]
      %v2481 = vunpack.c.l.b16 %v2017
      %v2482 = vunpack.c.h.b16 %v2017
      %v2483 = vunpack.c.l.b16 %v2018
      %v2484 = vunpack.c.h.b16 %v2018
      %v2485 = vunpack.c.l.b16 %v2019
      %v2486 = vunpack.c.h.b16 %v2019
      %v2487 = vunpack.c.l.b16 %v2020
      %v2488 = vunpack.c.h.b16 %v2020
      %v2489 = vunpack.c.l.b16 %v2021
      %v2490 = vunpack.c.l.b16 %v2022
      %v2491 = vunpack.c.h.b16 %v2022
      %v2492 = vunpack.c.l.b16 %v2023
      %v2493 = vunpack.c.h.b16 %v2023
      %v2494 = vunpack.c.l.b16 %v2024
      %v2495 = vunpack.c.h.b16 %v2024
      %v2496 = vunpack.c.l.b16 %v2025
      %v2497 = vunpack.c.h.b16 %v2025
      %v2498 = vunpack.c.l.b16 %v2026
      %v2499 = vunpack.c.l.b16 %v2027
      %v2500 = vunpack.c.h.b16 %v2027
      %v2501 = vunpack.c.l.b16 %v2028
      %v2502 = vunpack.c.h.b16 %v2028
      %v2503 = vunpack.c.l.b16 %v2029
      %v2504 = vunpack.c.h.b16 %v2029
      %v2505 = vunpack.c.l.b16 %v2030
      %v2506 = vunpack.c.h.b16 %v2030
      %v2507 = vunpack.c.l.b16 %v2031
      %v2508 = vunpack.c.l.b16 %v2032
      %v2509 = vunpack.c.h.b16 %v2032
      %v2510 = vunpack.c.l.b16 %v2033
      %v2511 = vunpack.c.h.b16 %v2033
      %v2512 = vunpack.c.l.b16 %v2034
      %v2513 = vunpack.c.h.b16 %v2034
      %v2514 = vunpack.c.l.b16 %v2035
      %v2515 = vunpack.c.h.b16 %v2035
      %v2516 = vunpack.c.l.b16 %v2036
      %v2517 = vunpack.c.l.b16 %v2037
      %v2518 = vunpack.c.h.b16 %v2037
      %v2519 = vunpack.c.l.b16 %v2038
      %v2520 = vunpack.c.h.b16 %v2038
      %v2521 = vunpack.c.l.b16 %v2039
      %v2522 = vunpack.c.h.b16 %v2039
      %v2523 = vunpack.c.l.b16 %v2040
      %v2524 = vunpack.c.h.b16 %v2040
      %v2525 = vunpack.c.l.b16 %v2041
      %v2526 = vunpack.c.l.b16 %v2042
      %v2527 = vunpack.c.h.b16 %v2042
      %v2528 = vunpack.c.l.b16 %v2043
      %v2529 = vunpack.c.h.b16 %v2043
      %v2530 = vunpack.c.l.b16 %v2044
      %v2531 = vunpack.c.h.b16 %v2044
      %v2532 = vunpack.c.l.b16 %v2045
      %v2533 = vunpack.c.h.b16 %v2045
      %v2534 = vunpack.c.l.b16 %v2046
      %v2535 = vunpack.c.l.b16 %v2047
      %v2536 = vunpack.c.h.b16 %v2047
      %v2537 = vunpack.c.l.b16 %v2048
      %v2538 = vunpack.c.h.b16 %v2048
      %v2539 = vunpack.c.l.b16 %v2049
      %v2540 = vunpack.c.h.b16 %v2049
      %v2541 = vunpack.c.l.b16 %v2050
      %v2542 = vunpack.c.h.b16 %v2050
      %v2543 = vunpack.c.l.b16 %v2051
      %v2544 = vunpack.c.l.b16 %v2052
      %v2545 = vunpack.c.h.b16 %v2052
      %v2546 = vunpack.c.l.b16 %v2053
      %v2547 = vunpack.c.h.b16 %v2053
      %v2548 = vunpack.c.l.b16 %v2054
      %v2549 = vunpack.c.h.b16 %v2054
      %v2550 = vunpack.c.l.b16 %v2055
      %v2551 = vunpack.c.h.b16 %v2055
      %v2552 = vunpack.c.l.b16 %v2056
      %v2553 = vunpack.c.l.b16 %v2057
      %v2554 = vunpack.c.h.b16 %v2057
      %v2555 = vunpack.c.l.b16 %v2058
      %v2556 = vunpack.c.h.b16 %v2058
      %v2557 = vunpack.c.l.b16 %v2059
      %v2558 = vunpack.c.h.b16 %v2059
      %v2559 = vunpack.c.l.b16 %v2060
      %v2560 = vunpack.c.h.b16 %v2060
      %v2561 = vunpack.c.l.b16 %v2061
      %v2562 = vunpack.c.l.b16 %v2062
      %v2563 = vunpack.c.h.b16 %v2062
      %v2564 = vunpack.c.l.b16 %v2063
      %v2565 = vunpack.c.h.b16 %v2063
      %v2566 = vunpack.c.l.b16 %v2064
      %v2567 = vunpack.c.h.b16 %v2064
      %v2568 = vunpack.c.l.b16 %v2065
      %v2569 = vunpack.c.h.b16 %v2065
      %v2570 = vunpack.c.l.b16 %v2066
      %v2571 = vunpack.c.l.b16 %v2067
      %v2572 = vunpack.c.h.b16 %v2067
      %v2573 = vunpack.c.l.b16 %v2068
      %v2574 = vunpack.c.h.b16 %v2068
      %v2575 = vunpack.c.l.b16 %v2069
      %v2576 = vunpack.c.h.b16 %v2069
      %v2577 = vunpack.c.l.b16 %v2070
      %v2578 = vunpack.c.h.b16 %v2070
      %v2579 = vunpack.c.l.b16 %v2071
      %v2580 = vunpack.c.l.b16 %v2072
      %v2581 = vunpack.c.h.b16 %v2072
      %v2582 = vunpack.c.l.b16 %v2073
      %v2583 = vunpack.c.h.b16 %v2073
      %v2584 = vunpack.c.l.b16 %v2074
      %v2585 = vunpack.c.h.b16 %v2074
      %v2586 = vunpack.c.l.b16 %v2075
      %v2587 = vunpack.c.h.b16 %v2075
      %v2588 = vunpack.c.l.b16 %v2076
      %v2589 = vunpack.c.l.b16 %v2077
      %v2590 = vunpack.c.h.b16 %v2077
      %v2591 = vunpack.c.l.b16 %v2078
      %v2592 = vunpack.c.h.b16 %v2078
      %v2593 = vunpack.c.l.b16 %v2079
      %v2594 = vunpack.c.h.b16 %v2079
      %v2595 = vunpack.c.l.b16 %v2080
      %v2596 = vunpack.c.h.b16 %v2080
      %v2597 = vunpack.c.l.b16 %v2081
      %v2598 = vunpack.c.l.b16 %v2082
      %v2599 = vunpack.c.h.b16 %v2082
      %v2600 = vunpack.c.l.b16 %v2083
      %v2601 = vunpack.c.h.b16 %v2083
      %v2602 = vunpack.c.l.b16 %v2084
      %v2603 = vunpack.c.h.b16 %v2084
      %v2604 = vunpack.c.l.b16 %v2085
      %v2605 = vunpack.c.h.b16 %v2085
      %v2606 = vunpack.c.l.b16 %v2086
      %v2607 = vunpack.c.l.b16 %v2087
      %v2608 = vunpack.c.h.b16 %v2087
      %v2609 = vunpack.c.l.b16 %v2088
      %v2610 = vunpack.c.h.b16 %v2088
      %v2611 = vunpack.c.l.b16 %v2089
      %v2612 = vunpack.c.h.b16 %v2089
      %v2613 = vunpack.c.l.b16 %v2090
      %v2614 = vunpack.c.h.b16 %v2090
      %v2615 = vunpack.c.l.b16 %v2091
      %v2616 = vunpack.c.l.b16 %v2092
      %v2617 = vunpack.c.h.b16 %v2092
      %v2618 = vunpack.c.l.b16 %v2093
      %v2619 = vunpack.c.h.b16 %v2093
      %v2620 = vunpack.c.l.b16 %v2094
      %v2621 = vunpack.c.h.b16 %v2094
      %v2622 = vunpack.c.l.b16 %v2095
      %v2623 = vunpack.c.h.b16 %v2095
      %v2624 = vunpack.c.l.b16 %v2096
      %v2625 = vunpack.c.l.b16 %v2097
      %v2626 = vunpack.c.h.b16 %v2097
      %v2627 = vunpack.c.l.b16 %v2098
      %v2628 = vunpack.c.h.b16 %v2098
      %v2629 = vunpack.c.l.b16 %v2099
      %v2630 = vunpack.c.h.b16 %v2099
      %v2631 = vunpack.c.l.b16 %v2100
      %v2632 = vunpack.c.h.b16 %v2100
      %v2633 = vunpack.c.l.b16 %v2101
      %v2634 = vunpack.c.l.b16 %v2102
      %v2635 = vunpack.c.h.b16 %v2102
      %v2636 = vunpack.c.l.b16 %v2103
      %v2637 = vunpack.c.h.b16 %v2103
      %v2638 = vunpack.c.l.b16 %v2104
      %v2639 = vunpack.c.h.b16 %v2104
      %v2640 = vunpack.c.l.b16 %v2105
      %v2641 = vunpack.c.h.b16 %v2105
      %v2642 = vunpack.c.l.b16 %v2106
      %v2643 = vunpack.c.l.b16 %v2107
      %v2644 = vunpack.c.h.b16 %v2107
      %v2645 = vunpack.c.l.b16 %v2108
      %v2646 = vunpack.c.h.b16 %v2108
      %v2647 = vunpack.c.l.b16 %v2109
      %v2648 = vunpack.c.h.b16 %v2109
      %v2649 = vunpack.c.l.b16 %v2110
      %v2650 = vunpack.c.h.b16 %v2110
      %v2651 = vunpack.c.l.b16 %v2111
      %v2652 = vunpack.c.l.b16 %v2112
      %v2653 = vunpack.c.h.b16 %v2112
      %v2654 = vunpack.c.l.b16 %v2113
      %v2655 = vunpack.c.h.b16 %v2113
      %v2656 = vunpack.c.l.b16 %v2114
      %v2657 = vunpack.c.h.b16 %v2114
      %v2658 = vunpack.c.l.b16 %v2115
      %v2659 = vunpack.c.h.b16 %v2115
      %v2660 = vunpack.c.l.b16 %v2116
      %v2661 = vunpack.c.l.b16 %v2117
      %v2662 = vunpack.c.h.b16 %v2117
      %v2663 = vunpack.c.l.b16 %v2118
      %v2664 = vunpack.c.h.b16 %v2118
      %v2665 = vunpack.c.l.b16 %v2119
      %v2666 = vunpack.c.h.b16 %v2119
      %v2667 = vunpack.c.l.b16 %v2120
      %v2668 = vunpack.c.h.b16 %v2120
      %v2669 = vunpack.c.l.b16 %v2121
      %v2670 = vunpack.c.l.b16 %v2122
      %v2671 = vunpack.c.h.b16 %v2122
      %v2672 = vunpack.c.l.b16 %v2123
      %v2673 = vunpack.c.h.b16 %v2123
      %v2674 = vunpack.c.l.b16 %v2124
      %v2675 = vunpack.c.h.b16 %v2124
      %v2676 = vunpack.c.l.b16 %v2125
      %v2677 = vunpack.c.h.b16 %v2125
      %v2678 = vunpack.c.l.b16 %v2126
      %v2679 = vunpack.c.l.b16 %v2127
      %v2680 = vunpack.c.h.b16 %v2127
      %v2681 = vunpack.c.l.b16 %v2128
      %v2682 = vunpack.c.h.b16 %v2128
      %v2683 = vunpack.c.l.b16 %v2129
      %v2684 = vunpack.c.h.b16 %v2129
      %v2685 = vunpack.c.l.b16 %v2130
      %v2686 = vunpack.c.h.b16 %v2130
      %v2687 = vunpack.c.l.b16 %v2131
      %v2688 = vunpack.c.l.b16 %v2132
      %v2689 = vunpack.c.h.b16 %v2132
      %v2690 = vunpack.c.l.b16 %v2133
      %v2691 = vunpack.c.h.b16 %v2133
      %v2692 = vunpack.c.l.b16 %v2134
      %v2693 = vunpack.c.h.b16 %v2134
      %v2694 = vunpack.c.l.b16 %v2135
      %v2695 = vunpack.c.h.b16 %v2135
      %v2696 = vunpack.c.l.b16 %v2136
      %v2697 = vunpack.c.l.b16 %v2137
      %v2698 = vunpack.c.h.b16 %v2137
      %v2699 = vunpack.c.l.b16 %v2138
      %v2700 = vunpack.c.h.b16 %v2138
      %v2701 = vunpack.c.l.b16 %v2139
      %v2702 = vunpack.c.h.b16 %v2139
      %v2703 = vunpack.c.l.b16 %v2140
      %v2704 = vunpack.c.h.b16 %v2140
      %v2705 = vunpack.c.l.b16 %v2141
      %v2706 = vunpack.c.l.b16 %v2142
      %v2707 = vunpack.c.h.b16 %v2142
      %v2708 = vunpack.c.l.b16 %v2143
      %v2709 = vunpack.c.h.b16 %v2143
      %v2710 = vunpack.c.l.b16 %v2144
      %v2711 = vunpack.c.h.b16 %v2144
      %v2712 = vunpack.c.l.b16 %v2145
      %v2713 = vunpack.c.h.b16 %v2145
      %v2714 = vunpack.c.l.b16 %v2146
      %v2715 = vunpack.c.l.b16 %v2147
      %v2716 = vunpack.c.h.b16 %v2147
      %v2717 = vunpack.c.l.b16 %v2148
      %v2718 = vunpack.c.h.b16 %v2148
      %v2719 = vunpack.c.l.b16 %v2149
      %v2720 = vunpack.c.h.b16 %v2149
      %v2721 = vunpack.c.l.b16 %v2150
      %v2722 = vunpack.c.h.b16 %v2150
      %v2723 = vunpack.c.l.b16 %v2151
      %v2724 = vunpack.c.l.b16 %v2152
      %v2725 = vunpack.c.h.b16 %v2152
      %v2726 = vunpack.c.l.b16 %v2153
      %v2727 = vunpack.c.h.b16 %v2153
      %v2728 = vunpack.c.l.b16 %v2154
      %v2729 = vunpack.c.h.b16 %v2154
      %v2730 = vunpack.c.l.b16 %v2155
      %v2731 = vunpack.c.h.b16 %v2155
      %v2732 = vunpack.c.l.b16 %v2156
      %v2733 = vunpack.c.l.b16 %v2157
      %v2734 = vunpack.c.h.b16 %v2157
      %v2735 = vunpack.c.l.b16 %v2158
      %v2736 = vunpack.c.h.b16 %v2158
      %v2737 = vunpack.c.l.b16 %v2159
      %v2738 = vunpack.c.h.b16 %v2159
      %v2739 = vunpack.c.l.b16 %v2160
      %v2740 = vunpack.c.h.b16 %v2160
      %v2741 = vunpack.c.l.b16 %v2161
      %v2742 = vunpack.c.l.b16 %v2162
      %v2743 = vunpack.c.h.b16 %v2162
      %v2744 = vunpack.c.l.b16 %v2163
      %v2745 = vunpack.c.h.b16 %v2163
      %v2746 = vunpack.c.l.b16 %v2164
      %v2747 = vunpack.c.h.b16 %v2164
      %v2748 = vunpack.c.l.b16 %v2165
      %v2749 = vunpack.c.h.b16 %v2165
      %v2750 = vunpack.c.l.b16 %v2166
      %v2751 = vunpack.c.l.b16 %v2167
      %v2752 = vunpack.c.h.b16 %v2167
      %v2753 = vunpack.c.l.b16 %v2168
      %v2754 = vunpack.c.h.b16 %v2168
      %v2755 = vunpack.c.l.b16 %v2169
      %v2756 = vunpack.c.h.b16 %v2169
      %v2757 = vunpack.c.l.b16 %v2170
      %v2758 = vunpack.c.h.b16 %v2170
      %v2759 = vunpack.c.l.b16 %v2171
      %v2760 = vunpack.c.l.b16 %v2172
      %v2761 = vunpack.c.h.b16 %v2172
      %v2762 = vunpack.c.l.b16 %v2173
      %v2763 = vunpack.c.h.b16 %v2173
      %v2764 = vunpack.c.l.b16 %v2174
      %v2765 = vunpack.c.h.b16 %v2174
      %v2766 = vunpack.c.l.b16 %v2175
      %v2767 = vunpack.c.h.b16 %v2175
      %v2768 = vunpack.c.l.b16 %v2176
      %v2769 = vpack.c.b16 %v2490, %v2481
      %v2770 = vpack.c.b16 %v2491, %v2482
      %v2771 = vpack.c.b16 %v2492, %v2483
      %v2772 = vpack.c.b16 %v2493, %v2484
      %v2773 = vpack.c.b16 %v2494, %v2485
      %v2774 = vpack.c.b16 %v2495, %v2486
      %v2775 = vpack.c.b16 %v2496, %v2487
      %v2776 = vpack.c.b16 %v2497, %v2488
      %v2777 = vpack.c.b16 %v2498, %v2489
      %v2778 = vpack.c.b16 %v2508, %v2499
      %v2779 = vpack.c.b16 %v2509, %v2500
      %v2780 = vpack.c.b16 %v2510, %v2501
      %v2781 = vpack.c.b16 %v2511, %v2502
      %v2782 = vpack.c.b16 %v2512, %v2503
      %v2783 = vpack.c.b16 %v2513, %v2504
      %v2784 = vpack.c.b16 %v2514, %v2505
      %v2785 = vpack.c.b16 %v2515, %v2506
      %v2786 = vpack.c.b16 %v2516, %v2507
      %v2787 = vpack.c.b16 %v2526, %v2517
      %v2788 = vpack.c.b16 %v2527, %v2518
      %v2789 = vpack.c.b16 %v2528, %v2519
      %v2790 = vpack.c.b16 %v2529, %v2520
      %v2791 = vpack.c.b16 %v2530, %v2521
      %v2792 = vpack.c.b16 %v2531, %v2522
      %v2793 = vpack.c.b16 %v2532, %v2523
      %v2794 = vpack.c.b16 %v2533, %v2524
      %v2795 = vpack.c.b16 %v2534, %v2525
      %v2796 = vpack.c.b16 %v2544, %v2535
      %v2797 = vpack.c.b16 %v2545, %v2536
      %v2798 = vpack.c.b16 %v2546, %v2537
      %v2799 = vpack.c.b16 %v2547, %v2538
      %v2800 = vpack.c.b16 %v2548, %v2539
      %v2801 = vpack.c.b16 %v2549, %v2540
      %v2802 = vpack.c.b16 %v2550, %v2541
      %v2803 = vpack.c.b16 %v2551, %v2542
      %v2804 = vpack.c.b16 %v2552, %v2543
      %v2805 = vpack.c.b16 %v2562, %v2553
      %v2806 = vpack.c.b16 %v2563, %v2554
      %v2807 = vpack.c.b16 %v2564, %v2555
      %v2808 = vpack.c.b16 %v2565, %v2556
      %v2809 = vpack.c.b16 %v2566, %v2557
      %v2810 = vpack.c.b16 %v2567, %v2558
      %v2811 = vpack.c.b16 %v2568, %v2559
      %v2812 = vpack.c.b16 %v2569, %v2560
      %v2813 = vpack.c.b16 %v2570, %v2561
      %v2814 = vpack.c.b16 %v2580, %v2571
      %v2815 = vpack.c.b16 %v2581, %v2572
      %v2816 = vpack.c.b16 %v2582, %v2573
      %v2817 = vpack.c.b16 %v2583, %v2574
      %v2818 = vpack.c.b16 %v2584, %v2575
      %v2819 = vpack.c.b16 %v2585, %v2576
      %v2820 = vpack.c.b16 %v2586, %v2577
      %v2821 = vpack.c.b16 %v2587, %v2578
      %v2822 = vpack.c.b16 %v2588, %v2579
      %v2823 = vpack.c.b16 %v2598, %v2589
      %v2824 = vpack.c.b16 %v2599, %v2590
      %v2825 = vpack.c.b16 %v2600, %v2591
      %v2826 = vpack.c.b16 %v2601, %v2592
      %v2827 = vpack.c.b16 %v2602, %v2593
      %v2828 = vpack.c.b16 %v2603, %v2594
      %v2829 = vpack.c.b16 %v2604, %v2595
      %v2830 = vpack.c.b16 %v2605, %v2596
      %v2831 = vpack.c.b16 %v2606, %v2597
      %v2832 = vpack.c.b16 %v2616, %v2607
      %v2833 = vpack.c.b16 %v2617, %v2608
      %v2834 = vpack.c.b16 %v2618, %v2609
      %v2835 = vpack.c.b16 %v2619, %v2610
      %v2836 = vpack.c.b16 %v2620, %v2611
      %v2837 = vpack.c.b16 %v2621, %v2612
      %v2838 = vpack.c.b16 %v2622, %v2613
      %v2839 = vpack.c.b16 %v2623, %v2614
      %v2840 = vpack.c.b16 %v2624, %v2615
      %v2841 = vpack.c.b16 %v2634, %v2625
      %v2842 = vpack.c.b16 %v2635, %v2626
      %v2843 = vpack.c.b16 %v2636, %v2627
      %v2844 = vpack.c.b16 %v2637, %v2628
      %v2845 = vpack.c.b16 %v2638, %v2629
      %v2846 = vpack.c.b16 %v2639, %v2630
      %v2847 = vpack.c.b16 %v2640, %v2631
      %v2848 = vpack.c.b16 %v2641, %v2632
      %v2849 = vpack.c.b16 %v2642, %v2633
      %v2850 = vpack.c.b16 %v2652, %v2643
      %v2851 = vpack.c.b16 %v2653, %v2644
      %v2852 = vpack.c.b16 %v2654, %v2645
      %v2853 = vpack.c.b16 %v2655, %v2646
      %v2854 = vpack.c.b16 %v2656, %v2647
      %v2855 = vpack.c.b16 %v2657, %v2648
      %v2856 = vpack.c.b16 %v2658, %v2649
      %v2857 = vpack.c.b16 %v2659, %v2650
      %v2858 = vpack.c.b16 %v2660, %v2651
      %v2859 = vpack.c.b16 %v2670, %v2661
      %v2860 = vpack.c.b16 %v2671, %v2662
      %v2861 = vpack.c.b16 %v2672, %v2663
      %v2862 = vpack.c.b16 %v2673, %v2664
      %v2863 = vpack.c.b16 %v2674, %v2665
      %v2864 = vpack.c.b16 %v2675, %v2666
      %v2865 = vpack.c.b16 %v2676, %v2667
      %v2866 = vpack.c.b16 %v2677, %v2668
      %v2867 = vpack.c.b16 %v2678, %v2669
      %v2868 = vpack.c.b16 %v2688, %v2679
      %v2869 = vpack.c.b16 %v2689, %v2680
      %v2870 = vpack.c.b16 %v2690, %v2681
      %v2871 = vpack.c.b16 %v2691, %v2682
      %v2872 = vpack.c.b16 %v2692, %v2683
      %v2873 = vpack.c.b16 %v2693, %v2684
      %v2874 = vpack.c.b16 %v2694, %v2685
      %v2875 = vpack.c.b16 %v2695, %v2686
      %v2876 = vpack.c.b16 %v2696, %v2687
      %v2877 = vpack.c.b16 %v2706, %v2697
      %v2878 = vpack.c.b16 %v2707, %v2698
      %v2879 = vpack.c.b16 %v2708, %v2699
      %v2880 = vpack.c.b16 %v2709, %v2700
      %v2881 = vpack.c.b16 %v2710, %v2701
      %v2882 = vpack.c.b16 %v2711, %v2702
      %v2883 = vpack.c.b16 %v2712, %v2703
      %v2884 = vpack.c.b16 %v2713, %v2704
      %v2885 = vpack.c.b16 %v2714, %v2705
      %v2886 = vpack.c.b16 %v2724, %v2715
      %v2887 = vpack.c.b16 %v2725, %v2716
      %v2888 = vpack.c.b16 %v2726, %v2717
      %v2889 = vpack.c.b16 %v2727, %v2718
      %v2890 = vpack.c.b16 %v2728, %v2719
      %v2891 = vpack.c.b16 %v2729, %v2720
      %v2892 = vpack.c.b16 %v2730, %v2721
      %v2893 = vpack.c.b16 %v2731, %v2722
      %v2894 = vpack.c.b16 %v2732, %v2723
      %v2895 = vpack.c.b16 %v2742, %v2733
      %v2896 = vpack.c.b16 %v2743, %v2734
      %v2897 = vpack.c.b16 %v2744, %v2735
      %v2898 = vpack.c.b16 %v2745, %v2736
      %v2899 = vpack.c.b16 %v2746, %v2737
      %v2900 = vpack.c.b16 %v2747, %v2738
      %v2901 = vpack.c.b16 %v2748, %v2739
      %v2902 = vpack.c.b16 %v2749, %v2740
      %v2903 = vpack.c.b16 %v2750, %v2741
      %v2904 = vpack.c.b16 %v2760, %v2751
      %v2905 = vpack.c.b16 %v2761, %v2752
      %v2906 = vpack.c.b16 %v2762, %v2753
      %v2907 = vpack.c.b16 %v2763, %v2754
      %v2908 = vpack.c.b16 %v2764, %v2755
      %v2909 = vpack.c.b16 %v2765, %v2756
      %v2910 = vpack.c.b16 %v2766, %v2757
      %v2911 = vpack.c.b16 %v2767, %v2758
      %v2912 = vpack.c.b16 %v2768, %v2759
      %v3201 = vunpack.c.l.b16 %v2177
      %v3202 = vunpack.c.l.b16 %v2178
      %v3203 = vunpack.c.l.b16 %v2179
      %v3204 = vunpack.c.l.b16 %v2180
      %v3205 = vunpack.c.l.b16 %v2181
      %v3206 = vunpack.c.l.b16 %v2182
      %v3207 = vunpack.c.l.b16 %v2183
      %v3208 = vunpack.c.l.b16 %v2184
      %v3209 = vunpack.c.l.b16 %v2185
      %v3210 = vunpack.c.l.b16 %v2186
      %v3211 = vunpack.c.l.b16 %v2187
      %v3212 = vunpack.c.l.b16 %v2188
      %v3213 = vunpack.c.l.b16 %v2189
      %v3214 = vunpack.c.l.b16 %v2190
      %v3215 = vunpack.c.l.b16 %v2191
      %v3216 = vunpack.c.l.b16 %v2192
      %v3217 = vunpack.c.l.b16 %v2193
      %v3218 = vunpack.c.l.b16 %v2194
      %v3219 = vunpack.c.l.b16 %v2195
      %v3220 = vunpack.c.l.b16 %v2196
      %v3221 = vunpack.c.l.b16 %v2197
      %v3222 = vunpack.c.l.b16 %v2198
      %v3223 = vunpack.c.l.b16 %v2199
      %v3224 = vunpack.c.l.b16 %v2200
      %v3225 = vunpack.c.l.b16 %v2201
      %v3226 = vunpack.c.l.b16 %v2202
      %v3227 = vunpack.c.l.b16 %v2203
      %v3228 = vunpack.c.l.b16 %v2204
      %v3229 = vunpack.c.l.b16 %v2205
      %v3230 = vunpack.c.l.b16 %v2206
      %v3231 = vunpack.c.l.b16 %v2207
      %v3232 = vunpack.c.l.b16 %v2208
      %v3233 = vunpack.c.l.b16 %v2209
      %v3234 = vunpack.c.l.b16 %v2210
      %v3235 = vunpack.c.l.b16 %v2211
      %v3236 = vunpack.c.l.b16 %v2212
      %v3237 = vunpack.c.l.b16 %v2213
      %v3238 = vunpack.c.l.b16 %v2214
      %v3239 = vunpack.c.l.b16 %v2215
      %v3240 = vunpack.c.l.b16 %v2216
      %v3241 = vunpack.c.l.b16 %v2217
      %v3242 = vunpack.c.l.b16 %v2218
      %v3243 = vunpack.c.l.b16 %v2219
      %v3244 = vunpack.c.l.b16 %v2220
      %v3245 = vunpack.c.l.b16 %v2221
      %v3246 = vunpack.c.l.b16 %v2222
      %v3247 = vunpack.c.l.b16 %v2223
      %v3248 = vunpack.c.l.b16 %v2224
      %v3249 = vunpack.c.l.b16 %v2225
      %v3250 = vunpack.c.l.b16 %v2226
      %v3251 = vunpack.c.l.b16 %v2227
      %v3252 = vunpack.c.l.b16 %v2228
      %v3253 = vunpack.c.l.b16 %v2229
      %v3254 = vunpack.c.l.b16 %v2230
      %v3255 = vunpack.c.l.b16 %v2231
      %v3256 = vunpack.c.l.b16 %v2232
      %v3257 = vunpack.c.l.b16 %v2233
      %v3258 = vunpack.c.l.b16 %v2234
      %v3259 = vunpack.c.l.b16 %v2235
      %v3260 = vunpack.c.l.b16 %v2236
      %v3261 = vunpack.c.l.b16 %v2237
      %v3262 = vunpack.c.l.b16 %v2238
      %v3263 = vunpack.c.l.b16 %v2239
      %v3264 = vunpack.c.l.b16 %v2240
      %v3265 = vunpack.c.l.b16 %v2241
      %v3266 = vunpack.c.l.b16 %v2242
      %v3267 = vunpack.c.l.b16 %v2243
      %v3268 = vunpack.c.l.b16 %v2244
      %v3269 = vunpack.c.l.b16 %v2245
      %v3270 = vunpack.c.l.b16 %v2246
      %v3271 = vunpack.c.l.b16 %v2247
      %v3272 = vunpack.c.l.b16 %v2248
      %v3273 = vunpack.c.l.b16 %v2249
      %v3274 = vunpack.c.l.b16 %v2250
      %v3275 = vunpack.c.l.b16 %v2251
      %v3276 = vunpack.c.l.b16 %v2252
      %v3277 = vunpack.c.l.b16 %v2253
      %v3278 = vunpack.c.l.b16 %v2254
      %v3279 = vunpack.c.l.b16 %v2255
      %v3280 = vunpack.c.l.b16 %v2256
      %v3281 = vunpack.c.l.b16 %v2257
      %v3282 = vunpack.c.l.b16 %v2258
      %v3283 = vunpack.c.l.b16 %v2259
      %v3284 = vunpack.c.l.b16 %v2260
      %v3285 = vunpack.c.l.b16 %v2261
      %v3286 = vunpack.c.l.b16 %v2262
      %v3287 = vunpack.c.l.b16 %v2263
      %v3288 = vunpack.c.l.b16 %v2264
      %v3289 = vunpack.c.l.b16 %v2265
      %v3290 = vunpack.c.l.b16 %v2266
      %v3291 = vunpack.c.l.b16 %v2267
      %v3292 = vunpack.c.l.b16 %v2268
      %v3293 = vunpack.c.l.b16 %v2269
      %v3294 = vunpack.c.l.b16 %v2270
      %v3295 = vunpack.c.l.b16 %v2271
      %v3296 = vunpack.c.l.b16 %v2272
      %v3297 = vunpack.c.l.b16 %v2273
      %v3298 = vunpack.c.l.b16 %v2274
      %v3299 = vunpack.c.l.b16 %v2275
      %v3300 = vunpack.c.l.b16 %v2276
      %v3301 = vunpack.c.l.b16 %v2277
      %v3302 = vunpack.c.l.b16 %v2278
      %v3303 = vunpack.c.l.b16 %v2279
      %v3304 = vunpack.c.l.b16 %v2280
      %v3305 = vunpack.c.l.b16 %v2281
      %v3306 = vunpack.c.l.b16 %v2282
      %v3307 = vunpack.c.l.b16 %v2283
      %v3308 = vunpack.c.l.b16 %v2284
      %v3309 = vunpack.c.l.b16 %v2285
      %v3310 = vunpack.c.l.b16 %v2286
      %v3311 = vunpack.c.l.b16 %v2287
      %v3312 = vunpack.c.l.b16 %v2288
      %v3313 = vunpack.c.l.b16 %v2289
      %v3314 = vunpack.c.l.b16 %v2290
      %v3315 = vunpack.c.l.b16 %v2291
      %v3316 = vunpack.c.l.b16 %v2292
      %v3317 = vunpack.c.l.b16 %v2293
      %v3318 = vunpack.c.l.b16 %v2294
      %v3319 = vunpack.c.l.b16 %v2295
      %v3320 = vunpack.c.l.b16 %v2296
      %v3321 = vunpack.c.l.b16 %v2297
      %v3322 = vunpack.c.l.b16 %v2298
      %v3323 = vunpack.c.l.b16 %v2299
      %v3324 = vunpack.c.l.b16 %v2300
      %v3325 = vunpack.c.l.b16 %v2301
      %v3326 = vunpack.c.l.b16 %v2302
      %v3327 = vunpack.c.l.b16 %v2303
      %v3328 = vunpack.c.l.b16 %v2304
      %v3329 = vunpack.c.l.b16 %v2305
      %v3330 = vunpack.c.l.b16 %v2306
      %v3331 = vunpack.c.l.b16 %v2307
      %v3332 = vunpack.c.l.b16 %v2308
      %v3333 = vunpack.c.l.b16 %v2309
      %v3334 = vunpack.c.l.b16 %v2310
      %v3335 = vunpack.c.l.b16 %v2311
      %v3336 = vunpack.c.l.b16 %v2312
      %v3337 = vunpack.c.l.b16 %v2313
      %v3338 = vunpack.c.l.b16 %v2314
      %v3339 = vunpack.c.l.b16 %v2315
      %v3340 = vunpack.c.l.b16 %v2316
      %v3341 = vunpack.c.l.b16 %v2317
      %v3342 = vunpack.c.l.b16 %v2318
      %v3343 = vunpack.c.l.b16 %v2319
      %v3344 = vunpack.c.l.b16 %v2320
      %v3345 = vpack.c.b16 %v3202, %v3201
      %v3346 = vpack.c.b16 %v3204, %v3203
      %v3347 = vpack.c.b16 %v3206, %v3205
      %v3348 = vpack.c.b16 %v3208, %v3207
      %v3349 = vpack.c.b16 %v3210, %v3209
      %v3350 = vpack.c.b16 %v3212, %v3211
      %v3351 = vpack.c.b16 %v3214, %v3213
      %v3352 = vpack.c.b16 %v3216, %v3215
      %v3353 = vpack.c.b16 %v3218, %v3217
      %v3354 = vpack.c.b16 %v3220, %v3219
      %v3355 = vpack.c.b16 %v3222, %v3221
      %v3356 = vpack.c.b16 %v3224, %v3223
      %v3357 = vpack.c.b16 %v3226, %v3225
      %v3358 = vpack.c.b16 %v3228, %v3227
      %v3359 = vpack.c.b16 %v3230, %v3229
      %v3360 = vpack.c.b16 %v3232, %v3231
      %v3361 = vpack.c.b16 %v3234, %v3233
      %v3362 = vpack.c.b16 %v3236, %v3235
      %v3363 = vpack.c.b16 %v3238, %v3237
      %v3364 = vpack.c.b16 %v3240, %v3239
      %v3365 = vpack.c.b16 %v3242, %v3241
      %v3366 = vpack.c.b16 %v3244, %v3243
      %v3367 = vpack.c.b16 %v3246, %v3245
      %v3368 = vpack.c.b16 %v3248, %v3247
      %v3369 = vpack.c.b16 %v3250, %v3249
      %v3370 = vpack.c.b16 %v3252, %v3251
      %v3371 = vpack.c.b16 %v3254, %v3253
      %v3372 = vpack.c.b16 %v3256, %v3255
      %v3373 = vpack.c.b16 %v3258, %v3257
      %v3374 = vpack.c.b16 %v3260, %v3259
      %v3375 = vpack.c.b16 %v3262, %v3261
      %v3376 = vpack.c.b16 %v3264, %v3263
      %v3377 = vpack.c.b16 %v3266, %v3265
      %v3378 = vpack.c.b16 %v3268, %v3267
      %v3379 = vpack.c.b16 %v3270, %v3269
      %v3380 = vpack.c.b16 %v3272, %v3271
      %v3381 = vpack.c.b16 %v3274, %v3273
      %v3382 = vpack.c.b16 %v3276, %v3275
      %v3383 = vpack.c.b16 %v3278, %v3277
      %v3384 = vpack.c.b16 %v3280, %v3279
      %v3385 = vpack.c.b16 %v3282, %v3281
      %v3386 = vpack.c.b16 %v3284, %v3283
      %v3387 = vpack.c.b16 %v3286, %v3285
      %v3388 = vpack.c.b16 %v3288, %v3287
      %v3389 = vpack.c.b16 %v3290, %v3289
      %v3390 = vpack.c.b16 %v3292, %v3291
      %v3391 = vpack.c.b16 %v3294, %v3293
      %v3392 = vpack.c.b16 %v3296, %v3295
      %v3393 = vpack.c.b16 %v3298, %v3297
      %v3394 = vpack.c.b16 %v3300, %v3299
      %v3395 = vpack.c.b16 %v3302, %v3301
      %v3396 = vpack.c.b16 %v3304, %v3303
      %v3397 = vpack.c.b16 %v3306, %v3305
      %v3398 = vpack.c.b16 %v3308, %v3307
      %v3399 = vpack.c.b16 %v3310, %v3309
      %v3400 = vpack.c.b16 %v3312, %v3311
      %v3401 = vpack.c.b16 %v3314, %v3313
      %v3402 = vpack.c.b16 %v3316, %v3315
      %v3403 = vpack.c.b16 %v3318, %v3317
      %v3404 = vpack.c.b16 %v3320, %v3319
      %v3405 = vpack.c.b16 %v3322, %v3321
      %v3406 = vpack.c.b16 %v3324, %v3323
      %v3407 = vpack.c.b16 %v3326, %v3325
      %v3408 = vpack.c.b16 %v3328, %v3327
      %v3409 = vpack.c.b16 %v3330, %v3329
      %v3410 = vpack.c.b16 %v3332, %v3331
      %v3411 = vpack.c.b16 %v3334, %v3333
      %v3412 = vpack.c.b16 %v3336, %v3335
      %v3413 = vpack.c.b16 %v3338, %v3337
      %v3414 = vpack.c.b16 %v3340, %v3339
      %v3415 = vpack.c.b16 %v3342, %v3341
      %v3416 = vpack.c.b16 %v3344, %v3343
      %3489 = vmatpush.bf16.msra.mxu0 %v3352
      %3490 = vmatpush.bf16.msra.mxu0 %v3351
      %3491 = vmatpush.bf16.msra.mxu0 %v3350
      %3492 = vmatpush.bf16.msra.mxu0 %v3349
      %3493 = vmatpush.bf16.msra.mxu0 %v3348
      %3494 = vmatpush.bf16.msra.mxu0 %v3347
      %3495 = vmatpush.bf16.msra.mxu0 %v3346
      %3496 = vmatpush.bf16.msra.mxu0 %v3345
      %3497 = vmatmul.bf16.gmra.mxu0 %v2769
      %v3498 = vpop.f32.mrf.mxu0
      %v3499 = vadd.f32 0.0, %v3498
      %v3500 = vpop.f32.mrf.mxu0
      %v3501 = vadd.f32 0.0, %v3500
      %3502 = vmatmul.bf16.gmra.mxu0 %v2778
      %v3503 = vpop.f32.mrf.mxu0
      %v3504 = vadd.f32 0.0, %v3503
      %v3505 = vpop.f32.mrf.mxu0
      %v3506 = vadd.f32 0.0, %v3505
      %3507 = vmatmul.bf16.gmra.mxu0 %v2787
      %v3508 = vpop.f32.mrf.mxu0
      %v3509 = vadd.f32 0.0, %v3508
      %v3510 = vpop.f32.mrf.mxu0
      %v3511 = vadd.f32 0.0, %v3510
      %3512 = vmatmul.bf16.gmra.mxu0 %v2796
      %v3513 = vpop.f32.mrf.mxu0
      %v3514 = vadd.f32 0.0, %v3513
      %v3515 = vpop.f32.mrf.mxu0
      %v3516 = vadd.f32 0.0, %v3515
      %3517 = vmatmul.bf16.gmra.mxu0 %v2805
      %v3518 = vpop.f32.mrf.mxu0
      %v3519 = vadd.f32 0.0, %v3518
      %v3520 = vpop.f32.mrf.mxu0
      %v3521 = vadd.f32 0.0, %v3520
      %3522 = vmatmul.bf16.gmra.mxu0 %v2814
      %v3523 = vpop.f32.mrf.mxu0
      %v3524 = vadd.f32 0.0, %v3523
      %v3525 = vpop.f32.mrf.mxu0
      %v3526 = vadd.f32 0.0, %v3525
      %3527 = vmatmul.bf16.gmra.mxu0 %v2823
      %v3528 = vpop.f32.mrf.mxu0
      %v3529 = vadd.f32 0.0, %v3528
      %v3530 = vpop.f32.mrf.mxu0
      %v3531 = vadd.f32 0.0, %v3530
      %3532 = vmatmul.bf16.gmra.mxu0 %v2832
      %v3533 = vpop.f32.mrf.mxu0
      %v3534 = vadd.f32 0.0, %v3533
      %v3535 = vpop.f32.mrf.mxu0
      %v3536 = vadd.f32 0.0, %v3535
      %3537 = vmatmul.bf16.gmra.mxu0 %v2841
      %v3538 = vpop.f32.mrf.mxu0
      %v3539 = vadd.f32 0.0, %v3538
      %v3540 = vpop.f32.mrf.mxu0
      %v3541 = vadd.f32 0.0, %v3540
      %3542 = vmatmul.bf16.gmra.mxu0 %v2850
      %v3543 = vpop.f32.mrf.mxu0
      %v3544 = vadd.f32 0.0, %v3543
      %v3545 = vpop.f32.mrf.mxu0
      %v3546 = vadd.f32 0.0, %v3545
      %3547 = vmatmul.bf16.gmra.mxu0 %v2859
      %v3548 = vpop.f32.mrf.mxu0
      %v3549 = vadd.f32 0.0, %v3548
      %v3550 = vpop.f32.mrf.mxu0
      %v3551 = vadd.f32 0.0, %v3550
      %3552 = vmatmul.bf16.gmra.mxu0 %v2868
      %v3553 = vpop.f32.mrf.mxu0
      %v3554 = vadd.f32 0.0, %v3553
      %v3555 = vpop.f32.mrf.mxu0
      %v3556 = vadd.f32 0.0, %v3555
      %3557 = vmatmul.bf16.gmra.mxu0 %v2877
      %v3558 = vpop.f32.mrf.mxu0
      %v3559 = vadd.f32 0.0, %v3558
      %v3560 = vpop.f32.mrf.mxu0
      %v3561 = vadd.f32 0.0, %v3560
      %3562 = vmatmul.bf16.gmra.mxu0 %v2886
      %v3563 = vpop.f32.mrf.mxu0
      %v3564 = vadd.f32 0.0, %v3563
      %v3565 = vpop.f32.mrf.mxu0
      %v3566 = vadd.f32 0.0, %v3565
      %3567 = vmatmul.bf16.gmra.mxu0 %v2895
      %v3568 = vpop.f32.mrf.mxu0
      %v3569 = vadd.f32 0.0, %v3568
      %v3570 = vpop.f32.mrf.mxu0
      %v3571 = vadd.f32 0.0, %v3570
      %3572 = vmatmul.bf16.gmra.mxu0 %v2904
      %v3573 = vpop.f32.mrf.mxu0
      %v3574 = vadd.f32 0.0, %v3573
      %v3575 = vpop.f32.mrf.mxu0
      %v3576 = vadd.f32 0.0, %v3575
      %3577 = vdwg.mxu0
      %3578 = vmatpush.bf16.msra.mxu0 %v3360
      %3579 = vmatpush.bf16.msra.mxu0 %v3359
      %3580 = vmatpush.bf16.msra.mxu0 %v3358
      %3581 = vmatpush.bf16.msra.mxu0 %v3357
      %3582 = vmatpush.bf16.msra.mxu0 %v3356
      %3583 = vmatpush.bf16.msra.mxu0 %v3355
      %3584 = vmatpush.bf16.msra.mxu0 %v3354
      %3585 = vmatpush.bf16.msra.mxu0 %v3353
      %3586 = vmatmul.bf16.gmra.mxu0 %v2770
      %v3587 = vpop.f32.mrf.mxu0
      %v3588 = vadd.f32 %v3499, %v3587
      %v3589 = vpop.f32.mrf.mxu0
      %v3590 = vadd.f32 %v3501, %v3589
      %3591 = vmatmul.bf16.gmra.mxu0 %v2779
      %v3592 = vpop.f32.mrf.mxu0
      %v3593 = vadd.f32 %v3504, %v3592
      %v3594 = vpop.f32.mrf.mxu0
      %v3595 = vadd.f32 %v3506, %v3594
      %3596 = vmatmul.bf16.gmra.mxu0 %v2788
      %v3597 = vpop.f32.mrf.mxu0
      %v3598 = vadd.f32 %v3509, %v3597
      %v3599 = vpop.f32.mrf.mxu0
      %v3600 = vadd.f32 %v3511, %v3599
      %3601 = vmatmul.bf16.gmra.mxu0 %v2797
      %v3602 = vpop.f32.mrf.mxu0
      %v3603 = vadd.f32 %v3514, %v3602
      %v3604 = vpop.f32.mrf.mxu0
      %v3605 = vadd.f32 %v3516, %v3604
      %3606 = vmatmul.bf16.gmra.mxu0 %v2806
      %v3607 = vpop.f32.mrf.mxu0
      %v3608 = vadd.f32 %v3519, %v3607
      %v3609 = vpop.f32.mrf.mxu0
      %v3610 = vadd.f32 %v3521, %v3609
      %3611 = vmatmul.bf16.gmra.mxu0 %v2815
      %v3612 = vpop.f32.mrf.mxu0
      %v3613 = vadd.f32 %v3524, %v3612
      %v3614 = vpop.f32.mrf.mxu0
      %v3615 = vadd.f32 %v3526, %v3614
      %3616 = vmatmul.bf16.gmra.mxu0 %v2824
      %v3617 = vpop.f32.mrf.mxu0
      %v3618 = vadd.f32 %v3529, %v3617
      %v3619 = vpop.f32.mrf.mxu0
      %v3620 = vadd.f32 %v3531, %v3619
      %3621 = vmatmul.bf16.gmra.mxu0 %v2833
      %v3622 = vpop.f32.mrf.mxu0
      %v3623 = vadd.f32 %v3534, %v3622
      %v3624 = vpop.f32.mrf.mxu0
      %v3625 = vadd.f32 %v3536, %v3624
      %3626 = vmatmul.bf16.gmra.mxu0 %v2842
      %v3627 = vpop.f32.mrf.mxu0
      %v3628 = vadd.f32 %v3539, %v3627
      %v3629 = vpop.f32.mrf.mxu0
      %v3630 = vadd.f32 %v3541, %v3629
      %3631 = vmatmul.bf16.gmra.mxu0 %v2851
      %v3632 = vpop.f32.mrf.mxu0
      %v3633 = vadd.f32 %v3544, %v3632
      %v3634 = vpop.f32.mrf.mxu0
      %v3635 = vadd.f32 %v3546, %v3634
      %3636 = vmatmul.bf16.gmra.mxu0 %v2860
      %v3637 = vpop.f32.mrf.mxu0
      %v3638 = vadd.f32 %v3549, %v3637
      %v3639 = vpop.f32.mrf.mxu0
      %v3640 = vadd.f32 %v3551, %v3639
      %3641 = vmatmul.bf16.gmra.mxu0 %v2869
      %v3642 = vpop.f32.mrf.mxu0
      %v3643 = vadd.f32 %v3554, %v3642
      %v3644 = vpop.f32.mrf.mxu0
      %v3645 = vadd.f32 %v3556, %v3644
      %3646 = vmatmul.bf16.gmra.mxu0 %v2878
      %v3647 = vpop.f32.mrf.mxu0
      %v3648 = vadd.f32 %v3559, %v3647
      %v3649 = vpop.f32.mrf.mxu0
      %v3650 = vadd.f32 %v3561, %v3649
      %3651 = vmatmul.bf16.gmra.mxu0 %v2887
      %v3652 = vpop.f32.mrf.mxu0
      %v3653 = vadd.f32 %v3564, %v3652
      %v3654 = vpop.f32.mrf.mxu0
      %v3655 = vadd.f32 %v3566, %v3654
      %3656 = vmatmul.bf16.gmra.mxu0 %v2896
      %v3657 = vpop.f32.mrf.mxu0
      %v3658 = vadd.f32 %v3569, %v3657
      %v3659 = vpop.f32.mrf.mxu0
      %v3660 = vadd.f32 %v3571, %v3659
      %3661 = vmatmul.bf16.gmra.mxu0 %v2905
      %v3662 = vpop.f32.mrf.mxu0
      %v3663 = vadd.f32 %v3574, %v3662
      %v3664 = vpop.f32.mrf.mxu0
      %v3665 = vadd.f32 %v3576, %v3664
      %3666 = vdwg.mxu0
      %3667 = vmatpush.bf16.msra.mxu0 %v3368
      %3668 = vmatpush.bf16.msra.mxu0 %v3367
      %3669 = vmatpush.bf16.msra.mxu0 %v3366
      %3670 = vmatpush.bf16.msra.mxu0 %v3365
      %3671 = vmatpush.bf16.msra.mxu0 %v3364
      %3672 = vmatpush.bf16.msra.mxu0 %v3363
      %3673 = vmatpush.bf16.msra.mxu0 %v3362
      %3674 = vmatpush.bf16.msra.mxu0 %v3361
      %3675 = vmatmul.bf16.gmra.mxu0 %v2771
      %v3676 = vpop.f32.mrf.mxu0
      %v3677 = vadd.f32 %v3588, %v3676
      %v3678 = vpop.f32.mrf.mxu0
      %v3679 = vadd.f32 %v3590, %v3678
      %3680 = vmatmul.bf16.gmra.mxu0 %v2780
      %v3681 = vpop.f32.mrf.mxu0
      %v3682 = vadd.f32 %v3593, %v3681
      %v3683 = vpop.f32.mrf.mxu0
      %v3684 = vadd.f32 %v3595, %v3683
      %3685 = vmatmul.bf16.gmra.mxu0 %v2789
      %v3686 = vpop.f32.mrf.mxu0
      %v3687 = vadd.f32 %v3598, %v3686
      %v3688 = vpop.f32.mrf.mxu0
      %v3689 = vadd.f32 %v3600, %v3688
      %3690 = vmatmul.bf16.gmra.mxu0 %v2798
      %v3691 = vpop.f32.mrf.mxu0
      %v3692 = vadd.f32 %v3603, %v3691
      %v3693 = vpop.f32.mrf.mxu0
      %v3694 = vadd.f32 %v3605, %v3693
      %3695 = vmatmul.bf16.gmra.mxu0 %v2807
      %v3696 = vpop.f32.mrf.mxu0
      %v3697 = vadd.f32 %v3608, %v3696
      %v3698 = vpop.f32.mrf.mxu0
      %v3699 = vadd.f32 %v3610, %v3698
      %3700 = vmatmul.bf16.gmra.mxu0 %v2816
      %v3701 = vpop.f32.mrf.mxu0
      %v3702 = vadd.f32 %v3613, %v3701
      %v3703 = vpop.f32.mrf.mxu0
      %v3704 = vadd.f32 %v3615, %v3703
      %3705 = vmatmul.bf16.gmra.mxu0 %v2825
      %v3706 = vpop.f32.mrf.mxu0
      %v3707 = vadd.f32 %v3618, %v3706
      %v3708 = vpop.f32.mrf.mxu0
      %v3709 = vadd.f32 %v3620, %v3708
      %3710 = vmatmul.bf16.gmra.mxu0 %v2834
      %v3711 = vpop.f32.mrf.mxu0
      %v3712 = vadd.f32 %v3623, %v3711
      %v3713 = vpop.f32.mrf.mxu0
      %v3714 = vadd.f32 %v3625, %v3713
      %3715 = vmatmul.bf16.gmra.mxu0 %v2843
      %v3716 = vpop.f32.mrf.mxu0
      %v3717 = vadd.f32 %v3628, %v3716
      %v3718 = vpop.f32.mrf.mxu0
      %v3719 = vadd.f32 %v3630, %v3718
      %3720 = vmatmul.bf16.gmra.mxu0 %v2852
      %v3721 = vpop.f32.mrf.mxu0
      %v3722 = vadd.f32 %v3633, %v3721
      %v3723 = vpop.f32.mrf.mxu0
      %v3724 = vadd.f32 %v3635, %v3723
      %3725 = vmatmul.bf16.gmra.mxu0 %v2861
      %v3726 = vpop.f32.mrf.mxu0
      %v3727 = vadd.f32 %v3638, %v3726
      %v3728 = vpop.f32.mrf.mxu0
      %v3729 = vadd.f32 %v3640, %v3728
      %3730 = vmatmul.bf16.gmra.mxu0 %v2870
      %v3731 = vpop.f32.mrf.mxu0
      %v3732 = vadd.f32 %v3643, %v3731
      %v3733 = vpop.f32.mrf.mxu0
      %v3734 = vadd.f32 %v3645, %v3733
      %3735 = vmatmul.bf16.gmra.mxu0 %v2879
      %v3736 = vpop.f32.mrf.mxu0
      %v3737 = vadd.f32 %v3648, %v3736
      %v3738 = vpop.f32.mrf.mxu0
      %v3739 = vadd.f32 %v3650, %v3738
      %3740 = vmatmul.bf16.gmra.mxu0 %v2888
      %v3741 = vpop.f32.mrf.mxu0
      %v3742 = vadd.f32 %v3653, %v3741
      %v3743 = vpop.f32.mrf.mxu0
      %v3744 = vadd.f32 %v3655, %v3743
      %3745 = vmatmul.bf16.gmra.mxu0 %v2897
      %v3746 = vpop.f32.mrf.mxu0
      %v3747 = vadd.f32 %v3658, %v3746
      %v3748 = vpop.f32.mrf.mxu0
      %v3749 = vadd.f32 %v3660, %v3748
      %3750 = vmatmul.bf16.gmra.mxu0 %v2906
      %v3751 = vpop.f32.mrf.mxu0
      %v3752 = vadd.f32 %v3663, %v3751
      %v3753 = vpop.f32.mrf.mxu0
      %v3754 = vadd.f32 %v3665, %v3753
      %3755 = vdwg.mxu0
      %3756 = vmatpush.bf16.msra.mxu0 %v3376
      %3757 = vmatpush.bf16.msra.mxu0 %v3375
      %3758 = vmatpush.bf16.msra.mxu0 %v3374
      %3759 = vmatpush.bf16.msra.mxu0 %v3373
      %3760 = vmatpush.bf16.msra.mxu0 %v3372
      %3761 = vmatpush.bf16.msra.mxu0 %v3371
      %3762 = vmatpush.bf16.msra.mxu0 %v3370
      %3763 = vmatpush.bf16.msra.mxu0 %v3369
      %3764 = vmatmul.bf16.gmra.mxu0 %v2772
      %v3765 = vpop.f32.mrf.mxu0
      %v3766 = vadd.f32 %v3677, %v3765
      %v3767 = vpop.f32.mrf.mxu0
      %v3768 = vadd.f32 %v3679, %v3767
      %3769 = vmatmul.bf16.gmra.mxu0 %v2781
      %v3770 = vpop.f32.mrf.mxu0
      %v3771 = vadd.f32 %v3682, %v3770
      %v3772 = vpop.f32.mrf.mxu0
      %v3773 = vadd.f32 %v3684, %v3772
      %3774 = vmatmul.bf16.gmra.mxu0 %v2790
      %v3775 = vpop.f32.mrf.mxu0
      %v3776 = vadd.f32 %v3687, %v3775
      %v3777 = vpop.f32.mrf.mxu0
      %v3778 = vadd.f32 %v3689, %v3777
      %3779 = vmatmul.bf16.gmra.mxu0 %v2799
      %v3780 = vpop.f32.mrf.mxu0
      %v3781 = vadd.f32 %v3692, %v3780
      %v3782 = vpop.f32.mrf.mxu0
      %v3783 = vadd.f32 %v3694, %v3782
      %3784 = vmatmul.bf16.gmra.mxu0 %v2808
      %v3785 = vpop.f32.mrf.mxu0
      %v3786 = vadd.f32 %v3697, %v3785
      %v3787 = vpop.f32.mrf.mxu0
      %v3788 = vadd.f32 %v3699, %v3787
      %3789 = vmatmul.bf16.gmra.mxu0 %v2817
      %v3790 = vpop.f32.mrf.mxu0
      %v3791 = vadd.f32 %v3702, %v3790
      %v3792 = vpop.f32.mrf.mxu0
      %v3793 = vadd.f32 %v3704, %v3792
      %3794 = vmatmul.bf16.gmra.mxu0 %v2826
      %v3795 = vpop.f32.mrf.mxu0
      %v3796 = vadd.f32 %v3707, %v3795
      %v3797 = vpop.f32.mrf.mxu0
      %v3798 = vadd.f32 %v3709, %v3797
      %3799 = vmatmul.bf16.gmra.mxu0 %v2835
      %v3800 = vpop.f32.mrf.mxu0
      %v3801 = vadd.f32 %v3712, %v3800
      %v3802 = vpop.f32.mrf.mxu0
      %v3803 = vadd.f32 %v3714, %v3802
      %3804 = vmatmul.bf16.gmra.mxu0 %v2844
      %v3805 = vpop.f32.mrf.mxu0
      %v3806 = vadd.f32 %v3717, %v3805
      %v3807 = vpop.f32.mrf.mxu0
      %v3808 = vadd.f32 %v3719, %v3807
      %3809 = vmatmul.bf16.gmra.mxu0 %v2853
      %v3810 = vpop.f32.mrf.mxu0
      %v3811 = vadd.f32 %v3722, %v3810
      %v3812 = vpop.f32.mrf.mxu0
      %v3813 = vadd.f32 %v3724, %v3812
      %3814 = vmatmul.bf16.gmra.mxu0 %v2862
      %v3815 = vpop.f32.mrf.mxu0
      %v3816 = vadd.f32 %v3727, %v3815
      %v3817 = vpop.f32.mrf.mxu0
      %v3818 = vadd.f32 %v3729, %v3817
      %3819 = vmatmul.bf16.gmra.mxu0 %v2871
      %v3820 = vpop.f32.mrf.mxu0
      %v3821 = vadd.f32 %v3732, %v3820
      %v3822 = vpop.f32.mrf.mxu0
      %v3823 = vadd.f32 %v3734, %v3822
      %3824 = vmatmul.bf16.gmra.mxu0 %v2880
      %v3825 = vpop.f32.mrf.mxu0
      %v3826 = vadd.f32 %v3737, %v3825
      %v3827 = vpop.f32.mrf.mxu0
      %v3828 = vadd.f32 %v3739, %v3827
      %3829 = vmatmul.bf16.gmra.mxu0 %v2889
      %v3830 = vpop.f32.mrf.mxu0
      %v3831 = vadd.f32 %v3742, %v3830
      %v3832 = vpop.f32.mrf.mxu0
      %v3833 = vadd.f32 %v3744, %v3832
      %3834 = vmatmul.bf16.gmra.mxu0 %v2898
      %v3835 = vpop.f32.mrf.mxu0
      %v3836 = vadd.f32 %v3747, %v3835
      %v3837 = vpop.f32.mrf.mxu0
      %v3838 = vadd.f32 %v3749, %v3837
      %3839 = vmatmul.bf16.gmra.mxu0 %v2907
      %v3840 = vpop.f32.mrf.mxu0
      %v3841 = vadd.f32 %v3752, %v3840
      %v3842 = vpop.f32.mrf.mxu0
      %v3843 = vadd.f32 %v3754, %v3842
      %3844 = vdwg.mxu0
      %3845 = vmatpush.bf16.msra.mxu0 %v3384
      %3846 = vmatpush.bf16.msra.mxu0 %v3383
      %3847 = vmatpush.bf16.msra.mxu0 %v3382
      %3848 = vmatpush.bf16.msra.mxu0 %v3381
      %3849 = vmatpush.bf16.msra.mxu0 %v3380
      %3850 = vmatpush.bf16.msra.mxu0 %v3379
      %3851 = vmatpush.bf16.msra.mxu0 %v3378
      %3852 = vmatpush.bf16.msra.mxu0 %v3377
      %3853 = vmatmul.bf16.gmra.mxu0 %v2773
      %v3854 = vpop.f32.mrf.mxu0
      %v3855 = vadd.f32 %v3766, %v3854
      %v3856 = vpop.f32.mrf.mxu0
      %v3857 = vadd.f32 %v3768, %v3856
      %3858 = vmatmul.bf16.gmra.mxu0 %v2782
      %v3859 = vpop.f32.mrf.mxu0
      %v3860 = vadd.f32 %v3771, %v3859
      %v3861 = vpop.f32.mrf.mxu0
      %v3862 = vadd.f32 %v3773, %v3861
      %3863 = vmatmul.bf16.gmra.mxu0 %v2791
      %v3864 = vpop.f32.mrf.mxu0
      %v3865 = vadd.f32 %v3776, %v3864
      %v3866 = vpop.f32.mrf.mxu0
      %v3867 = vadd.f32 %v3778, %v3866
      %3868 = vmatmul.bf16.gmra.mxu0 %v2800
      %v3869 = vpop.f32.mrf.mxu0
      %v3870 = vadd.f32 %v3781, %v3869
      %v3871 = vpop.f32.mrf.mxu0
      %v3872 = vadd.f32 %v3783, %v3871
      %3873 = vmatmul.bf16.gmra.mxu0 %v2809
      %v3874 = vpop.f32.mrf.mxu0
      %v3875 = vadd.f32 %v3786, %v3874
      %v3876 = vpop.f32.mrf.mxu0
      %v3877 = vadd.f32 %v3788, %v3876
      %3878 = vmatmul.bf16.gmra.mxu0 %v2818
      %v3879 = vpop.f32.mrf.mxu0
      %v3880 = vadd.f32 %v3791, %v3879
      %v3881 = vpop.f32.mrf.mxu0
      %v3882 = vadd.f32 %v3793, %v3881
      %3883 = vmatmul.bf16.gmra.mxu0 %v2827
      %v3884 = vpop.f32.mrf.mxu0
      %v3885 = vadd.f32 %v3796, %v3884
      %v3886 = vpop.f32.mrf.mxu0
      %v3887 = vadd.f32 %v3798, %v3886
      %3888 = vmatmul.bf16.gmra.mxu0 %v2836
      %v3889 = vpop.f32.mrf.mxu0
      %v3890 = vadd.f32 %v3801, %v3889
      %v3891 = vpop.f32.mrf.mxu0
      %v3892 = vadd.f32 %v3803, %v3891
      %3893 = vmatmul.bf16.gmra.mxu0 %v2845
      %v3894 = vpop.f32.mrf.mxu0
      %v3895 = vadd.f32 %v3806, %v3894
      %v3896 = vpop.f32.mrf.mxu0
      %v3897 = vadd.f32 %v3808, %v3896
      %3898 = vmatmul.bf16.gmra.mxu0 %v2854
      %v3899 = vpop.f32.mrf.mxu0
      %v3900 = vadd.f32 %v3811, %v3899
      %v3901 = vpop.f32.mrf.mxu0
      %v3902 = vadd.f32 %v3813, %v3901
      %3903 = vmatmul.bf16.gmra.mxu0 %v2863
      %v3904 = vpop.f32.mrf.mxu0
      %v3905 = vadd.f32 %v3816, %v3904
      %v3906 = vpop.f32.mrf.mxu0
      %v3907 = vadd.f32 %v3818, %v3906
      %3908 = vmatmul.bf16.gmra.mxu0 %v2872
      %v3909 = vpop.f32.mrf.mxu0
      %v3910 = vadd.f32 %v3821, %v3909
      %v3911 = vpop.f32.mrf.mxu0
      %v3912 = vadd.f32 %v3823, %v3911
      %3913 = vmatmul.bf16.gmra.mxu0 %v2881
      %v3914 = vpop.f32.mrf.mxu0
      %v3915 = vadd.f32 %v3826, %v3914
      %v3916 = vpop.f32.mrf.mxu0
      %v3917 = vadd.f32 %v3828, %v3916
      %3918 = vmatmul.bf16.gmra.mxu0 %v2890
      %v3919 = vpop.f32.mrf.mxu0
      %v3920 = vadd.f32 %v3831, %v3919
      %v3921 = vpop.f32.mrf.mxu0
      %v3922 = vadd.f32 %v3833, %v3921
      %3923 = vmatmul.bf16.gmra.mxu0 %v2899
      %v3924 = vpop.f32.mrf.mxu0
      %v3925 = vadd.f32 %v3836, %v3924
      %v3926 = vpop.f32.mrf.mxu0
      %v3927 = vadd.f32 %v3838, %v3926
      %3928 = vmatmul.bf16.gmra.mxu0 %v2908
      %v3929 = vpop.f32.mrf.mxu0
      %v3930 = vadd.f32 %v3841, %v3929
      %v3931 = vpop.f32.mrf.mxu0
      %v3932 = vadd.f32 %v3843, %v3931
      %3933 = vdwg.mxu0
      %3934 = vmatpush.bf16.msra.mxu0 %v3392
      %3935 = vmatpush.bf16.msra.mxu0 %v3391
      %3936 = vmatpush.bf16.msra.mxu0 %v3390
      %3937 = vmatpush.bf16.msra.mxu0 %v3389
      %3938 = vmatpush.bf16.msra.mxu0 %v3388
      %3939 = vmatpush.bf16.msra.mxu0 %v3387
      %3940 = vmatpush.bf16.msra.mxu0 %v3386
      %3941 = vmatpush.bf16.msra.mxu0 %v3385
      %3942 = vmatmul.bf16.gmra.mxu0 %v2774
      %v3943 = vpop.f32.mrf.mxu0
      %v3944 = vadd.f32 %v3855, %v3943
      %v3945 = vpop.f32.mrf.mxu0
      %v3946 = vadd.f32 %v3857, %v3945
      %3947 = vmatmul.bf16.gmra.mxu0 %v2783
      %v3948 = vpop.f32.mrf.mxu0
      %v3949 = vadd.f32 %v3860, %v3948
      %v3950 = vpop.f32.mrf.mxu0
      %v3951 = vadd.f32 %v3862, %v3950
      %3952 = vmatmul.bf16.gmra.mxu0 %v2792
      %v3953 = vpop.f32.mrf.mxu0
      %v3954 = vadd.f32 %v3865, %v3953
      %v3955 = vpop.f32.mrf.mxu0
      %v3956 = vadd.f32 %v3867, %v3955
      %3957 = vmatmul.bf16.gmra.mxu0 %v2801
      %v3958 = vpop.f32.mrf.mxu0
      %v3959 = vadd.f32 %v3870, %v3958
      %v3960 = vpop.f32.mrf.mxu0
      %v3961 = vadd.f32 %v3872, %v3960
      %3962 = vmatmul.bf16.gmra.mxu0 %v2810
      %v3963 = vpop.f32.mrf.mxu0
      %v3964 = vadd.f32 %v3875, %v3963
      %v3965 = vpop.f32.mrf.mxu0
      %v3966 = vadd.f32 %v3877, %v3965
      %3967 = vmatmul.bf16.gmra.mxu0 %v2819
      %v3968 = vpop.f32.mrf.mxu0
      %v3969 = vadd.f32 %v3880, %v3968
      %v3970 = vpop.f32.mrf.mxu0
      %v3971 = vadd.f32 %v3882, %v3970
      %3972 = vmatmul.bf16.gmra.mxu0 %v2828
      %v3973 = vpop.f32.mrf.mxu0
      %v3974 = vadd.f32 %v3885, %v3973
      %v3975 = vpop.f32.mrf.mxu0
      %v3976 = vadd.f32 %v3887, %v3975
      %3977 = vmatmul.bf16.gmra.mxu0 %v2837
      %v3978 = vpop.f32.mrf.mxu0
      %v3979 = vadd.f32 %v3890, %v3978
      %v3980 = vpop.f32.mrf.mxu0
      %v3981 = vadd.f32 %v3892, %v3980
      %3982 = vmatmul.bf16.gmra.mxu0 %v2846
      %v3983 = vpop.f32.mrf.mxu0
      %v3984 = vadd.f32 %v3895, %v3983
      %v3985 = vpop.f32.mrf.mxu0
      %v3986 = vadd.f32 %v3897, %v3985
      %3987 = vmatmul.bf16.gmra.mxu0 %v2855
      %v3988 = vpop.f32.mrf.mxu0
      %v3989 = vadd.f32 %v3900, %v3988
      %v3990 = vpop.f32.mrf.mxu0
      %v3991 = vadd.f32 %v3902, %v3990
      %3992 = vmatmul.bf16.gmra.mxu0 %v2864
      %v3993 = vpop.f32.mrf.mxu0
      %v3994 = vadd.f32 %v3905, %v3993
      %v3995 = vpop.f32.mrf.mxu0
      %v3996 = vadd.f32 %v3907, %v3995
      %3997 = vmatmul.bf16.gmra.mxu0 %v2873
      %v3998 = vpop.f32.mrf.mxu0
      %v3999 = vadd.f32 %v3910, %v3998
      %v4000 = vpop.f32.mrf.mxu0
      %v4001 = vadd.f32 %v3912, %v4000
      %4002 = vmatmul.bf16.gmra.mxu0 %v2882
      %v4003 = vpop.f32.mrf.mxu0
      %v4004 = vadd.f32 %v3915, %v4003
      %v4005 = vpop.f32.mrf.mxu0
      %v4006 = vadd.f32 %v3917, %v4005
      %4007 = vmatmul.bf16.gmra.mxu0 %v2891
      %v4008 = vpop.f32.mrf.mxu0
      %v4009 = vadd.f32 %v3920, %v4008
      %v4010 = vpop.f32.mrf.mxu0
      %v4011 = vadd.f32 %v3922, %v4010
      %4012 = vmatmul.bf16.gmra.mxu0 %v2900
      %v4013 = vpop.f32.mrf.mxu0
      %v4014 = vadd.f32 %v3925, %v4013
      %v4015 = vpop.f32.mrf.mxu0
      %v4016 = vadd.f32 %v3927, %v4015
      %4017 = vmatmul.bf16.gmra.mxu0 %v2909
      %v4018 = vpop.f32.mrf.mxu0
      %v4019 = vadd.f32 %v3930, %v4018
      %v4020 = vpop.f32.mrf.mxu0
      %v4021 = vadd.f32 %v3932, %v4020
      %4022 = vdwg.mxu0
      %4023 = vmatpush.bf16.msra.mxu0 %v3400
      %4024 = vmatpush.bf16.msra.mxu0 %v3399
      %4025 = vmatpush.bf16.msra.mxu0 %v3398
      %4026 = vmatpush.bf16.msra.mxu0 %v3397
      %4027 = vmatpush.bf16.msra.mxu0 %v3396
      %4028 = vmatpush.bf16.msra.mxu0 %v3395
      %4029 = vmatpush.bf16.msra.mxu0 %v3394
      %4030 = vmatpush.bf16.msra.mxu0 %v3393
      %4031 = vmatmul.bf16.gmra.mxu0 %v2775
      %v4032 = vpop.f32.mrf.mxu0
      %v4033 = vadd.f32 %v3944, %v4032
      %v4034 = vpop.f32.mrf.mxu0
      %v4035 = vadd.f32 %v3946, %v4034
      %4036 = vmatmul.bf16.gmra.mxu0 %v2784
      %v4037 = vpop.f32.mrf.mxu0
      %v4038 = vadd.f32 %v3949, %v4037
      %v4039 = vpop.f32.mrf.mxu0
      %v4040 = vadd.f32 %v3951, %v4039
      %4041 = vmatmul.bf16.gmra.mxu0 %v2793
      %v4042 = vpop.f32.mrf.mxu0
      %v4043 = vadd.f32 %v3954, %v4042
      %v4044 = vpop.f32.mrf.mxu0
      %v4045 = vadd.f32 %v3956, %v4044
      %4046 = vmatmul.bf16.gmra.mxu0 %v2802
      %v4047 = vpop.f32.mrf.mxu0
      %v4048 = vadd.f32 %v3959, %v4047
      %v4049 = vpop.f32.mrf.mxu0
      %v4050 = vadd.f32 %v3961, %v4049
      %4051 = vmatmul.bf16.gmra.mxu0 %v2811
      %v4052 = vpop.f32.mrf.mxu0
      %v4053 = vadd.f32 %v3964, %v4052
      %v4054 = vpop.f32.mrf.mxu0
      %v4055 = vadd.f32 %v3966, %v4054
      %4056 = vmatmul.bf16.gmra.mxu0 %v2820
      %v4057 = vpop.f32.mrf.mxu0
      %v4058 = vadd.f32 %v3969, %v4057
      %v4059 = vpop.f32.mrf.mxu0
      %v4060 = vadd.f32 %v3971, %v4059
      %4061 = vmatmul.bf16.gmra.mxu0 %v2829
      %v4062 = vpop.f32.mrf.mxu0
      %v4063 = vadd.f32 %v3974, %v4062
      %v4064 = vpop.f32.mrf.mxu0
      %v4065 = vadd.f32 %v3976, %v4064
      %4066 = vmatmul.bf16.gmra.mxu0 %v2838
      %v4067 = vpop.f32.mrf.mxu0
      %v4068 = vadd.f32 %v3979, %v4067
      %v4069 = vpop.f32.mrf.mxu0
      %v4070 = vadd.f32 %v3981, %v4069
      %4071 = vmatmul.bf16.gmra.mxu0 %v2847
      %v4072 = vpop.f32.mrf.mxu0
      %v4073 = vadd.f32 %v3984, %v4072
      %v4074 = vpop.f32.mrf.mxu0
      %v4075 = vadd.f32 %v3986, %v4074
      %4076 = vmatmul.bf16.gmra.mxu0 %v2856
      %v4077 = vpop.f32.mrf.mxu0
      %v4078 = vadd.f32 %v3989, %v4077
      %v4079 = vpop.f32.mrf.mxu0
      %v4080 = vadd.f32 %v3991, %v4079
      %4081 = vmatmul.bf16.gmra.mxu0 %v2865
      %v4082 = vpop.f32.mrf.mxu0
      %v4083 = vadd.f32 %v3994, %v4082
      %v4084 = vpop.f32.mrf.mxu0
      %v4085 = vadd.f32 %v3996, %v4084
      %4086 = vmatmul.bf16.gmra.mxu0 %v2874
      %v4087 = vpop.f32.mrf.mxu0
      %v4088 = vadd.f32 %v3999, %v4087
      %v4089 = vpop.f32.mrf.mxu0
      %v4090 = vadd.f32 %v4001, %v4089
      %4091 = vmatmul.bf16.gmra.mxu0 %v2883
      %v4092 = vpop.f32.mrf.mxu0
      %v4093 = vadd.f32 %v4004, %v4092
      %v4094 = vpop.f32.mrf.mxu0
      %v4095 = vadd.f32 %v4006, %v4094
      %4096 = vmatmul.bf16.gmra.mxu0 %v2892
      %v4097 = vpop.f32.mrf.mxu0
      %v4098 = vadd.f32 %v4009, %v4097
      %v4099 = vpop.f32.mrf.mxu0
      %v4100 = vadd.f32 %v4011, %v4099
      %4101 = vmatmul.bf16.gmra.mxu0 %v2901
      %v4102 = vpop.f32.mrf.mxu0
      %v4103 = vadd.f32 %v4014, %v4102
      %v4104 = vpop.f32.mrf.mxu0
      %v4105 = vadd.f32 %v4016, %v4104
      %4106 = vmatmul.bf16.gmra.mxu0 %v2910
      %v4107 = vpop.f32.mrf.mxu0
      %v4108 = vadd.f32 %v4019, %v4107
      %v4109 = vpop.f32.mrf.mxu0
      %v4110 = vadd.f32 %v4021, %v4109
      %4111 = vdwg.mxu0
      %4112 = vmatpush.bf16.msra.mxu0 %v3408
      %4113 = vmatpush.bf16.msra.mxu0 %v3407
      %4114 = vmatpush.bf16.msra.mxu0 %v3406
      %4115 = vmatpush.bf16.msra.mxu0 %v3405
      %4116 = vmatpush.bf16.msra.mxu0 %v3404
      %4117 = vmatpush.bf16.msra.mxu0 %v3403
      %4118 = vmatpush.bf16.msra.mxu0 %v3402
      %4119 = vmatpush.bf16.msra.mxu0 %v3401
      %4120 = vmatmul.bf16.gmra.mxu0 %v2776
      %v4121 = vpop.f32.mrf.mxu0
      %v4122 = vadd.f32 %v4033, %v4121
      %v4123 = vpop.f32.mrf.mxu0
      %v4124 = vadd.f32 %v4035, %v4123
      %4125 = vmatmul.bf16.gmra.mxu0 %v2785
      %v4126 = vpop.f32.mrf.mxu0
      %v4127 = vadd.f32 %v4038, %v4126
      %v4128 = vpop.f32.mrf.mxu0
      %v4129 = vadd.f32 %v4040, %v4128
      %4130 = vmatmul.bf16.gmra.mxu0 %v2794
      %v4131 = vpop.f32.mrf.mxu0
      %v4132 = vadd.f32 %v4043, %v4131
      %v4133 = vpop.f32.mrf.mxu0
      %v4134 = vadd.f32 %v4045, %v4133
      %4135 = vmatmul.bf16.gmra.mxu0 %v2803
      %v4136 = vpop.f32.mrf.mxu0
      %v4137 = vadd.f32 %v4048, %v4136
      %v4138 = vpop.f32.mrf.mxu0
      %v4139 = vadd.f32 %v4050, %v4138
      %4140 = vmatmul.bf16.gmra.mxu0 %v2812
      %v4141 = vpop.f32.mrf.mxu0
      %v4142 = vadd.f32 %v4053, %v4141
      %v4143 = vpop.f32.mrf.mxu0
      %v4144 = vadd.f32 %v4055, %v4143
      %4145 = vmatmul.bf16.gmra.mxu0 %v2821
      %v4146 = vpop.f32.mrf.mxu0
      %v4147 = vadd.f32 %v4058, %v4146
      %v4148 = vpop.f32.mrf.mxu0
      %v4149 = vadd.f32 %v4060, %v4148
      %4150 = vmatmul.bf16.gmra.mxu0 %v2830
      %v4151 = vpop.f32.mrf.mxu0
      %v4152 = vadd.f32 %v4063, %v4151
      %v4153 = vpop.f32.mrf.mxu0
      %v4154 = vadd.f32 %v4065, %v4153
      %4155 = vmatmul.bf16.gmra.mxu0 %v2839
      %v4156 = vpop.f32.mrf.mxu0
      %v4157 = vadd.f32 %v4068, %v4156
      %v4158 = vpop.f32.mrf.mxu0
      %v4159 = vadd.f32 %v4070, %v4158
      %4160 = vmatmul.bf16.gmra.mxu0 %v2848
      %v4161 = vpop.f32.mrf.mxu0
      %v4162 = vadd.f32 %v4073, %v4161
      %v4163 = vpop.f32.mrf.mxu0
      %v4164 = vadd.f32 %v4075, %v4163
      %4165 = vmatmul.bf16.gmra.mxu0 %v2857
      %v4166 = vpop.f32.mrf.mxu0
      %v4167 = vadd.f32 %v4078, %v4166
      %v4168 = vpop.f32.mrf.mxu0
      %v4169 = vadd.f32 %v4080, %v4168
      %4170 = vmatmul.bf16.gmra.mxu0 %v2866
      %v4171 = vpop.f32.mrf.mxu0
      %v4172 = vadd.f32 %v4083, %v4171
      %v4173 = vpop.f32.mrf.mxu0
      %v4174 = vadd.f32 %v4085, %v4173
      %4175 = vmatmul.bf16.gmra.mxu0 %v2875
      %v4176 = vpop.f32.mrf.mxu0
      %v4177 = vadd.f32 %v4088, %v4176
      %v4178 = vpop.f32.mrf.mxu0
      %v4179 = vadd.f32 %v4090, %v4178
      %4180 = vmatmul.bf16.gmra.mxu0 %v2884
      %v4181 = vpop.f32.mrf.mxu0
      %v4182 = vadd.f32 %v4093, %v4181
      %v4183 = vpop.f32.mrf.mxu0
      %v4184 = vadd.f32 %v4095, %v4183
      %4185 = vmatmul.bf16.gmra.mxu0 %v2893
      %v4186 = vpop.f32.mrf.mxu0
      %v4187 = vadd.f32 %v4098, %v4186
      %v4188 = vpop.f32.mrf.mxu0
      %v4189 = vadd.f32 %v4100, %v4188
      %4190 = vmatmul.bf16.gmra.mxu0 %v2902
      %v4191 = vpop.f32.mrf.mxu0
      %v4192 = vadd.f32 %v4103, %v4191
      %v4193 = vpop.f32.mrf.mxu0
      %v4194 = vadd.f32 %v4105, %v4193
      %4195 = vmatmul.bf16.gmra.mxu0 %v2911
      %v4196 = vpop.f32.mrf.mxu0
      %v4197 = vadd.f32 %v4108, %v4196
      %v4198 = vpop.f32.mrf.mxu0
      %v4199 = vadd.f32 %v4110, %v4198
      %4200 = vdwg.mxu0
      %4201 = vmatpush.bf16.msra.mxu0 %v3416
      %4202 = vmatpush.bf16.msra.mxu0 %v3415
      %4203 = vmatpush.bf16.msra.mxu0 %v3414
      %4204 = vmatpush.bf16.msra.mxu0 %v3413
      %4205 = vmatpush.bf16.msra.mxu0 %v3412
      %4206 = vmatpush.bf16.msra.mxu0 %v3411
      %4207 = vmatpush.bf16.msra.mxu0 %v3410
      %4208 = vmatpush.bf16.msra.mxu0 %v3409
      %4209 = vmatmul.bf16.gmra.mxu0 %v2777
      %v4210 = vpop.f32.mrf.mxu0
      %v4211 = vadd.f32 %v4122, %v4210
      %v4212 = vpop.f32.mrf.mxu0
      %v4213 = vadd.f32 %v4124, %v4212
      %4214 = vmatmul.bf16.gmra.mxu0 %v2786
      %v4215 = vpop.f32.mrf.mxu0
      %v4216 = vadd.f32 %v4127, %v4215
      %v4217 = vpop.f32.mrf.mxu0
      %v4218 = vadd.f32 %v4129, %v4217
      %4219 = vmatmul.bf16.gmra.mxu0 %v2795
      %v4220 = vpop.f32.mrf.mxu0
      %v4221 = vadd.f32 %v4132, %v4220
      %v4222 = vpop.f32.mrf.mxu0
      %v4223 = vadd.f32 %v4134, %v4222
      %4224 = vmatmul.bf16.gmra.mxu0 %v2804
      %v4225 = vpop.f32.mrf.mxu0
      %v4226 = vadd.f32 %v4137, %v4225
      %v4227 = vpop.f32.mrf.mxu0
      %v4228 = vadd.f32 %v4139, %v4227
      %4229 = vmatmul.bf16.gmra.mxu0 %v2813
      %v4230 = vpop.f32.mrf.mxu0
      %v4231 = vadd.f32 %v4142, %v4230
      %v4232 = vpop.f32.mrf.mxu0
      %v4233 = vadd.f32 %v4144, %v4232
      %4234 = vmatmul.bf16.gmra.mxu0 %v2822
      %v4235 = vpop.f32.mrf.mxu0
      %v4236 = vadd.f32 %v4147, %v4235
      %v4237 = vpop.f32.mrf.mxu0
      %v4238 = vadd.f32 %v4149, %v4237
      %4239 = vmatmul.bf16.gmra.mxu0 %v2831
      %v4240 = vpop.f32.mrf.mxu0
      %v4241 = vadd.f32 %v4152, %v4240
      %v4242 = vpop.f32.mrf.mxu0
      %v4243 = vadd.f32 %v4154, %v4242
      %4244 = vmatmul.bf16.gmra.mxu0 %v2840
      %v4245 = vpop.f32.mrf.mxu0
      %v4246 = vadd.f32 %v4157, %v4245
      %v4247 = vpop.f32.mrf.mxu0
      %v4248 = vadd.f32 %v4159, %v4247
      %4249 = vmatmul.bf16.gmra.mxu0 %v2849
      %v4250 = vpop.f32.mrf.mxu0
      %v4251 = vadd.f32 %v4162, %v4250
      %v4252 = vpop.f32.mrf.mxu0
      %v4253 = vadd.f32 %v4164, %v4252
      %4254 = vmatmul.bf16.gmra.mxu0 %v2858
      %v4255 = vpop.f32.mrf.mxu0
      %v4256 = vadd.f32 %v4167, %v4255
      %v4257 = vpop.f32.mrf.mxu0
      %v4258 = vadd.f32 %v4169, %v4257
      %4259 = vmatmul.bf16.gmra.mxu0 %v2867
      %v4260 = vpop.f32.mrf.mxu0
      %v4261 = vadd.f32 %v4172, %v4260
      %v4262 = vpop.f32.mrf.mxu0
      %v4263 = vadd.f32 %v4174, %v4262
      %4264 = vmatmul.bf16.gmra.mxu0 %v2876
      %v4265 = vpop.f32.mrf.mxu0
      %v4266 = vadd.f32 %v4177, %v4265
      %v4267 = vpop.f32.mrf.mxu0
      %v4268 = vadd.f32 %v4179, %v4267
      %4269 = vmatmul.bf16.gmra.mxu0 %v2885
      %v4270 = vpop.f32.mrf.mxu0
      %v4271 = vadd.f32 %v4182, %v4270
      %v4272 = vpop.f32.mrf.mxu0
      %v4273 = vadd.f32 %v4184, %v4272
      %4274 = vmatmul.bf16.gmra.mxu0 %v2894
      %v4275 = vpop.f32.mrf.mxu0
      %v4276 = vadd.f32 %v4187, %v4275
      %v4277 = vpop.f32.mrf.mxu0
      %v4278 = vadd.f32 %v4189, %v4277
      %4279 = vmatmul.bf16.gmra.mxu0 %v2903
      %v4280 = vpop.f32.mrf.mxu0
      %v4281 = vadd.f32 %v4192, %v4280
      %v4282 = vpop.f32.mrf.mxu0
      %v4283 = vadd.f32 %v4194, %v4282
      %4284 = vmatmul.bf16.gmra.mxu0 %v2912
      %v4285 = vpop.f32.mrf.mxu0
      %v4286 = vadd.f32 %v4197, %v4285
      %v4287 = vpop.f32.mrf.mxu0
      %v4288 = vadd.f32 %v4199, %v4287
      %4289 = vdwg.mxu0
      %v4290 = vld [vmem:[%s305] sm:$0x1]
      %v4292 = vperm.slane %v4290, 0
      %v4294 = vmul.f32 %v4211, %v4292
      %v4295 = vmul.f32 %v4213, %v4292
      %v4296 = vmul.f32 %v4216, %v4292
      %v4297 = vmul.f32 %v4218, %v4292
      %v4298 = vmul.f32 %v4221, %v4292
      %v4299 = vmul.f32 %v4223, %v4292
      %v4300 = vmul.f32 %v4226, %v4292
      %v4301 = vmul.f32 %v4228, %v4292
      %v4302 = vmul.f32 %v4231, %v4292
      %v4303 = vmul.f32 %v4233, %v4292
      %v4304 = vmul.f32 %v4236, %v4292
      %v4305 = vmul.f32 %v4238, %v4292
      %v4306 = vmul.f32 %v4241, %v4292
      %v4307 = vmul.f32 %v4243, %v4292
      %v4308 = vmul.f32 %v4246, %v4292
      %v4309 = vmul.f32 %v4248, %v4292
      %v4310 = vmul.f32 %v4251, %v4292
      %v4311 = vmul.f32 %v4253, %v4292
      %v4312 = vmul.f32 %v4256, %v4292
      %v4313 = vmul.f32 %v4258, %v4292
      %v4314 = vmul.f32 %v4261, %v4292
      %v4315 = vmul.f32 %v4263, %v4292
      %v4316 = vmul.f32 %v4266, %v4292
      %v4317 = vmul.f32 %v4268, %v4292
      %v4318 = vmul.f32 %v4271, %v4292
      %v4319 = vmul.f32 %v4273, %v4292
      %v4320 = vmul.f32 %v4276, %v4292
      %v4321 = vmul.f32 %v4278, %v4292
      %v4322 = vmul.f32 %v4281, %v4292
      %v4323 = vmul.f32 %v4283, %v4292
      %v4324 = vmul.f32 %v4286, %v4292
      %v4325 = vmul.f32 %v4288, %v4292
      %v4326 = vld [vmem:[%s308] sm:$0x1]
      %v4328 = vperm.slane %v4326, 0
      %v4330 = vadd.f32 %v4294, %v4328
      %v4331 = vadd.f32 %v4295, %v4328
      %v4332 = vadd.f32 %v4296, %v4328
      %v4333 = vadd.f32 %v4297, %v4328
      %v4334 = vadd.f32 %v4298, %v4328
      %v4335 = vadd.f32 %v4299, %v4328
      %v4336 = vadd.f32 %v4300, %v4328
      %v4337 = vadd.f32 %v4301, %v4328
      %v4338 = vadd.f32 %v4302, %v4328
      %v4339 = vadd.f32 %v4303, %v4328
      %v4340 = vadd.f32 %v4304, %v4328
      %v4341 = vadd.f32 %v4305, %v4328
      %v4342 = vadd.f32 %v4306, %v4328
      %v4343 = vadd.f32 %v4307, %v4328
      %v4344 = vadd.f32 %v4308, %v4328
      %v4345 = vadd.f32 %v4309, %v4328
      %v4346 = vadd.f32 %v4310, %v4328
      %v4347 = vadd.f32 %v4311, %v4328
      %v4348 = vadd.f32 %v4312, %v4328
      %v4349 = vadd.f32 %v4313, %v4328
      %v4350 = vadd.f32 %v4314, %v4328
      %v4351 = vadd.f32 %v4315, %v4328
      %v4352 = vadd.f32 %v4316, %v4328
      %v4353 = vadd.f32 %v4317, %v4328
      %v4354 = vadd.f32 %v4318, %v4328
      %v4355 = vadd.f32 %v4319, %v4328
      %v4356 = vadd.f32 %v4320, %v4328
      %v4357 = vadd.f32 %v4321, %v4328
      %v4358 = vadd.f32 %v4322, %v4328
      %v4359 = vadd.f32 %v4323, %v4328
      %v4360 = vadd.f32 %v4324, %v4328
      %v4361 = vadd.f32 %v4325, %v4328
      %v4362 = vmax.f32 %v4330, 0.0
      %v4363 = vmax.f32 %v4331, 0.0
      %v4364 = vmax.f32 %v4332, 0.0
      %v4365 = vmax.f32 %v4333, 0.0
      %v4366 = vmax.f32 %v4334, 0.0
      %v4367 = vmax.f32 %v4335, 0.0
      %v4368 = vmax.f32 %v4336, 0.0
      %v4369 = vmax.f32 %v4337, 0.0
      %v4370 = vmax.f32 %v4338, 0.0
      %v4371 = vmax.f32 %v4339, 0.0
      %v4372 = vmax.f32 %v4340, 0.0
      %v4373 = vmax.f32 %v4341, 0.0
      %v4374 = vmax.f32 %v4342, 0.0
      %v4375 = vmax.f32 %v4343, 0.0
      %v4376 = vmax.f32 %v4344, 0.0
      %v4377 = vmax.f32 %v4345, 0.0
      %v4378 = vmax.f32 %v4346, 0.0
      %v4379 = vmax.f32 %v4347, 0.0
      %v4380 = vmax.f32 %v4348, 0.0
      %v4381 = vmax.f32 %v4349, 0.0
      %v4382 = vmax.f32 %v4350, 0.0
      %v4383 = vmax.f32 %v4351, 0.0
      %v4384 = vmax.f32 %v4352, 0.0
      %v4385 = vmax.f32 %v4353, 0.0
      %v4386 = vmax.f32 %v4354, 0.0
      %v4387 = vmax.f32 %v4355, 0.0
      %v4388 = vmax.f32 %v4356, 0.0
      %v4389 = vmax.f32 %v4357, 0.0
      %v4390 = vmax.f32 %v4358, 0.0
      %v4391 = vmax.f32 %v4359, 0.0
      %v4392 = vmax.f32 %v4360, 0.0
      %v4393 = vmax.f32 %v4361, 0.0
      %v4394 = vpack.c.bf16 %v4362, %v4362
      %v4395 = vpack.c.bf16 %v4363, %v4363
      %v4396 = vpack.c.bf16 %v4364, %v4364
      %v4397 = vpack.c.bf16 %v4365, %v4365
      %v4398 = vpack.c.bf16 %v4366, %v4366
      %v4399 = vpack.c.bf16 %v4367, %v4367
      %v4400 = vpack.c.bf16 %v4368, %v4368
      %v4401 = vpack.c.bf16 %v4369, %v4369
      %v4402 = vpack.c.bf16 %v4370, %v4370
      %v4403 = vpack.c.bf16 %v4371, %v4371
      %v4404 = vpack.c.bf16 %v4372, %v4372
      %v4405 = vpack.c.bf16 %v4373, %v4373
      %v4406 = vpack.c.bf16 %v4374, %v4374
      %v4407 = vpack.c.bf16 %v4375, %v4375
      %v4408 = vpack.c.bf16 %v4376, %v4376
      %v4409 = vpack.c.bf16 %v4377, %v4377
      %v4410 = vpack.c.bf16 %v4378, %v4378
      %v4411 = vpack.c.bf16 %v4379, %v4379
      %v4412 = vpack.c.bf16 %v4380, %v4380
      %v4413 = vpack.c.bf16 %v4381, %v4381
      %v4414 = vpack.c.bf16 %v4382, %v4382
      %v4415 = vpack.c.bf16 %v4383, %v4383
      %v4416 = vpack.c.bf16 %v4384, %v4384
      %v4417 = vpack.c.bf16 %v4385, %v4385
      %v4418 = vpack.c.bf16 %v4386, %v4386
      %v4419 = vpack.c.bf16 %v4387, %v4387
      %v4420 = vpack.c.bf16 %v4388, %v4388
      %v4421 = vpack.c.bf16 %v4389, %v4389
      %v4422 = vpack.c.bf16 %v4390, %v4390
      %v4423 = vpack.c.bf16 %v4391, %v4391
      %v4424 = vpack.c.bf16 %v4392, %v4392
      %v4425 = vpack.c.bf16 %v4393, %v4393
      %4426 = vst [vmem:[%s316] sm:$0xf] %v4394
      %4427 = vst [vmem:[%s316 + $0x4] sm:$0xf] %v4395
      %4428 = vst [vmem:[%s316 + $0x8] sm:$0xf] %v4396
      %4429 = vst [vmem:[%s316 + $0xc] sm:$0xf] %v4397
      %4430 = vst [vmem:[%s316 + $0x10] sm:$0xf] %v4398
      %4431 = vst [vmem:[%s316 + $0x14] sm:$0xf] %v4399
      %4432 = vst [vmem:[%s316 + $0x18] sm:$0xf] %v4400
      %4433 = vst [vmem:[%s316 + $0x1c] sm:$0xf] %v4401
      %4434 = vst [vmem:[%s316 + $0x20] sm:$0xf] %v4402
      %4435 = vst [vmem:[%s316 + $0x24] sm:$0xf] %v4403
      %4436 = vst [vmem:[%s316 + $0x28] sm:$0xf] %v4404
      %4437 = vst [vmem:[%s316 + $0x2c] sm:$0xf] %v4405
      %4438 = vst [vmem:[%s316 + $0x30] sm:$0xf] %v4406
      %4439 = vst [vmem:[%s316 + $0x34] sm:$0xf] %v4407
      %4440 = vst [vmem:[%s316 + $0x38] sm:$0xf] %v4408
      %4441 = vst [vmem:[%s316 + $0x3c] sm:$0xf] %v4409
      %4442 = vst [vmem:[%s316 + $0x40] sm:$0xf] %v4410
      %4443 = vst [vmem:[%s316 + $0x44] sm:$0xf] %v4411
      %4444 = vst [vmem:[%s316 + $0x48] sm:$0xf] %v4412
      %4445 = vst [vmem:[%s316 + $0x4c] sm:$0xf] %v4413
      %4446 = vst [vmem:[%s316 + $0x50] sm:$0xf] %v4414
      %4447 = vst [vmem:[%s316 + $0x54] sm:$0xf] %v4415
      %4448 = vst [vmem:[%s316 + $0x58] sm:$0xf] %v4416
      %4449 = vst [vmem:[%s316 + $0x5c] sm:$0xf] %v4417
      %4450 = vst [vmem:[%s316 + $0x60] sm:$0xf] %v4418
      %4451 = vst [vmem:[%s316 + $0x64] sm:$0xf] %v4419
      %4452 = vst [vmem:[%s316 + $0x68] sm:$0xf] %v4420
      %4453 = vst [vmem:[%s316 + $0x6c] sm:$0xf] %v4421
      %4454 = vst [vmem:[%s316 + $0x70] sm:$0xf] %v4422
      %4455 = vst [vmem:[%s316 + $0x74] sm:$0xf] %v4423
      %4456 = vst [vmem:[%s316 + $0x78] sm:$0xf] %v4424
      %4457 = vst [vmem:[%s316 + $0x7c] sm:$0xf] %v4425
      %p4458 = scmp.lt.s32.totalorder %s21, 1
      %s4459 = scalar_select %p4458, %s21, 1
      %p4460 = scmp.lt.s32.totalorder %s22, 0
      %s4461 = scalar_select %p4460, %s22, 0
      %s4462 = smul.addr %s4459, 32
      %s4463 = sadd.s32 %s4461, %s4462
      %s4464 = smul.addr %s4463, 4
      %s4465 = scalar_lea.vmem %s6, %s4464
      // Predicated region
      $region49: #{basic_block_forward.2} parent=43 // pred_check
        %p4466 = pneg %p195
      $region50: #{basic_block_forward.2} parent=43 // pred_check_branch
        %4468 = sbr.rel (%p4466) target = $region52
      $region51: #{basic_block_forward.2} parent=43 // pred_region
        _
      $region52: #{basic_block_forward.2} parent=43 // pred_fallthru
        _
    $region44: #{basic_block_forward.2} parent=5 // pred_fallthru
      _
    %p4469 = scmp.le.s32.totalorder 2, %s12
    // Predicated region
    $region53: #{basic_block_forward.2} parent=5 // pred_check
      %p4470 = pneg %p4469
    $region54: #{basic_block_forward.2} parent=5 // pred_check_branch
      %4472 = sbr.rel (%p4470) target = $region56
    $region55: #{basic_block_forward.2} parent=5 // pred_region
      %s4473 = ssub.s32 %s12, 2
      // Predicated region
      $region57: #{basic_block_forward.2} parent=55 // pred_check
        %p4474 = pneg %p201
      $region58: #{basic_block_forward.2} parent=55 // pred_check_branch
        %4476 = sbr.rel (%p4474) target = $region60
      $region59: #{basic_block_forward.2} parent=55 // pred_region
        %p4477 = scmp.lt.s32.totalorder %s23, 1
        %s4478 = scalar_select %p4477, %s23, 1
        %p4479 = scmp.lt.s32.totalorder %s24, 0
        %s4480 = scalar_select %p4479, %s24, 0
        %s4481 = smul.addr %s4478, 32
        %s4482 = sadd.s32 %s4480, %s4481
        %s4483 = smul.addr %s4482, 4
        %s4484 = scalar_lea.vmem %s6, %s4483
      $region60: #{basic_block_forward.2} parent=55 // pred_fallthru
        _
    $region56: #{basic_block_forward.2} parent=5 // pred_fallthru
      _
  $region6: #{basic_block_forward.2} parent=0 // loop_footer
    %s16 = sadd.s32 1, %s12
  $region7: #{basic_block_forward.2} parent=0 // loop_footer_branch
    %11 = sbr.rel target = $region3
  $region8: #{basic_block_forward.2} parent=0 // loop_exit
    _

</llo_original>
